<compile_context>
chip_gen: v7x
topology: tpu7x:2x2x1
jax: 0.10.0
libtpu: 0.0.40
codegen_flags: <defaults>
</compile_context>

<pallas_src>
import jax
import jax.numpy as jnp
from jax import lax
from jax.experimental import pallas as pl
from jax.experimental.pallas import tpu as pltpu

# ----------------------------- configuration --------------------------------
VOXEL_SIZE = (0.2, 0.2, 1.0)                        # (vx, vy, vz)
PCD_RANGE = (0.0, -25.0, -25.0, 50.0, 25.0, 25.0)   # [xmin, ymin, zmin, xmax, ymax, zmax]
GRID_ZYX = (25, 16, 16)          # small demo grid (module default: (50, 250, 250))
VFE_FEAT_CHANNELS = (32, 64)     # scaled-down VFE channels (default: (32, 128))
MIDDLE_IN = VFE_FEAT_CHANNELS[-1]
MIDDLE_BASE = 16
ENC_CHANNELS = ((16,), (32, 32, 32), (64, 64, 64), (64, 64, 64))
ENC_PADDINGS = ((1,), (1, 1, 1), (1, 1, 1), ((0, 1, 1), 1, 1))
MIDDLE_OUT = 64
BN_EPS = 1e-3
# TODO(synk): encoder_downsampling_other_dim semantics unknown; defaults are all
#             False so the standard mmdet3d SparseEncoder stride-2 downsampling
#             is used for the first block of stages 1..3.


# ============================ HardVFE (Pallas) ===============================
def _vfe_kernel(npts_ref, feats_ref, w0_ref, b0_ref, w1a_ref, w1b_ref, b1_ref,
                out_ref):
    """Two VFE layers (linear(no bias) + folded-BN affine + ReLU).
    Layer 1's concat(pointwise, max) weight is split so the max-pooled half is
    computed once per voxel; ReLU+max are folded (relu is monotone)."""
    tn, M, C0 = feats_ref.shape
    C1 = w0_ref.shape[1]
    C2 = w1a_ref.shape[1]

    # padding-point mask: point j of voxel i is valid iff j < num_points[i]
    npts = npts_ref[...]                                             # (tn, 1)
    idx = lax.broadcasted_iota(jnp.int32, (tn, M), 1).astype(jnp.float32)
    mask = (idx < npts).astype(jnp.float32)                          # (tn, M)
    x = feats_ref[...] * mask[:, :, None]                            # (tn, M, C0)

    # ---- VFE layer 0 (max_out=True, cat_max=True) ----
    h = jnp.maximum(
        jnp.dot(x.reshape(tn * M, C0), w0_ref[...],
                preferred_element_type=jnp.float32) + b0_ref[...], 0.0)
    hmax = jnp.max(h.reshape(tn, M, C1), axis=1)                     # (tn, C1)

    # ---- VFE layer 1 (max_out=True, cat_max=False) ----
    # max_j relu(h_j @ W1a + hmax @ W1b + b1) == relu(max_j(h_j @ W1a) + ...)
    a = jnp.dot(h, w1a_ref[...], preferred_element_type=jnp.float32)  # (tn*M, C2)
    amax = jnp.max(a.reshape(tn, M, C2), axis=1)                      # (tn, C2)
    c = jnp.dot(hmax, w1b_ref[...], preferred_element_type=jnp.float32)
    out_ref[...] = jnp.maximum(amax + c + b1_ref[...], 0.0)


def hard_vfe(features, num_points, coors, vfe_params, *, tile_n=256):
    """features: (N, M, 3) xyz; num_points: (N,); coors: (N, 4) [b, z, y, x]."""
    N, M, _ = features.shape
    vx, vy, vz = VOXEL_SIZE
    x_off = vx / 2.0 + PCD_RANGE[0]
    y_off = vy / 2.0 + PCD_RANGE[1]
    z_off = vz / 2.0 + PCD_RANGE[2]

    # glue: voxel-center offset features (with_voxel_center=True)
    cf = coors.astype(jnp.float32)
    f_center = jnp.stack(
        [features[:, :, 0] - (cf[:, 3:4] * vx + x_off),
         features[:, :, 1] - (cf[:, 2:3] * vy + y_off),
         features[:, :, 2] - (cf[:, 1:2] * vz + z_off)], axis=-1)
    vfeats = jnp.concatenate([features, f_center], axis=-1)          # (N, M, 6)
    npts = num_points.astype(jnp.float32)[:, None]                   # (N, 1)

    w0, b0, w1, b1 = vfe_params
    C1 = w0.shape[1]
    C2 = w1.shape[1]
    w1a, w1b = w1[:C1], w1[C1:]          # split concat(pointwise, max) weight

    # bigger tiles + tail padding (padded voxels have num_points=0 and are
    # sliced off again, so they never reach the scatter).
    tile_n = min(tile_n, max(8, N))
    n_pad = (-N) % tile_n
    if n_pad:
        vfeats = jnp.pad(vfeats, ((0, n_pad), (0, 0), (0, 0)))
        npts = jnp.pad(npts, ((0, n_pad), (0, 0)))
    Np = N + n_pad

    out = pl.pallas_call(
        _vfe_kernel,
        out_shape=jax.ShapeDtypeStruct((Np, C2), jnp.float32),
        grid_spec=pltpu.PrefetchScalarGridSpec(
            num_scalar_prefetch=0,
            grid=(Np // tile_n,),
            in_specs=[
                pl.BlockSpec((tile_n, 1), lambda i: (i, 0)),
                pl.BlockSpec((tile_n, M, vfeats.shape[-1]), lambda i: (i, 0, 0)),
                pl.BlockSpec(w0.shape, lambda i: (0, 0)),
                pl.BlockSpec(b0.shape, lambda i: (0, 0)),
                pl.BlockSpec(w1a.shape, lambda i: (0, 0)),
                pl.BlockSpec(w1b.shape, lambda i: (0, 0)),
                pl.BlockSpec(b1.shape, lambda i: (0, 0)),
            ],
            out_specs=pl.BlockSpec((tile_n, C2), lambda i: (i, 0)),
        ),
        compiler_params=pltpu.CompilerParams(
            dimension_semantics=("parallel",),
            vmem_limit_bytes=48 * 1024 * 1024),
    )(npts, vfeats, w0, b0, w1a, w1b, b1)
    return out[:N]


# ============== dense 3D conv + BN(affine) + ReLU + mask (Pallas) ============
def _make_conv_kernel(*, KD, KH, KW, sd, D, H, W, Cin, pd, ph, pw, Wp, Mrows,
                      HWflat):
    """One output depth-plane per grid step; taps are plane-wide MXU matmuls."""
    Dp = D + 2 * pd

    def kernel(x_ref, w_ref, b_ref, sel_ref, m_ref, o_ref, xpad_ref):
        d = pl.program_id(1)

        # Stage the (unpadded) input volume once per batch element into a
        # zero-padded, W-flattened VMEM scratch (replaces wrapper jnp.pad).
        @pl.when(d == 0)
        def _stage():
            @pl.loop(0, Dp)
            def _(dz):
                xpad_ref[dz] = jnp.zeros((HWflat, Cin), jnp.bfloat16)

            @pl.loop(0, D)
            def _(dz):
                @pl.loop(0, H)
                def _(hr):
                    xpad_ref[pd + dz,
                             pl.ds((ph + hr) * Wp + pw, W), :] = x_ref[0, dz, hr]

        # Full-resolution accumulation over the flattened (h, w) plane:
        # one (Mrows, Cin) x (Cin, Cout) bf16 matmul per kernel tap.
        Cout = w_ref.shape[-1]
        acc = jnp.zeros((Mrows, Cout), jnp.float32)
        for kd in range(KD):
            d_in = d * sd + kd
            for kh in range(KH):
                for kw in range(KW):
                    slab = xpad_ref[d_in, pl.ds(kh * Wp + kw, Mrows), :]
                    acc = acc + jnp.dot(slab, w_ref[kd, kh, kw],
                                        preferred_element_type=jnp.float32)

        # Stride / valid-column extraction as a tiny constant 0/1 matmul, then
        # fused bias + ReLU + active-voxel mask epilogue and one plane store.
        picked = jnp.dot(sel_ref[...], acc.astype(jnp.bfloat16),
                         preferred_element_type=jnp.float32)   # (Ho*Wo, Cout)
        res = jnp.maximum(picked + b_ref[...], 0.0) * m_ref[0, 0]
        o_ref[0, 0] = res.astype(o_ref.dtype)

    return kernel


def conv3d_block(x, out_mask, w, bias, *, k, s, p):
    """relu(conv3d(x, stride=s, padding=p) + bias) * out_mask.
    x: (B, D, H, W, Cin) bf16; out_mask: (B, Do, Ho, Wo, 1) f32."""
    B, D, H, W, Cin = x.shape
    KD, KH, KW = k
    sd, sh, sw = s
    pd, ph, pw = p
    Cout = w.shape[-1]
    Do = (D + 2 * pd - KD) // sd + 1
    Ho = (H + 2 * ph - KH) // sh + 1
    Wo = (W + 2 * pw - KW) // sw + 1
    Hp, Wp = H + 2 * ph, W + 2 * pw
    H1 = Hp - KH + 1                     # stride-1 output rows
    Mrows = H1 * Wp                      # full-resolution candidate rows / plane
    HWflat = Hp * Wp + (KW - 1)          # flattened padded plane + read slack
    assert out_mask.shape == (B, Do, Ho, Wo, 1)

    # Row-selection matrix: output (ho, wo) <- full-res row ho*sh*Wp + wo*sw.
    tgt = ((jnp.arange(Ho, dtype=jnp.int32)[:, None] * sh) * Wp
           + jnp.arange(Wo, dtype=jnp.int32)[None, :] * sw).reshape(Ho * Wo)
    sel = (tgt[:, None] == jnp.arange(Mrows, dtype=jnp.int32)[None, :]
           ).astype(jnp.bfloat16)

    kernel = _make_conv_kernel(KD=KD, KH=KH, KW=KW, sd=sd, D=D, H=H, W=W,
                               Cin=Cin, pd=pd, ph=ph, pw=pw, Wp=Wp,
                               Mrows=Mrows, HWflat=HWflat)

    flops = 2 * B * Do * (KD * KH * KW * Mrows * Cin * Cout
                          + Ho * Wo * Mrows * Cout)
    bytes_accessed = (int(x.size) * 2 + int(w.size) * 2
                      + B * Do * Ho * Wo * (Cout * 2 + 4)
                      + Ho * Wo * Mrows * 2)

    out = pl.pallas_call(
        kernel,
        out_shape=jax.ShapeDtypeStruct((B, Do, Ho * Wo, Cout), jnp.bfloat16),
        grid_spec=pltpu.PrefetchScalarGridSpec(
            num_scalar_prefetch=0,
            grid=(B, Do),
            in_specs=[
                pl.BlockSpec((1, D, H, W, Cin), lambda b, d: (b, 0, 0, 0, 0)),
                pl.BlockSpec((KD, KH, KW, Cin, Cout),
                             lambda b, d: (0, 0, 0, 0, 0)),
                pl.BlockSpec((1, Cout), lambda b, d: (0, 0)),
                pl.BlockSpec((Ho * Wo, Mrows), lambda b, d: (0, 0)),
                pl.BlockSpec((1, 1, Ho * Wo, 1), lambda b, d: (b, d, 0, 0)),
            ],
            out_specs=pl.BlockSpec((1, 1, Ho * Wo, Cout),
                                   lambda b, d: (b, d, 0, 0)),
            scratch_shapes=[pltpu.VMEM((D + 2 * pd, HWflat, Cin), jnp.bfloat16)],
        ),
        compiler_params=pltpu.CompilerParams(
            dimension_semantics=("parallel", "arbitrary"),
            vmem_limit_bytes=48 * 1024 * 1024),   # fits v7x's 64 MiB VMEM
        cost_estimate=pl.CostEstimate(flops=flops, transcendentals=0,
                                      bytes_accessed=bytes_accessed),
    )(x.astype(jnp.bfloat16), w.astype(jnp.bfloat16), bias.astype(jnp.float32),
      sel, out_mask.reshape(B, Do, Ho * Wo, 1).astype(jnp.float32))
    return out.reshape(B, Do, Ho, Wo, Cout)


def dilate_mask(mask, kernel, stride, padding):
    """Active set of a (non-submanifold) sparse conv: any active input in window."""
    kd, kh, kw = kernel
    pd, ph, pw = padding
    out = lax.reduce_window(
        mask, 0.0, lax.max,
        window_dimensions=(1, kd, kh, kw, 1),
        window_strides=(1,) + tuple(stride) + (1,),
        padding=((0, 0), (pd, pd), (ph, ph), (pw, pw), (0, 0)))
    return (out > 0.5).astype(mask.dtype)


# ===================== SparseLocalDescriptor (middle) ========================
def sparse_local_descriptor(voxel_feats, coors, batch_size, params):
    D, H, W = GRID_ZYX
    C = voxel_feats.shape[-1]
    b, z, y, x = coors[:, 0], coors[:, 1], coors[:, 2], coors[:, 3]

    # glue: scatter voxel features into the dense grid (== SparseConvTensor)
    # TODO(synk): still an XLA scatter; a coords-driven Pallas scatter (scalar-
    #             prefetched coors) could fuse this with conv_input's input DMA.
    dense = jnp.zeros((batch_size, D, H, W, C), jnp.float32)
    dense = dense.at[b, z, y, x].set(voxel_feats)
    mask = jnp.zeros((batch_size, D, H, W, 1), jnp.float32)
    mask = mask.at[b, z, y, x].set(1.0)

    feat = dense.astype(jnp.bfloat16)

    # conv_input: SubMConv3d(k=3, p=1) + BN + ReLU (active set unchanged)
    w, bias = params["conv_input"]
    feat = conv3d_block(feat, mask, w, bias, k=(3, 3, 3), s=(1, 1, 1),
                        p=(1, 1, 1))

    # encoder stages
    for i, blocks in enumerate(ENC_CHANNELS):
        for j in range(len(blocks)):
            w, bias = params[f"enc_{i}_{j}"]
            pad = ENC_PADDINGS[i][j]
            pad = (pad, pad, pad) if isinstance(pad, int) else tuple(pad)
            if i != 0 and j == 0:
                # SparseConv3d downsample, stride 2 in all dims
                stride = (2, 2, 2)
                mask = dilate_mask(mask, (3, 3, 3), stride, pad)
            else:
                # SubMConv3d: same active set
                stride = (1, 1, 1)
            feat = conv3d_block(feat, mask, w, bias, k=(3, 3, 3), s=stride,
                                p=pad)

    # conv_out: SparseConv3d(kernel=(3,1,1), stride=(2,1,1), padding=0)
    w, bias = params["conv_out"]
    mask = dilate_mask(mask, (3, 1, 1), (2, 1, 1), (0, 0, 0))
    feat = conv3d_block(feat, mask, w, bias, k=(3, 1, 1), s=(2, 1, 1),
                        p=(0, 0, 0))

    # to BEV, matching torch: dense() -> (N, C, D, H, W) -> view(N, C*D, H, W)
    feat = feat.astype(jnp.float32)
    B, Do, Ho, Wo, Co = feat.shape
    return jnp.transpose(feat, (0, 4, 1, 2, 3)).reshape(B, Co * Do, Ho, Wo)


def voxel_local_feature_extractor(features, num_points, coors, batch_size,
                                  vfe_params, middle_params):
    vfe_out = hard_vfe(features, num_points, coors, vfe_params)
    return sparse_local_descriptor(vfe_out, coors, int(batch_size),
                                   middle_params)


# ============================ parameter builders =============================
def _bn_scale_shift(key, cout):
    kg, kb, km, kv = jax.random.split(key, 4)
    gamma = 1.0 + 0.1 * jax.random.normal(kg, (cout,), jnp.float32)
    beta = 0.1 * jax.random.normal(kb, (cout,), jnp.float32)
    rmean = 0.05 * jax.random.normal(km, (cout,), jnp.float32)
    rvar = 1.0 + 0.2 * jax.random.uniform(kv, (cout,), jnp.float32)
    # TODO(synk): inference-mode BatchNorm (running stats); train-mode batch
    #             statistics are not reproduced.
    scale = gamma / jnp.sqrt(rvar + BN_EPS)
    shift = beta - rmean * scale
    return scale, shift


def make_linear_bn(key, cin, cout):
    kw, kbn = jax.random.split(key)
    w = jax.random.normal(kw, (cin, cout), jnp.float32) / jnp.sqrt(float(cin))
    scale, shift = _bn_scale_shift(kbn, cout)
    return w * scale[None, :], shift[None, :]


def make_conv_bn(key, cin, cout, kernel=(3, 3, 3)):
    kw, kbn = jax.random.split(key)
    kd, kh, kwid = kernel
    fan_in = float(cin * kd * kh * kwid)
    w = jax.random.normal(kw, (kd, kh, kwid, cin, cout),
                          jnp.float32) / jnp.sqrt(fan_in)
    scale, shift = _bn_scale_shift(kbn, cout)
    return w * scale[None, None, None, None, :], shift[None, :]


def build_params(key):
    c0 = 3 + 3  # xyz + voxel-center offsets (with_voxel_center=True)
    c1, c2 = VFE_FEAT_CHANNELS
    w0, b0 = make_linear_bn(jax.random.fold_in(key, 0), c0, c1)
    w1, b1 = make_linear_bn(jax.random.fold_in(key, 1), 2 * c1, c2)
    vfe_params = (w0, b0, w1, b1)

    mid = {}
    mid["conv_input"] = make_conv_bn(jax.random.fold_in(key, 100),
                                     MIDDLE_IN, MIDDLE_BASE, (3, 3, 3))
    cin = MIDDLE_BASE
    idx = 101
    for i, blocks in enumerate(ENC_CHANNELS):
        for j, cout in enumerate(blocks):
            mid[f"enc_{i}_{j}"] = make_conv_bn(jax.random.fold_in(key, idx),
                                               cin, cout, (3, 3, 3))
            cin = cout
            idx += 1
    mid["conv_out"] = make_conv_bn(jax.random.fold_in(key, 200),
                                   cin, MIDDLE_OUT, (3, 1, 1))
    return vfe_params, mid


# =================================== main ====================================
if __name__ == "__main__":
    key = jax.random.PRNGKey(0)
    D, H, W = GRID_ZYX
    B, N, M = 2, 512, 8

    k_coor, k_np, k_pts, k_par = jax.random.split(key, 4)

    # unique voxel coordinates across the mini-batch
    total = B * D * H * W
    flat = jax.random.choice(k_coor, total, shape=(N,), replace=False)
    b_idx = flat // (D * H * W)
    rem = flat % (D * H * W)
    z_idx = rem // (H * W)
    rem2 = rem % (H * W)
    y_idx = rem2 // W
    x_idx = rem2 % W
    coors = jnp.stack([b_idx, z_idx, y_idx, x_idx], axis=1).astype(jnp.int32)

    num_points = jax.random.randint(k_np, (N,), 1, M + 1, dtype=jnp.int32)

    # synthetic points: voxel center + jitter inside the voxel
    vx, vy, vz = VOXEL_SIZE
    centers = jnp.stack(
        [coors[:, 3].astype(jnp.float32) * vx + vx / 2 + PCD_RANGE[0],
         coors[:, 2].astype(jnp.float32) * vy + vy / 2 + PCD_RANGE[1],
         coors[:, 1].astype(jnp.float32) * vz + vz / 2 + PCD_RANGE[2]], axis=-1)
    jitter = (jax.random.uniform(k_pts, (N, M, 3)) - 0.5) * jnp.array([vx, vy, vz])
    features = centers[:, None, :] + jitter                     # (N, M, 3)

    vfe_params, middle_params = build_params(k_par)

    out = voxel_local_feature_extractor(features, num_points, coors, B,
                                        vfe_params, middle_params)
    out = jax.block_until_ready(out)
    assert out.ndim == 4 and out.shape[0] == B
    print("KERNEL_OK")
</pallas_src>

<mosaic_0001>
module attributes {stable_mosaic.version = 11 : i64} {
  func.func @_vfe_kernel(%arg0: i32, %arg1: memref<256x1xf32, #tpu.memory_space<vmem>>, %arg2: memref<256x8x6xf32, #tpu.memory_space<vmem>>, %arg3: memref<6x32xf32, #tpu.memory_space<vmem>>, %arg4: memref<1x32xf32, #tpu.memory_space<vmem>>, %arg5: memref<32x64xf32, #tpu.memory_space<vmem>>, %arg6: memref<32x64xf32, #tpu.memory_space<vmem>>, %arg7: memref<1x64xf32, #tpu.memory_space<vmem>>, %arg8: memref<256x64xf32, #tpu.memory_space<vmem>>) attributes {dimension_semantics = [#tpu.dimension_semantics<parallel>], iteration_bounds = array<i64: 2>, scalar_prefetch = 0 : i64, scratch_operands = 0 : i64, tpu.core_type = #tpu.core_type<tc>, window_params = [{transform_indices = @transform_0, window_bounds = array<i64: 256, 1>}, {transform_indices = @transform_1, window_bounds = array<i64: 256, 8, 6>}, {pipeline_mode = #tpu.pipeline_mode<synchronous>, transform_indices = @transform_2, window_bounds = array<i64: 6, 32>}, {pipeline_mode = #tpu.pipeline_mode<synchronous>, transform_indices = @transform_3, window_bounds = array<i64: 1, 32>}, {pipeline_mode = #tpu.pipeline_mode<synchronous>, transform_indices = @transform_4, window_bounds = array<i64: 32, 64>}, {pipeline_mode = #tpu.pipeline_mode<synchronous>, transform_indices = @transform_5, window_bounds = array<i64: 32, 64>}, {pipeline_mode = #tpu.pipeline_mode<synchronous>, transform_indices = @transform_6, window_bounds = array<i64: 1, 64>}, {transform_indices = @transform_7, window_bounds = array<i64: 256, 64>}]} {
    %c0 = arith.constant 0 : index
    %c0_0 = arith.constant 0 : index
    %0 = vector.load %arg1[%c0, %c0_0] : memref<256x1xf32, #tpu.memory_space<vmem>>, vector<256x1xf32>
    %1 = tpu.iota {dimensions = array<i32: 1>} : vector<256x8xi32>
    %2 = arith.sitofp %1 : vector<256x8xi32> to vector<256x8xf32>
    %3 = vector.broadcast %0 : vector<256x1xf32> to vector<256x8xf32>
    %4 = arith.cmpf olt, %2, %3 : vector<256x8xf32>
    %5 = arith.extui %4 : vector<256x8xi1> to vector<256x8xi32>
    %6 = arith.sitofp %5 : vector<256x8xi32> to vector<256x8xf32>
    %c0_1 = arith.constant 0 : index
    %c0_2 = arith.constant 0 : index
    %c0_3 = arith.constant 0 : index
    %7 = vector.load %arg2[%c0_1, %c0_2, %c0_3] : memref<256x8x6xf32, #tpu.memory_space<vmem>>, vector<256x8x6xf32>
    %8 = vector.shape_cast %6 : vector<256x8xf32> to vector<256x8x1xf32>
    %9 = vector.broadcast %8 : vector<256x8x1xf32> to vector<256x8x6xf32>
    %10 = arith.mulf %7, %9 : vector<256x8x6xf32>
    %11 = vector.shape_cast %10 : vector<256x8x6xf32> to vector<2048x6xf32>
    %c0_4 = arith.constant 0 : index
    %c0_5 = arith.constant 0 : index
    %12 = vector.load %arg3[%c0_4, %c0_5] : memref<6x32xf32, #tpu.memory_space<vmem>>, vector<6x32xf32>
    %cst = arith.constant dense<0.000000e+00> : vector<2048x32xf32>
    %13 = tpu.matmul %11, %12, %cst {dimension_numbers = #tpu.dot_dimension_numbers<[1], [0], [0], [1], [0, 0, 1, 1], [], []>} : vector<2048x6xf32>, vector<6x32xf32>, vector<2048x32xf32> -> vector<2048x32xf32>
    %c0_6 = arith.constant 0 : index
    %c0_7 = arith.constant 0 : index
    %14 = vector.load %arg4[%c0_6, %c0_7] : memref<1x32xf32, #tpu.memory_space<vmem>>, vector<1x32xf32>
    %15 = vector.broadcast %14 : vector<1x32xf32> to vector<2048x32xf32>
    %16 = arith.addf %13, %15 : vector<2048x32xf32>
    %cst_8 = arith.constant 0.000000e+00 : f32
    %17 = vector.broadcast %cst_8 : f32 to vector<2048x32xf32>
    %18 = arith.maximumf %16, %17 : vector<2048x32xf32>
    %19 = vector.shape_cast %18 : vector<2048x32xf32> to vector<256x8x32xf32>
    %cst_9 = arith.constant dense<0xFF800000> : vector<256x32xf32>
    %20 = vector.multi_reduction <maximumf>, %19, %cst_9 [1] : vector<256x8x32xf32> to vector<256x32xf32>
    %c0_10 = arith.constant 0 : index
    %c0_11 = arith.constant 0 : index
    %21 = vector.load %arg5[%c0_10, %c0_11] : memref<32x64xf32, #tpu.memory_space<vmem>>, vector<32x64xf32>
    %cst_12 = arith.constant dense<0.000000e+00> : vector<2048x64xf32>
    %22 = tpu.matmul %18, %21, %cst_12 {dimension_numbers = #tpu.dot_dimension_numbers<[1], [0], [0], [1], [0, 0, 1, 1], [], []>} : vector<2048x32xf32>, vector<32x64xf32>, vector<2048x64xf32> -> vector<2048x64xf32>
    %23 = vector.shape_cast %22 : vector<2048x64xf32> to vector<256x8x64xf32>
    %cst_13 = arith.constant dense<0xFF800000> : vector<256x64xf32>
    %24 = vector.multi_reduction <maximumf>, %23, %cst_13 [1] : vector<256x8x64xf32> to vector<256x64xf32>
    %c0_14 = arith.constant 0 : index
    %c0_15 = arith.constant 0 : index
    %25 = vector.load %arg6[%c0_14, %c0_15] : memref<32x64xf32, #tpu.memory_space<vmem>>, vector<32x64xf32>
    %cst_16 = arith.constant dense<0.000000e+00> : vector<256x64xf32>
    %26 = tpu.matmul %20, %25, %cst_16 {dimension_numbers = #tpu.dot_dimension_numbers<[1], [0], [0], [1], [0, 0, 1, 1], [], []>} : vector<256x32xf32>, vector<32x64xf32>, vector<256x64xf32> -> vector<256x64xf32>
    %27 = arith.addf %24, %26 : vector<256x64xf32>
    %c0_17 = arith.constant 0 : index
    %c0_18 = arith.constant 0 : index
    %28 = vector.load %arg7[%c0_17, %c0_18] : memref<1x64xf32, #tpu.memory_space<vmem>>, vector<1x64xf32>
    %29 = vector.broadcast %28 : vector<1x64xf32> to vector<256x64xf32>
    %30 = arith.addf %27, %29 : vector<256x64xf32>
    %cst_19 = arith.constant 0.000000e+00 : f32
    %31 = vector.broadcast %cst_19 : f32 to vector<256x64xf32>
    %32 = arith.maximumf %30, %31 : vector<256x64xf32>
    %c0_20 = arith.constant 0 : index
    %c0_21 = arith.constant 0 : index
    %33 = vector.load %arg8[%c0_20, %c0_21] : memref<256x64xf32, #tpu.memory_space<vmem>>, vector<256x64xf32>
    tpu.vector_store %arg8[%c0_20, %c0_21], %32 {strides = array<i32>} : memref<256x64xf32, #tpu.memory_space<vmem>>, vector<256x64xf32>,
    return
  }
  func.func @transform_0(%arg0: i32) -> (i32, i32) {
    %c0_i32 = arith.constant 0 : i32
    %c0_i32_0 = arith.constant 0 : i32
    return %arg0, %c0_i32 : i32, i32
  }
  func.func @transform_1(%arg0: i32) -> (i32, i32, i32) {
    %c0_i32 = arith.constant 0 : i32
    %c0_i32_0 = arith.constant 0 : i32
    %c0_i32_1 = arith.constant 0 : i32
    return %arg0, %c0_i32, %c0_i32_0 : i32, i32, i32
  }
  func.func @transform_2(%arg0: i32) -> (i32, i32) {
    %c0_i32 = arith.constant 0 : i32
    %c0_i32_0 = arith.constant 0 : i32
    %c0_i32_1 = arith.constant 0 : i32
    return %c0_i32, %c0_i32_0 : i32, i32
  }
  func.func @transform_3(%arg0: i32) -> (i32, i32) {
    %c0_i32 = arith.constant 0 : i32
    %c0_i32_0 = arith.constant 0 : i32
    %c0_i32_1 = arith.constant 0 : i32
    return %c0_i32, %c0_i32_0 : i32, i32
  }
  func.func @transform_4(%arg0: i32) -> (i32, i32) {
    %c0_i32 = arith.constant 0 : i32
    %c0_i32_0 = arith.constant 0 : i32
    %c0_i32_1 = arith.constant 0 : i32
    return %c0_i32, %c0_i32_0 : i32, i32
  }
  func.func @transform_5(%arg0: i32) -> (i32, i32) {
    %c0_i32 = arith.constant 0 : i32
    %c0_i32_0 = arith.constant 0 : i32
    %c0_i32_1 = arith.constant 0 : i32
    return %c0_i32, %c0_i32_0 : i32, i32
  }
  func.func @transform_6(%arg0: i32) -> (i32, i32) {
    %c0_i32 = arith.constant 0 : i32
    %c0_i32_0 = arith.constant 0 : i32
    %c0_i32_1 = arith.constant 0 : i32
    return %c0_i32, %c0_i32_0 : i32, i32
  }
  func.func @transform_7(%arg0: i32) -> (i32, i32) {
    %c0_i32 = arith.constant 0 : i32
    %c0_i32_0 = arith.constant 0 : i32
    return %arg0, %c0_i32 : i32, i32
  }
}

</mosaic_0001>

<llo_original>
// kernel: tpu_custom_call.1
$region0: #{tpu_custom_call.1}
  #allocation0 [shape = 'u32[]', space=smem, size = 0x4, offset = 0x4, fixed_abs, tag = 'smem constant byte address 0x4 - core index']
  #allocation1 [shape = 'u32[144,128]{1,0:T(1,128)}', space=vmem, size = 0x12000, scoped, tag = 'internal scratch']
  %s0 = inlined_call_operand.vmem [shape: f32[512,1], index: 0, kind: input, shape index: {}]
  %s1 = inlined_call_operand.vmem [shape: f32[512,8,6], index: 1, kind: input, shape index: {}]
  %s2 = inlined_call_operand.vmem [shape: f32[6,32], index: 2, kind: input, shape index: {}]
  %s3 = inlined_call_operand.vmem [shape: f32[1,32], index: 3, kind: input, shape index: {}]
  %s4 = inlined_call_operand.vmem [shape: f32[32,64], index: 4, kind: input, shape index: {}]
  %s5 = inlined_call_operand.vmem [shape: f32[32,64], index: 5, kind: input, shape index: {}]
  %s6 = inlined_call_operand.vmem [shape: f32[1,64], index: 6, kind: input, shape index: {}]
  %s7 = inlined_call_operand.vmem [shape: f32[512,64], index: 7, kind: output, shape index: {}]
  %s8 = sld [smem:[#allocation0]]
  $region61: #{tpu_custom_call.1} parent=0
    _
  %s10 = ssub.s32 1, %s8
  %s11 = scalar_select 0, %s10, %s8
  loop: start=0, step=1, limit=4
  $region2: #{tpu_custom_call.1} parent=0 // loop_pre_header
    _
  $region3: #{tpu_custom_call.1} parent=0 // loop_header
    %s13 = sphi 0, %s17
    %p14 = scmp.ge.s32.totalorder %s13, 4
    %s23 = sphi 0, %s25
    %s26 = sphi 0, %s23
    %s27 = sphi 0, %s26
    %s43 = sphi 0, %s27
    %s49 = sphi 0, %s51
    %s52 = sphi 0, %s49
    %s53 = sphi 0, %s52
    %s69 = sphi 0, %s53
    %s73 = sphi 0, %s73
    %s75 = sphi 0, %s73
    %s76 = sphi 0, %s75
    %s90 = sphi 0, %s76
    %s94 = sphi 0, %s94
    %s96 = sphi 0, %s94
    %s97 = sphi 0, %s96
    %s111 = sphi 0, %s97
    %s115 = sphi 0, %s115
    %s117 = sphi 0, %s115
    %s118 = sphi 0, %s117
    %s132 = sphi 0, %s118
    %s136 = sphi 0, %s136
    %s138 = sphi 0, %s136
    %s139 = sphi 0, %s138
    %s153 = sphi 0, %s139
    %s157 = sphi 0, %s157
    %s159 = sphi 0, %s157
    %s160 = sphi 0, %s159
    %s174 = sphi 0, %s160
    %s180 = sphi 0, %s182
    %s183 = sphi 0, %s180
    %s184 = sphi 0, %s183
    %s200 = sphi 0, %s184
  $region4: #{tpu_custom_call.1} parent=0 // loop_header_branch
    %16 = sbr.rel (%p14) target = $region8
  $region5: #{tpu_custom_call.1} parent=0 // loop_body
    %s18 = ssub.s32 %s13, 1
    %s19 = ssub.s32 %s13, 2
    %s20 = sadd.s32 %s13, 1
    %s21 = ssub.s32 %s13, %s20
    %p22 = scmp.eq.s32.totalorder %s21, 0
    %s24 = sadd.s32 %s23, 1
    %s25 = scalar_select %p22, %s23, %s24
    %p28 = pneg %p22
    %p29 = scmp.eq.s32.totalorder %s13, 1
    %p30 = por %p28, %p29
    %p31 = scmp.ne.s32.totalorder %s23, %s26
    %p32 = scmp.eq.s32.totalorder %s13, 0
    %p33 = por %p31, %p32
    %p34 = scmp.ne.s32.totalorder %s23, %s26
    %p35 = scmp.eq.s32.totalorder %s18, 1
    %p36 = por %p34, %p35
    %p37 = scmp.ne.s32.totalorder %s26, %s27
    %p38 = scmp.eq.s32.totalorder %s18, 0
    %p39 = por %p37, %p38
    %p40 = scmp.ne.s32.totalorder %s26, %s27
    %p41 = scmp.eq.s32.totalorder %s19, 1
    %p42 = por %p40, %p41
    %p44 = scmp.ne.s32.totalorder %s27, %s43
    %p45 = scmp.eq.s32.totalorder %s19, 0
    %p46 = por %p44, %p45
    %s47 = ssub.s32 %s13, %s20
    %p48 = scmp.eq.s32.totalorder %s47, 0
    %s50 = sadd.s32 %s49, 1
    %s51 = scalar_select %p48, %s49, %s50
    %p54 = pneg %p48
    %p55 = scmp.eq.s32.totalorder %s13, 1
    %p56 = por %p54, %p55
    %p57 = scmp.ne.s32.totalorder %s49, %s52
    %p58 = scmp.eq.s32.totalorder %s13, 0
    %p59 = por %p57, %p58
    %p60 = scmp.ne.s32.totalorder %s49, %s52
    %p61 = scmp.eq.s32.totalorder %s18, 1
    %p62 = por %p60, %p61
    %p63 = scmp.ne.s32.totalorder %s52, %s53
    %p64 = scmp.eq.s32.totalorder %s18, 0
    %p65 = por %p63, %p64
    %p66 = scmp.ne.s32.totalorder %s52, %s53
    %p67 = scmp.eq.s32.totalorder %s19, 1
    %p68 = por %p66, %p67
    %p70 = scmp.ne.s32.totalorder %s53, %s69
    %p71 = scmp.eq.s32.totalorder %s19, 0
    %p72 = por %p70, %p71
    %s74 = sadd.s32 %s73, 1
    %p77 = scmp.eq.s32.totalorder %s13, 1
    %p78 = scmp.ne.s32.totalorder %s73, %s75
    %p79 = scmp.eq.s32.totalorder %s13, 0
    %p80 = por %p78, %p79
    %p81 = scmp.ne.s32.totalorder %s73, %s75
    %p82 = scmp.eq.s32.totalorder %s18, 1
    %p83 = por %p81, %p82
    %p84 = scmp.ne.s32.totalorder %s75, %s76
    %p85 = scmp.eq.s32.totalorder %s18, 0
    %p86 = por %p84, %p85
    %p87 = scmp.ne.s32.totalorder %s75, %s76
    %p88 = scmp.eq.s32.totalorder %s19, 1
    %p89 = por %p87, %p88
    %p91 = scmp.ne.s32.totalorder %s76, %s90
    %p92 = scmp.eq.s32.totalorder %s19, 0
    %p93 = por %p91, %p92
    %s95 = sadd.s32 %s94, 1
    %p98 = scmp.eq.s32.totalorder %s13, 1
    %p99 = scmp.ne.s32.totalorder %s94, %s96
    %p100 = scmp.eq.s32.totalorder %s13, 0
    %p101 = por %p99, %p100
    %p102 = scmp.ne.s32.totalorder %s94, %s96
    %p103 = scmp.eq.s32.totalorder %s18, 1
    %p104 = por %p102, %p103
    %p105 = scmp.ne.s32.totalorder %s96, %s97
    %p106 = scmp.eq.s32.totalorder %s18, 0
    %p107 = por %p105, %p106
    %p108 = scmp.ne.s32.totalorder %s96, %s97
    %p109 = scmp.eq.s32.totalorder %s19, 1
    %p110 = por %p108, %p109
    %p112 = scmp.ne.s32.totalorder %s97, %s111
    %p113 = scmp.eq.s32.totalorder %s19, 0
    %p114 = por %p112, %p113
    %s116 = sadd.s32 %s115, 1
    %p119 = scmp.eq.s32.totalorder %s13, 1
    %p120 = scmp.ne.s32.totalorder %s115, %s117
    %p121 = scmp.eq.s32.totalorder %s13, 0
    %p122 = por %p120, %p121
    %p123 = scmp.ne.s32.totalorder %s115, %s117
    %p124 = scmp.eq.s32.totalorder %s18, 1
    %p125 = por %p123, %p124
    %p126 = scmp.ne.s32.totalorder %s117, %s118
    %p127 = scmp.eq.s32.totalorder %s18, 0
    %p128 = por %p126, %p127
    %p129 = scmp.ne.s32.totalorder %s117, %s118
    %p130 = scmp.eq.s32.totalorder %s19, 1
    %p131 = por %p129, %p130
    %p133 = scmp.ne.s32.totalorder %s118, %s132
    %p134 = scmp.eq.s32.totalorder %s19, 0
    %p135 = por %p133, %p134
    %s137 = sadd.s32 %s136, 1
    %p140 = scmp.eq.s32.totalorder %s13, 1
    %p141 = scmp.ne.s32.totalorder %s136, %s138
    %p142 = scmp.eq.s32.totalorder %s13, 0
    %p143 = por %p141, %p142
    %p144 = scmp.ne.s32.totalorder %s136, %s138
    %p145 = scmp.eq.s32.totalorder %s18, 1
    %p146 = por %p144, %p145
    %p147 = scmp.ne.s32.totalorder %s138, %s139
    %p148 = scmp.eq.s32.totalorder %s18, 0
    %p149 = por %p147, %p148
    %p150 = scmp.ne.s32.totalorder %s138, %s139
    %p151 = scmp.eq.s32.totalorder %s19, 1
    %p152 = por %p150, %p151
    %p154 = scmp.ne.s32.totalorder %s139, %s153
    %p155 = scmp.eq.s32.totalorder %s19, 0
    %p156 = por %p154, %p155
    %s158 = sadd.s32 %s157, 1
    %p161 = scmp.eq.s32.totalorder %s13, 1
    %p162 = scmp.ne.s32.totalorder %s157, %s159
    %p163 = scmp.eq.s32.totalorder %s13, 0
    %p164 = por %p162, %p163
    %p165 = scmp.ne.s32.totalorder %s157, %s159
    %p166 = scmp.eq.s32.totalorder %s18, 1
    %p167 = por %p165, %p166
    %p168 = scmp.ne.s32.totalorder %s159, %s160
    %p169 = scmp.eq.s32.totalorder %s18, 0
    %p170 = por %p168, %p169
    %p171 = scmp.ne.s32.totalorder %s159, %s160
    %p172 = scmp.eq.s32.totalorder %s19, 1
    %p173 = por %p171, %p172
    %p175 = scmp.ne.s32.totalorder %s160, %s174
    %p176 = scmp.eq.s32.totalorder %s19, 0
    %p177 = por %p175, %p176
    %s178 = ssub.s32 %s13, %s20
    %p179 = scmp.eq.s32.totalorder %s178, 0
    %s181 = sadd.s32 %s180, 1
    %s182 = scalar_select %p179, %s180, %s181
    %p185 = pneg %p179
    %p186 = scmp.eq.s32.totalorder %s13, 1
    %p187 = por %p185, %p186
    %p188 = scmp.ne.s32.totalorder %s180, %s183
    %p189 = scmp.eq.s32.totalorder %s13, 0
    %p190 = por %p188, %p189
    %p191 = scmp.ne.s32.totalorder %s180, %s183
    %p192 = scmp.eq.s32.totalorder %s18, 1
    %p193 = por %p191, %p192
    %p194 = scmp.ne.s32.totalorder %s183, %s184
    %p195 = scmp.eq.s32.totalorder %s18, 0
    %p196 = por %p194, %p195
    %p197 = scmp.ne.s32.totalorder %s183, %s184
    %p198 = scmp.eq.s32.totalorder %s19, 1
    %p199 = por %p197, %p198
    %p201 = scmp.ne.s32.totalorder %s184, %s200
    %p202 = scmp.eq.s32.totalorder %s19, 0
    %p203 = por %p201, %p202
    %p204 = scmp.le.s32.totalorder 1, %s13
    %p205 = scmp.lt.s32.totalorder %s13, 3
    %p206 = pnand %p204, %p205
    %p207 = pneg %p206
    // Predicated region
    $region9: #{tpu_custom_call.1} parent=5 // pred_check
      _
    $region10: #{tpu_custom_call.1} parent=5 // pred_check_branch
      %209 = sbr.rel (%p206) target = $region12
    $region11: #{tpu_custom_call.1} parent=5 // pred_region
      %s210 = ssub.s32 %s13, 1
      // Predicated region
      $region13: #{tpu_custom_call.1} parent=11 // pred_check
        %p211 = pneg %p86
      $region14: #{tpu_custom_call.1} parent=11 // pred_check_branch
        %213 = sbr.rel (%p211) target = $region16
      $region15: #{tpu_custom_call.1} parent=11 // pred_region
        _
      $region16: #{tpu_custom_call.1} parent=11 // pred_fallthru
        _
      // Predicated region
      $region17: #{tpu_custom_call.1} parent=11 // pred_check
        %p214 = pneg %p107
      $region18: #{tpu_custom_call.1} parent=11 // pred_check_branch
        %216 = sbr.rel (%p214) target = $region20
      $region19: #{tpu_custom_call.1} parent=11 // pred_region
        _
      $region20: #{tpu_custom_call.1} parent=11 // pred_fallthru
        _
      // Predicated region
      $region21: #{tpu_custom_call.1} parent=11 // pred_check
        %p217 = pneg %p128
      $region22: #{tpu_custom_call.1} parent=11 // pred_check_branch
        %219 = sbr.rel (%p217) target = $region24
      $region23: #{tpu_custom_call.1} parent=11 // pred_region
        _
      $region24: #{tpu_custom_call.1} parent=11 // pred_fallthru
        _
      // Predicated region
      $region25: #{tpu_custom_call.1} parent=11 // pred_check
        %p220 = pneg %p149
      $region26: #{tpu_custom_call.1} parent=11 // pred_check_branch
        %222 = sbr.rel (%p220) target = $region28
      $region27: #{tpu_custom_call.1} parent=11 // pred_region
        _
      $region28: #{tpu_custom_call.1} parent=11 // pred_fallthru
        _
      // Predicated region
      $region29: #{tpu_custom_call.1} parent=11 // pred_check
        %p223 = pneg %p170
      $region30: #{tpu_custom_call.1} parent=11 // pred_check_branch
        %225 = sbr.rel (%p223) target = $region32
      $region31: #{tpu_custom_call.1} parent=11 // pred_region
        _
      $region32: #{tpu_custom_call.1} parent=11 // pred_fallthru
        _
    $region12: #{tpu_custom_call.1} parent=5 // pred_fallthru
      _
    %p226 = scmp.lt.s32.totalorder %s13, 2
    // Predicated region
    $region33: #{tpu_custom_call.1} parent=5 // pred_check
      %p227 = pneg %p226
    $region34: #{tpu_custom_call.1} parent=5 // pred_check_branch
      %229 = sbr.rel (%p227) target = $region36
    $region35: #{tpu_custom_call.1} parent=5 // pred_region
      // Predicated region
      $region37: #{tpu_custom_call.1} parent=35 // pred_check
        %p230 = pneg %p33
      $region38: #{tpu_custom_call.1} parent=35 // pred_check_branch
        %232 = sbr.rel (%p230) target = $region40
      $region39: #{tpu_custom_call.1} parent=35 // pred_region
        %s233 = smul.u32 32, %s13
        %p234 = scmp.lt.s32.totalorder %s233, 63
        %s235 = scalar_select %p234, %s233, 63
        %s236 = smul.addr %s235, 8
        %s237 = scalar_lea.vmem %s0, %s236
        %s238 = smul.u32 32, %s13
      $region40: #{tpu_custom_call.1} parent=35 // pred_fallthru
        _
      // Predicated region
      $region41: #{tpu_custom_call.1} parent=35 // pred_check
        %p239 = pneg %p59
      $region42: #{tpu_custom_call.1} parent=35 // pred_check_branch
        %241 = sbr.rel (%p239) target = $region44
      $region43: #{tpu_custom_call.1} parent=35 // pred_region
        %s242 = smul.u32 256, %s13
        %p243 = scmp.lt.s32.totalorder %s242, 511
        %s244 = scalar_select %p243, %s242, 511
        %s245 = smul.addr %s244, 8
        %s246 = scalar_lea.vmem %s1, %s245
        %s247 = smul.u32 256, %s13
      $region44: #{tpu_custom_call.1} parent=35 // pred_fallthru
        _
    $region36: #{tpu_custom_call.1} parent=5 // pred_fallthru
      _
    %p248 = scmp.le.s32.totalorder 1, %s13
    %p249 = scmp.lt.s32.totalorder %s13, 3
    %p250 = pnand %p248, %p249
    %p251 = pneg %p250
    // Predicated region
    $region45: #{tpu_custom_call.1} parent=5 // pred_check
      _
    $region46: #{tpu_custom_call.1} parent=5 // pred_check_branch
      %253 = sbr.rel (%p250) target = $region48
    $region47: #{tpu_custom_call.1} parent=5 // pred_region
      %s254 = ssub.s32 %s13, 1
      %s255 = smul.u32 32, %s18
      %p256 = scmp.lt.s32.totalorder %s255, 63
      %s257 = scalar_select %p256, %s255, 63
      %s258 = smul.addr %s257, 8
      %s259 = scalar_lea.vmem %s0, %s258
      %p260 = pneg %p39
      %p261 = pneg %p36
      %s262 = smul.u32 256, %s18
      %p263 = scmp.lt.s32.totalorder %s262, 511
      %s264 = scalar_select %p263, %s262, 511
      %s265 = smul.addr %s264, 8
      %s266 = scalar_lea.vmem %s1, %s265
      %p267 = pneg %p65
      %p268 = pneg %p62
      %p269 = pneg %p86
      %p270 = pneg %p83
      %p271 = pneg %p107
      %p272 = pneg %p104
      %p273 = pneg %p128
      %p274 = pneg %p125
      %p275 = pneg %p149
      %p276 = pneg %p146
      %p277 = pneg %p170
      %p278 = pneg %p167
      %p279 = pneg %p196
      %p280 = pneg %p193
      %s281 = smul.u32 32, %s18
      %p282 = scmp.lt.s32.totalorder %s281, 63
      %s283 = scalar_select %p282, %s281, 63
      %s284 = smul.addr %s283, 8
      %s285 = scalar_lea.vmem %s7, %s284
      %s286 = smul.u32 32, %s18
      %p287 = scmp.lt.s32.totalorder %s286, 63
      %s288 = scalar_select %p287, %s286, 63
      %s289 = smul.addr %s288, 8
      %s290 = scalar_lea.vmem %s0, %s289
      %s291 = smul.u32 32, %s18
      %s292 = smul.u32 256, %s18
      %p293 = scmp.lt.s32.totalorder %s292, 511
      %s294 = scalar_select %p293, %s292, 511
      %s295 = smul.addr %s294, 8
      %s296 = scalar_lea.vmem %s1, %s295
      %s297 = smul.u32 256, %s18
      %s298 = smul.u32 32, %s18
      %p299 = scmp.lt.s32.totalorder %s298, 63
      %s300 = scalar_select %p299, %s298, 63
      %s301 = smul.addr %s300, 8
      %s302 = scalar_lea.vmem %s7, %s301
      %s303 = smul.u32 32, %s18
      %v304 = vld [vmem:[%s290] sm:$0xff]
      %v305 = vld [vmem:[%s290 + $0x8] sm:$0xff]
      %v306 = vld [vmem:[%s290 + $0x10] sm:$0xff]
      %v307 = vld [vmem:[%s290 + $0x18] sm:$0xff]
      %v308 = vld [vmem:[%s290 + $0x20] sm:$0xff]
      %v309 = vld [vmem:[%s290 + $0x28] sm:$0xff]
      %v310 = vld [vmem:[%s290 + $0x30] sm:$0xff]
      %v311 = vld [vmem:[%s290 + $0x38] sm:$0xff]
      %v312 = vld [vmem:[%s290 + $0x40] sm:$0xff]
      %v313 = vld [vmem:[%s290 + $0x48] sm:$0xff]
      %v314 = vld [vmem:[%s290 + $0x50] sm:$0xff]
      %v315 = vld [vmem:[%s290 + $0x58] sm:$0xff]
      %v316 = vld [vmem:[%s290 + $0x60] sm:$0xff]
      %v317 = vld [vmem:[%s290 + $0x68] sm:$0xff]
      %v318 = vld [vmem:[%s290 + $0x70] sm:$0xff]
      %v319 = vld [vmem:[%s290 + $0x78] sm:$0xff]
      %v320 = vld [vmem:[%s290 + $0x80] sm:$0xff]
      %v321 = vld [vmem:[%s290 + $0x88] sm:$0xff]
      %v322 = vld [vmem:[%s290 + $0x90] sm:$0xff]
      %v323 = vld [vmem:[%s290 + $0x98] sm:$0xff]
      %v324 = vld [vmem:[%s290 + $0xa0] sm:$0xff]
      %v325 = vld [vmem:[%s290 + $0xa8] sm:$0xff]
      %v326 = vld [vmem:[%s290 + $0xb0] sm:$0xff]
      %v327 = vld [vmem:[%s290 + $0xb8] sm:$0xff]
      %v328 = vld [vmem:[%s290 + $0xc0] sm:$0xff]
      %v329 = vld [vmem:[%s290 + $0xc8] sm:$0xff]
      %v330 = vld [vmem:[%s290 + $0xd0] sm:$0xff]
      %v331 = vld [vmem:[%s290 + $0xd8] sm:$0xff]
      %v332 = vld [vmem:[%s290 + $0xe0] sm:$0xff]
      %v333 = vld [vmem:[%s290 + $0xe8] sm:$0xff]
      %v334 = vld [vmem:[%s290 + $0xf0] sm:$0xff]
      %v335 = vld [vmem:[%s290 + $0xf8] sm:$0xff]
      %v336 = vlaneseq
      %v337 = vand.u32 %v336, 127
      %v338 = vcvt.s32.f32 %v337
      %340 = vset.pattern.permute.xlu0 0
      %341 = vperm.xlu0 %340, %v304
      %v342 = vpop.permute.xlu0 %341
      %345 = vset.pattern.permute.xlu0 0
      %346 = vperm.xlu0 %345, %v305
      %v347 = vpop.permute.xlu0 %346
      %350 = vset.pattern.permute.xlu0 0
      %351 = vperm.xlu0 %350, %v306
      %v352 = vpop.permute.xlu0 %351
      %355 = vset.pattern.permute.xlu0 0
      %356 = vperm.xlu0 %355, %v307
      %v357 = vpop.permute.xlu0 %356
      %360 = vset.pattern.permute.xlu0 0
      %361 = vperm.xlu0 %360, %v308
      %v362 = vpop.permute.xlu0 %361
      %365 = vset.pattern.permute.xlu0 0
      %366 = vperm.xlu0 %365, %v309
      %v367 = vpop.permute.xlu0 %366
      %370 = vset.pattern.permute.xlu0 0
      %371 = vperm.xlu0 %370, %v310
      %v372 = vpop.permute.xlu0 %371
      %375 = vset.pattern.permute.xlu0 0
      %376 = vperm.xlu0 %375, %v311
      %v377 = vpop.permute.xlu0 %376
      %380 = vset.pattern.permute.xlu0 0
      %381 = vperm.xlu0 %380, %v312
      %v382 = vpop.permute.xlu0 %381
      %385 = vset.pattern.permute.xlu0 0
      %386 = vperm.xlu0 %385, %v313
      %v387 = vpop.permute.xlu0 %386
      %390 = vset.pattern.permute.xlu0 0
      %391 = vperm.xlu0 %390, %v314
      %v392 = vpop.permute.xlu0 %391
      %395 = vset.pattern.permute.xlu0 0
      %396 = vperm.xlu0 %395, %v315
      %v397 = vpop.permute.xlu0 %396
      %400 = vset.pattern.permute.xlu0 0
      %401 = vperm.xlu0 %400, %v316
      %v402 = vpop.permute.xlu0 %401
      %405 = vset.pattern.permute.xlu0 0
      %406 = vperm.xlu0 %405, %v317
      %v407 = vpop.permute.xlu0 %406
      %410 = vset.pattern.permute.xlu0 0
      %411 = vperm.xlu0 %410, %v318
      %v412 = vpop.permute.xlu0 %411
      %415 = vset.pattern.permute.xlu0 0
      %416 = vperm.xlu0 %415, %v319
      %v417 = vpop.permute.xlu0 %416
      %420 = vset.pattern.permute.xlu0 0
      %421 = vperm.xlu0 %420, %v320
      %v422 = vpop.permute.xlu0 %421
      %425 = vset.pattern.permute.xlu0 0
      %426 = vperm.xlu0 %425, %v321
      %v427 = vpop.permute.xlu0 %426
      %430 = vset.pattern.permute.xlu0 0
      %431 = vperm.xlu0 %430, %v322
      %v432 = vpop.permute.xlu0 %431
      %435 = vset.pattern.permute.xlu0 0
      %436 = vperm.xlu0 %435, %v323
      %v437 = vpop.permute.xlu0 %436
      %440 = vset.pattern.permute.xlu0 0
      %441 = vperm.xlu0 %440, %v324
      %v442 = vpop.permute.xlu0 %441
      %445 = vset.pattern.permute.xlu0 0
      %446 = vperm.xlu0 %445, %v325
      %v447 = vpop.permute.xlu0 %446
      %450 = vset.pattern.permute.xlu0 0
      %451 = vperm.xlu0 %450, %v326
      %v452 = vpop.permute.xlu0 %451
      %455 = vset.pattern.permute.xlu0 0
      %456 = vperm.xlu0 %455, %v327
      %v457 = vpop.permute.xlu0 %456
      %460 = vset.pattern.permute.xlu0 0
      %461 = vperm.xlu0 %460, %v328
      %v462 = vpop.permute.xlu0 %461
      %465 = vset.pattern.permute.xlu0 0
      %466 = vperm.xlu0 %465, %v329
      %v467 = vpop.permute.xlu0 %466
      %470 = vset.pattern.permute.xlu0 0
      %471 = vperm.xlu0 %470, %v330
      %v472 = vpop.permute.xlu0 %471
      %475 = vset.pattern.permute.xlu0 0
      %476 = vperm.xlu0 %475, %v331
      %v477 = vpop.permute.xlu0 %476
      %480 = vset.pattern.permute.xlu0 0
      %481 = vperm.xlu0 %480, %v332
      %v482 = vpop.permute.xlu0 %481
      %485 = vset.pattern.permute.xlu0 0
      %486 = vperm.xlu0 %485, %v333
      %v487 = vpop.permute.xlu0 %486
      %490 = vset.pattern.permute.xlu0 0
      %491 = vperm.xlu0 %490, %v334
      %v492 = vpop.permute.xlu0 %491
      %495 = vset.pattern.permute.xlu0 0
      %496 = vperm.xlu0 %495, %v335
      %v497 = vpop.permute.xlu0 %496
      %vm499 = vcmp.lt.f32.partialorder %v338, %v342
      %vm500 = vcmp.lt.f32.partialorder %v338, %v347
      %vm501 = vcmp.lt.f32.partialorder %v338, %v352
      %vm502 = vcmp.lt.f32.partialorder %v338, %v357
      %vm503 = vcmp.lt.f32.partialorder %v338, %v362
      %vm504 = vcmp.lt.f32.partialorder %v338, %v367
      %vm505 = vcmp.lt.f32.partialorder %v338, %v372
      %vm506 = vcmp.lt.f32.partialorder %v338, %v377
      %vm507 = vcmp.lt.f32.partialorder %v338, %v382
      %vm508 = vcmp.lt.f32.partialorder %v338, %v387
      %vm509 = vcmp.lt.f32.partialorder %v338, %v392
      %vm510 = vcmp.lt.f32.partialorder %v338, %v397
      %vm511 = vcmp.lt.f32.partialorder %v338, %v402
      %vm512 = vcmp.lt.f32.partialorder %v338, %v407
      %vm513 = vcmp.lt.f32.partialorder %v338, %v412
      %vm514 = vcmp.lt.f32.partialorder %v338, %v417
      %vm515 = vcmp.lt.f32.partialorder %v338, %v422
      %vm516 = vcmp.lt.f32.partialorder %v338, %v427
      %vm517 = vcmp.lt.f32.partialorder %v338, %v432
      %vm518 = vcmp.lt.f32.partialorder %v338, %v437
      %vm519 = vcmp.lt.f32.partialorder %v338, %v442
      %vm520 = vcmp.lt.f32.partialorder %v338, %v447
      %vm521 = vcmp.lt.f32.partialorder %v338, %v452
      %vm522 = vcmp.lt.f32.partialorder %v338, %v457
      %vm523 = vcmp.lt.f32.partialorder %v338, %v462
      %vm524 = vcmp.lt.f32.partialorder %v338, %v467
      %vm525 = vcmp.lt.f32.partialorder %v338, %v472
      %vm526 = vcmp.lt.f32.partialorder %v338, %v477
      %vm527 = vcmp.lt.f32.partialorder %v338, %v482
      %vm528 = vcmp.lt.f32.partialorder %v338, %v487
      %vm529 = vcmp.lt.f32.partialorder %v338, %v492
      %vm530 = vcmp.lt.f32.partialorder %v338, %v497
      %v531 = vsel %vm499, 1, 0
      %v532 = vsel %vm500, 1, 0
      %v533 = vsel %vm501, 1, 0
      %v534 = vsel %vm502, 1, 0
      %v535 = vsel %vm503, 1, 0
      %v536 = vsel %vm504, 1, 0
      %v537 = vsel %vm505, 1, 0
      %v538 = vsel %vm506, 1, 0
      %v539 = vsel %vm507, 1, 0
      %v540 = vsel %vm508, 1, 0
      %v541 = vsel %vm509, 1, 0
      %v542 = vsel %vm510, 1, 0
      %v543 = vsel %vm511, 1, 0
      %v544 = vsel %vm512, 1, 0
      %v545 = vsel %vm513, 1, 0
      %v546 = vsel %vm514, 1, 0
      %v547 = vsel %vm515, 1, 0
      %v548 = vsel %vm516, 1, 0
      %v549 = vsel %vm517, 1, 0
      %v550 = vsel %vm518, 1, 0
      %v551 = vsel %vm519, 1, 0
      %v552 = vsel %vm520, 1, 0
      %v553 = vsel %vm521, 1, 0
      %v554 = vsel %vm522, 1, 0
      %v555 = vsel %vm523, 1, 0
      %v556 = vsel %vm524, 1, 0
      %v557 = vsel %vm525, 1, 0
      %v558 = vsel %vm526, 1, 0
      %v559 = vsel %vm527, 1, 0
      %v560 = vsel %vm528, 1, 0
      %v561 = vsel %vm529, 1, 0
      %v562 = vsel %vm530, 1, 0
      %v563 = vcvt.s32.f32 %v531
      %v564 = vcvt.s32.f32 %v532
      %v565 = vcvt.s32.f32 %v533
      %v566 = vcvt.s32.f32 %v534
      %v567 = vcvt.s32.f32 %v535
      %v568 = vcvt.s32.f32 %v536
      %v569 = vcvt.s32.f32 %v537
      %v570 = vcvt.s32.f32 %v538
      %v571 = vcvt.s32.f32 %v539
      %v572 = vcvt.s32.f32 %v540
      %v573 = vcvt.s32.f32 %v541
      %v574 = vcvt.s32.f32 %v542
      %v575 = vcvt.s32.f32 %v543
      %v576 = vcvt.s32.f32 %v544
      %v577 = vcvt.s32.f32 %v545
      %v578 = vcvt.s32.f32 %v546
      %v579 = vcvt.s32.f32 %v547
      %v580 = vcvt.s32.f32 %v548
      %v581 = vcvt.s32.f32 %v549
      %v582 = vcvt.s32.f32 %v550
      %v583 = vcvt.s32.f32 %v551
      %v584 = vcvt.s32.f32 %v552
      %v585 = vcvt.s32.f32 %v553
      %v586 = vcvt.s32.f32 %v554
      %v587 = vcvt.s32.f32 %v555
      %v588 = vcvt.s32.f32 %v556
      %v589 = vcvt.s32.f32 %v557
      %v590 = vcvt.s32.f32 %v558
      %v591 = vcvt.s32.f32 %v559
      %v592 = vcvt.s32.f32 %v560
      %v593 = vcvt.s32.f32 %v561
      %v594 = vcvt.s32.f32 %v562
      %v595 = vld [vmem:[%s296] sm:$0xff]
      %v596 = vld [vmem:[%s296 + $0x8] sm:$0xff]
      %v597 = vld [vmem:[%s296 + $0x10] sm:$0xff]
      %v598 = vld [vmem:[%s296 + $0x18] sm:$0xff]
      %v599 = vld [vmem:[%s296 + $0x20] sm:$0xff]
      %v600 = vld [vmem:[%s296 + $0x28] sm:$0xff]
      %v601 = vld [vmem:[%s296 + $0x30] sm:$0xff]
      %v602 = vld [vmem:[%s296 + $0x38] sm:$0xff]
      %v603 = vld [vmem:[%s296 + $0x40] sm:$0xff]
      %v604 = vld [vmem:[%s296 + $0x48] sm:$0xff]
      %v605 = vld [vmem:[%s296 + $0x50] sm:$0xff]
      %v606 = vld [vmem:[%s296 + $0x58] sm:$0xff]
      %v607 = vld [vmem:[%s296 + $0x60] sm:$0xff]
      %v608 = vld [vmem:[%s296 + $0x68] sm:$0xff]
      %v609 = vld [vmem:[%s296 + $0x70] sm:$0xff]
      %v610 = vld [vmem:[%s296 + $0x78] sm:$0xff]
      %v611 = vld [vmem:[%s296 + $0x80] sm:$0xff]
      %v612 = vld [vmem:[%s296 + $0x88] sm:$0xff]
      %v613 = vld [vmem:[%s296 + $0x90] sm:$0xff]
      %v614 = vld [vmem:[%s296 + $0x98] sm:$0xff]
      %v615 = vld [vmem:[%s296 + $0xa0] sm:$0xff]
      %v616 = vld [vmem:[%s296 + $0xa8] sm:$0xff]
      %v617 = vld [vmem:[%s296 + $0xb0] sm:$0xff]
      %v618 = vld [vmem:[%s296 + $0xb8] sm:$0xff]
      %v619 = vld [vmem:[%s296 + $0xc0] sm:$0xff]
      %v620 = vld [vmem:[%s296 + $0xc8] sm:$0xff]
      %v621 = vld [vmem:[%s296 + $0xd0] sm:$0xff]
      %v622 = vld [vmem:[%s296 + $0xd8] sm:$0xff]
      %v623 = vld [vmem:[%s296 + $0xe0] sm:$0xff]
      %v624 = vld [vmem:[%s296 + $0xe8] sm:$0xff]
      %v625 = vld [vmem:[%s296 + $0xf0] sm:$0xff]
      %v626 = vld [vmem:[%s296 + $0xf8] sm:$0xff]
      %v627 = vld [vmem:[%s296 + $0x100] sm:$0xff]
      %v628 = vld [vmem:[%s296 + $0x108] sm:$0xff]
      %v629 = vld [vmem:[%s296 + $0x110] sm:$0xff]
      %v630 = vld [vmem:[%s296 + $0x118] sm:$0xff]
      %v631 = vld [vmem:[%s296 + $0x120] sm:$0xff]
      %v632 = vld [vmem:[%s296 + $0x128] sm:$0xff]
      %v633 = vld [vmem:[%s296 + $0x130] sm:$0xff]
      %v634 = vld [vmem:[%s296 + $0x138] sm:$0xff]
      %v635 = vld [vmem:[%s296 + $0x140] sm:$0xff]
      %v636 = vld [vmem:[%s296 + $0x148] sm:$0xff]
      %v637 = vld [vmem:[%s296 + $0x150] sm:$0xff]
      %v638 = vld [vmem:[%s296 + $0x158] sm:$0xff]
      %v639 = vld [vmem:[%s296 + $0x160] sm:$0xff]
      %v640 = vld [vmem:[%s296 + $0x168] sm:$0xff]
      %v641 = vld [vmem:[%s296 + $0x170] sm:$0xff]
      %v642 = vld [vmem:[%s296 + $0x178] sm:$0xff]
      %v643 = vld [vmem:[%s296 + $0x180] sm:$0xff]
      %v644 = vld [vmem:[%s296 + $0x188] sm:$0xff]
      %v645 = vld [vmem:[%s296 + $0x190] sm:$0xff]
      %v646 = vld [vmem:[%s296 + $0x198] sm:$0xff]
      %v647 = vld [vmem:[%s296 + $0x1a0] sm:$0xff]
      %v648 = vld [vmem:[%s296 + $0x1a8] sm:$0xff]
      %v649 = vld [vmem:[%s296 + $0x1b0] sm:$0xff]
      %v650 = vld [vmem:[%s296 + $0x1b8] sm:$0xff]
      %v651 = vld [vmem:[%s296 + $0x1c0] sm:$0xff]
      %v652 = vld [vmem:[%s296 + $0x1c8] sm:$0xff]
      %v653 = vld [vmem:[%s296 + $0x1d0] sm:$0xff]
      %v654 = vld [vmem:[%s296 + $0x1d8] sm:$0xff]
      %v655 = vld [vmem:[%s296 + $0x1e0] sm:$0xff]
      %v656 = vld [vmem:[%s296 + $0x1e8] sm:$0xff]
      %v657 = vld [vmem:[%s296 + $0x1f0] sm:$0xff]
      %v658 = vld [vmem:[%s296 + $0x1f8] sm:$0xff]
      %v659 = vld [vmem:[%s296 + $0x200] sm:$0xff]
      %v660 = vld [vmem:[%s296 + $0x208] sm:$0xff]
      %v661 = vld [vmem:[%s296 + $0x210] sm:$0xff]
      %v662 = vld [vmem:[%s296 + $0x218] sm:$0xff]
      %v663 = vld [vmem:[%s296 + $0x220] sm:$0xff]
      %v664 = vld [vmem:[%s296 + $0x228] sm:$0xff]
      %v665 = vld [vmem:[%s296 + $0x230] sm:$0xff]
      %v666 = vld [vmem:[%s296 + $0x238] sm:$0xff]
      %v667 = vld [vmem:[%s296 + $0x240] sm:$0xff]
      %v668 = vld [vmem:[%s296 + $0x248] sm:$0xff]
      %v669 = vld [vmem:[%s296 + $0x250] sm:$0xff]
      %v670 = vld [vmem:[%s296 + $0x258] sm:$0xff]
      %v671 = vld [vmem:[%s296 + $0x260] sm:$0xff]
      %v672 = vld [vmem:[%s296 + $0x268] sm:$0xff]
      %v673 = vld [vmem:[%s296 + $0x270] sm:$0xff]
      %v674 = vld [vmem:[%s296 + $0x278] sm:$0xff]
      %v675 = vld [vmem:[%s296 + $0x280] sm:$0xff]
      %v676 = vld [vmem:[%s296 + $0x288] sm:$0xff]
      %v677 = vld [vmem:[%s296 + $0x290] sm:$0xff]
      %v678 = vld [vmem:[%s296 + $0x298] sm:$0xff]
      %v679 = vld [vmem:[%s296 + $0x2a0] sm:$0xff]
      %v680 = vld [vmem:[%s296 + $0x2a8] sm:$0xff]
      %v681 = vld [vmem:[%s296 + $0x2b0] sm:$0xff]
      %v682 = vld [vmem:[%s296 + $0x2b8] sm:$0xff]
      %v683 = vld [vmem:[%s296 + $0x2c0] sm:$0xff]
      %v684 = vld [vmem:[%s296 + $0x2c8] sm:$0xff]
      %v685 = vld [vmem:[%s296 + $0x2d0] sm:$0xff]
      %v686 = vld [vmem:[%s296 + $0x2d8] sm:$0xff]
      %v687 = vld [vmem:[%s296 + $0x2e0] sm:$0xff]
      %v688 = vld [vmem:[%s296 + $0x2e8] sm:$0xff]
      %v689 = vld [vmem:[%s296 + $0x2f0] sm:$0xff]
      %v690 = vld [vmem:[%s296 + $0x2f8] sm:$0xff]
      %v691 = vld [vmem:[%s296 + $0x300] sm:$0xff]
      %v692 = vld [vmem:[%s296 + $0x308] sm:$0xff]
      %v693 = vld [vmem:[%s296 + $0x310] sm:$0xff]
      %v694 = vld [vmem:[%s296 + $0x318] sm:$0xff]
      %v695 = vld [vmem:[%s296 + $0x320] sm:$0xff]
      %v696 = vld [vmem:[%s296 + $0x328] sm:$0xff]
      %v697 = vld [vmem:[%s296 + $0x330] sm:$0xff]
      %v698 = vld [vmem:[%s296 + $0x338] sm:$0xff]
      %v699 = vld [vmem:[%s296 + $0x340] sm:$0xff]
      %v700 = vld [vmem:[%s296 + $0x348] sm:$0xff]
      %v701 = vld [vmem:[%s296 + $0x350] sm:$0xff]
      %v702 = vld [vmem:[%s296 + $0x358] sm:$0xff]
      %v703 = vld [vmem:[%s296 + $0x360] sm:$0xff]
      %v704 = vld [vmem:[%s296 + $0x368] sm:$0xff]
      %v705 = vld [vmem:[%s296 + $0x370] sm:$0xff]
      %v706 = vld [vmem:[%s296 + $0x378] sm:$0xff]
      %v707 = vld [vmem:[%s296 + $0x380] sm:$0xff]
      %v708 = vld [vmem:[%s296 + $0x388] sm:$0xff]
      %v709 = vld [vmem:[%s296 + $0x390] sm:$0xff]
      %v710 = vld [vmem:[%s296 + $0x398] sm:$0xff]
      %v711 = vld [vmem:[%s296 + $0x3a0] sm:$0xff]
      %v712 = vld [vmem:[%s296 + $0x3a8] sm:$0xff]
      %v713 = vld [vmem:[%s296 + $0x3b0] sm:$0xff]
      %v714 = vld [vmem:[%s296 + $0x3b8] sm:$0xff]
      %v715 = vld [vmem:[%s296 + $0x3c0] sm:$0xff]
      %v716 = vld [vmem:[%s296 + $0x3c8] sm:$0xff]
      %v717 = vld [vmem:[%s296 + $0x3d0] sm:$0xff]
      %v718 = vld [vmem:[%s296 + $0x3d8] sm:$0xff]
      %v719 = vld [vmem:[%s296 + $0x3e0] sm:$0xff]
      %v720 = vld [vmem:[%s296 + $0x3e8] sm:$0xff]
      %v721 = vld [vmem:[%s296 + $0x3f0] sm:$0xff]
      %v722 = vld [vmem:[%s296 + $0x3f8] sm:$0xff]
      %v723 = vld [vmem:[%s296 + $0x400] sm:$0xff]
      %v724 = vld [vmem:[%s296 + $0x408] sm:$0xff]
      %v725 = vld [vmem:[%s296 + $0x410] sm:$0xff]
      %v726 = vld [vmem:[%s296 + $0x418] sm:$0xff]
      %v727 = vld [vmem:[%s296 + $0x420] sm:$0xff]
      %v728 = vld [vmem:[%s296 + $0x428] sm:$0xff]
      %v729 = vld [vmem:[%s296 + $0x430] sm:$0xff]
      %v730 = vld [vmem:[%s296 + $0x438] sm:$0xff]
      %v731 = vld [vmem:[%s296 + $0x440] sm:$0xff]
      %v732 = vld [vmem:[%s296 + $0x448] sm:$0xff]
      %v733 = vld [vmem:[%s296 + $0x450] sm:$0xff]
      %v734 = vld [vmem:[%s296 + $0x458] sm:$0xff]
      %v735 = vld [vmem:[%s296 + $0x460] sm:$0xff]
      %v736 = vld [vmem:[%s296 + $0x468] sm:$0xff]
      %v737 = vld [vmem:[%s296 + $0x470] sm:$0xff]
      %v738 = vld [vmem:[%s296 + $0x478] sm:$0xff]
      %v739 = vld [vmem:[%s296 + $0x480] sm:$0xff]
      %v740 = vld [vmem:[%s296 + $0x488] sm:$0xff]
      %v741 = vld [vmem:[%s296 + $0x490] sm:$0xff]
      %v742 = vld [vmem:[%s296 + $0x498] sm:$0xff]
      %v743 = vld [vmem:[%s296 + $0x4a0] sm:$0xff]
      %v744 = vld [vmem:[%s296 + $0x4a8] sm:$0xff]
      %v745 = vld [vmem:[%s296 + $0x4b0] sm:$0xff]
      %v746 = vld [vmem:[%s296 + $0x4b8] sm:$0xff]
      %v747 = vld [vmem:[%s296 + $0x4c0] sm:$0xff]
      %v748 = vld [vmem:[%s296 + $0x4c8] sm:$0xff]
      %v749 = vld [vmem:[%s296 + $0x4d0] sm:$0xff]
      %v750 = vld [vmem:[%s296 + $0x4d8] sm:$0xff]
      %v751 = vld [vmem:[%s296 + $0x4e0] sm:$0xff]
      %v752 = vld [vmem:[%s296 + $0x4e8] sm:$0xff]
      %v753 = vld [vmem:[%s296 + $0x4f0] sm:$0xff]
      %v754 = vld [vmem:[%s296 + $0x4f8] sm:$0xff]
      %v755 = vld [vmem:[%s296 + $0x500] sm:$0xff]
      %v756 = vld [vmem:[%s296 + $0x508] sm:$0xff]
      %v757 = vld [vmem:[%s296 + $0x510] sm:$0xff]
      %v758 = vld [vmem:[%s296 + $0x518] sm:$0xff]
      %v759 = vld [vmem:[%s296 + $0x520] sm:$0xff]
      %v760 = vld [vmem:[%s296 + $0x528] sm:$0xff]
      %v761 = vld [vmem:[%s296 + $0x530] sm:$0xff]
      %v762 = vld [vmem:[%s296 + $0x538] sm:$0xff]
      %v763 = vld [vmem:[%s296 + $0x540] sm:$0xff]
      %v764 = vld [vmem:[%s296 + $0x548] sm:$0xff]
      %v765 = vld [vmem:[%s296 + $0x550] sm:$0xff]
      %v766 = vld [vmem:[%s296 + $0x558] sm:$0xff]
      %v767 = vld [vmem:[%s296 + $0x560] sm:$0xff]
      %v768 = vld [vmem:[%s296 + $0x568] sm:$0xff]
      %v769 = vld [vmem:[%s296 + $0x570] sm:$0xff]
      %v770 = vld [vmem:[%s296 + $0x578] sm:$0xff]
      %v771 = vld [vmem:[%s296 + $0x580] sm:$0xff]
      %v772 = vld [vmem:[%s296 + $0x588] sm:$0xff]
      %v773 = vld [vmem:[%s296 + $0x590] sm:$0xff]
      %v774 = vld [vmem:[%s296 + $0x598] sm:$0xff]
      %v775 = vld [vmem:[%s296 + $0x5a0] sm:$0xff]
      %v776 = vld [vmem:[%s296 + $0x5a8] sm:$0xff]
      %v777 = vld [vmem:[%s296 + $0x5b0] sm:$0xff]
      %v778 = vld [vmem:[%s296 + $0x5b8] sm:$0xff]
      %v779 = vld [vmem:[%s296 + $0x5c0] sm:$0xff]
      %v780 = vld [vmem:[%s296 + $0x5c8] sm:$0xff]
      %v781 = vld [vmem:[%s296 + $0x5d0] sm:$0xff]
      %v782 = vld [vmem:[%s296 + $0x5d8] sm:$0xff]
      %v783 = vld [vmem:[%s296 + $0x5e0] sm:$0xff]
      %v784 = vld [vmem:[%s296 + $0x5e8] sm:$0xff]
      %v785 = vld [vmem:[%s296 + $0x5f0] sm:$0xff]
      %v786 = vld [vmem:[%s296 + $0x5f8] sm:$0xff]
      %v787 = vld [vmem:[%s296 + $0x600] sm:$0xff]
      %v788 = vld [vmem:[%s296 + $0x608] sm:$0xff]
      %v789 = vld [vmem:[%s296 + $0x610] sm:$0xff]
      %v790 = vld [vmem:[%s296 + $0x618] sm:$0xff]
      %v791 = vld [vmem:[%s296 + $0x620] sm:$0xff]
      %v792 = vld [vmem:[%s296 + $0x628] sm:$0xff]
      %v793 = vld [vmem:[%s296 + $0x630] sm:$0xff]
      %v794 = vld [vmem:[%s296 + $0x638] sm:$0xff]
      %v795 = vld [vmem:[%s296 + $0x640] sm:$0xff]
      %v796 = vld [vmem:[%s296 + $0x648] sm:$0xff]
      %v797 = vld [vmem:[%s296 + $0x650] sm:$0xff]
      %v798 = vld [vmem:[%s296 + $0x658] sm:$0xff]
      %v799 = vld [vmem:[%s296 + $0x660] sm:$0xff]
      %v800 = vld [vmem:[%s296 + $0x668] sm:$0xff]
      %v801 = vld [vmem:[%s296 + $0x670] sm:$0xff]
      %v802 = vld [vmem:[%s296 + $0x678] sm:$0xff]
      %v803 = vld [vmem:[%s296 + $0x680] sm:$0xff]
      %v804 = vld [vmem:[%s296 + $0x688] sm:$0xff]
      %v805 = vld [vmem:[%s296 + $0x690] sm:$0xff]
      %v806 = vld [vmem:[%s296 + $0x698] sm:$0xff]
      %v807 = vld [vmem:[%s296 + $0x6a0] sm:$0xff]
      %v808 = vld [vmem:[%s296 + $0x6a8] sm:$0xff]
      %v809 = vld [vmem:[%s296 + $0x6b0] sm:$0xff]
      %v810 = vld [vmem:[%s296 + $0x6b8] sm:$0xff]
      %v811 = vld [vmem:[%s296 + $0x6c0] sm:$0xff]
      %v812 = vld [vmem:[%s296 + $0x6c8] sm:$0xff]
      %v813 = vld [vmem:[%s296 + $0x6d0] sm:$0xff]
      %v814 = vld [vmem:[%s296 + $0x6d8] sm:$0xff]
      %v815 = vld [vmem:[%s296 + $0x6e0] sm:$0xff]
      %v816 = vld [vmem:[%s296 + $0x6e8] sm:$0xff]
      %v817 = vld [vmem:[%s296 + $0x6f0] sm:$0xff]
      %v818 = vld [vmem:[%s296 + $0x6f8] sm:$0xff]
      %v819 = vld [vmem:[%s296 + $0x700] sm:$0xff]
      %v820 = vld [vmem:[%s296 + $0x708] sm:$0xff]
      %v821 = vld [vmem:[%s296 + $0x710] sm:$0xff]
      %v822 = vld [vmem:[%s296 + $0x718] sm:$0xff]
      %v823 = vld [vmem:[%s296 + $0x720] sm:$0xff]
      %v824 = vld [vmem:[%s296 + $0x728] sm:$0xff]
      %v825 = vld [vmem:[%s296 + $0x730] sm:$0xff]
      %v826 = vld [vmem:[%s296 + $0x738] sm:$0xff]
      %v827 = vld [vmem:[%s296 + $0x740] sm:$0xff]
      %v828 = vld [vmem:[%s296 + $0x748] sm:$0xff]
      %v829 = vld [vmem:[%s296 + $0x750] sm:$0xff]
      %v830 = vld [vmem:[%s296 + $0x758] sm:$0xff]
      %v831 = vld [vmem:[%s296 + $0x760] sm:$0xff]
      %v832 = vld [vmem:[%s296 + $0x768] sm:$0xff]
      %v833 = vld [vmem:[%s296 + $0x770] sm:$0xff]
      %v834 = vld [vmem:[%s296 + $0x778] sm:$0xff]
      %v835 = vld [vmem:[%s296 + $0x780] sm:$0xff]
      %v836 = vld [vmem:[%s296 + $0x788] sm:$0xff]
      %v837 = vld [vmem:[%s296 + $0x790] sm:$0xff]
      %v838 = vld [vmem:[%s296 + $0x798] sm:$0xff]
      %v839 = vld [vmem:[%s296 + $0x7a0] sm:$0xff]
      %v840 = vld [vmem:[%s296 + $0x7a8] sm:$0xff]
      %v841 = vld [vmem:[%s296 + $0x7b0] sm:$0xff]
      %v842 = vld [vmem:[%s296 + $0x7b8] sm:$0xff]
      %v843 = vld [vmem:[%s296 + $0x7c0] sm:$0xff]
      %v844 = vld [vmem:[%s296 + $0x7c8] sm:$0xff]
      %v845 = vld [vmem:[%s296 + $0x7d0] sm:$0xff]
      %v846 = vld [vmem:[%s296 + $0x7d8] sm:$0xff]
      %v847 = vld [vmem:[%s296 + $0x7e0] sm:$0xff]
      %v848 = vld [vmem:[%s296 + $0x7e8] sm:$0xff]
      %v849 = vld [vmem:[%s296 + $0x7f0] sm:$0xff]
      %v850 = vld [vmem:[%s296 + $0x7f8] sm:$0xff]
      %v851 = vlaneseq
      %v852 = vshrl.u32 %v851, 7
      %v853 = vsub.s32 0, %v852
      %v854 = vrot.slane %v563, %v853
      %856 = vbcast.lane.b32.xlu0 %v854, 256
      %v857 = vpop.permute.xlu0 %856
      %v858 = vlaneseq
      %v859 = vshrl.u32 %v858, 7
      %v860 = vsub.s32 1, %v859
      %v861 = vrot.slane %v563, %v860
      %863 = vbcast.lane.b32.xlu0 %v861, 256
      %v864 = vpop.permute.xlu0 %863
      %v865 = vlaneseq
      %v866 = vshrl.u32 %v865, 7
      %v867 = vsub.s32 2, %v866
      %v868 = vrot.slane %v563, %v867
      %870 = vbcast.lane.b32.xlu0 %v868, 256
      %v871 = vpop.permute.xlu0 %870
      %v872 = vlaneseq
      %v873 = vshrl.u32 %v872, 7
      %v874 = vsub.s32 3, %v873
      %v875 = vrot.slane %v563, %v874
      %877 = vbcast.lane.b32.xlu0 %v875, 256
      %v878 = vpop.permute.xlu0 %877
      %v879 = vlaneseq
      %v880 = vshrl.u32 %v879, 7
      %v881 = vsub.s32 4, %v880
      %v882 = vrot.slane %v563, %v881
      %884 = vbcast.lane.b32.xlu0 %v882, 256
      %v885 = vpop.permute.xlu0 %884
      %v886 = vlaneseq
      %v887 = vshrl.u32 %v886, 7
      %v888 = vsub.s32 5, %v887
      %v889 = vrot.slane %v563, %v888
      %891 = vbcast.lane.b32.xlu0 %v889, 256
      %v892 = vpop.permute.xlu0 %891
      %v893 = vlaneseq
      %v894 = vshrl.u32 %v893, 7
      %v895 = vsub.s32 6, %v894
      %v896 = vrot.slane %v563, %v895
      %898 = vbcast.lane.b32.xlu0 %v896, 256
      %v899 = vpop.permute.xlu0 %898
      %v900 = vlaneseq
      %v901 = vshrl.u32 %v900, 7
      %v902 = vsub.s32 7, %v901
      %v903 = vrot.slane %v563, %v902
      %905 = vbcast.lane.b32.xlu0 %v903, 256
      %v906 = vpop.permute.xlu0 %905
      %v907 = vlaneseq
      %v908 = vshrl.u32 %v907, 7
      %v909 = vsub.s32 0, %v908
      %v910 = vrot.slane %v564, %v909
      %912 = vbcast.lane.b32.xlu0 %v910, 256
      %v913 = vpop.permute.xlu0 %912
      %v914 = vlaneseq
      %v915 = vshrl.u32 %v914, 7
      %v916 = vsub.s32 1, %v915
      %v917 = vrot.slane %v564, %v916
      %919 = vbcast.lane.b32.xlu0 %v917, 256
      %v920 = vpop.permute.xlu0 %919
      %v921 = vlaneseq
      %v922 = vshrl.u32 %v921, 7
      %v923 = vsub.s32 2, %v922
      %v924 = vrot.slane %v564, %v923
      %926 = vbcast.lane.b32.xlu0 %v924, 256
      %v927 = vpop.permute.xlu0 %926
      %v928 = vlaneseq
      %v929 = vshrl.u32 %v928, 7
      %v930 = vsub.s32 3, %v929
      %v931 = vrot.slane %v564, %v930
      %933 = vbcast.lane.b32.xlu0 %v931, 256
      %v934 = vpop.permute.xlu0 %933
      %v935 = vlaneseq
      %v936 = vshrl.u32 %v935, 7
      %v937 = vsub.s32 4, %v936
      %v938 = vrot.slane %v564, %v937
      %940 = vbcast.lane.b32.xlu0 %v938, 256
      %v941 = vpop.permute.xlu0 %940
      %v942 = vlaneseq
      %v943 = vshrl.u32 %v942, 7
      %v944 = vsub.s32 5, %v943
      %v945 = vrot.slane %v564, %v944
      %947 = vbcast.lane.b32.xlu0 %v945, 256
      %v948 = vpop.permute.xlu0 %947
      %v949 = vlaneseq
      %v950 = vshrl.u32 %v949, 7
      %v951 = vsub.s32 6, %v950
      %v952 = vrot.slane %v564, %v951
      %954 = vbcast.lane.b32.xlu0 %v952, 256
      %v955 = vpop.permute.xlu0 %954
      %v956 = vlaneseq
      %v957 = vshrl.u32 %v956, 7
      %v958 = vsub.s32 7, %v957
      %v959 = vrot.slane %v564, %v958
      %961 = vbcast.lane.b32.xlu0 %v959, 256
      %v962 = vpop.permute.xlu0 %961
      %v963 = vlaneseq
      %v964 = vshrl.u32 %v963, 7
      %v965 = vsub.s32 0, %v964
      %v966 = vrot.slane %v565, %v965
      %968 = vbcast.lane.b32.xlu0 %v966, 256
      %v969 = vpop.permute.xlu0 %968
      %v970 = vlaneseq
      %v971 = vshrl.u32 %v970, 7
      %v972 = vsub.s32 1, %v971
      %v973 = vrot.slane %v565, %v972
      %975 = vbcast.lane.b32.xlu0 %v973, 256
      %v976 = vpop.permute.xlu0 %975
      %v977 = vlaneseq
      %v978 = vshrl.u32 %v977, 7
      %v979 = vsub.s32 2, %v978
      %v980 = vrot.slane %v565, %v979
      %982 = vbcast.lane.b32.xlu0 %v980, 256
      %v983 = vpop.permute.xlu0 %982
      %v984 = vlaneseq
      %v985 = vshrl.u32 %v984, 7
      %v986 = vsub.s32 3, %v985
      %v987 = vrot.slane %v565, %v986
      %989 = vbcast.lane.b32.xlu0 %v987, 256
      %v990 = vpop.permute.xlu0 %989
      %v991 = vlaneseq
      %v992 = vshrl.u32 %v991, 7
      %v993 = vsub.s32 4, %v992
      %v994 = vrot.slane %v565, %v993
      %996 = vbcast.lane.b32.xlu0 %v994, 256
      %v997 = vpop.permute.xlu0 %996
      %v998 = vlaneseq
      %v999 = vshrl.u32 %v998, 7
      %v1000 = vsub.s32 5, %v999
      %v1001 = vrot.slane %v565, %v1000
      %1003 = vbcast.lane.b32.xlu0 %v1001, 256
      %v1004 = vpop.permute.xlu0 %1003
      %v1005 = vlaneseq
      %v1006 = vshrl.u32 %v1005, 7
      %v1007 = vsub.s32 6, %v1006
      %v1008 = vrot.slane %v565, %v1007
      %1010 = vbcast.lane.b32.xlu0 %v1008, 256
      %v1011 = vpop.permute.xlu0 %1010
      %v1012 = vlaneseq
      %v1013 = vshrl.u32 %v1012, 7
      %v1014 = vsub.s32 7, %v1013
      %v1015 = vrot.slane %v565, %v1014
      %1017 = vbcast.lane.b32.xlu0 %v1015, 256
      %v1018 = vpop.permute.xlu0 %1017
      %v1019 = vlaneseq
      %v1020 = vshrl.u32 %v1019, 7
      %v1021 = vsub.s32 0, %v1020
      %v1022 = vrot.slane %v566, %v1021
      %1024 = vbcast.lane.b32.xlu0 %v1022, 256
      %v1025 = vpop.permute.xlu0 %1024
      %v1026 = vlaneseq
      %v1027 = vshrl.u32 %v1026, 7
      %v1028 = vsub.s32 1, %v1027
      %v1029 = vrot.slane %v566, %v1028
      %1031 = vbcast.lane.b32.xlu0 %v1029, 256
      %v1032 = vpop.permute.xlu0 %1031
      %v1033 = vlaneseq
      %v1034 = vshrl.u32 %v1033, 7
      %v1035 = vsub.s32 2, %v1034
      %v1036 = vrot.slane %v566, %v1035
      %1038 = vbcast.lane.b32.xlu0 %v1036, 256
      %v1039 = vpop.permute.xlu0 %1038
      %v1040 = vlaneseq
      %v1041 = vshrl.u32 %v1040, 7
      %v1042 = vsub.s32 3, %v1041
      %v1043 = vrot.slane %v566, %v1042
      %1045 = vbcast.lane.b32.xlu0 %v1043, 256
      %v1046 = vpop.permute.xlu0 %1045
      %v1047 = vlaneseq
      %v1048 = vshrl.u32 %v1047, 7
      %v1049 = vsub.s32 4, %v1048
      %v1050 = vrot.slane %v566, %v1049
      %1052 = vbcast.lane.b32.xlu0 %v1050, 256
      %v1053 = vpop.permute.xlu0 %1052
      %v1054 = vlaneseq
      %v1055 = vshrl.u32 %v1054, 7
      %v1056 = vsub.s32 5, %v1055
      %v1057 = vrot.slane %v566, %v1056
      %1059 = vbcast.lane.b32.xlu0 %v1057, 256
      %v1060 = vpop.permute.xlu0 %1059
      %v1061 = vlaneseq
      %v1062 = vshrl.u32 %v1061, 7
      %v1063 = vsub.s32 6, %v1062
      %v1064 = vrot.slane %v566, %v1063
      %1066 = vbcast.lane.b32.xlu0 %v1064, 256
      %v1067 = vpop.permute.xlu0 %1066
      %v1068 = vlaneseq
      %v1069 = vshrl.u32 %v1068, 7
      %v1070 = vsub.s32 7, %v1069
      %v1071 = vrot.slane %v566, %v1070
      %1073 = vbcast.lane.b32.xlu0 %v1071, 256
      %v1074 = vpop.permute.xlu0 %1073
      %v1075 = vlaneseq
      %v1076 = vshrl.u32 %v1075, 7
      %v1077 = vsub.s32 0, %v1076
      %v1078 = vrot.slane %v567, %v1077
      %1080 = vbcast.lane.b32.xlu0 %v1078, 256
      %v1081 = vpop.permute.xlu0 %1080
      %v1082 = vlaneseq
      %v1083 = vshrl.u32 %v1082, 7
      %v1084 = vsub.s32 1, %v1083
      %v1085 = vrot.slane %v567, %v1084
      %1087 = vbcast.lane.b32.xlu0 %v1085, 256
      %v1088 = vpop.permute.xlu0 %1087
      %v1089 = vlaneseq
      %v1090 = vshrl.u32 %v1089, 7
      %v1091 = vsub.s32 2, %v1090
      %v1092 = vrot.slane %v567, %v1091
      %1094 = vbcast.lane.b32.xlu0 %v1092, 256
      %v1095 = vpop.permute.xlu0 %1094
      %v1096 = vlaneseq
      %v1097 = vshrl.u32 %v1096, 7
      %v1098 = vsub.s32 3, %v1097
      %v1099 = vrot.slane %v567, %v1098
      %1101 = vbcast.lane.b32.xlu0 %v1099, 256
      %v1102 = vpop.permute.xlu0 %1101
      %v1103 = vlaneseq
      %v1104 = vshrl.u32 %v1103, 7
      %v1105 = vsub.s32 4, %v1104
      %v1106 = vrot.slane %v567, %v1105
      %1108 = vbcast.lane.b32.xlu0 %v1106, 256
      %v1109 = vpop.permute.xlu0 %1108
      %v1110 = vlaneseq
      %v1111 = vshrl.u32 %v1110, 7
      %v1112 = vsub.s32 5, %v1111
      %v1113 = vrot.slane %v567, %v1112
      %1115 = vbcast.lane.b32.xlu0 %v1113, 256
      %v1116 = vpop.permute.xlu0 %1115
      %v1117 = vlaneseq
      %v1118 = vshrl.u32 %v1117, 7
      %v1119 = vsub.s32 6, %v1118
      %v1120 = vrot.slane %v567, %v1119
      %1122 = vbcast.lane.b32.xlu0 %v1120, 256
      %v1123 = vpop.permute.xlu0 %1122
      %v1124 = vlaneseq
      %v1125 = vshrl.u32 %v1124, 7
      %v1126 = vsub.s32 7, %v1125
      %v1127 = vrot.slane %v567, %v1126
      %1129 = vbcast.lane.b32.xlu0 %v1127, 256
      %v1130 = vpop.permute.xlu0 %1129
      %v1131 = vlaneseq
      %v1132 = vshrl.u32 %v1131, 7
      %v1133 = vsub.s32 0, %v1132
      %v1134 = vrot.slane %v568, %v1133
      %1136 = vbcast.lane.b32.xlu0 %v1134, 256
      %v1137 = vpop.permute.xlu0 %1136
      %v1138 = vlaneseq
      %v1139 = vshrl.u32 %v1138, 7
      %v1140 = vsub.s32 1, %v1139
      %v1141 = vrot.slane %v568, %v1140
      %1143 = vbcast.lane.b32.xlu0 %v1141, 256
      %v1144 = vpop.permute.xlu0 %1143
      %v1145 = vlaneseq
      %v1146 = vshrl.u32 %v1145, 7
      %v1147 = vsub.s32 2, %v1146
      %v1148 = vrot.slane %v568, %v1147
      %1150 = vbcast.lane.b32.xlu0 %v1148, 256
      %v1151 = vpop.permute.xlu0 %1150
      %v1152 = vlaneseq
      %v1153 = vshrl.u32 %v1152, 7
      %v1154 = vsub.s32 3, %v1153
      %v1155 = vrot.slane %v568, %v1154
      %1157 = vbcast.lane.b32.xlu0 %v1155, 256
      %v1158 = vpop.permute.xlu0 %1157
      %v1159 = vlaneseq
      %v1160 = vshrl.u32 %v1159, 7
      %v1161 = vsub.s32 4, %v1160
      %v1162 = vrot.slane %v568, %v1161
      %1164 = vbcast.lane.b32.xlu0 %v1162, 256
      %v1165 = vpop.permute.xlu0 %1164
      %v1166 = vlaneseq
      %v1167 = vshrl.u32 %v1166, 7
      %v1168 = vsub.s32 5, %v1167
      %v1169 = vrot.slane %v568, %v1168
      %1171 = vbcast.lane.b32.xlu0 %v1169, 256
      %v1172 = vpop.permute.xlu0 %1171
      %v1173 = vlaneseq
      %v1174 = vshrl.u32 %v1173, 7
      %v1175 = vsub.s32 6, %v1174
      %v1176 = vrot.slane %v568, %v1175
      %1178 = vbcast.lane.b32.xlu0 %v1176, 256
      %v1179 = vpop.permute.xlu0 %1178
      %v1180 = vlaneseq
      %v1181 = vshrl.u32 %v1180, 7
      %v1182 = vsub.s32 7, %v1181
      %v1183 = vrot.slane %v568, %v1182
      %1185 = vbcast.lane.b32.xlu0 %v1183, 256
      %v1186 = vpop.permute.xlu0 %1185
      %v1187 = vlaneseq
      %v1188 = vshrl.u32 %v1187, 7
      %v1189 = vsub.s32 0, %v1188
      %v1190 = vrot.slane %v569, %v1189
      %1192 = vbcast.lane.b32.xlu0 %v1190, 256
      %v1193 = vpop.permute.xlu0 %1192
      %v1194 = vlaneseq
      %v1195 = vshrl.u32 %v1194, 7
      %v1196 = vsub.s32 1, %v1195
      %v1197 = vrot.slane %v569, %v1196
      %1199 = vbcast.lane.b32.xlu0 %v1197, 256
      %v1200 = vpop.permute.xlu0 %1199
      %v1201 = vlaneseq
      %v1202 = vshrl.u32 %v1201, 7
      %v1203 = vsub.s32 2, %v1202
      %v1204 = vrot.slane %v569, %v1203
      %1206 = vbcast.lane.b32.xlu0 %v1204, 256
      %v1207 = vpop.permute.xlu0 %1206
      %v1208 = vlaneseq
      %v1209 = vshrl.u32 %v1208, 7
      %v1210 = vsub.s32 3, %v1209
      %v1211 = vrot.slane %v569, %v1210
      %1213 = vbcast.lane.b32.xlu0 %v1211, 256
      %v1214 = vpop.permute.xlu0 %1213
      %v1215 = vlaneseq
      %v1216 = vshrl.u32 %v1215, 7
      %v1217 = vsub.s32 4, %v1216
      %v1218 = vrot.slane %v569, %v1217
      %1220 = vbcast.lane.b32.xlu0 %v1218, 256
      %v1221 = vpop.permute.xlu0 %1220
      %v1222 = vlaneseq
      %v1223 = vshrl.u32 %v1222, 7
      %v1224 = vsub.s32 5, %v1223
      %v1225 = vrot.slane %v569, %v1224
      %1227 = vbcast.lane.b32.xlu0 %v1225, 256
      %v1228 = vpop.permute.xlu0 %1227
      %v1229 = vlaneseq
      %v1230 = vshrl.u32 %v1229, 7
      %v1231 = vsub.s32 6, %v1230
      %v1232 = vrot.slane %v569, %v1231
      %1234 = vbcast.lane.b32.xlu0 %v1232, 256
      %v1235 = vpop.permute.xlu0 %1234
      %v1236 = vlaneseq
      %v1237 = vshrl.u32 %v1236, 7
      %v1238 = vsub.s32 7, %v1237
      %v1239 = vrot.slane %v569, %v1238
      %1241 = vbcast.lane.b32.xlu0 %v1239, 256
      %v1242 = vpop.permute.xlu0 %1241
      %v1243 = vlaneseq
      %v1244 = vshrl.u32 %v1243, 7
      %v1245 = vsub.s32 0, %v1244
      %v1246 = vrot.slane %v570, %v1245
      %1248 = vbcast.lane.b32.xlu0 %v1246, 256
      %v1249 = vpop.permute.xlu0 %1248
      %v1250 = vlaneseq
      %v1251 = vshrl.u32 %v1250, 7
      %v1252 = vsub.s32 1, %v1251
      %v1253 = vrot.slane %v570, %v1252
      %1255 = vbcast.lane.b32.xlu0 %v1253, 256
      %v1256 = vpop.permute.xlu0 %1255
      %v1257 = vlaneseq
      %v1258 = vshrl.u32 %v1257, 7
      %v1259 = vsub.s32 2, %v1258
      %v1260 = vrot.slane %v570, %v1259
      %1262 = vbcast.lane.b32.xlu0 %v1260, 256
      %v1263 = vpop.permute.xlu0 %1262
      %v1264 = vlaneseq
      %v1265 = vshrl.u32 %v1264, 7
      %v1266 = vsub.s32 3, %v1265
      %v1267 = vrot.slane %v570, %v1266
      %1269 = vbcast.lane.b32.xlu0 %v1267, 256
      %v1270 = vpop.permute.xlu0 %1269
      %v1271 = vlaneseq
      %v1272 = vshrl.u32 %v1271, 7
      %v1273 = vsub.s32 4, %v1272
      %v1274 = vrot.slane %v570, %v1273
      %1276 = vbcast.lane.b32.xlu0 %v1274, 256
      %v1277 = vpop.permute.xlu0 %1276
      %v1278 = vlaneseq
      %v1279 = vshrl.u32 %v1278, 7
      %v1280 = vsub.s32 5, %v1279
      %v1281 = vrot.slane %v570, %v1280
      %1283 = vbcast.lane.b32.xlu0 %v1281, 256
      %v1284 = vpop.permute.xlu0 %1283
      %v1285 = vlaneseq
      %v1286 = vshrl.u32 %v1285, 7
      %v1287 = vsub.s32 6, %v1286
      %v1288 = vrot.slane %v570, %v1287
      %1290 = vbcast.lane.b32.xlu0 %v1288, 256
      %v1291 = vpop.permute.xlu0 %1290
      %v1292 = vlaneseq
      %v1293 = vshrl.u32 %v1292, 7
      %v1294 = vsub.s32 7, %v1293
      %v1295 = vrot.slane %v570, %v1294
      %1297 = vbcast.lane.b32.xlu0 %v1295, 256
      %v1298 = vpop.permute.xlu0 %1297
      %v1299 = vlaneseq
      %v1300 = vshrl.u32 %v1299, 7
      %v1301 = vsub.s32 0, %v1300
      %v1302 = vrot.slane %v571, %v1301
      %1304 = vbcast.lane.b32.xlu0 %v1302, 256
      %v1305 = vpop.permute.xlu0 %1304
      %v1306 = vlaneseq
      %v1307 = vshrl.u32 %v1306, 7
      %v1308 = vsub.s32 1, %v1307
      %v1309 = vrot.slane %v571, %v1308
      %1311 = vbcast.lane.b32.xlu0 %v1309, 256
      %v1312 = vpop.permute.xlu0 %1311
      %v1313 = vlaneseq
      %v1314 = vshrl.u32 %v1313, 7
      %v1315 = vsub.s32 2, %v1314
      %v1316 = vrot.slane %v571, %v1315
      %1318 = vbcast.lane.b32.xlu0 %v1316, 256
      %v1319 = vpop.permute.xlu0 %1318
      %v1320 = vlaneseq
      %v1321 = vshrl.u32 %v1320, 7
      %v1322 = vsub.s32 3, %v1321
      %v1323 = vrot.slane %v571, %v1322
      %1325 = vbcast.lane.b32.xlu0 %v1323, 256
      %v1326 = vpop.permute.xlu0 %1325
      %v1327 = vlaneseq
      %v1328 = vshrl.u32 %v1327, 7
      %v1329 = vsub.s32 4, %v1328
      %v1330 = vrot.slane %v571, %v1329
      %1332 = vbcast.lane.b32.xlu0 %v1330, 256
      %v1333 = vpop.permute.xlu0 %1332
      %v1334 = vlaneseq
      %v1335 = vshrl.u32 %v1334, 7
      %v1336 = vsub.s32 5, %v1335
      %v1337 = vrot.slane %v571, %v1336
      %1339 = vbcast.lane.b32.xlu0 %v1337, 256
      %v1340 = vpop.permute.xlu0 %1339
      %v1341 = vlaneseq
      %v1342 = vshrl.u32 %v1341, 7
      %v1343 = vsub.s32 6, %v1342
      %v1344 = vrot.slane %v571, %v1343
      %1346 = vbcast.lane.b32.xlu0 %v1344, 256
      %v1347 = vpop.permute.xlu0 %1346
      %v1348 = vlaneseq
      %v1349 = vshrl.u32 %v1348, 7
      %v1350 = vsub.s32 7, %v1349
      %v1351 = vrot.slane %v571, %v1350
      %1353 = vbcast.lane.b32.xlu0 %v1351, 256
      %v1354 = vpop.permute.xlu0 %1353
      %v1355 = vlaneseq
      %v1356 = vshrl.u32 %v1355, 7
      %v1357 = vsub.s32 0, %v1356
      %v1358 = vrot.slane %v572, %v1357
      %1360 = vbcast.lane.b32.xlu0 %v1358, 256
      %v1361 = vpop.permute.xlu0 %1360
      %v1362 = vlaneseq
      %v1363 = vshrl.u32 %v1362, 7
      %v1364 = vsub.s32 1, %v1363
      %v1365 = vrot.slane %v572, %v1364
      %1367 = vbcast.lane.b32.xlu0 %v1365, 256
      %v1368 = vpop.permute.xlu0 %1367
      %v1369 = vlaneseq
      %v1370 = vshrl.u32 %v1369, 7
      %v1371 = vsub.s32 2, %v1370
      %v1372 = vrot.slane %v572, %v1371
      %1374 = vbcast.lane.b32.xlu0 %v1372, 256
      %v1375 = vpop.permute.xlu0 %1374
      %v1376 = vlaneseq
      %v1377 = vshrl.u32 %v1376, 7
      %v1378 = vsub.s32 3, %v1377
      %v1379 = vrot.slane %v572, %v1378
      %1381 = vbcast.lane.b32.xlu0 %v1379, 256
      %v1382 = vpop.permute.xlu0 %1381
      %v1383 = vlaneseq
      %v1384 = vshrl.u32 %v1383, 7
      %v1385 = vsub.s32 4, %v1384
      %v1386 = vrot.slane %v572, %v1385
      %1388 = vbcast.lane.b32.xlu0 %v1386, 256
      %v1389 = vpop.permute.xlu0 %1388
      %v1390 = vlaneseq
      %v1391 = vshrl.u32 %v1390, 7
      %v1392 = vsub.s32 5, %v1391
      %v1393 = vrot.slane %v572, %v1392
      %1395 = vbcast.lane.b32.xlu0 %v1393, 256
      %v1396 = vpop.permute.xlu0 %1395
      %v1397 = vlaneseq
      %v1398 = vshrl.u32 %v1397, 7
      %v1399 = vsub.s32 6, %v1398
      %v1400 = vrot.slane %v572, %v1399
      %1402 = vbcast.lane.b32.xlu0 %v1400, 256
      %v1403 = vpop.permute.xlu0 %1402
      %v1404 = vlaneseq
      %v1405 = vshrl.u32 %v1404, 7
      %v1406 = vsub.s32 7, %v1405
      %v1407 = vrot.slane %v572, %v1406
      %1409 = vbcast.lane.b32.xlu0 %v1407, 256
      %v1410 = vpop.permute.xlu0 %1409
      %v1411 = vlaneseq
      %v1412 = vshrl.u32 %v1411, 7
      %v1413 = vsub.s32 0, %v1412
      %v1414 = vrot.slane %v573, %v1413
      %1416 = vbcast.lane.b32.xlu0 %v1414, 256
      %v1417 = vpop.permute.xlu0 %1416
      %v1418 = vlaneseq
      %v1419 = vshrl.u32 %v1418, 7
      %v1420 = vsub.s32 1, %v1419
      %v1421 = vrot.slane %v573, %v1420
      %1423 = vbcast.lane.b32.xlu0 %v1421, 256
      %v1424 = vpop.permute.xlu0 %1423
      %v1425 = vlaneseq
      %v1426 = vshrl.u32 %v1425, 7
      %v1427 = vsub.s32 2, %v1426
      %v1428 = vrot.slane %v573, %v1427
      %1430 = vbcast.lane.b32.xlu0 %v1428, 256
      %v1431 = vpop.permute.xlu0 %1430
      %v1432 = vlaneseq
      %v1433 = vshrl.u32 %v1432, 7
      %v1434 = vsub.s32 3, %v1433
      %v1435 = vrot.slane %v573, %v1434
      %1437 = vbcast.lane.b32.xlu0 %v1435, 256
      %v1438 = vpop.permute.xlu0 %1437
      %v1439 = vlaneseq
      %v1440 = vshrl.u32 %v1439, 7
      %v1441 = vsub.s32 4, %v1440
      %v1442 = vrot.slane %v573, %v1441
      %1444 = vbcast.lane.b32.xlu0 %v1442, 256
      %v1445 = vpop.permute.xlu0 %1444
      %v1446 = vlaneseq
      %v1447 = vshrl.u32 %v1446, 7
      %v1448 = vsub.s32 5, %v1447
      %v1449 = vrot.slane %v573, %v1448
      %1451 = vbcast.lane.b32.xlu0 %v1449, 256
      %v1452 = vpop.permute.xlu0 %1451
      %v1453 = vlaneseq
      %v1454 = vshrl.u32 %v1453, 7
      %v1455 = vsub.s32 6, %v1454
      %v1456 = vrot.slane %v573, %v1455
      %1458 = vbcast.lane.b32.xlu0 %v1456, 256
      %v1459 = vpop.permute.xlu0 %1458
      %v1460 = vlaneseq
      %v1461 = vshrl.u32 %v1460, 7
      %v1462 = vsub.s32 7, %v1461
      %v1463 = vrot.slane %v573, %v1462
      %1465 = vbcast.lane.b32.xlu0 %v1463, 256
      %v1466 = vpop.permute.xlu0 %1465
      %v1467 = vlaneseq
      %v1468 = vshrl.u32 %v1467, 7
      %v1469 = vsub.s32 0, %v1468
      %v1470 = vrot.slane %v574, %v1469
      %1472 = vbcast.lane.b32.xlu0 %v1470, 256
      %v1473 = vpop.permute.xlu0 %1472
      %v1474 = vlaneseq
      %v1475 = vshrl.u32 %v1474, 7
      %v1476 = vsub.s32 1, %v1475
      %v1477 = vrot.slane %v574, %v1476
      %1479 = vbcast.lane.b32.xlu0 %v1477, 256
      %v1480 = vpop.permute.xlu0 %1479
      %v1481 = vlaneseq
      %v1482 = vshrl.u32 %v1481, 7
      %v1483 = vsub.s32 2, %v1482
      %v1484 = vrot.slane %v574, %v1483
      %1486 = vbcast.lane.b32.xlu0 %v1484, 256
      %v1487 = vpop.permute.xlu0 %1486
      %v1488 = vlaneseq
      %v1489 = vshrl.u32 %v1488, 7
      %v1490 = vsub.s32 3, %v1489
      %v1491 = vrot.slane %v574, %v1490
      %1493 = vbcast.lane.b32.xlu0 %v1491, 256
      %v1494 = vpop.permute.xlu0 %1493
      %v1495 = vlaneseq
      %v1496 = vshrl.u32 %v1495, 7
      %v1497 = vsub.s32 4, %v1496
      %v1498 = vrot.slane %v574, %v1497
      %1500 = vbcast.lane.b32.xlu0 %v1498, 256
      %v1501 = vpop.permute.xlu0 %1500
      %v1502 = vlaneseq
      %v1503 = vshrl.u32 %v1502, 7
      %v1504 = vsub.s32 5, %v1503
      %v1505 = vrot.slane %v574, %v1504
      %1507 = vbcast.lane.b32.xlu0 %v1505, 256
      %v1508 = vpop.permute.xlu0 %1507
      %v1509 = vlaneseq
      %v1510 = vshrl.u32 %v1509, 7
      %v1511 = vsub.s32 6, %v1510
      %v1512 = vrot.slane %v574, %v1511
      %1514 = vbcast.lane.b32.xlu0 %v1512, 256
      %v1515 = vpop.permute.xlu0 %1514
      %v1516 = vlaneseq
      %v1517 = vshrl.u32 %v1516, 7
      %v1518 = vsub.s32 7, %v1517
      %v1519 = vrot.slane %v574, %v1518
      %1521 = vbcast.lane.b32.xlu0 %v1519, 256
      %v1522 = vpop.permute.xlu0 %1521
      %v1523 = vlaneseq
      %v1524 = vshrl.u32 %v1523, 7
      %v1525 = vsub.s32 0, %v1524
      %v1526 = vrot.slane %v575, %v1525
      %1528 = vbcast.lane.b32.xlu0 %v1526, 256
      %v1529 = vpop.permute.xlu0 %1528
      %v1530 = vlaneseq
      %v1531 = vshrl.u32 %v1530, 7
      %v1532 = vsub.s32 1, %v1531
      %v1533 = vrot.slane %v575, %v1532
      %1535 = vbcast.lane.b32.xlu0 %v1533, 256
      %v1536 = vpop.permute.xlu0 %1535
      %v1537 = vlaneseq
      %v1538 = vshrl.u32 %v1537, 7
      %v1539 = vsub.s32 2, %v1538
      %v1540 = vrot.slane %v575, %v1539
      %1542 = vbcast.lane.b32.xlu0 %v1540, 256
      %v1543 = vpop.permute.xlu0 %1542
      %v1544 = vlaneseq
      %v1545 = vshrl.u32 %v1544, 7
      %v1546 = vsub.s32 3, %v1545
      %v1547 = vrot.slane %v575, %v1546
      %1549 = vbcast.lane.b32.xlu0 %v1547, 256
      %v1550 = vpop.permute.xlu0 %1549
      %v1551 = vlaneseq
      %v1552 = vshrl.u32 %v1551, 7
      %v1553 = vsub.s32 4, %v1552
      %v1554 = vrot.slane %v575, %v1553
      %1556 = vbcast.lane.b32.xlu0 %v1554, 256
      %v1557 = vpop.permute.xlu0 %1556
      %v1558 = vlaneseq
      %v1559 = vshrl.u32 %v1558, 7
      %v1560 = vsub.s32 5, %v1559
      %v1561 = vrot.slane %v575, %v1560
      %1563 = vbcast.lane.b32.xlu0 %v1561, 256
      %v1564 = vpop.permute.xlu0 %1563
      %v1565 = vlaneseq
      %v1566 = vshrl.u32 %v1565, 7
      %v1567 = vsub.s32 6, %v1566
      %v1568 = vrot.slane %v575, %v1567
      %1570 = vbcast.lane.b32.xlu0 %v1568, 256
      %v1571 = vpop.permute.xlu0 %1570
      %v1572 = vlaneseq
      %v1573 = vshrl.u32 %v1572, 7
      %v1574 = vsub.s32 7, %v1573
      %v1575 = vrot.slane %v575, %v1574
      %1577 = vbcast.lane.b32.xlu0 %v1575, 256
      %v1578 = vpop.permute.xlu0 %1577
      %v1579 = vlaneseq
      %v1580 = vshrl.u32 %v1579, 7
      %v1581 = vsub.s32 0, %v1580
      %v1582 = vrot.slane %v576, %v1581
      %1584 = vbcast.lane.b32.xlu0 %v1582, 256
      %v1585 = vpop.permute.xlu0 %1584
      %v1586 = vlaneseq
      %v1587 = vshrl.u32 %v1586, 7
      %v1588 = vsub.s32 1, %v1587
      %v1589 = vrot.slane %v576, %v1588
      %1591 = vbcast.lane.b32.xlu0 %v1589, 256
      %v1592 = vpop.permute.xlu0 %1591
      %v1593 = vlaneseq
      %v1594 = vshrl.u32 %v1593, 7
      %v1595 = vsub.s32 2, %v1594
      %v1596 = vrot.slane %v576, %v1595
      %1598 = vbcast.lane.b32.xlu0 %v1596, 256
      %v1599 = vpop.permute.xlu0 %1598
      %v1600 = vlaneseq
      %v1601 = vshrl.u32 %v1600, 7
      %v1602 = vsub.s32 3, %v1601
      %v1603 = vrot.slane %v576, %v1602
      %1605 = vbcast.lane.b32.xlu0 %v1603, 256
      %v1606 = vpop.permute.xlu0 %1605
      %v1607 = vlaneseq
      %v1608 = vshrl.u32 %v1607, 7
      %v1609 = vsub.s32 4, %v1608
      %v1610 = vrot.slane %v576, %v1609
      %1612 = vbcast.lane.b32.xlu0 %v1610, 256
      %v1613 = vpop.permute.xlu0 %1612
      %v1614 = vlaneseq
      %v1615 = vshrl.u32 %v1614, 7
      %v1616 = vsub.s32 5, %v1615
      %v1617 = vrot.slane %v576, %v1616
      %1619 = vbcast.lane.b32.xlu0 %v1617, 256
      %v1620 = vpop.permute.xlu0 %1619
      %v1621 = vlaneseq
      %v1622 = vshrl.u32 %v1621, 7
      %v1623 = vsub.s32 6, %v1622
      %v1624 = vrot.slane %v576, %v1623
      %1626 = vbcast.lane.b32.xlu0 %v1624, 256
      %v1627 = vpop.permute.xlu0 %1626
      %v1628 = vlaneseq
      %v1629 = vshrl.u32 %v1628, 7
      %v1630 = vsub.s32 7, %v1629
      %v1631 = vrot.slane %v576, %v1630
      %1633 = vbcast.lane.b32.xlu0 %v1631, 256
      %v1634 = vpop.permute.xlu0 %1633
      %v1635 = vlaneseq
      %v1636 = vshrl.u32 %v1635, 7
      %v1637 = vsub.s32 0, %v1636
      %v1638 = vrot.slane %v577, %v1637
      %1640 = vbcast.lane.b32.xlu0 %v1638, 256
      %v1641 = vpop.permute.xlu0 %1640
      %v1642 = vlaneseq
      %v1643 = vshrl.u32 %v1642, 7
      %v1644 = vsub.s32 1, %v1643
      %v1645 = vrot.slane %v577, %v1644
      %1647 = vbcast.lane.b32.xlu0 %v1645, 256
      %v1648 = vpop.permute.xlu0 %1647
      %v1649 = vlaneseq
      %v1650 = vshrl.u32 %v1649, 7
      %v1651 = vsub.s32 2, %v1650
      %v1652 = vrot.slane %v577, %v1651
      %1654 = vbcast.lane.b32.xlu0 %v1652, 256
      %v1655 = vpop.permute.xlu0 %1654
      %v1656 = vlaneseq
      %v1657 = vshrl.u32 %v1656, 7
      %v1658 = vsub.s32 3, %v1657
      %v1659 = vrot.slane %v577, %v1658
      %1661 = vbcast.lane.b32.xlu0 %v1659, 256
      %v1662 = vpop.permute.xlu0 %1661
      %v1663 = vlaneseq
      %v1664 = vshrl.u32 %v1663, 7
      %v1665 = vsub.s32 4, %v1664
      %v1666 = vrot.slane %v577, %v1665
      %1668 = vbcast.lane.b32.xlu0 %v1666, 256
      %v1669 = vpop.permute.xlu0 %1668
      %v1670 = vlaneseq
      %v1671 = vshrl.u32 %v1670, 7
      %v1672 = vsub.s32 5, %v1671
      %v1673 = vrot.slane %v577, %v1672
      %1675 = vbcast.lane.b32.xlu0 %v1673, 256
      %v1676 = vpop.permute.xlu0 %1675
      %v1677 = vlaneseq
      %v1678 = vshrl.u32 %v1677, 7
      %v1679 = vsub.s32 6, %v1678
      %v1680 = vrot.slane %v577, %v1679
      %1682 = vbcast.lane.b32.xlu0 %v1680, 256
      %v1683 = vpop.permute.xlu0 %1682
      %v1684 = vlaneseq
      %v1685 = vshrl.u32 %v1684, 7
      %v1686 = vsub.s32 7, %v1685
      %v1687 = vrot.slane %v577, %v1686
      %1689 = vbcast.lane.b32.xlu0 %v1687, 256
      %v1690 = vpop.permute.xlu0 %1689
      %v1691 = vlaneseq
      %v1692 = vshrl.u32 %v1691, 7
      %v1693 = vsub.s32 0, %v1692
      %v1694 = vrot.slane %v578, %v1693
      %1696 = vbcast.lane.b32.xlu0 %v1694, 256
      %v1697 = vpop.permute.xlu0 %1696
      %v1698 = vlaneseq
      %v1699 = vshrl.u32 %v1698, 7
      %v1700 = vsub.s32 1, %v1699
      %v1701 = vrot.slane %v578, %v1700
      %1703 = vbcast.lane.b32.xlu0 %v1701, 256
      %v1704 = vpop.permute.xlu0 %1703
      %v1705 = vlaneseq
      %v1706 = vshrl.u32 %v1705, 7
      %v1707 = vsub.s32 2, %v1706
      %v1708 = vrot.slane %v578, %v1707
      %1710 = vbcast.lane.b32.xlu0 %v1708, 256
      %v1711 = vpop.permute.xlu0 %1710
      %v1712 = vlaneseq
      %v1713 = vshrl.u32 %v1712, 7
      %v1714 = vsub.s32 3, %v1713
      %v1715 = vrot.slane %v578, %v1714
      %1717 = vbcast.lane.b32.xlu0 %v1715, 256
      %v1718 = vpop.permute.xlu0 %1717
      %v1719 = vlaneseq
      %v1720 = vshrl.u32 %v1719, 7
      %v1721 = vsub.s32 4, %v1720
      %v1722 = vrot.slane %v578, %v1721
      %1724 = vbcast.lane.b32.xlu0 %v1722, 256
      %v1725 = vpop.permute.xlu0 %1724
      %v1726 = vlaneseq
      %v1727 = vshrl.u32 %v1726, 7
      %v1728 = vsub.s32 5, %v1727
      %v1729 = vrot.slane %v578, %v1728
      %1731 = vbcast.lane.b32.xlu0 %v1729, 256
      %v1732 = vpop.permute.xlu0 %1731
      %v1733 = vlaneseq
      %v1734 = vshrl.u32 %v1733, 7
      %v1735 = vsub.s32 6, %v1734
      %v1736 = vrot.slane %v578, %v1735
      %1738 = vbcast.lane.b32.xlu0 %v1736, 256
      %v1739 = vpop.permute.xlu0 %1738
      %v1740 = vlaneseq
      %v1741 = vshrl.u32 %v1740, 7
      %v1742 = vsub.s32 7, %v1741
      %v1743 = vrot.slane %v578, %v1742
      %1745 = vbcast.lane.b32.xlu0 %v1743, 256
      %v1746 = vpop.permute.xlu0 %1745
      %v1747 = vlaneseq
      %v1748 = vshrl.u32 %v1747, 7
      %v1749 = vsub.s32 0, %v1748
      %v1750 = vrot.slane %v579, %v1749
      %1752 = vbcast.lane.b32.xlu0 %v1750, 256
      %v1753 = vpop.permute.xlu0 %1752
      %v1754 = vlaneseq
      %v1755 = vshrl.u32 %v1754, 7
      %v1756 = vsub.s32 1, %v1755
      %v1757 = vrot.slane %v579, %v1756
      %1759 = vbcast.lane.b32.xlu0 %v1757, 256
      %v1760 = vpop.permute.xlu0 %1759
      %v1761 = vlaneseq
      %v1762 = vshrl.u32 %v1761, 7
      %v1763 = vsub.s32 2, %v1762
      %v1764 = vrot.slane %v579, %v1763
      %1766 = vbcast.lane.b32.xlu0 %v1764, 256
      %v1767 = vpop.permute.xlu0 %1766
      %v1768 = vlaneseq
      %v1769 = vshrl.u32 %v1768, 7
      %v1770 = vsub.s32 3, %v1769
      %v1771 = vrot.slane %v579, %v1770
      %1773 = vbcast.lane.b32.xlu0 %v1771, 256
      %v1774 = vpop.permute.xlu0 %1773
      %v1775 = vlaneseq
      %v1776 = vshrl.u32 %v1775, 7
      %v1777 = vsub.s32 4, %v1776
      %v1778 = vrot.slane %v579, %v1777
      %1780 = vbcast.lane.b32.xlu0 %v1778, 256
      %v1781 = vpop.permute.xlu0 %1780
      %v1782 = vlaneseq
      %v1783 = vshrl.u32 %v1782, 7
      %v1784 = vsub.s32 5, %v1783
      %v1785 = vrot.slane %v579, %v1784
      %1787 = vbcast.lane.b32.xlu0 %v1785, 256
      %v1788 = vpop.permute.xlu0 %1787
      %v1789 = vlaneseq
      %v1790 = vshrl.u32 %v1789, 7
      %v1791 = vsub.s32 6, %v1790
      %v1792 = vrot.slane %v579, %v1791
      %1794 = vbcast.lane.b32.xlu0 %v1792, 256
      %v1795 = vpop.permute.xlu0 %1794
      %v1796 = vlaneseq
      %v1797 = vshrl.u32 %v1796, 7
      %v1798 = vsub.s32 7, %v1797
      %v1799 = vrot.slane %v579, %v1798
      %1801 = vbcast.lane.b32.xlu0 %v1799, 256
      %v1802 = vpop.permute.xlu0 %1801
      %v1803 = vlaneseq
      %v1804 = vshrl.u32 %v1803, 7
      %v1805 = vsub.s32 0, %v1804
      %v1806 = vrot.slane %v580, %v1805
      %1808 = vbcast.lane.b32.xlu0 %v1806, 256
      %v1809 = vpop.permute.xlu0 %1808
      %v1810 = vlaneseq
      %v1811 = vshrl.u32 %v1810, 7
      %v1812 = vsub.s32 1, %v1811
      %v1813 = vrot.slane %v580, %v1812
      %1815 = vbcast.lane.b32.xlu0 %v1813, 256
      %v1816 = vpop.permute.xlu0 %1815
      %v1817 = vlaneseq
      %v1818 = vshrl.u32 %v1817, 7
      %v1819 = vsub.s32 2, %v1818
      %v1820 = vrot.slane %v580, %v1819
      %1822 = vbcast.lane.b32.xlu0 %v1820, 256
      %v1823 = vpop.permute.xlu0 %1822
      %v1824 = vlaneseq
      %v1825 = vshrl.u32 %v1824, 7
      %v1826 = vsub.s32 3, %v1825
      %v1827 = vrot.slane %v580, %v1826
      %1829 = vbcast.lane.b32.xlu0 %v1827, 256
      %v1830 = vpop.permute.xlu0 %1829
      %v1831 = vlaneseq
      %v1832 = vshrl.u32 %v1831, 7
      %v1833 = vsub.s32 4, %v1832
      %v1834 = vrot.slane %v580, %v1833
      %1836 = vbcast.lane.b32.xlu0 %v1834, 256
      %v1837 = vpop.permute.xlu0 %1836
      %v1838 = vlaneseq
      %v1839 = vshrl.u32 %v1838, 7
      %v1840 = vsub.s32 5, %v1839
      %v1841 = vrot.slane %v580, %v1840
      %1843 = vbcast.lane.b32.xlu0 %v1841, 256
      %v1844 = vpop.permute.xlu0 %1843
      %v1845 = vlaneseq
      %v1846 = vshrl.u32 %v1845, 7
      %v1847 = vsub.s32 6, %v1846
      %v1848 = vrot.slane %v580, %v1847
      %1850 = vbcast.lane.b32.xlu0 %v1848, 256
      %v1851 = vpop.permute.xlu0 %1850
      %v1852 = vlaneseq
      %v1853 = vshrl.u32 %v1852, 7
      %v1854 = vsub.s32 7, %v1853
      %v1855 = vrot.slane %v580, %v1854
      %1857 = vbcast.lane.b32.xlu0 %v1855, 256
      %v1858 = vpop.permute.xlu0 %1857
      %v1859 = vlaneseq
      %v1860 = vshrl.u32 %v1859, 7
      %v1861 = vsub.s32 0, %v1860
      %v1862 = vrot.slane %v581, %v1861
      %1864 = vbcast.lane.b32.xlu0 %v1862, 256
      %v1865 = vpop.permute.xlu0 %1864
      %v1866 = vlaneseq
      %v1867 = vshrl.u32 %v1866, 7
      %v1868 = vsub.s32 1, %v1867
      %v1869 = vrot.slane %v581, %v1868
      %1871 = vbcast.lane.b32.xlu0 %v1869, 256
      %v1872 = vpop.permute.xlu0 %1871
      %v1873 = vlaneseq
      %v1874 = vshrl.u32 %v1873, 7
      %v1875 = vsub.s32 2, %v1874
      %v1876 = vrot.slane %v581, %v1875
      %1878 = vbcast.lane.b32.xlu0 %v1876, 256
      %v1879 = vpop.permute.xlu0 %1878
      %v1880 = vlaneseq
      %v1881 = vshrl.u32 %v1880, 7
      %v1882 = vsub.s32 3, %v1881
      %v1883 = vrot.slane %v581, %v1882
      %1885 = vbcast.lane.b32.xlu0 %v1883, 256
      %v1886 = vpop.permute.xlu0 %1885
      %v1887 = vlaneseq
      %v1888 = vshrl.u32 %v1887, 7
      %v1889 = vsub.s32 4, %v1888
      %v1890 = vrot.slane %v581, %v1889
      %1892 = vbcast.lane.b32.xlu0 %v1890, 256
      %v1893 = vpop.permute.xlu0 %1892
      %v1894 = vlaneseq
      %v1895 = vshrl.u32 %v1894, 7
      %v1896 = vsub.s32 5, %v1895
      %v1897 = vrot.slane %v581, %v1896
      %1899 = vbcast.lane.b32.xlu0 %v1897, 256
      %v1900 = vpop.permute.xlu0 %1899
      %v1901 = vlaneseq
      %v1902 = vshrl.u32 %v1901, 7
      %v1903 = vsub.s32 6, %v1902
      %v1904 = vrot.slane %v581, %v1903
      %1906 = vbcast.lane.b32.xlu0 %v1904, 256
      %v1907 = vpop.permute.xlu0 %1906
      %v1908 = vlaneseq
      %v1909 = vshrl.u32 %v1908, 7
      %v1910 = vsub.s32 7, %v1909
      %v1911 = vrot.slane %v581, %v1910
      %1913 = vbcast.lane.b32.xlu0 %v1911, 256
      %v1914 = vpop.permute.xlu0 %1913
      %v1915 = vlaneseq
      %v1916 = vshrl.u32 %v1915, 7
      %v1917 = vsub.s32 0, %v1916
      %v1918 = vrot.slane %v582, %v1917
      %1920 = vbcast.lane.b32.xlu0 %v1918, 256
      %v1921 = vpop.permute.xlu0 %1920
      %v1922 = vlaneseq
      %v1923 = vshrl.u32 %v1922, 7
      %v1924 = vsub.s32 1, %v1923
      %v1925 = vrot.slane %v582, %v1924
      %1927 = vbcast.lane.b32.xlu0 %v1925, 256
      %v1928 = vpop.permute.xlu0 %1927
      %v1929 = vlaneseq
      %v1930 = vshrl.u32 %v1929, 7
      %v1931 = vsub.s32 2, %v1930
      %v1932 = vrot.slane %v582, %v1931
      %1934 = vbcast.lane.b32.xlu0 %v1932, 256
      %v1935 = vpop.permute.xlu0 %1934
      %v1936 = vlaneseq
      %v1937 = vshrl.u32 %v1936, 7
      %v1938 = vsub.s32 3, %v1937
      %v1939 = vrot.slane %v582, %v1938
      %1941 = vbcast.lane.b32.xlu0 %v1939, 256
      %v1942 = vpop.permute.xlu0 %1941
      %v1943 = vlaneseq
      %v1944 = vshrl.u32 %v1943, 7
      %v1945 = vsub.s32 4, %v1944
      %v1946 = vrot.slane %v582, %v1945
      %1948 = vbcast.lane.b32.xlu0 %v1946, 256
      %v1949 = vpop.permute.xlu0 %1948
      %v1950 = vlaneseq
      %v1951 = vshrl.u32 %v1950, 7
      %v1952 = vsub.s32 5, %v1951
      %v1953 = vrot.slane %v582, %v1952
      %1955 = vbcast.lane.b32.xlu0 %v1953, 256
      %v1956 = vpop.permute.xlu0 %1955
      %v1957 = vlaneseq
      %v1958 = vshrl.u32 %v1957, 7
      %v1959 = vsub.s32 6, %v1958
      %v1960 = vrot.slane %v582, %v1959
      %1962 = vbcast.lane.b32.xlu0 %v1960, 256
      %v1963 = vpop.permute.xlu0 %1962
      %v1964 = vlaneseq
      %v1965 = vshrl.u32 %v1964, 7
      %v1966 = vsub.s32 7, %v1965
      %v1967 = vrot.slane %v582, %v1966
      %1969 = vbcast.lane.b32.xlu0 %v1967, 256
      %v1970 = vpop.permute.xlu0 %1969
      %v1971 = vlaneseq
      %v1972 = vshrl.u32 %v1971, 7
      %v1973 = vsub.s32 0, %v1972
      %v1974 = vrot.slane %v583, %v1973
      %1976 = vbcast.lane.b32.xlu0 %v1974, 256
      %v1977 = vpop.permute.xlu0 %1976
      %v1978 = vlaneseq
      %v1979 = vshrl.u32 %v1978, 7
      %v1980 = vsub.s32 1, %v1979
      %v1981 = vrot.slane %v583, %v1980
      %1983 = vbcast.lane.b32.xlu0 %v1981, 256
      %v1984 = vpop.permute.xlu0 %1983
      %v1985 = vlaneseq
      %v1986 = vshrl.u32 %v1985, 7
      %v1987 = vsub.s32 2, %v1986
      %v1988 = vrot.slane %v583, %v1987
      %1990 = vbcast.lane.b32.xlu0 %v1988, 256
      %v1991 = vpop.permute.xlu0 %1990
      %v1992 = vlaneseq
      %v1993 = vshrl.u32 %v1992, 7
      %v1994 = vsub.s32 3, %v1993
      %v1995 = vrot.slane %v583, %v1994
      %1997 = vbcast.lane.b32.xlu0 %v1995, 256
      %v1998 = vpop.permute.xlu0 %1997
      %v1999 = vlaneseq
      %v2000 = vshrl.u32 %v1999, 7
      %v2001 = vsub.s32 4, %v2000
      %v2002 = vrot.slane %v583, %v2001
      %2004 = vbcast.lane.b32.xlu0 %v2002, 256
      %v2005 = vpop.permute.xlu0 %2004
      %v2006 = vlaneseq
      %v2007 = vshrl.u32 %v2006, 7
      %v2008 = vsub.s32 5, %v2007
      %v2009 = vrot.slane %v583, %v2008
      %2011 = vbcast.lane.b32.xlu0 %v2009, 256
      %v2012 = vpop.permute.xlu0 %2011
      %v2013 = vlaneseq
      %v2014 = vshrl.u32 %v2013, 7
      %v2015 = vsub.s32 6, %v2014
      %v2016 = vrot.slane %v583, %v2015
      %2018 = vbcast.lane.b32.xlu0 %v2016, 256
      %v2019 = vpop.permute.xlu0 %2018
      %v2020 = vlaneseq
      %v2021 = vshrl.u32 %v2020, 7
      %v2022 = vsub.s32 7, %v2021
      %v2023 = vrot.slane %v583, %v2022
      %2025 = vbcast.lane.b32.xlu0 %v2023, 256
      %v2026 = vpop.permute.xlu0 %2025
      %v2027 = vlaneseq
      %v2028 = vshrl.u32 %v2027, 7
      %v2029 = vsub.s32 0, %v2028
      %v2030 = vrot.slane %v584, %v2029
      %2032 = vbcast.lane.b32.xlu0 %v2030, 256
      %v2033 = vpop.permute.xlu0 %2032
      %v2034 = vlaneseq
      %v2035 = vshrl.u32 %v2034, 7
      %v2036 = vsub.s32 1, %v2035
      %v2037 = vrot.slane %v584, %v2036
      %2039 = vbcast.lane.b32.xlu0 %v2037, 256
      %v2040 = vpop.permute.xlu0 %2039
      %v2041 = vlaneseq
      %v2042 = vshrl.u32 %v2041, 7
      %v2043 = vsub.s32 2, %v2042
      %v2044 = vrot.slane %v584, %v2043
      %2046 = vbcast.lane.b32.xlu0 %v2044, 256
      %v2047 = vpop.permute.xlu0 %2046
      %v2048 = vlaneseq
      %v2049 = vshrl.u32 %v2048, 7
      %v2050 = vsub.s32 3, %v2049
      %v2051 = vrot.slane %v584, %v2050
      %2053 = vbcast.lane.b32.xlu0 %v2051, 256
      %v2054 = vpop.permute.xlu0 %2053
      %v2055 = vlaneseq
      %v2056 = vshrl.u32 %v2055, 7
      %v2057 = vsub.s32 4, %v2056
      %v2058 = vrot.slane %v584, %v2057
      %2060 = vbcast.lane.b32.xlu0 %v2058, 256
      %v2061 = vpop.permute.xlu0 %2060
      %v2062 = vlaneseq
      %v2063 = vshrl.u32 %v2062, 7
      %v2064 = vsub.s32 5, %v2063
      %v2065 = vrot.slane %v584, %v2064
      %2067 = vbcast.lane.b32.xlu0 %v2065, 256
      %v2068 = vpop.permute.xlu0 %2067
      %v2069 = vlaneseq
      %v2070 = vshrl.u32 %v2069, 7
      %v2071 = vsub.s32 6, %v2070
      %v2072 = vrot.slane %v584, %v2071
      %2074 = vbcast.lane.b32.xlu0 %v2072, 256
      %v2075 = vpop.permute.xlu0 %2074
      %v2076 = vlaneseq
      %v2077 = vshrl.u32 %v2076, 7
      %v2078 = vsub.s32 7, %v2077
      %v2079 = vrot.slane %v584, %v2078
      %2081 = vbcast.lane.b32.xlu0 %v2079, 256
      %v2082 = vpop.permute.xlu0 %2081
      %v2083 = vlaneseq
      %v2084 = vshrl.u32 %v2083, 7
      %v2085 = vsub.s32 0, %v2084
      %v2086 = vrot.slane %v585, %v2085
      %2088 = vbcast.lane.b32.xlu0 %v2086, 256
      %v2089 = vpop.permute.xlu0 %2088
      %v2090 = vlaneseq
      %v2091 = vshrl.u32 %v2090, 7
      %v2092 = vsub.s32 1, %v2091
      %v2093 = vrot.slane %v585, %v2092
      %2095 = vbcast.lane.b32.xlu0 %v2093, 256
      %v2096 = vpop.permute.xlu0 %2095
      %v2097 = vlaneseq
      %v2098 = vshrl.u32 %v2097, 7
      %v2099 = vsub.s32 2, %v2098
      %v2100 = vrot.slane %v585, %v2099
      %2102 = vbcast.lane.b32.xlu0 %v2100, 256
      %v2103 = vpop.permute.xlu0 %2102
      %v2104 = vlaneseq
      %v2105 = vshrl.u32 %v2104, 7
      %v2106 = vsub.s32 3, %v2105
      %v2107 = vrot.slane %v585, %v2106
      %2109 = vbcast.lane.b32.xlu0 %v2107, 256
      %v2110 = vpop.permute.xlu0 %2109
      %v2111 = vlaneseq
      %v2112 = vshrl.u32 %v2111, 7
      %v2113 = vsub.s32 4, %v2112
      %v2114 = vrot.slane %v585, %v2113
      %2116 = vbcast.lane.b32.xlu0 %v2114, 256
      %v2117 = vpop.permute.xlu0 %2116
      %v2118 = vlaneseq
      %v2119 = vshrl.u32 %v2118, 7
      %v2120 = vsub.s32 5, %v2119
      %v2121 = vrot.slane %v585, %v2120
      %2123 = vbcast.lane.b32.xlu0 %v2121, 256
      %v2124 = vpop.permute.xlu0 %2123
      %v2125 = vlaneseq
      %v2126 = vshrl.u32 %v2125, 7
      %v2127 = vsub.s32 6, %v2126
      %v2128 = vrot.slane %v585, %v2127
      %2130 = vbcast.lane.b32.xlu0 %v2128, 256
      %v2131 = vpop.permute.xlu0 %2130
      %v2132 = vlaneseq
      %v2133 = vshrl.u32 %v2132, 7
      %v2134 = vsub.s32 7, %v2133
      %v2135 = vrot.slane %v585, %v2134
      %2137 = vbcast.lane.b32.xlu0 %v2135, 256
      %v2138 = vpop.permute.xlu0 %2137
      %v2139 = vlaneseq
      %v2140 = vshrl.u32 %v2139, 7
      %v2141 = vsub.s32 0, %v2140
      %v2142 = vrot.slane %v586, %v2141
      %2144 = vbcast.lane.b32.xlu0 %v2142, 256
      %v2145 = vpop.permute.xlu0 %2144
      %v2146 = vlaneseq
      %v2147 = vshrl.u32 %v2146, 7
      %v2148 = vsub.s32 1, %v2147
      %v2149 = vrot.slane %v586, %v2148
      %2151 = vbcast.lane.b32.xlu0 %v2149, 256
      %v2152 = vpop.permute.xlu0 %2151
      %v2153 = vlaneseq
      %v2154 = vshrl.u32 %v2153, 7
      %v2155 = vsub.s32 2, %v2154
      %v2156 = vrot.slane %v586, %v2155
      %2158 = vbcast.lane.b32.xlu0 %v2156, 256
      %v2159 = vpop.permute.xlu0 %2158
      %v2160 = vlaneseq
      %v2161 = vshrl.u32 %v2160, 7
      %v2162 = vsub.s32 3, %v2161
      %v2163 = vrot.slane %v586, %v2162
      %2165 = vbcast.lane.b32.xlu0 %v2163, 256
      %v2166 = vpop.permute.xlu0 %2165
      %v2167 = vlaneseq
      %v2168 = vshrl.u32 %v2167, 7
      %v2169 = vsub.s32 4, %v2168
      %v2170 = vrot.slane %v586, %v2169
      %2172 = vbcast.lane.b32.xlu0 %v2170, 256
      %v2173 = vpop.permute.xlu0 %2172
      %v2174 = vlaneseq
      %v2175 = vshrl.u32 %v2174, 7
      %v2176 = vsub.s32 5, %v2175
      %v2177 = vrot.slane %v586, %v2176
      %2179 = vbcast.lane.b32.xlu0 %v2177, 256
      %v2180 = vpop.permute.xlu0 %2179
      %v2181 = vlaneseq
      %v2182 = vshrl.u32 %v2181, 7
      %v2183 = vsub.s32 6, %v2182
      %v2184 = vrot.slane %v586, %v2183
      %2186 = vbcast.lane.b32.xlu0 %v2184, 256
      %v2187 = vpop.permute.xlu0 %2186
      %v2188 = vlaneseq
      %v2189 = vshrl.u32 %v2188, 7
      %v2190 = vsub.s32 7, %v2189
      %v2191 = vrot.slane %v586, %v2190
      %2193 = vbcast.lane.b32.xlu0 %v2191, 256
      %v2194 = vpop.permute.xlu0 %2193
      %v2195 = vlaneseq
      %v2196 = vshrl.u32 %v2195, 7
      %v2197 = vsub.s32 0, %v2196
      %v2198 = vrot.slane %v587, %v2197
      %2200 = vbcast.lane.b32.xlu0 %v2198, 256
      %v2201 = vpop.permute.xlu0 %2200
      %v2202 = vlaneseq
      %v2203 = vshrl.u32 %v2202, 7
      %v2204 = vsub.s32 1, %v2203
      %v2205 = vrot.slane %v587, %v2204
      %2207 = vbcast.lane.b32.xlu0 %v2205, 256
      %v2208 = vpop.permute.xlu0 %2207
      %v2209 = vlaneseq
      %v2210 = vshrl.u32 %v2209, 7
      %v2211 = vsub.s32 2, %v2210
      %v2212 = vrot.slane %v587, %v2211
      %2214 = vbcast.lane.b32.xlu0 %v2212, 256
      %v2215 = vpop.permute.xlu0 %2214
      %v2216 = vlaneseq
      %v2217 = vshrl.u32 %v2216, 7
      %v2218 = vsub.s32 3, %v2217
      %v2219 = vrot.slane %v587, %v2218
      %2221 = vbcast.lane.b32.xlu0 %v2219, 256
      %v2222 = vpop.permute.xlu0 %2221
      %v2223 = vlaneseq
      %v2224 = vshrl.u32 %v2223, 7
      %v2225 = vsub.s32 4, %v2224
      %v2226 = vrot.slane %v587, %v2225
      %2228 = vbcast.lane.b32.xlu0 %v2226, 256
      %v2229 = vpop.permute.xlu0 %2228
      %v2230 = vlaneseq
      %v2231 = vshrl.u32 %v2230, 7
      %v2232 = vsub.s32 5, %v2231
      %v2233 = vrot.slane %v587, %v2232
      %2235 = vbcast.lane.b32.xlu0 %v2233, 256
      %v2236 = vpop.permute.xlu0 %2235
      %v2237 = vlaneseq
      %v2238 = vshrl.u32 %v2237, 7
      %v2239 = vsub.s32 6, %v2238
      %v2240 = vrot.slane %v587, %v2239
      %2242 = vbcast.lane.b32.xlu0 %v2240, 256
      %v2243 = vpop.permute.xlu0 %2242
      %v2244 = vlaneseq
      %v2245 = vshrl.u32 %v2244, 7
      %v2246 = vsub.s32 7, %v2245
      %v2247 = vrot.slane %v587, %v2246
      %2249 = vbcast.lane.b32.xlu0 %v2247, 256
      %v2250 = vpop.permute.xlu0 %2249
      %v2251 = vlaneseq
      %v2252 = vshrl.u32 %v2251, 7
      %v2253 = vsub.s32 0, %v2252
      %v2254 = vrot.slane %v588, %v2253
      %2256 = vbcast.lane.b32.xlu0 %v2254, 256
      %v2257 = vpop.permute.xlu0 %2256
      %v2258 = vlaneseq
      %v2259 = vshrl.u32 %v2258, 7
      %v2260 = vsub.s32 1, %v2259
      %v2261 = vrot.slane %v588, %v2260
      %2263 = vbcast.lane.b32.xlu0 %v2261, 256
      %v2264 = vpop.permute.xlu0 %2263
      %v2265 = vlaneseq
      %v2266 = vshrl.u32 %v2265, 7
      %v2267 = vsub.s32 2, %v2266
      %v2268 = vrot.slane %v588, %v2267
      %2270 = vbcast.lane.b32.xlu0 %v2268, 256
      %v2271 = vpop.permute.xlu0 %2270
      %v2272 = vlaneseq
      %v2273 = vshrl.u32 %v2272, 7
      %v2274 = vsub.s32 3, %v2273
      %v2275 = vrot.slane %v588, %v2274
      %2277 = vbcast.lane.b32.xlu0 %v2275, 256
      %v2278 = vpop.permute.xlu0 %2277
      %v2279 = vlaneseq
      %v2280 = vshrl.u32 %v2279, 7
      %v2281 = vsub.s32 4, %v2280
      %v2282 = vrot.slane %v588, %v2281
      %2284 = vbcast.lane.b32.xlu0 %v2282, 256
      %v2285 = vpop.permute.xlu0 %2284
      %v2286 = vlaneseq
      %v2287 = vshrl.u32 %v2286, 7
      %v2288 = vsub.s32 5, %v2287
      %v2289 = vrot.slane %v588, %v2288
      %2291 = vbcast.lane.b32.xlu0 %v2289, 256
      %v2292 = vpop.permute.xlu0 %2291
      %v2293 = vlaneseq
      %v2294 = vshrl.u32 %v2293, 7
      %v2295 = vsub.s32 6, %v2294
      %v2296 = vrot.slane %v588, %v2295
      %2298 = vbcast.lane.b32.xlu0 %v2296, 256
      %v2299 = vpop.permute.xlu0 %2298
      %v2300 = vlaneseq
      %v2301 = vshrl.u32 %v2300, 7
      %v2302 = vsub.s32 7, %v2301
      %v2303 = vrot.slane %v588, %v2302
      %2305 = vbcast.lane.b32.xlu0 %v2303, 256
      %v2306 = vpop.permute.xlu0 %2305
      %v2307 = vlaneseq
      %v2308 = vshrl.u32 %v2307, 7
      %v2309 = vsub.s32 0, %v2308
      %v2310 = vrot.slane %v589, %v2309
      %2312 = vbcast.lane.b32.xlu0 %v2310, 256
      %v2313 = vpop.permute.xlu0 %2312
      %v2314 = vlaneseq
      %v2315 = vshrl.u32 %v2314, 7
      %v2316 = vsub.s32 1, %v2315
      %v2317 = vrot.slane %v589, %v2316
      %2319 = vbcast.lane.b32.xlu0 %v2317, 256
      %v2320 = vpop.permute.xlu0 %2319
      %v2321 = vlaneseq
      %v2322 = vshrl.u32 %v2321, 7
      %v2323 = vsub.s32 2, %v2322
      %v2324 = vrot.slane %v589, %v2323
      %2326 = vbcast.lane.b32.xlu0 %v2324, 256
      %v2327 = vpop.permute.xlu0 %2326
      %v2328 = vlaneseq
      %v2329 = vshrl.u32 %v2328, 7
      %v2330 = vsub.s32 3, %v2329
      %v2331 = vrot.slane %v589, %v2330
      %2333 = vbcast.lane.b32.xlu0 %v2331, 256
      %v2334 = vpop.permute.xlu0 %2333
      %v2335 = vlaneseq
      %v2336 = vshrl.u32 %v2335, 7
      %v2337 = vsub.s32 4, %v2336
      %v2338 = vrot.slane %v589, %v2337
      %2340 = vbcast.lane.b32.xlu0 %v2338, 256
      %v2341 = vpop.permute.xlu0 %2340
      %v2342 = vlaneseq
      %v2343 = vshrl.u32 %v2342, 7
      %v2344 = vsub.s32 5, %v2343
      %v2345 = vrot.slane %v589, %v2344
      %2347 = vbcast.lane.b32.xlu0 %v2345, 256
      %v2348 = vpop.permute.xlu0 %2347
      %v2349 = vlaneseq
      %v2350 = vshrl.u32 %v2349, 7
      %v2351 = vsub.s32 6, %v2350
      %v2352 = vrot.slane %v589, %v2351
      %2354 = vbcast.lane.b32.xlu0 %v2352, 256
      %v2355 = vpop.permute.xlu0 %2354
      %v2356 = vlaneseq
      %v2357 = vshrl.u32 %v2356, 7
      %v2358 = vsub.s32 7, %v2357
      %v2359 = vrot.slane %v589, %v2358
      %2361 = vbcast.lane.b32.xlu0 %v2359, 256
      %v2362 = vpop.permute.xlu0 %2361
      %v2363 = vlaneseq
      %v2364 = vshrl.u32 %v2363, 7
      %v2365 = vsub.s32 0, %v2364
      %v2366 = vrot.slane %v590, %v2365
      %2368 = vbcast.lane.b32.xlu0 %v2366, 256
      %v2369 = vpop.permute.xlu0 %2368
      %v2370 = vlaneseq
      %v2371 = vshrl.u32 %v2370, 7
      %v2372 = vsub.s32 1, %v2371
      %v2373 = vrot.slane %v590, %v2372
      %2375 = vbcast.lane.b32.xlu0 %v2373, 256
      %v2376 = vpop.permute.xlu0 %2375
      %v2377 = vlaneseq
      %v2378 = vshrl.u32 %v2377, 7
      %v2379 = vsub.s32 2, %v2378
      %v2380 = vrot.slane %v590, %v2379
      %2382 = vbcast.lane.b32.xlu0 %v2380, 256
      %v2383 = vpop.permute.xlu0 %2382
      %v2384 = vlaneseq
      %v2385 = vshrl.u32 %v2384, 7
      %v2386 = vsub.s32 3, %v2385
      %v2387 = vrot.slane %v590, %v2386
      %2389 = vbcast.lane.b32.xlu0 %v2387, 256
      %v2390 = vpop.permute.xlu0 %2389
      %v2391 = vlaneseq
      %v2392 = vshrl.u32 %v2391, 7
      %v2393 = vsub.s32 4, %v2392
      %v2394 = vrot.slane %v590, %v2393
      %2396 = vbcast.lane.b32.xlu0 %v2394, 256
      %v2397 = vpop.permute.xlu0 %2396
      %v2398 = vlaneseq
      %v2399 = vshrl.u32 %v2398, 7
      %v2400 = vsub.s32 5, %v2399
      %v2401 = vrot.slane %v590, %v2400
      %2403 = vbcast.lane.b32.xlu0 %v2401, 256
      %v2404 = vpop.permute.xlu0 %2403
      %v2405 = vlaneseq
      %v2406 = vshrl.u32 %v2405, 7
      %v2407 = vsub.s32 6, %v2406
      %v2408 = vrot.slane %v590, %v2407
      %2410 = vbcast.lane.b32.xlu0 %v2408, 256
      %v2411 = vpop.permute.xlu0 %2410
      %v2412 = vlaneseq
      %v2413 = vshrl.u32 %v2412, 7
      %v2414 = vsub.s32 7, %v2413
      %v2415 = vrot.slane %v590, %v2414
      %2417 = vbcast.lane.b32.xlu0 %v2415, 256
      %v2418 = vpop.permute.xlu0 %2417
      %v2419 = vlaneseq
      %v2420 = vshrl.u32 %v2419, 7
      %v2421 = vsub.s32 0, %v2420
      %v2422 = vrot.slane %v591, %v2421
      %2424 = vbcast.lane.b32.xlu0 %v2422, 256
      %v2425 = vpop.permute.xlu0 %2424
      %v2426 = vlaneseq
      %v2427 = vshrl.u32 %v2426, 7
      %v2428 = vsub.s32 1, %v2427
      %v2429 = vrot.slane %v591, %v2428
      %2431 = vbcast.lane.b32.xlu0 %v2429, 256
      %v2432 = vpop.permute.xlu0 %2431
      %v2433 = vlaneseq
      %v2434 = vshrl.u32 %v2433, 7
      %v2435 = vsub.s32 2, %v2434
      %v2436 = vrot.slane %v591, %v2435
      %2438 = vbcast.lane.b32.xlu0 %v2436, 256
      %v2439 = vpop.permute.xlu0 %2438
      %v2440 = vlaneseq
      %v2441 = vshrl.u32 %v2440, 7
      %v2442 = vsub.s32 3, %v2441
      %v2443 = vrot.slane %v591, %v2442
      %2445 = vbcast.lane.b32.xlu0 %v2443, 256
      %v2446 = vpop.permute.xlu0 %2445
      %v2447 = vlaneseq
      %v2448 = vshrl.u32 %v2447, 7
      %v2449 = vsub.s32 4, %v2448
      %v2450 = vrot.slane %v591, %v2449
      %2452 = vbcast.lane.b32.xlu0 %v2450, 256
      %v2453 = vpop.permute.xlu0 %2452
      %v2454 = vlaneseq
      %v2455 = vshrl.u32 %v2454, 7
      %v2456 = vsub.s32 5, %v2455
      %v2457 = vrot.slane %v591, %v2456
      %2459 = vbcast.lane.b32.xlu0 %v2457, 256
      %v2460 = vpop.permute.xlu0 %2459
      %v2461 = vlaneseq
      %v2462 = vshrl.u32 %v2461, 7
      %v2463 = vsub.s32 6, %v2462
      %v2464 = vrot.slane %v591, %v2463
      %2466 = vbcast.lane.b32.xlu0 %v2464, 256
      %v2467 = vpop.permute.xlu0 %2466
      %v2468 = vlaneseq
      %v2469 = vshrl.u32 %v2468, 7
      %v2470 = vsub.s32 7, %v2469
      %v2471 = vrot.slane %v591, %v2470
      %2473 = vbcast.lane.b32.xlu0 %v2471, 256
      %v2474 = vpop.permute.xlu0 %2473
      %v2475 = vlaneseq
      %v2476 = vshrl.u32 %v2475, 7
      %v2477 = vsub.s32 0, %v2476
      %v2478 = vrot.slane %v592, %v2477
      %2480 = vbcast.lane.b32.xlu0 %v2478, 256
      %v2481 = vpop.permute.xlu0 %2480
      %v2482 = vlaneseq
      %v2483 = vshrl.u32 %v2482, 7
      %v2484 = vsub.s32 1, %v2483
      %v2485 = vrot.slane %v592, %v2484
      %2487 = vbcast.lane.b32.xlu0 %v2485, 256
      %v2488 = vpop.permute.xlu0 %2487
      %v2489 = vlaneseq
      %v2490 = vshrl.u32 %v2489, 7
      %v2491 = vsub.s32 2, %v2490
      %v2492 = vrot.slane %v592, %v2491
      %2494 = vbcast.lane.b32.xlu0 %v2492, 256
      %v2495 = vpop.permute.xlu0 %2494
      %v2496 = vlaneseq
      %v2497 = vshrl.u32 %v2496, 7
      %v2498 = vsub.s32 3, %v2497
      %v2499 = vrot.slane %v592, %v2498
      %2501 = vbcast.lane.b32.xlu0 %v2499, 256
      %v2502 = vpop.permute.xlu0 %2501
      %v2503 = vlaneseq
      %v2504 = vshrl.u32 %v2503, 7
      %v2505 = vsub.s32 4, %v2504
      %v2506 = vrot.slane %v592, %v2505
      %2508 = vbcast.lane.b32.xlu0 %v2506, 256
      %v2509 = vpop.permute.xlu0 %2508
      %v2510 = vlaneseq
      %v2511 = vshrl.u32 %v2510, 7
      %v2512 = vsub.s32 5, %v2511
      %v2513 = vrot.slane %v592, %v2512
      %2515 = vbcast.lane.b32.xlu0 %v2513, 256
      %v2516 = vpop.permute.xlu0 %2515
      %v2517 = vlaneseq
      %v2518 = vshrl.u32 %v2517, 7
      %v2519 = vsub.s32 6, %v2518
      %v2520 = vrot.slane %v592, %v2519
      %2522 = vbcast.lane.b32.xlu0 %v2520, 256
      %v2523 = vpop.permute.xlu0 %2522
      %v2524 = vlaneseq
      %v2525 = vshrl.u32 %v2524, 7
      %v2526 = vsub.s32 7, %v2525
      %v2527 = vrot.slane %v592, %v2526
      %2529 = vbcast.lane.b32.xlu0 %v2527, 256
      %v2530 = vpop.permute.xlu0 %2529
      %v2531 = vlaneseq
      %v2532 = vshrl.u32 %v2531, 7
      %v2533 = vsub.s32 0, %v2532
      %v2534 = vrot.slane %v593, %v2533
      %2536 = vbcast.lane.b32.xlu0 %v2534, 256
      %v2537 = vpop.permute.xlu0 %2536
      %v2538 = vlaneseq
      %v2539 = vshrl.u32 %v2538, 7
      %v2540 = vsub.s32 1, %v2539
      %v2541 = vrot.slane %v593, %v2540
      %2543 = vbcast.lane.b32.xlu0 %v2541, 256
      %v2544 = vpop.permute.xlu0 %2543
      %v2545 = vlaneseq
      %v2546 = vshrl.u32 %v2545, 7
      %v2547 = vsub.s32 2, %v2546
      %v2548 = vrot.slane %v593, %v2547
      %2550 = vbcast.lane.b32.xlu0 %v2548, 256
      %v2551 = vpop.permute.xlu0 %2550
      %v2552 = vlaneseq
      %v2553 = vshrl.u32 %v2552, 7
      %v2554 = vsub.s32 3, %v2553
      %v2555 = vrot.slane %v593, %v2554
      %2557 = vbcast.lane.b32.xlu0 %v2555, 256
      %v2558 = vpop.permute.xlu0 %2557
      %v2559 = vlaneseq
      %v2560 = vshrl.u32 %v2559, 7
      %v2561 = vsub.s32 4, %v2560
      %v2562 = vrot.slane %v593, %v2561
      %2564 = vbcast.lane.b32.xlu0 %v2562, 256
      %v2565 = vpop.permute.xlu0 %2564
      %v2566 = vlaneseq
      %v2567 = vshrl.u32 %v2566, 7
      %v2568 = vsub.s32 5, %v2567
      %v2569 = vrot.slane %v593, %v2568
      %2571 = vbcast.lane.b32.xlu0 %v2569, 256
      %v2572 = vpop.permute.xlu0 %2571
      %v2573 = vlaneseq
      %v2574 = vshrl.u32 %v2573, 7
      %v2575 = vsub.s32 6, %v2574
      %v2576 = vrot.slane %v593, %v2575
      %2578 = vbcast.lane.b32.xlu0 %v2576, 256
      %v2579 = vpop.permute.xlu0 %2578
      %v2580 = vlaneseq
      %v2581 = vshrl.u32 %v2580, 7
      %v2582 = vsub.s32 7, %v2581
      %v2583 = vrot.slane %v593, %v2582
      %2585 = vbcast.lane.b32.xlu0 %v2583, 256
      %v2586 = vpop.permute.xlu0 %2585
      %v2587 = vlaneseq
      %v2588 = vshrl.u32 %v2587, 7
      %v2589 = vsub.s32 0, %v2588
      %v2590 = vrot.slane %v594, %v2589
      %2592 = vbcast.lane.b32.xlu0 %v2590, 256
      %v2593 = vpop.permute.xlu0 %2592
      %v2594 = vlaneseq
      %v2595 = vshrl.u32 %v2594, 7
      %v2596 = vsub.s32 1, %v2595
      %v2597 = vrot.slane %v594, %v2596
      %2599 = vbcast.lane.b32.xlu0 %v2597, 256
      %v2600 = vpop.permute.xlu0 %2599
      %v2601 = vlaneseq
      %v2602 = vshrl.u32 %v2601, 7
      %v2603 = vsub.s32 2, %v2602
      %v2604 = vrot.slane %v594, %v2603
      %2606 = vbcast.lane.b32.xlu0 %v2604, 256
      %v2607 = vpop.permute.xlu0 %2606
      %v2608 = vlaneseq
      %v2609 = vshrl.u32 %v2608, 7
      %v2610 = vsub.s32 3, %v2609
      %v2611 = vrot.slane %v594, %v2610
      %2613 = vbcast.lane.b32.xlu0 %v2611, 256
      %v2614 = vpop.permute.xlu0 %2613
      %v2615 = vlaneseq
      %v2616 = vshrl.u32 %v2615, 7
      %v2617 = vsub.s32 4, %v2616
      %v2618 = vrot.slane %v594, %v2617
      %2620 = vbcast.lane.b32.xlu0 %v2618, 256
      %v2621 = vpop.permute.xlu0 %2620
      %v2622 = vlaneseq
      %v2623 = vshrl.u32 %v2622, 7
      %v2624 = vsub.s32 5, %v2623
      %v2625 = vrot.slane %v594, %v2624
      %2627 = vbcast.lane.b32.xlu0 %v2625, 256
      %v2628 = vpop.permute.xlu0 %2627
      %v2629 = vlaneseq
      %v2630 = vshrl.u32 %v2629, 7
      %v2631 = vsub.s32 6, %v2630
      %v2632 = vrot.slane %v594, %v2631
      %2634 = vbcast.lane.b32.xlu0 %v2632, 256
      %v2635 = vpop.permute.xlu0 %2634
      %v2636 = vlaneseq
      %v2637 = vshrl.u32 %v2636, 7
      %v2638 = vsub.s32 7, %v2637
      %v2639 = vrot.slane %v594, %v2638
      %2641 = vbcast.lane.b32.xlu0 %v2639, 256
      %v2642 = vpop.permute.xlu0 %2641
      %v2643 = vmul.f32 %v595, %v857
      %v2644 = vmul.f32 %v596, %v864
      %v2645 = vmul.f32 %v597, %v871
      %v2646 = vmul.f32 %v598, %v878
      %v2647 = vmul.f32 %v599, %v885
      %v2648 = vmul.f32 %v600, %v892
      %v2649 = vmul.f32 %v601, %v899
      %v2650 = vmul.f32 %v602, %v906
      %v2651 = vmul.f32 %v603, %v913
      %v2652 = vmul.f32 %v604, %v920
      %v2653 = vmul.f32 %v605, %v927
      %v2654 = vmul.f32 %v606, %v934
      %v2655 = vmul.f32 %v607, %v941
      %v2656 = vmul.f32 %v608, %v948
      %v2657 = vmul.f32 %v609, %v955
      %v2658 = vmul.f32 %v610, %v962
      %v2659 = vmul.f32 %v611, %v969
      %v2660 = vmul.f32 %v612, %v976
      %v2661 = vmul.f32 %v613, %v983
      %v2662 = vmul.f32 %v614, %v990
      %v2663 = vmul.f32 %v615, %v997
      %v2664 = vmul.f32 %v616, %v1004
      %v2665 = vmul.f32 %v617, %v1011
      %v2666 = vmul.f32 %v618, %v1018
      %v2667 = vmul.f32 %v619, %v1025
      %v2668 = vmul.f32 %v620, %v1032
      %v2669 = vmul.f32 %v621, %v1039
      %v2670 = vmul.f32 %v622, %v1046
      %v2671 = vmul.f32 %v623, %v1053
      %v2672 = vmul.f32 %v624, %v1060
      %v2673 = vmul.f32 %v625, %v1067
      %v2674 = vmul.f32 %v626, %v1074
      %v2675 = vmul.f32 %v627, %v1081
      %v2676 = vmul.f32 %v628, %v1088
      %v2677 = vmul.f32 %v629, %v1095
      %v2678 = vmul.f32 %v630, %v1102
      %v2679 = vmul.f32 %v631, %v1109
      %v2680 = vmul.f32 %v632, %v1116
      %v2681 = vmul.f32 %v633, %v1123
      %v2682 = vmul.f32 %v634, %v1130
      %v2683 = vmul.f32 %v635, %v1137
      %v2684 = vmul.f32 %v636, %v1144
      %v2685 = vmul.f32 %v637, %v1151
      %v2686 = vmul.f32 %v638, %v1158
      %v2687 = vmul.f32 %v639, %v1165
      %v2688 = vmul.f32 %v640, %v1172
      %v2689 = vmul.f32 %v641, %v1179
      %v2690 = vmul.f32 %v642, %v1186
      %v2691 = vmul.f32 %v643, %v1193
      %v2692 = vmul.f32 %v644, %v1200
      %v2693 = vmul.f32 %v645, %v1207
      %v2694 = vmul.f32 %v646, %v1214
      %v2695 = vmul.f32 %v647, %v1221
      %v2696 = vmul.f32 %v648, %v1228
      %v2697 = vmul.f32 %v649, %v1235
      %v2698 = vmul.f32 %v650, %v1242
      %v2699 = vmul.f32 %v651, %v1249
      %v2700 = vmul.f32 %v652, %v1256
      %v2701 = vmul.f32 %v653, %v1263
      %v2702 = vmul.f32 %v654, %v1270
      %v2703 = vmul.f32 %v655, %v1277
      %v2704 = vmul.f32 %v656, %v1284
      %v2705 = vmul.f32 %v657, %v1291
      %v2706 = vmul.f32 %v658, %v1298
      %v2707 = vmul.f32 %v659, %v1305
      %v2708 = vmul.f32 %v660, %v1312
      %v2709 = vmul.f32 %v661, %v1319
      %v2710 = vmul.f32 %v662, %v1326
      %v2711 = vmul.f32 %v663, %v1333
      %v2712 = vmul.f32 %v664, %v1340
      %v2713 = vmul.f32 %v665, %v1347
      %v2714 = vmul.f32 %v666, %v1354
      %v2715 = vmul.f32 %v667, %v1361
      %v2716 = vmul.f32 %v668, %v1368
      %v2717 = vmul.f32 %v669, %v1375
      %v2718 = vmul.f32 %v670, %v1382
      %v2719 = vmul.f32 %v671, %v1389
      %v2720 = vmul.f32 %v672, %v1396
      %v2721 = vmul.f32 %v673, %v1403
      %v2722 = vmul.f32 %v674, %v1410
      %v2723 = vmul.f32 %v675, %v1417
      %v2724 = vmul.f32 %v676, %v1424
      %v2725 = vmul.f32 %v677, %v1431
      %v2726 = vmul.f32 %v678, %v1438
      %v2727 = vmul.f32 %v679, %v1445
      %v2728 = vmul.f32 %v680, %v1452
      %v2729 = vmul.f32 %v681, %v1459
      %v2730 = vmul.f32 %v682, %v1466
      %v2731 = vmul.f32 %v683, %v1473
      %v2732 = vmul.f32 %v684, %v1480
      %v2733 = vmul.f32 %v685, %v1487
      %v2734 = vmul.f32 %v686, %v1494
      %v2735 = vmul.f32 %v687, %v1501
      %v2736 = vmul.f32 %v688, %v1508
      %v2737 = vmul.f32 %v689, %v1515
      %v2738 = vmul.f32 %v690, %v1522
      %v2739 = vmul.f32 %v691, %v1529
      %v2740 = vmul.f32 %v692, %v1536
      %v2741 = vmul.f32 %v693, %v1543
      %v2742 = vmul.f32 %v694, %v1550
      %v2743 = vmul.f32 %v695, %v1557
      %v2744 = vmul.f32 %v696, %v1564
      %v2745 = vmul.f32 %v697, %v1571
      %v2746 = vmul.f32 %v698, %v1578
      %v2747 = vmul.f32 %v699, %v1585
      %v2748 = vmul.f32 %v700, %v1592
      %v2749 = vmul.f32 %v701, %v1599
      %v2750 = vmul.f32 %v702, %v1606
      %v2751 = vmul.f32 %v703, %v1613
      %v2752 = vmul.f32 %v704, %v1620
      %v2753 = vmul.f32 %v705, %v1627
      %v2754 = vmul.f32 %v706, %v1634
      %v2755 = vmul.f32 %v707, %v1641
      %v2756 = vmul.f32 %v708, %v1648
      %v2757 = vmul.f32 %v709, %v1655
      %v2758 = vmul.f32 %v710, %v1662
      %v2759 = vmul.f32 %v711, %v1669
      %v2760 = vmul.f32 %v712, %v1676
      %v2761 = vmul.f32 %v713, %v1683
      %v2762 = vmul.f32 %v714, %v1690
      %v2763 = vmul.f32 %v715, %v1697
      %v2764 = vmul.f32 %v716, %v1704
      %v2765 = vmul.f32 %v717, %v1711
      %v2766 = vmul.f32 %v718, %v1718
      %v2767 = vmul.f32 %v719, %v1725
      %v2768 = vmul.f32 %v720, %v1732
      %v2769 = vmul.f32 %v721, %v1739
      %v2770 = vmul.f32 %v722, %v1746
      %v2771 = vmul.f32 %v723, %v1753
      %v2772 = vmul.f32 %v724, %v1760
      %v2773 = vmul.f32 %v725, %v1767
      %v2774 = vmul.f32 %v726, %v1774
      %v2775 = vmul.f32 %v727, %v1781
      %v2776 = vmul.f32 %v728, %v1788
      %v2777 = vmul.f32 %v729, %v1795
      %v2778 = vmul.f32 %v730, %v1802
      %v2779 = vmul.f32 %v731, %v1809
      %v2780 = vmul.f32 %v732, %v1816
      %v2781 = vmul.f32 %v733, %v1823
      %v2782 = vmul.f32 %v734, %v1830
      %v2783 = vmul.f32 %v735, %v1837
      %v2784 = vmul.f32 %v736, %v1844
      %v2785 = vmul.f32 %v737, %v1851
      %v2786 = vmul.f32 %v738, %v1858
      %v2787 = vmul.f32 %v739, %v1865
      %v2788 = vmul.f32 %v740, %v1872
      %v2789 = vmul.f32 %v741, %v1879
      %v2790 = vmul.f32 %v742, %v1886
      %v2791 = vmul.f32 %v743, %v1893
      %v2792 = vmul.f32 %v744, %v1900
      %v2793 = vmul.f32 %v745, %v1907
      %v2794 = vmul.f32 %v746, %v1914
      %v2795 = vmul.f32 %v747, %v1921
      %v2796 = vmul.f32 %v748, %v1928
      %v2797 = vmul.f32 %v749, %v1935
      %v2798 = vmul.f32 %v750, %v1942
      %v2799 = vmul.f32 %v751, %v1949
      %v2800 = vmul.f32 %v752, %v1956
      %v2801 = vmul.f32 %v753, %v1963
      %v2802 = vmul.f32 %v754, %v1970
      %v2803 = vmul.f32 %v755, %v1977
      %v2804 = vmul.f32 %v756, %v1984
      %v2805 = vmul.f32 %v757, %v1991
      %v2806 = vmul.f32 %v758, %v1998
      %v2807 = vmul.f32 %v759, %v2005
      %v2808 = vmul.f32 %v760, %v2012
      %v2809 = vmul.f32 %v761, %v2019
      %v2810 = vmul.f32 %v762, %v2026
      %v2811 = vmul.f32 %v763, %v2033
      %v2812 = vmul.f32 %v764, %v2040
      %v2813 = vmul.f32 %v765, %v2047
      %v2814 = vmul.f32 %v766, %v2054
      %v2815 = vmul.f32 %v767, %v2061
      %v2816 = vmul.f32 %v768, %v2068
      %v2817 = vmul.f32 %v769, %v2075
      %v2818 = vmul.f32 %v770, %v2082
      %v2819 = vmul.f32 %v771, %v2089
      %v2820 = vmul.f32 %v772, %v2096
      %v2821 = vmul.f32 %v773, %v2103
      %v2822 = vmul.f32 %v774, %v2110
      %v2823 = vmul.f32 %v775, %v2117
      %v2824 = vmul.f32 %v776, %v2124
      %v2825 = vmul.f32 %v777, %v2131
      %v2826 = vmul.f32 %v778, %v2138
      %v2827 = vmul.f32 %v779, %v2145
      %v2828 = vmul.f32 %v780, %v2152
      %v2829 = vmul.f32 %v781, %v2159
      %v2830 = vmul.f32 %v782, %v2166
      %v2831 = vmul.f32 %v783, %v2173
      %v2832 = vmul.f32 %v784, %v2180
      %v2833 = vmul.f32 %v785, %v2187
      %v2834 = vmul.f32 %v786, %v2194
      %v2835 = vmul.f32 %v787, %v2201
      %v2836 = vmul.f32 %v788, %v2208
      %v2837 = vmul.f32 %v789, %v2215
      %v2838 = vmul.f32 %v790, %v2222
      %v2839 = vmul.f32 %v791, %v2229
      %v2840 = vmul.f32 %v792, %v2236
      %v2841 = vmul.f32 %v793, %v2243
      %v2842 = vmul.f32 %v794, %v2250
      %v2843 = vmul.f32 %v795, %v2257
      %v2844 = vmul.f32 %v796, %v2264
      %v2845 = vmul.f32 %v797, %v2271
      %v2846 = vmul.f32 %v798, %v2278
      %v2847 = vmul.f32 %v799, %v2285
      %v2848 = vmul.f32 %v800, %v2292
      %v2849 = vmul.f32 %v801, %v2299
      %v2850 = vmul.f32 %v802, %v2306
      %v2851 = vmul.f32 %v803, %v2313
      %v2852 = vmul.f32 %v804, %v2320
      %v2853 = vmul.f32 %v805, %v2327
      %v2854 = vmul.f32 %v806, %v2334
      %v2855 = vmul.f32 %v807, %v2341
      %v2856 = vmul.f32 %v808, %v2348
      %v2857 = vmul.f32 %v809, %v2355
      %v2858 = vmul.f32 %v810, %v2362
      %v2859 = vmul.f32 %v811, %v2369
      %v2860 = vmul.f32 %v812, %v2376
      %v2861 = vmul.f32 %v813, %v2383
      %v2862 = vmul.f32 %v814, %v2390
      %v2863 = vmul.f32 %v815, %v2397
      %v2864 = vmul.f32 %v816, %v2404
      %v2865 = vmul.f32 %v817, %v2411
      %v2866 = vmul.f32 %v818, %v2418
      %v2867 = vmul.f32 %v819, %v2425
      %v2868 = vmul.f32 %v820, %v2432
      %v2869 = vmul.f32 %v821, %v2439
      %v2870 = vmul.f32 %v822, %v2446
      %v2871 = vmul.f32 %v823, %v2453
      %v2872 = vmul.f32 %v824, %v2460
      %v2873 = vmul.f32 %v825, %v2467
      %v2874 = vmul.f32 %v826, %v2474
      %v2875 = vmul.f32 %v827, %v2481
      %v2876 = vmul.f32 %v828, %v2488
      %v2877 = vmul.f32 %v829, %v2495
      %v2878 = vmul.f32 %v830, %v2502
      %v2879 = vmul.f32 %v831, %v2509
      %v2880 = vmul.f32 %v832, %v2516
      %v2881 = vmul.f32 %v833, %v2523
      %v2882 = vmul.f32 %v834, %v2530
      %v2883 = vmul.f32 %v835, %v2537
      %v2884 = vmul.f32 %v836, %v2544
      %v2885 = vmul.f32 %v837, %v2551
      %v2886 = vmul.f32 %v838, %v2558
      %v2887 = vmul.f32 %v839, %v2565
      %v2888 = vmul.f32 %v840, %v2572
      %v2889 = vmul.f32 %v841, %v2579
      %v2890 = vmul.f32 %v842, %v2586
      %v2891 = vmul.f32 %v843, %v2593
      %v2892 = vmul.f32 %v844, %v2600
      %v2893 = vmul.f32 %v845, %v2607
      %v2894 = vmul.f32 %v846, %v2614
      %v2895 = vmul.f32 %v847, %v2621
      %v2896 = vmul.f32 %v848, %v2628
      %v2897 = vmul.f32 %v849, %v2635
      %v2898 = vmul.f32 %v850, %v2642
      %v2899 = vld [vmem:[%s2] sm:$0x3f]
      %v2900 = vld [vmem:[%s3] sm:$0x1]
      %v2902 = vlaneseq
      %v2903 = vshrl.u32 %v2902, 7
      %v2904 = vsub.s32 0, %v2903
      %v2905 = vrot.slane %v2900, %v2904
      %vm2907 = vcmask 48128
      %v2909 = vsel %vm2907, %v2643, 0
      %v2912 = vsel %vm2907, %v2644, 0
      %v2915 = vsel %vm2907, %v2645, 0
      %v2918 = vsel %vm2907, %v2646, 0
      %v2921 = vsel %vm2907, %v2647, 0
      %v2924 = vsel %vm2907, %v2648, 0
      %v2927 = vsel %vm2907, %v2649, 0
      %v2930 = vsel %vm2907, %v2650, 0
      %v2933 = vsel %vm2907, %v2651, 0
      %v2936 = vsel %vm2907, %v2652, 0
      %v2939 = vsel %vm2907, %v2653, 0
      %v2942 = vsel %vm2907, %v2654, 0
      %v2945 = vsel %vm2907, %v2655, 0
      %v2948 = vsel %vm2907, %v2656, 0
      %v2951 = vsel %vm2907, %v2657, 0
      %v2954 = vsel %vm2907, %v2658, 0
      %v2957 = vsel %vm2907, %v2659, 0
      %v2960 = vsel %vm2907, %v2660, 0
      %v2963 = vsel %vm2907, %v2661, 0
      %v2966 = vsel %vm2907, %v2662, 0
      %v2969 = vsel %vm2907, %v2663, 0
      %v2972 = vsel %vm2907, %v2664, 0
      %v2975 = vsel %vm2907, %v2665, 0
      %v2978 = vsel %vm2907, %v2666, 0
      %v2981 = vsel %vm2907, %v2667, 0
      %v2984 = vsel %vm2907, %v2668, 0
      %v2987 = vsel %vm2907, %v2669, 0
      %v2990 = vsel %vm2907, %v2670, 0
      %v2993 = vsel %vm2907, %v2671, 0
      %v2996 = vsel %vm2907, %v2672, 0
      %v2999 = vsel %vm2907, %v2673, 0
      %v3002 = vsel %vm2907, %v2674, 0
      %v3005 = vsel %vm2907, %v2675, 0
      %v3008 = vsel %vm2907, %v2676, 0
      %v3011 = vsel %vm2907, %v2677, 0
      %v3014 = vsel %vm2907, %v2678, 0
      %v3017 = vsel %vm2907, %v2679, 0
      %v3020 = vsel %vm2907, %v2680, 0
      %v3023 = vsel %vm2907, %v2681, 0
      %v3026 = vsel %vm2907, %v2682, 0
      %v3029 = vsel %vm2907, %v2683, 0
      %v3032 = vsel %vm2907, %v2684, 0
      %v3035 = vsel %vm2907, %v2685, 0
      %v3038 = vsel %vm2907, %v2686, 0
      %v3041 = vsel %vm2907, %v2687, 0
      %v3044 = vsel %vm2907, %v2688, 0
      %v3047 = vsel %vm2907, %v2689, 0
      %v3050 = vsel %vm2907, %v2690, 0
      %v3053 = vsel %vm2907, %v2691, 0
      %v3056 = vsel %vm2907, %v2692, 0
      %v3059 = vsel %vm2907, %v2693, 0
      %v3062 = vsel %vm2907, %v2694, 0
      %v3065 = vsel %vm2907, %v2695, 0
      %v3068 = vsel %vm2907, %v2696, 0
      %v3071 = vsel %vm2907, %v2697, 0
      %v3074 = vsel %vm2907, %v2698, 0
      %v3077 = vsel %vm2907, %v2699, 0
      %v3080 = vsel %vm2907, %v2700, 0
      %v3083 = vsel %vm2907, %v2701, 0
      %v3086 = vsel %vm2907, %v2702, 0
      %v3089 = vsel %vm2907, %v2703, 0
      %v3092 = vsel %vm2907, %v2704, 0
      %v3095 = vsel %vm2907, %v2705, 0
      %v3098 = vsel %vm2907, %v2706, 0
      %v3101 = vsel %vm2907, %v2707, 0
      %v3104 = vsel %vm2907, %v2708, 0
      %v3107 = vsel %vm2907, %v2709, 0
      %v3110 = vsel %vm2907, %v2710, 0
      %v3113 = vsel %vm2907, %v2711, 0
      %v3116 = vsel %vm2907, %v2712, 0
      %v3119 = vsel %vm2907, %v2713, 0
      %v3122 = vsel %vm2907, %v2714, 0
      %v3125 = vsel %vm2907, %v2715, 0
      %v3128 = vsel %vm2907, %v2716, 0
      %v3131 = vsel %vm2907, %v2717, 0
      %v3134 = vsel %vm2907, %v2718, 0
      %v3137 = vsel %vm2907, %v2719, 0
      %v3140 = vsel %vm2907, %v2720, 0
      %v3143 = vsel %vm2907, %v2721, 0
      %v3146 = vsel %vm2907, %v2722, 0
      %v3149 = vsel %vm2907, %v2723, 0
      %v3152 = vsel %vm2907, %v2724, 0
      %v3155 = vsel %vm2907, %v2725, 0
      %v3158 = vsel %vm2907, %v2726, 0
      %v3161 = vsel %vm2907, %v2727, 0
      %v3164 = vsel %vm2907, %v2728, 0
      %v3167 = vsel %vm2907, %v2729, 0
      %v3170 = vsel %vm2907, %v2730, 0
      %v3173 = vsel %vm2907, %v2731, 0
      %v3176 = vsel %vm2907, %v2732, 0
      %v3179 = vsel %vm2907, %v2733, 0
      %v3182 = vsel %vm2907, %v2734, 0
      %v3185 = vsel %vm2907, %v2735, 0
      %v3188 = vsel %vm2907, %v2736, 0
      %v3191 = vsel %vm2907, %v2737, 0
      %v3194 = vsel %vm2907, %v2738, 0
      %v3197 = vsel %vm2907, %v2739, 0
      %v3200 = vsel %vm2907, %v2740, 0
      %v3203 = vsel %vm2907, %v2741, 0
      %v3206 = vsel %vm2907, %v2742, 0
      %v3209 = vsel %vm2907, %v2743, 0
      %v3212 = vsel %vm2907, %v2744, 0
      %v3215 = vsel %vm2907, %v2745, 0
      %v3218 = vsel %vm2907, %v2746, 0
      %v3221 = vsel %vm2907, %v2747, 0
      %v3224 = vsel %vm2907, %v2748, 0
      %v3227 = vsel %vm2907, %v2749, 0
      %v3230 = vsel %vm2907, %v2750, 0
      %v3233 = vsel %vm2907, %v2751, 0
      %v3236 = vsel %vm2907, %v2752, 0
      %v3239 = vsel %vm2907, %v2753, 0
      %v3242 = vsel %vm2907, %v2754, 0
      %v3245 = vsel %vm2907, %v2755, 0
      %v3248 = vsel %vm2907, %v2756, 0
      %v3251 = vsel %vm2907, %v2757, 0
      %v3254 = vsel %vm2907, %v2758, 0
      %v3257 = vsel %vm2907, %v2759, 0
      %v3260 = vsel %vm2907, %v2760, 0
      %v3263 = vsel %vm2907, %v2761, 0
      %v3266 = vsel %vm2907, %v2762, 0
      %v3269 = vsel %vm2907, %v2763, 0
      %v3272 = vsel %vm2907, %v2764, 0
      %v3275 = vsel %vm2907, %v2765, 0
      %v3278 = vsel %vm2907, %v2766, 0
      %v3281 = vsel %vm2907, %v2767, 0
      %v3284 = vsel %vm2907, %v2768, 0
      %v3287 = vsel %vm2907, %v2769, 0
      %v3290 = vsel %vm2907, %v2770, 0
      %v3293 = vsel %vm2907, %v2771, 0
      %v3296 = vsel %vm2907, %v2772, 0
      %v3299 = vsel %vm2907, %v2773, 0
      %v3302 = vsel %vm2907, %v2774, 0
      %v3305 = vsel %vm2907, %v2775, 0
      %v3308 = vsel %vm2907, %v2776, 0
      %v3311 = vsel %vm2907, %v2777, 0
      %v3314 = vsel %vm2907, %v2778, 0
      %v3317 = vsel %vm2907, %v2779, 0
      %v3320 = vsel %vm2907, %v2780, 0
      %v3323 = vsel %vm2907, %v2781, 0
      %v3326 = vsel %vm2907, %v2782, 0
      %v3329 = vsel %vm2907, %v2783, 0
      %v3332 = vsel %vm2907, %v2784, 0
      %v3335 = vsel %vm2907, %v2785, 0
      %v3338 = vsel %vm2907, %v2786, 0
      %v3341 = vsel %vm2907, %v2787, 0
      %v3344 = vsel %vm2907, %v2788, 0
      %v3347 = vsel %vm2907, %v2789, 0
      %v3350 = vsel %vm2907, %v2790, 0
      %v3353 = vsel %vm2907, %v2791, 0
      %v3356 = vsel %vm2907, %v2792, 0
      %v3359 = vsel %vm2907, %v2793, 0
      %v3362 = vsel %vm2907, %v2794, 0
      %v3365 = vsel %vm2907, %v2795, 0
      %v3368 = vsel %vm2907, %v2796, 0
      %v3371 = vsel %vm2907, %v2797, 0
      %v3374 = vsel %vm2907, %v2798, 0
      %v3377 = vsel %vm2907, %v2799, 0
      %v3380 = vsel %vm2907, %v2800, 0
      %v3383 = vsel %vm2907, %v2801, 0
      %v3386 = vsel %vm2907, %v2802, 0
      %v3389 = vsel %vm2907, %v2803, 0
      %v3392 = vsel %vm2907, %v2804, 0
      %v3395 = vsel %vm2907, %v2805, 0
      %v3398 = vsel %vm2907, %v2806, 0
      %v3401 = vsel %vm2907, %v2807, 0
      %v3404 = vsel %vm2907, %v2808, 0
      %v3407 = vsel %vm2907, %v2809, 0
      %v3410 = vsel %vm2907, %v2810, 0
      %v3413 = vsel %vm2907, %v2811, 0
      %v3416 = vsel %vm2907, %v2812, 0
      %v3419 = vsel %vm2907, %v2813, 0
      %v3422 = vsel %vm2907, %v2814, 0
      %v3425 = vsel %vm2907, %v2815, 0
      %v3428 = vsel %vm2907, %v2816, 0
      %v3431 = vsel %vm2907, %v2817, 0
      %v3434 = vsel %vm2907, %v2818, 0
      %v3437 = vsel %vm2907, %v2819, 0
      %v3440 = vsel %vm2907, %v2820, 0
      %v3443 = vsel %vm2907, %v2821, 0
      %v3446 = vsel %vm2907, %v2822, 0
      %v3449 = vsel %vm2907, %v2823, 0
      %v3452 = vsel %vm2907, %v2824, 0
      %v3455 = vsel %vm2907, %v2825, 0
      %v3458 = vsel %vm2907, %v2826, 0
      %v3461 = vsel %vm2907, %v2827, 0
      %v3464 = vsel %vm2907, %v2828, 0
      %v3467 = vsel %vm2907, %v2829, 0
      %v3470 = vsel %vm2907, %v2830, 0
      %v3473 = vsel %vm2907, %v2831, 0
      %v3476 = vsel %vm2907, %v2832, 0
      %v3479 = vsel %vm2907, %v2833, 0
      %v3482 = vsel %vm2907, %v2834, 0
      %v3485 = vsel %vm2907, %v2835, 0
      %v3488 = vsel %vm2907, %v2836, 0
      %v3491 = vsel %vm2907, %v2837, 0
      %v3494 = vsel %vm2907, %v2838, 0
      %v3497 = vsel %vm2907, %v2839, 0
      %v3500 = vsel %vm2907, %v2840, 0
      %v3503 = vsel %vm2907, %v2841, 0
      %v3506 = vsel %vm2907, %v2842, 0
      %v3509 = vsel %vm2907, %v2843, 0
      %v3512 = vsel %vm2907, %v2844, 0
      %v3515 = vsel %vm2907, %v2845, 0
      %v3518 = vsel %vm2907, %v2846, 0
      %v3521 = vsel %vm2907, %v2847, 0
      %v3524 = vsel %vm2907, %v2848, 0
      %v3527 = vsel %vm2907, %v2849, 0
      %v3530 = vsel %vm2907, %v2850, 0
      %v3533 = vsel %vm2907, %v2851, 0
      %v3536 = vsel %vm2907, %v2852, 0
      %v3539 = vsel %vm2907, %v2853, 0
      %v3542 = vsel %vm2907, %v2854, 0
      %v3545 = vsel %vm2907, %v2855, 0
      %v3548 = vsel %vm2907, %v2856, 0
      %v3551 = vsel %vm2907, %v2857, 0
      %v3554 = vsel %vm2907, %v2858, 0
      %v3557 = vsel %vm2907, %v2859, 0
      %v3560 = vsel %vm2907, %v2860, 0
      %v3563 = vsel %vm2907, %v2861, 0
      %v3566 = vsel %vm2907, %v2862, 0
      %v3569 = vsel %vm2907, %v2863, 0
      %v3572 = vsel %vm2907, %v2864, 0
      %v3575 = vsel %vm2907, %v2865, 0
      %v3578 = vsel %vm2907, %v2866, 0
      %v3581 = vsel %vm2907, %v2867, 0
      %v3584 = vsel %vm2907, %v2868, 0
      %v3587 = vsel %vm2907, %v2869, 0
      %v3590 = vsel %vm2907, %v2870, 0
      %v3593 = vsel %vm2907, %v2871, 0
      %v3596 = vsel %vm2907, %v2872, 0
      %v3599 = vsel %vm2907, %v2873, 0
      %v3602 = vsel %vm2907, %v2874, 0
      %v3605 = vsel %vm2907, %v2875, 0
      %v3608 = vsel %vm2907, %v2876, 0
      %v3611 = vsel %vm2907, %v2877, 0
      %v3614 = vsel %vm2907, %v2878, 0
      %v3617 = vsel %vm2907, %v2879, 0
      %v3620 = vsel %vm2907, %v2880, 0
      %v3623 = vsel %vm2907, %v2881, 0
      %v3626 = vsel %vm2907, %v2882, 0
      %v3629 = vsel %vm2907, %v2883, 0
      %v3632 = vsel %vm2907, %v2884, 0
      %v3635 = vsel %vm2907, %v2885, 0
      %v3638 = vsel %vm2907, %v2886, 0
      %v3641 = vsel %vm2907, %v2887, 0
      %v3644 = vsel %vm2907, %v2888, 0
      %v3647 = vsel %vm2907, %v2889, 0
      %v3650 = vsel %vm2907, %v2890, 0
      %v3653 = vsel %vm2907, %v2891, 0
      %v3656 = vsel %vm2907, %v2892, 0
      %v3659 = vsel %vm2907, %v2893, 0
      %v3662 = vsel %vm2907, %v2894, 0
      %v3665 = vsel %vm2907, %v2895, 0
      %v3668 = vsel %vm2907, %v2896, 0
      %v3671 = vsel %vm2907, %v2897, 0
      %v3674 = vsel %vm2907, %v2898, 0
      %vm3676 = vcmask 1045504
      %v3678 = vsel %vm3676, %v2899, 0
      %3680 = vmatprep.subr.mxu0 0.0
      %3681 = vmatpush1.msra.mxu0 %v3678
      %3682 = vmatprep.subr.mxu0 0.0
      %3683 = vmatpush1.msra.mxu0 0.0
      %3684 = vmatprep.subr.mxu0 0.0
      %3685 = vmatpush1.msra.mxu0 0.0
      %3686 = vmatprep.subr.mxu0 0.0
      %3687 = vmatpush1.msra.mxu0 0.0
      %3688 = vmatprep.subr.mxu0 0.0
      %3689 = vmatpush1.msra.mxu0 0.0
      %3690 = vmatprep.subr.mxu0 0.0
      %3691 = vmatpush1.msra.mxu0 0.0
      %3692 = vmatprep.subr.mxu0 0.0
      %3693 = vmatpush1.msra.mxu0 0.0
      %3694 = vmatprep.subr.mxu0 0.0
      %3695 = vmatpush1.msra.mxu0 0.0
      %3696 = vmatprep.subr.mxu0 0.0
      %3697 = vmatpush1.msra.mxu0 0.0
      %3698 = vmatprep.subr.mxu0 0.0
      %3699 = vmatpush1.msra.mxu0 0.0
      %3700 = vmatprep.subr.mxu0 0.0
      %3701 = vmatpush1.msra.mxu0 0.0
      %3702 = vmatprep.subr.mxu0 0.0
      %3703 = vmatpush1.msra.mxu0 0.0
      %3704 = vmatprep.subr.mxu0 0.0
      %3705 = vmatpush1.msra.mxu0 0.0
      %3706 = vmatprep.subr.mxu0 0.0
      %3707 = vmatpush1.msra.mxu0 0.0
      %3708 = vmatprep.subr.mxu0 0.0
      %3709 = vmatpush1.msra.mxu0 0.0
      %3710 = vmatprep.subr.mxu0 0.0
      %3711 = vmatpush1.msra.mxu0 0.0
      %3712 = vmatprep.subr.mxu0 0.0
      %3713 = vmatpush1.msra.mxu0 0.0
      %3714 = vmatprep.subr.mxu0 0.0
      %3715 = vmatpush1.msra.mxu0 0.0
      %3716 = vmatprep.subr.mxu0 0.0
      %3717 = vmatpush1.msra.mxu0 0.0
      %3718 = vmatprep.subr.mxu0 0.0
      %3719 = vmatpush1.msra.mxu0 0.0
      %3720 = vmatprep.subr.mxu0 0.0
      %3721 = vmatpush1.msra.mxu0 0.0
      %3722 = vmatprep.subr.mxu0 0.0
      %3723 = vmatpush1.msra.mxu0 0.0
      %3724 = vmatprep.subr.mxu0 0.0
      %3725 = vmatpush1.msra.mxu0 0.0
      %3726 = vmatprep.subr.mxu0 0.0
      %3727 = vmatpush1.msra.mxu0 0.0
      %3728 = vmatprep.subr.mxu0 0.0
      %3729 = vmatpush1.msra.mxu0 0.0
      %3730 = vmatprep.subr.mxu0 0.0
      %3731 = vmatpush1.msra.mxu0 0.0
      %3732 = vmatprep.subr.mxu0 0.0
      %3733 = vmatpush1.msra.mxu0 0.0
      %3734 = vmatprep.subr.mxu0 0.0
      %3735 = vmatpush1.msra.mxu0 0.0
      %3736 = vmatprep.subr.mxu0 0.0
      %3737 = vmatpush1.msra.mxu0 0.0
      %3738 = vmatprep.subr.mxu0 0.0
      %3739 = vmatpush1.msra.mxu0 0.0
      %3740 = vmatprep.subr.mxu0 0.0
      %3741 = vmatpush1.msra.mxu0 0.0
      %3742 = vmatprep.subr.mxu0 0.0
      %3743 = vmatpush1.msra.mxu0 0.0
      %3744 = vmatprep.mubr.f32.mxu0 0.0
      %3745 = vmatmul.mubr.f32.gmra.mrb[0].mxu0 %v2909
      %v3746 = vpop.f32.mrb[0].mxu0
      %v3747 = vadd.f32 %v2905, %v3746
      %v3748 = vpop.f32.mrb[0].mxu0
      %3749 = vmatprep.mubr.f32.mxu0 0.0
      %3750 = vmatmul.mubr.f32.gmra.mrb[0].mxu0 %v2912
      %v3751 = vpop.f32.mrb[0].mxu0
      %v3752 = vadd.f32 %v2905, %v3751
      %v3753 = vpop.f32.mrb[0].mxu0
      %3754 = vmatprep.mubr.f32.mxu0 0.0
      %3755 = vmatmul.mubr.f32.gmra.mrb[0].mxu0 %v2915
      %v3756 = vpop.f32.mrb[0].mxu0
      %v3757 = vadd.f32 %v2905, %v3756
      %v3758 = vpop.f32.mrb[0].mxu0
      %3759 = vmatprep.mubr.f32.mxu0 0.0
      %3760 = vmatmul.mubr.f32.gmra.mrb[0].mxu0 %v2918
      %v3761 = vpop.f32.mrb[0].mxu0
      %v3762 = vadd.f32 %v2905, %v3761
      %v3763 = vpop.f32.mrb[0].mxu0
      %3764 = vmatprep.mubr.f32.mxu0 0.0
      %3765 = vmatmul.mubr.f32.gmra.mrb[0].mxu0 %v2921
      %v3766 = vpop.f32.mrb[0].mxu0
      %v3767 = vadd.f32 %v2905, %v3766
      %v3768 = vpop.f32.mrb[0].mxu0
      %3769 = vmatprep.mubr.f32.mxu0 0.0
      %3770 = vmatmul.mubr.f32.gmra.mrb[0].mxu0 %v2924
      %v3771 = vpop.f32.mrb[0].mxu0
      %v3772 = vadd.f32 %v2905, %v3771
      %v3773 = vpop.f32.mrb[0].mxu0
      %3774 = vmatprep.mubr.f32.mxu0 0.0
      %3775 = vmatmul.mubr.f32.gmra.mrb[0].mxu0 %v2927
      %v3776 = vpop.f32.mrb[0].mxu0
      %v3777 = vadd.f32 %v2905, %v3776
      %v3778 = vpop.f32.mrb[0].mxu0
      %3779 = vmatprep.mubr.f32.mxu0 0.0
      %3780 = vmatmul.mubr.f32.gmra.mrb[0].mxu0 %v2930
      %v3781 = vpop.f32.mrb[0].mxu0
      %v3782 = vadd.f32 %v2905, %v3781
      %v3783 = vpop.f32.mrb[0].mxu0
      %3784 = vmatprep.mubr.f32.mxu0 0.0
      %3785 = vmatmul.mubr.f32.gmra.mrb[0].mxu0 %v2933
      %v3786 = vpop.f32.mrb[0].mxu0
      %v3787 = vadd.f32 %v2905, %v3786
      %v3788 = vpop.f32.mrb[0].mxu0
      %3789 = vmatprep.mubr.f32.mxu0 0.0
      %3790 = vmatmul.mubr.f32.gmra.mrb[0].mxu0 %v2936
      %v3791 = vpop.f32.mrb[0].mxu0
      %v3792 = vadd.f32 %v2905, %v3791
      %v3793 = vpop.f32.mrb[0].mxu0
      %3794 = vmatprep.mubr.f32.mxu0 0.0
      %3795 = vmatmul.mubr.f32.gmra.mrb[0].mxu0 %v2939
      %v3796 = vpop.f32.mrb[0].mxu0
      %v3797 = vadd.f32 %v2905, %v3796
      %v3798 = vpop.f32.mrb[0].mxu0
      %3799 = vmatprep.mubr.f32.mxu0 0.0
      %3800 = vmatmul.mubr.f32.gmra.mrb[0].mxu0 %v2942
      %v3801 = vpop.f32.mrb[0].mxu0
      %v3802 = vadd.f32 %v2905, %v3801
      %v3803 = vpop.f32.mrb[0].mxu0
      %3804 = vmatprep.mubr.f32.mxu0 0.0
      %3805 = vmatmul.mubr.f32.gmra.mrb[0].mxu0 %v2945
      %v3806 = vpop.f32.mrb[0].mxu0
      %v3807 = vadd.f32 %v2905, %v3806
      %v3808 = vpop.f32.mrb[0].mxu0
      %3809 = vmatprep.mubr.f32.mxu0 0.0
      %3810 = vmatmul.mubr.f32.gmra.mrb[0].mxu0 %v2948
      %v3811 = vpop.f32.mrb[0].mxu0
      %v3812 = vadd.f32 %v2905, %v3811
      %v3813 = vpop.f32.mrb[0].mxu0
      %3814 = vmatprep.mubr.f32.mxu0 0.0
      %3815 = vmatmul.mubr.f32.gmra.mrb[0].mxu0 %v2951
      %v3816 = vpop.f32.mrb[0].mxu0
      %v3817 = vadd.f32 %v2905, %v3816
      %v3818 = vpop.f32.mrb[0].mxu0
      %3819 = vmatprep.mubr.f32.mxu0 0.0
      %3820 = vmatmul.mubr.f32.gmra.mrb[0].mxu0 %v2954
      %v3821 = vpop.f32.mrb[0].mxu0
      %v3822 = vadd.f32 %v2905, %v3821
      %v3823 = vpop.f32.mrb[0].mxu0
      %3824 = vmatprep.mubr.f32.mxu0 0.0
      %3825 = vmatmul.mubr.f32.gmra.mrb[0].mxu0 %v2957
      %v3826 = vpop.f32.mrb[0].mxu0
      %v3827 = vadd.f32 %v2905, %v3826
      %v3828 = vpop.f32.mrb[0].mxu0
      %3829 = vmatprep.mubr.f32.mxu0 0.0
      %3830 = vmatmul.mubr.f32.gmra.mrb[0].mxu0 %v2960
      %v3831 = vpop.f32.mrb[0].mxu0
      %v3832 = vadd.f32 %v2905, %v3831
      %v3833 = vpop.f32.mrb[0].mxu0
      %3834 = vmatprep.mubr.f32.mxu0 0.0
      %3835 = vmatmul.mubr.f32.gmra.mrb[0].mxu0 %v2963
      %v3836 = vpop.f32.mrb[0].mxu0
      %v3837 = vadd.f32 %v2905, %v3836
      %v3838 = vpop.f32.mrb[0].mxu0
      %3839 = vmatprep.mubr.f32.mxu0 0.0
      %3840 = vmatmul.mubr.f32.gmra.mrb[0].mxu0 %v2966
      %v3841 = vpop.f32.mrb[0].mxu0
      %v3842 = vadd.f32 %v2905, %v3841
      %v3843 = vpop.f32.mrb[0].mxu0
      %3844 = vmatprep.mubr.f32.mxu0 0.0
      %3845 = vmatmul.mubr.f32.gmra.mrb[0].mxu0 %v2969
      %v3846 = vpop.f32.mrb[0].mxu0
      %v3847 = vadd.f32 %v2905, %v3846
      %v3848 = vpop.f32.mrb[0].mxu0
      %3849 = vmatprep.mubr.f32.mxu0 0.0
      %3850 = vmatmul.mubr.f32.gmra.mrb[0].mxu0 %v2972
      %v3851 = vpop.f32.mrb[0].mxu0
      %v3852 = vadd.f32 %v2905, %v3851
      %v3853 = vpop.f32.mrb[0].mxu0
      %3854 = vmatprep.mubr.f32.mxu0 0.0
      %3855 = vmatmul.mubr.f32.gmra.mrb[0].mxu0 %v2975
      %v3856 = vpop.f32.mrb[0].mxu0
      %v3857 = vadd.f32 %v2905, %v3856
      %v3858 = vpop.f32.mrb[0].mxu0
      %3859 = vmatprep.mubr.f32.mxu0 0.0
      %3860 = vmatmul.mubr.f32.gmra.mrb[0].mxu0 %v2978
      %v3861 = vpop.f32.mrb[0].mxu0
      %v3862 = vadd.f32 %v2905, %v3861
      %v3863 = vpop.f32.mrb[0].mxu0
      %3864 = vmatprep.mubr.f32.mxu0 0.0
      %3865 = vmatmul.mubr.f32.gmra.mrb[0].mxu0 %v2981
      %v3866 = vpop.f32.mrb[0].mxu0
      %v3867 = vadd.f32 %v2905, %v3866
      %v3868 = vpop.f32.mrb[0].mxu0
      %3869 = vmatprep.mubr.f32.mxu0 0.0
      %3870 = vmatmul.mubr.f32.gmra.mrb[0].mxu0 %v2984
      %v3871 = vpop.f32.mrb[0].mxu0
      %v3872 = vadd.f32 %v2905, %v3871
      %v3873 = vpop.f32.mrb[0].mxu0
      %3874 = vmatprep.mubr.f32.mxu0 0.0
      %3875 = vmatmul.mubr.f32.gmra.mrb[0].mxu0 %v2987
      %v3876 = vpop.f32.mrb[0].mxu0
      %v3877 = vadd.f32 %v2905, %v3876
      %v3878 = vpop.f32.mrb[0].mxu0
      %3879 = vmatprep.mubr.f32.mxu0 0.0
      %3880 = vmatmul.mubr.f32.gmra.mrb[0].mxu0 %v2990
      %v3881 = vpop.f32.mrb[0].mxu0
      %v3882 = vadd.f32 %v2905, %v3881
      %v3883 = vpop.f32.mrb[0].mxu0
      %3884 = vmatprep.mubr.f32.mxu0 0.0
      %3885 = vmatmul.mubr.f32.gmra.mrb[0].mxu0 %v2993
      %v3886 = vpop.f32.mrb[0].mxu0
      %v3887 = vadd.f32 %v2905, %v3886
      %v3888 = vpop.f32.mrb[0].mxu0
      %3889 = vmatprep.mubr.f32.mxu0 0.0
      %3890 = vmatmul.mubr.f32.gmra.mrb[0].mxu0 %v2996
      %v3891 = vpop.f32.mrb[0].mxu0
      %v3892 = vadd.f32 %v2905, %v3891
      %v3893 = vpop.f32.mrb[0].mxu0
      %3894 = vmatprep.mubr.f32.mxu0 0.0
      %3895 = vmatmul.mubr.f32.gmra.mrb[0].mxu0 %v2999
      %v3896 = vpop.f32.mrb[0].mxu0
      %v3897 = vadd.f32 %v2905, %v3896
      %v3898 = vpop.f32.mrb[0].mxu0
      %3899 = vmatprep.mubr.f32.mxu0 0.0
      %3900 = vmatmul.mubr.f32.gmra.mrb[0].mxu0 %v3002
      %v3901 = vpop.f32.mrb[0].mxu0
      %v3902 = vadd.f32 %v2905, %v3901
      %v3903 = vpop.f32.mrb[0].mxu0
      %3904 = vmatprep.mubr.f32.mxu0 0.0
      %3905 = vmatmul.mubr.f32.gmra.mrb[0].mxu0 %v3005
      %v3906 = vpop.f32.mrb[0].mxu0
      %v3907 = vadd.f32 %v2905, %v3906
      %v3908 = vpop.f32.mrb[0].mxu0
      %3909 = vmatprep.mubr.f32.mxu0 0.0
      %3910 = vmatmul.mubr.f32.gmra.mrb[0].mxu0 %v3008
      %v3911 = vpop.f32.mrb[0].mxu0
      %v3912 = vadd.f32 %v2905, %v3911
      %v3913 = vpop.f32.mrb[0].mxu0
      %3914 = vmatprep.mubr.f32.mxu0 0.0
      %3915 = vmatmul.mubr.f32.gmra.mrb[0].mxu0 %v3011
      %v3916 = vpop.f32.mrb[0].mxu0
      %v3917 = vadd.f32 %v2905, %v3916
      %v3918 = vpop.f32.mrb[0].mxu0
      %3919 = vmatprep.mubr.f32.mxu0 0.0
      %3920 = vmatmul.mubr.f32.gmra.mrb[0].mxu0 %v3014
      %v3921 = vpop.f32.mrb[0].mxu0
      %v3922 = vadd.f32 %v2905, %v3921
      %v3923 = vpop.f32.mrb[0].mxu0
      %3924 = vmatprep.mubr.f32.mxu0 0.0
      %3925 = vmatmul.mubr.f32.gmra.mrb[0].mxu0 %v3017
      %v3926 = vpop.f32.mrb[0].mxu0
      %v3927 = vadd.f32 %v2905, %v3926
      %v3928 = vpop.f32.mrb[0].mxu0
      %3929 = vmatprep.mubr.f32.mxu0 0.0
      %3930 = vmatmul.mubr.f32.gmra.mrb[0].mxu0 %v3020
      %v3931 = vpop.f32.mrb[0].mxu0
      %v3932 = vadd.f32 %v2905, %v3931
      %v3933 = vpop.f32.mrb[0].mxu0
      %3934 = vmatprep.mubr.f32.mxu0 0.0
      %3935 = vmatmul.mubr.f32.gmra.mrb[0].mxu0 %v3023
      %v3936 = vpop.f32.mrb[0].mxu0
      %v3937 = vadd.f32 %v2905, %v3936
      %v3938 = vpop.f32.mrb[0].mxu0
      %3939 = vmatprep.mubr.f32.mxu0 0.0
      %3940 = vmatmul.mubr.f32.gmra.mrb[0].mxu0 %v3026
      %v3941 = vpop.f32.mrb[0].mxu0
      %v3942 = vadd.f32 %v2905, %v3941
      %v3943 = vpop.f32.mrb[0].mxu0
      %3944 = vmatprep.mubr.f32.mxu0 0.0
      %3945 = vmatmul.mubr.f32.gmra.mrb[0].mxu0 %v3029
      %v3946 = vpop.f32.mrb[0].mxu0
      %v3947 = vadd.f32 %v2905, %v3946
      %v3948 = vpop.f32.mrb[0].mxu0
      %3949 = vmatprep.mubr.f32.mxu0 0.0
      %3950 = vmatmul.mubr.f32.gmra.mrb[0].mxu0 %v3032
      %v3951 = vpop.f32.mrb[0].mxu0
      %v3952 = vadd.f32 %v2905, %v3951
      %v3953 = vpop.f32.mrb[0].mxu0
      %3954 = vmatprep.mubr.f32.mxu0 0.0
      %3955 = vmatmul.mubr.f32.gmra.mrb[0].mxu0 %v3035
      %v3956 = vpop.f32.mrb[0].mxu0
      %v3957 = vadd.f32 %v2905, %v3956
      %v3958 = vpop.f32.mrb[0].mxu0
      %3959 = vmatprep.mubr.f32.mxu0 0.0
      %3960 = vmatmul.mubr.f32.gmra.mrb[0].mxu0 %v3038
      %v3961 = vpop.f32.mrb[0].mxu0
      %v3962 = vadd.f32 %v2905, %v3961
      %v3963 = vpop.f32.mrb[0].mxu0
      %3964 = vmatprep.mubr.f32.mxu0 0.0
      %3965 = vmatmul.mubr.f32.gmra.mrb[0].mxu0 %v3041
      %v3966 = vpop.f32.mrb[0].mxu0
      %v3967 = vadd.f32 %v2905, %v3966
      %v3968 = vpop.f32.mrb[0].mxu0
      %3969 = vmatprep.mubr.f32.mxu0 0.0
      %3970 = vmatmul.mubr.f32.gmra.mrb[0].mxu0 %v3044
      %v3971 = vpop.f32.mrb[0].mxu0
      %v3972 = vadd.f32 %v2905, %v3971
      %v3973 = vpop.f32.mrb[0].mxu0
      %3974 = vmatprep.mubr.f32.mxu0 0.0
      %3975 = vmatmul.mubr.f32.gmra.mrb[0].mxu0 %v3047
      %v3976 = vpop.f32.mrb[0].mxu0
      %v3977 = vadd.f32 %v2905, %v3976
      %v3978 = vpop.f32.mrb[0].mxu0
      %3979 = vmatprep.mubr.f32.mxu0 0.0
      %3980 = vmatmul.mubr.f32.gmra.mrb[0].mxu0 %v3050
      %v3981 = vpop.f32.mrb[0].mxu0
      %v3982 = vadd.f32 %v2905, %v3981
      %v3983 = vpop.f32.mrb[0].mxu0
      %3984 = vmatprep.mubr.f32.mxu0 0.0
      %3985 = vmatmul.mubr.f32.gmra.mrb[0].mxu0 %v3053
      %v3986 = vpop.f32.mrb[0].mxu0
      %v3987 = vadd.f32 %v2905, %v3986
      %v3988 = vpop.f32.mrb[0].mxu0
      %3989 = vmatprep.mubr.f32.mxu0 0.0
      %3990 = vmatmul.mubr.f32.gmra.mrb[0].mxu0 %v3056
      %v3991 = vpop.f32.mrb[0].mxu0
      %v3992 = vadd.f32 %v2905, %v3991
      %v3993 = vpop.f32.mrb[0].mxu0
      %3994 = vmatprep.mubr.f32.mxu0 0.0
      %3995 = vmatmul.mubr.f32.gmra.mrb[0].mxu0 %v3059
      %v3996 = vpop.f32.mrb[0].mxu0
      %v3997 = vadd.f32 %v2905, %v3996
      %v3998 = vpop.f32.mrb[0].mxu0
      %3999 = vmatprep.mubr.f32.mxu0 0.0
      %4000 = vmatmul.mubr.f32.gmra.mrb[0].mxu0 %v3062
      %v4001 = vpop.f32.mrb[0].mxu0
      %v4002 = vadd.f32 %v2905, %v4001
      %v4003 = vpop.f32.mrb[0].mxu0
      %4004 = vmatprep.mubr.f32.mxu0 0.0
      %4005 = vmatmul.mubr.f32.gmra.mrb[0].mxu0 %v3065
      %v4006 = vpop.f32.mrb[0].mxu0
      %v4007 = vadd.f32 %v2905, %v4006
      %v4008 = vpop.f32.mrb[0].mxu0
      %4009 = vmatprep.mubr.f32.mxu0 0.0
      %4010 = vmatmul.mubr.f32.gmra.mrb[0].mxu0 %v3068
      %v4011 = vpop.f32.mrb[0].mxu0
      %v4012 = vadd.f32 %v2905, %v4011
      %v4013 = vpop.f32.mrb[0].mxu0
      %4014 = vmatprep.mubr.f32.mxu0 0.0
      %4015 = vmatmul.mubr.f32.gmra.mrb[0].mxu0 %v3071
      %v4016 = vpop.f32.mrb[0].mxu0
      %v4017 = vadd.f32 %v2905, %v4016
      %v4018 = vpop.f32.mrb[0].mxu0
      %4019 = vmatprep.mubr.f32.mxu0 0.0
      %4020 = vmatmul.mubr.f32.gmra.mrb[0].mxu0 %v3074
      %v4021 = vpop.f32.mrb[0].mxu0
      %v4022 = vadd.f32 %v2905, %v4021
      %v4023 = vpop.f32.mrb[0].mxu0
      %4024 = vmatprep.mubr.f32.mxu0 0.0
      %4025 = vmatmul.mubr.f32.gmra.mrb[0].mxu0 %v3077
      %v4026 = vpop.f32.mrb[0].mxu0
      %v4027 = vadd.f32 %v2905, %v4026
      %v4028 = vpop.f32.mrb[0].mxu0
      %4029 = vmatprep.mubr.f32.mxu0 0.0
      %4030 = vmatmul.mubr.f32.gmra.mrb[0].mxu0 %v3080
      %v4031 = vpop.f32.mrb[0].mxu0
      %v4032 = vadd.f32 %v2905, %v4031
      %v4033 = vpop.f32.mrb[0].mxu0
      %4034 = vmatprep.mubr.f32.mxu0 0.0
      %4035 = vmatmul.mubr.f32.gmra.mrb[0].mxu0 %v3083
      %v4036 = vpop.f32.mrb[0].mxu0
      %v4037 = vadd.f32 %v2905, %v4036
      %v4038 = vpop.f32.mrb[0].mxu0
      %4039 = vmatprep.mubr.f32.mxu0 0.0
      %4040 = vmatmul.mubr.f32.gmra.mrb[0].mxu0 %v3086
      %v4041 = vpop.f32.mrb[0].mxu0
      %v4042 = vadd.f32 %v2905, %v4041
      %v4043 = vpop.f32.mrb[0].mxu0
      %4044 = vmatprep.mubr.f32.mxu0 0.0
      %4045 = vmatmul.mubr.f32.gmra.mrb[0].mxu0 %v3089
      %v4046 = vpop.f32.mrb[0].mxu0
      %v4047 = vadd.f32 %v2905, %v4046
      %v4048 = vpop.f32.mrb[0].mxu0
      %4049 = vmatprep.mubr.f32.mxu0 0.0
      %4050 = vmatmul.mubr.f32.gmra.mrb[0].mxu0 %v3092
      %v4051 = vpop.f32.mrb[0].mxu0
      %v4052 = vadd.f32 %v2905, %v4051
      %v4053 = vpop.f32.mrb[0].mxu0
      %4054 = vmatprep.mubr.f32.mxu0 0.0
      %4055 = vmatmul.mubr.f32.gmra.mrb[0].mxu0 %v3095
      %v4056 = vpop.f32.mrb[0].mxu0
      %v4057 = vadd.f32 %v2905, %v4056
      %v4058 = vpop.f32.mrb[0].mxu0
      %4059 = vmatprep.mubr.f32.mxu0 0.0
      %4060 = vmatmul.mubr.f32.gmra.mrb[0].mxu0 %v3098
      %v4061 = vpop.f32.mrb[0].mxu0
      %v4062 = vadd.f32 %v2905, %v4061
      %v4063 = vpop.f32.mrb[0].mxu0
      %4064 = vmatprep.mubr.f32.mxu0 0.0
      %4065 = vmatmul.mubr.f32.gmra.mrb[0].mxu0 %v3101
      %v4066 = vpop.f32.mrb[0].mxu0
      %v4067 = vadd.f32 %v2905, %v4066
      %v4068 = vpop.f32.mrb[0].mxu0
      %4069 = vmatprep.mubr.f32.mxu0 0.0
      %4070 = vmatmul.mubr.f32.gmra.mrb[0].mxu0 %v3104
      %v4071 = vpop.f32.mrb[0].mxu0
      %v4072 = vadd.f32 %v2905, %v4071
      %v4073 = vpop.f32.mrb[0].mxu0
      %4074 = vmatprep.mubr.f32.mxu0 0.0
      %4075 = vmatmul.mubr.f32.gmra.mrb[0].mxu0 %v3107
      %v4076 = vpop.f32.mrb[0].mxu0
      %v4077 = vadd.f32 %v2905, %v4076
      %v4078 = vpop.f32.mrb[0].mxu0
      %4079 = vmatprep.mubr.f32.mxu0 0.0
      %4080 = vmatmul.mubr.f32.gmra.mrb[0].mxu0 %v3110
      %v4081 = vpop.f32.mrb[0].mxu0
      %v4082 = vadd.f32 %v2905, %v4081
      %v4083 = vpop.f32.mrb[0].mxu0
      %4084 = vmatprep.mubr.f32.mxu0 0.0
      %4085 = vmatmul.mubr.f32.gmra.mrb[0].mxu0 %v3113
      %v4086 = vpop.f32.mrb[0].mxu0
      %v4087 = vadd.f32 %v2905, %v4086
      %v4088 = vpop.f32.mrb[0].mxu0
      %4089 = vmatprep.mubr.f32.mxu0 0.0
      %4090 = vmatmul.mubr.f32.gmra.mrb[0].mxu0 %v3116
      %v4091 = vpop.f32.mrb[0].mxu0
      %v4092 = vadd.f32 %v2905, %v4091
      %v4093 = vpop.f32.mrb[0].mxu0
      %4094 = vmatprep.mubr.f32.mxu0 0.0
      %4095 = vmatmul.mubr.f32.gmra.mrb[0].mxu0 %v3119
      %v4096 = vpop.f32.mrb[0].mxu0
      %v4097 = vadd.f32 %v2905, %v4096
      %v4098 = vpop.f32.mrb[0].mxu0
      %4099 = vmatprep.mubr.f32.mxu0 0.0
      %4100 = vmatmul.mubr.f32.gmra.mrb[0].mxu0 %v3122
      %v4101 = vpop.f32.mrb[0].mxu0
      %v4102 = vadd.f32 %v2905, %v4101
      %v4103 = vpop.f32.mrb[0].mxu0
      %4104 = vmatprep.mubr.f32.mxu0 0.0
      %4105 = vmatmul.mubr.f32.gmra.mrb[0].mxu0 %v3125
      %v4106 = vpop.f32.mrb[0].mxu0
      %v4107 = vadd.f32 %v2905, %v4106
      %v4108 = vpop.f32.mrb[0].mxu0
      %4109 = vmatprep.mubr.f32.mxu0 0.0
      %4110 = vmatmul.mubr.f32.gmra.mrb[0].mxu0 %v3128
      %v4111 = vpop.f32.mrb[0].mxu0
      %v4112 = vadd.f32 %v2905, %v4111
      %v4113 = vpop.f32.mrb[0].mxu0
      %4114 = vmatprep.mubr.f32.mxu0 0.0
      %4115 = vmatmul.mubr.f32.gmra.mrb[0].mxu0 %v3131
      %v4116 = vpop.f32.mrb[0].mxu0
      %v4117 = vadd.f32 %v2905, %v4116
      %v4118 = vpop.f32.mrb[0].mxu0
      %4119 = vmatprep.mubr.f32.mxu0 0.0
      %4120 = vmatmul.mubr.f32.gmra.mrb[0].mxu0 %v3134
      %v4121 = vpop.f32.mrb[0].mxu0
      %v4122 = vadd.f32 %v2905, %v4121
      %v4123 = vpop.f32.mrb[0].mxu0
      %4124 = vmatprep.mubr.f32.mxu0 0.0
      %4125 = vmatmul.mubr.f32.gmra.mrb[0].mxu0 %v3137
      %v4126 = vpop.f32.mrb[0].mxu0
      %v4127 = vadd.f32 %v2905, %v4126
      %v4128 = vpop.f32.mrb[0].mxu0
      %4129 = vmatprep.mubr.f32.mxu0 0.0
      %4130 = vmatmul.mubr.f32.gmra.mrb[0].mxu0 %v3140
      %v4131 = vpop.f32.mrb[0].mxu0
      %v4132 = vadd.f32 %v2905, %v4131
      %v4133 = vpop.f32.mrb[0].mxu0
      %4134 = vmatprep.mubr.f32.mxu0 0.0
      %4135 = vmatmul.mubr.f32.gmra.mrb[0].mxu0 %v3143
      %v4136 = vpop.f32.mrb[0].mxu0
      %v4137 = vadd.f32 %v2905, %v4136
      %v4138 = vpop.f32.mrb[0].mxu0
      %4139 = vmatprep.mubr.f32.mxu0 0.0
      %4140 = vmatmul.mubr.f32.gmra.mrb[0].mxu0 %v3146
      %v4141 = vpop.f32.mrb[0].mxu0
      %v4142 = vadd.f32 %v2905, %v4141
      %v4143 = vpop.f32.mrb[0].mxu0
      %4144 = vmatprep.mubr.f32.mxu0 0.0
      %4145 = vmatmul.mubr.f32.gmra.mrb[0].mxu0 %v3149
      %v4146 = vpop.f32.mrb[0].mxu0
      %v4147 = vadd.f32 %v2905, %v4146
      %v4148 = vpop.f32.mrb[0].mxu0
      %4149 = vmatprep.mubr.f32.mxu0 0.0
      %4150 = vmatmul.mubr.f32.gmra.mrb[0].mxu0 %v3152
      %v4151 = vpop.f32.mrb[0].mxu0
      %v4152 = vadd.f32 %v2905, %v4151
      %v4153 = vpop.f32.mrb[0].mxu0
      %4154 = vmatprep.mubr.f32.mxu0 0.0
      %4155 = vmatmul.mubr.f32.gmra.mrb[0].mxu0 %v3155
      %v4156 = vpop.f32.mrb[0].mxu0
      %v4157 = vadd.f32 %v2905, %v4156
      %v4158 = vpop.f32.mrb[0].mxu0
      %4159 = vmatprep.mubr.f32.mxu0 0.0
      %4160 = vmatmul.mubr.f32.gmra.mrb[0].mxu0 %v3158
      %v4161 = vpop.f32.mrb[0].mxu0
      %v4162 = vadd.f32 %v2905, %v4161
      %v4163 = vpop.f32.mrb[0].mxu0
      %4164 = vmatprep.mubr.f32.mxu0 0.0
      %4165 = vmatmul.mubr.f32.gmra.mrb[0].mxu0 %v3161
      %v4166 = vpop.f32.mrb[0].mxu0
      %v4167 = vadd.f32 %v2905, %v4166
      %v4168 = vpop.f32.mrb[0].mxu0
      %4169 = vmatprep.mubr.f32.mxu0 0.0
      %4170 = vmatmul.mubr.f32.gmra.mrb[0].mxu0 %v3164
      %v4171 = vpop.f32.mrb[0].mxu0
      %v4172 = vadd.f32 %v2905, %v4171
      %v4173 = vpop.f32.mrb[0].mxu0
      %4174 = vmatprep.mubr.f32.mxu0 0.0
      %4175 = vmatmul.mubr.f32.gmra.mrb[0].mxu0 %v3167
      %v4176 = vpop.f32.mrb[0].mxu0
      %v4177 = vadd.f32 %v2905, %v4176
      %v4178 = vpop.f32.mrb[0].mxu0
      %4179 = vmatprep.mubr.f32.mxu0 0.0
      %4180 = vmatmul.mubr.f32.gmra.mrb[0].mxu0 %v3170
      %v4181 = vpop.f32.mrb[0].mxu0
      %v4182 = vadd.f32 %v2905, %v4181
      %v4183 = vpop.f32.mrb[0].mxu0
      %4184 = vmatprep.mubr.f32.mxu0 0.0
      %4185 = vmatmul.mubr.f32.gmra.mrb[0].mxu0 %v3173
      %v4186 = vpop.f32.mrb[0].mxu0
      %v4187 = vadd.f32 %v2905, %v4186
      %v4188 = vpop.f32.mrb[0].mxu0
      %4189 = vmatprep.mubr.f32.mxu0 0.0
      %4190 = vmatmul.mubr.f32.gmra.mrb[0].mxu0 %v3176
      %v4191 = vpop.f32.mrb[0].mxu0
      %v4192 = vadd.f32 %v2905, %v4191
      %v4193 = vpop.f32.mrb[0].mxu0
      %4194 = vmatprep.mubr.f32.mxu0 0.0
      %4195 = vmatmul.mubr.f32.gmra.mrb[0].mxu0 %v3179
      %v4196 = vpop.f32.mrb[0].mxu0
      %v4197 = vadd.f32 %v2905, %v4196
      %v4198 = vpop.f32.mrb[0].mxu0
      %4199 = vmatprep.mubr.f32.mxu0 0.0
      %4200 = vmatmul.mubr.f32.gmra.mrb[0].mxu0 %v3182
      %v4201 = vpop.f32.mrb[0].mxu0
      %v4202 = vadd.f32 %v2905, %v4201
      %v4203 = vpop.f32.mrb[0].mxu0
      %4204 = vmatprep.mubr.f32.mxu0 0.0
      %4205 = vmatmul.mubr.f32.gmra.mrb[0].mxu0 %v3185
      %v4206 = vpop.f32.mrb[0].mxu0
      %v4207 = vadd.f32 %v2905, %v4206
      %v4208 = vpop.f32.mrb[0].mxu0
      %4209 = vmatprep.mubr.f32.mxu0 0.0
      %4210 = vmatmul.mubr.f32.gmra.mrb[0].mxu0 %v3188
      %v4211 = vpop.f32.mrb[0].mxu0
      %v4212 = vadd.f32 %v2905, %v4211
      %v4213 = vpop.f32.mrb[0].mxu0
      %4214 = vmatprep.mubr.f32.mxu0 0.0
      %4215 = vmatmul.mubr.f32.gmra.mrb[0].mxu0 %v3191
      %v4216 = vpop.f32.mrb[0].mxu0
      %v4217 = vadd.f32 %v2905, %v4216
      %v4218 = vpop.f32.mrb[0].mxu0
      %4219 = vmatprep.mubr.f32.mxu0 0.0
      %4220 = vmatmul.mubr.f32.gmra.mrb[0].mxu0 %v3194
      %v4221 = vpop.f32.mrb[0].mxu0
      %v4222 = vadd.f32 %v2905, %v4221
      %v4223 = vpop.f32.mrb[0].mxu0
      %4224 = vmatprep.mubr.f32.mxu0 0.0
      %4225 = vmatmul.mubr.f32.gmra.mrb[0].mxu0 %v3197
      %v4226 = vpop.f32.mrb[0].mxu0
      %v4227 = vadd.f32 %v2905, %v4226
      %v4228 = vpop.f32.mrb[0].mxu0
      %4229 = vmatprep.mubr.f32.mxu0 0.0
      %4230 = vmatmul.mubr.f32.gmra.mrb[0].mxu0 %v3200
      %v4231 = vpop.f32.mrb[0].mxu0
      %v4232 = vadd.f32 %v2905, %v4231
      %v4233 = vpop.f32.mrb[0].mxu0
      %4234 = vmatprep.mubr.f32.mxu0 0.0
      %4235 = vmatmul.mubr.f32.gmra.mrb[0].mxu0 %v3203
      %v4236 = vpop.f32.mrb[0].mxu0
      %v4237 = vadd.f32 %v2905, %v4236
      %v4238 = vpop.f32.mrb[0].mxu0
      %4239 = vmatprep.mubr.f32.mxu0 0.0
      %4240 = vmatmul.mubr.f32.gmra.mrb[0].mxu0 %v3206
      %v4241 = vpop.f32.mrb[0].mxu0
      %v4242 = vadd.f32 %v2905, %v4241
      %v4243 = vpop.f32.mrb[0].mxu0
      %4244 = vmatprep.mubr.f32.mxu0 0.0
      %4245 = vmatmul.mubr.f32.gmra.mrb[0].mxu0 %v3209
      %v4246 = vpop.f32.mrb[0].mxu0
      %v4247 = vadd.f32 %v2905, %v4246
      %v4248 = vpop.f32.mrb[0].mxu0
      %4249 = vmatprep.mubr.f32.mxu0 0.0
      %4250 = vmatmul.mubr.f32.gmra.mrb[0].mxu0 %v3212
      %v4251 = vpop.f32.mrb[0].mxu0
      %v4252 = vadd.f32 %v2905, %v4251
      %v4253 = vpop.f32.mrb[0].mxu0
      %4254 = vmatprep.mubr.f32.mxu0 0.0
      %4255 = vmatmul.mubr.f32.gmra.mrb[0].mxu0 %v3215
      %v4256 = vpop.f32.mrb[0].mxu0
      %v4257 = vadd.f32 %v2905, %v4256
      %v4258 = vpop.f32.mrb[0].mxu0
      %4259 = vmatprep.mubr.f32.mxu0 0.0
      %4260 = vmatmul.mubr.f32.gmra.mrb[0].mxu0 %v3218
      %v4261 = vpop.f32.mrb[0].mxu0
      %v4262 = vadd.f32 %v2905, %v4261
      %v4263 = vpop.f32.mrb[0].mxu0
      %4264 = vmatprep.mubr.f32.mxu0 0.0
      %4265 = vmatmul.mubr.f32.gmra.mrb[0].mxu0 %v3221
      %v4266 = vpop.f32.mrb[0].mxu0
      %v4267 = vadd.f32 %v2905, %v4266
      %v4268 = vpop.f32.mrb[0].mxu0
      %4269 = vmatprep.mubr.f32.mxu0 0.0
      %4270 = vmatmul.mubr.f32.gmra.mrb[0].mxu0 %v3224
      %v4271 = vpop.f32.mrb[0].mxu0
      %v4272 = vadd.f32 %v2905, %v4271
      %v4273 = vpop.f32.mrb[0].mxu0
      %4274 = vmatprep.mubr.f32.mxu0 0.0
      %4275 = vmatmul.mubr.f32.gmra.mrb[0].mxu0 %v3227
      %v4276 = vpop.f32.mrb[0].mxu0
      %v4277 = vadd.f32 %v2905, %v4276
      %v4278 = vpop.f32.mrb[0].mxu0
      %4279 = vmatprep.mubr.f32.mxu0 0.0
      %4280 = vmatmul.mubr.f32.gmra.mrb[0].mxu0 %v3230
      %v4281 = vpop.f32.mrb[0].mxu0
      %v4282 = vadd.f32 %v2905, %v4281
      %v4283 = vpop.f32.mrb[0].mxu0
      %4284 = vmatprep.mubr.f32.mxu0 0.0
      %4285 = vmatmul.mubr.f32.gmra.mrb[0].mxu0 %v3233
      %v4286 = vpop.f32.mrb[0].mxu0
      %v4287 = vadd.f32 %v2905, %v4286
      %v4288 = vpop.f32.mrb[0].mxu0
      %4289 = vmatprep.mubr.f32.mxu0 0.0
      %4290 = vmatmul.mubr.f32.gmra.mrb[0].mxu0 %v3236
      %v4291 = vpop.f32.mrb[0].mxu0
      %v4292 = vadd.f32 %v2905, %v4291
      %v4293 = vpop.f32.mrb[0].mxu0
      %4294 = vmatprep.mubr.f32.mxu0 0.0
      %4295 = vmatmul.mubr.f32.gmra.mrb[0].mxu0 %v3239
      %v4296 = vpop.f32.mrb[0].mxu0
      %v4297 = vadd.f32 %v2905, %v4296
      %v4298 = vpop.f32.mrb[0].mxu0
      %4299 = vmatprep.mubr.f32.mxu0 0.0
      %4300 = vmatmul.mubr.f32.gmra.mrb[0].mxu0 %v3242
      %v4301 = vpop.f32.mrb[0].mxu0
      %v4302 = vadd.f32 %v2905, %v4301
      %v4303 = vpop.f32.mrb[0].mxu0
      %4304 = vmatprep.mubr.f32.mxu0 0.0
      %4305 = vmatmul.mubr.f32.gmra.mrb[0].mxu0 %v3245
      %v4306 = vpop.f32.mrb[0].mxu0
      %v4307 = vadd.f32 %v2905, %v4306
      %v4308 = vpop.f32.mrb[0].mxu0
      %4309 = vmatprep.mubr.f32.mxu0 0.0
      %4310 = vmatmul.mubr.f32.gmra.mrb[0].mxu0 %v3248
      %v4311 = vpop.f32.mrb[0].mxu0
      %v4312 = vadd.f32 %v2905, %v4311
      %v4313 = vpop.f32.mrb[0].mxu0
      %4314 = vmatprep.mubr.f32.mxu0 0.0
      %4315 = vmatmul.mubr.f32.gmra.mrb[0].mxu0 %v3251
      %v4316 = vpop.f32.mrb[0].mxu0
      %v4317 = vadd.f32 %v2905, %v4316
      %v4318 = vpop.f32.mrb[0].mxu0
      %4319 = vmatprep.mubr.f32.mxu0 0.0
      %4320 = vmatmul.mubr.f32.gmra.mrb[0].mxu0 %v3254
      %v4321 = vpop.f32.mrb[0].mxu0
      %v4322 = vadd.f32 %v2905, %v4321
      %v4323 = vpop.f32.mrb[0].mxu0
      %4324 = vmatprep.mubr.f32.mxu0 0.0
      %4325 = vmatmul.mubr.f32.gmra.mrb[0].mxu0 %v3257
      %v4326 = vpop.f32.mrb[0].mxu0
      %v4327 = vadd.f32 %v2905, %v4326
      %v4328 = vpop.f32.mrb[0].mxu0
      %4329 = vmatprep.mubr.f32.mxu0 0.0
      %4330 = vmatmul.mubr.f32.gmra.mrb[0].mxu0 %v3260
      %v4331 = vpop.f32.mrb[0].mxu0
      %v4332 = vadd.f32 %v2905, %v4331
      %v4333 = vpop.f32.mrb[0].mxu0
      %4334 = vmatprep.mubr.f32.mxu0 0.0
      %4335 = vmatmul.mubr.f32.gmra.mrb[0].mxu0 %v3263
      %v4336 = vpop.f32.mrb[0].mxu0
      %v4337 = vadd.f32 %v2905, %v4336
      %v4338 = vpop.f32.mrb[0].mxu0
      %4339 = vmatprep.mubr.f32.mxu0 0.0
      %4340 = vmatmul.mubr.f32.gmra.mrb[0].mxu0 %v3266
      %v4341 = vpop.f32.mrb[0].mxu0
      %v4342 = vadd.f32 %v2905, %v4341
      %v4343 = vpop.f32.mrb[0].mxu0
      %4344 = vmatprep.mubr.f32.mxu0 0.0
      %4345 = vmatmul.mubr.f32.gmra.mrb[0].mxu0 %v3269
      %v4346 = vpop.f32.mrb[0].mxu0
      %v4347 = vadd.f32 %v2905, %v4346
      %v4348 = vpop.f32.mrb[0].mxu0
      %4349 = vmatprep.mubr.f32.mxu0 0.0
      %4350 = vmatmul.mubr.f32.gmra.mrb[0].mxu0 %v3272
      %v4351 = vpop.f32.mrb[0].mxu0
      %v4352 = vadd.f32 %v2905, %v4351
      %v4353 = vpop.f32.mrb[0].mxu0
      %4354 = vmatprep.mubr.f32.mxu0 0.0
      %4355 = vmatmul.mubr.f32.gmra.mrb[0].mxu0 %v3275
      %v4356 = vpop.f32.mrb[0].mxu0
      %v4357 = vadd.f32 %v2905, %v4356
      %v4358 = vpop.f32.mrb[0].mxu0
      %4359 = vmatprep.mubr.f32.mxu0 0.0
      %4360 = vmatmul.mubr.f32.gmra.mrb[0].mxu0 %v3278
      %v4361 = vpop.f32.mrb[0].mxu0
      %v4362 = vadd.f32 %v2905, %v4361
      %v4363 = vpop.f32.mrb[0].mxu0
      %4364 = vmatprep.mubr.f32.mxu0 0.0
      %4365 = vmatmul.mubr.f32.gmra.mrb[0].mxu0 %v3281
      %v4366 = vpop.f32.mrb[0].mxu0
      %v4367 = vadd.f32 %v2905, %v4366
      %v4368 = vpop.f32.mrb[0].mxu0
      %4369 = vmatprep.mubr.f32.mxu0 0.0
      %4370 = vmatmul.mubr.f32.gmra.mrb[0].mxu0 %v3284
      %v4371 = vpop.f32.mrb[0].mxu0
      %v4372 = vadd.f32 %v2905, %v4371
      %v4373 = vpop.f32.mrb[0].mxu0
      %4374 = vmatprep.mubr.f32.mxu0 0.0
      %4375 = vmatmul.mubr.f32.gmra.mrb[0].mxu0 %v3287
      %v4376 = vpop.f32.mrb[0].mxu0
      %v4377 = vadd.f32 %v2905, %v4376
      %v4378 = vpop.f32.mrb[0].mxu0
      %4379 = vmatprep.mubr.f32.mxu0 0.0
      %4380 = vmatmul.mubr.f32.gmra.mrb[0].mxu0 %v3290
      %v4381 = vpop.f32.mrb[0].mxu0
      %v4382 = vadd.f32 %v2905, %v4381
      %v4383 = vpop.f32.mrb[0].mxu0
      %4384 = vmatprep.mubr.f32.mxu0 0.0
      %4385 = vmatmul.mubr.f32.gmra.mrb[0].mxu0 %v3293
      %v4386 = vpop.f32.mrb[0].mxu0
      %v4387 = vadd.f32 %v2905, %v4386
      %v4388 = vpop.f32.mrb[0].mxu0
      %4389 = vmatprep.mubr.f32.mxu0 0.0
      %4390 = vmatmul.mubr.f32.gmra.mrb[0].mxu0 %v3296
      %v4391 = vpop.f32.mrb[0].mxu0
      %v4392 = vadd.f32 %v2905, %v4391
      %v4393 = vpop.f32.mrb[0].mxu0
      %4394 = vmatprep.mubr.f32.mxu0 0.0
      %4395 = vmatmul.mubr.f32.gmra.mrb[0].mxu0 %v3299
      %v4396 = vpop.f32.mrb[0].mxu0
      %v4397 = vadd.f32 %v2905, %v4396
      %v4398 = vpop.f32.mrb[0].mxu0
      %4399 = vmatprep.mubr.f32.mxu0 0.0
      %4400 = vmatmul.mubr.f32.gmra.mrb[0].mxu0 %v3302
      %v4401 = vpop.f32.mrb[0].mxu0
      %v4402 = vadd.f32 %v2905, %v4401
      %v4403 = vpop.f32.mrb[0].mxu0
      %4404 = vmatprep.mubr.f32.mxu0 0.0
      %4405 = vmatmul.mubr.f32.gmra.mrb[0].mxu0 %v3305
      %v4406 = vpop.f32.mrb[0].mxu0
      %v4407 = vadd.f32 %v2905, %v4406
      %v4408 = vpop.f32.mrb[0].mxu0
      %4409 = vmatprep.mubr.f32.mxu0 0.0
      %4410 = vmatmul.mubr.f32.gmra.mrb[0].mxu0 %v3308
      %v4411 = vpop.f32.mrb[0].mxu0
      %v4412 = vadd.f32 %v2905, %v4411
      %v4413 = vpop.f32.mrb[0].mxu0
      %4414 = vmatprep.mubr.f32.mxu0 0.0
      %4415 = vmatmul.mubr.f32.gmra.mrb[0].mxu0 %v3311
      %v4416 = vpop.f32.mrb[0].mxu0
      %v4417 = vadd.f32 %v2905, %v4416
      %v4418 = vpop.f32.mrb[0].mxu0
      %4419 = vmatprep.mubr.f32.mxu0 0.0
      %4420 = vmatmul.mubr.f32.gmra.mrb[0].mxu0 %v3314
      %v4421 = vpop.f32.mrb[0].mxu0
      %v4422 = vadd.f32 %v2905, %v4421
      %v4423 = vpop.f32.mrb[0].mxu0
      %4424 = vmatprep.mubr.f32.mxu0 0.0
      %4425 = vmatmul.mubr.f32.gmra.mrb[0].mxu0 %v3317
      %v4426 = vpop.f32.mrb[0].mxu0
      %v4427 = vadd.f32 %v2905, %v4426
      %v4428 = vpop.f32.mrb[0].mxu0
      %4429 = vmatprep.mubr.f32.mxu0 0.0
      %4430 = vmatmul.mubr.f32.gmra.mrb[0].mxu0 %v3320
      %v4431 = vpop.f32.mrb[0].mxu0
      %v4432 = vadd.f32 %v2905, %v4431
      %v4433 = vpop.f32.mrb[0].mxu0
      %4434 = vmatprep.mubr.f32.mxu0 0.0
      %4435 = vmatmul.mubr.f32.gmra.mrb[0].mxu0 %v3323
      %v4436 = vpop.f32.mrb[0].mxu0
      %v4437 = vadd.f32 %v2905, %v4436
      %v4438 = vpop.f32.mrb[0].mxu0
      %4439 = vmatprep.mubr.f32.mxu0 0.0
      %4440 = vmatmul.mubr.f32.gmra.mrb[0].mxu0 %v3326
      %v4441 = vpop.f32.mrb[0].mxu0
      %v4442 = vadd.f32 %v2905, %v4441
      %v4443 = vpop.f32.mrb[0].mxu0
      %4444 = vmatprep.mubr.f32.mxu0 0.0
      %4445 = vmatmul.mubr.f32.gmra.mrb[0].mxu0 %v3329
      %v4446 = vpop.f32.mrb[0].mxu0
      %v4447 = vadd.f32 %v2905, %v4446
      %v4448 = vpop.f32.mrb[0].mxu0
      %4449 = vmatprep.mubr.f32.mxu0 0.0
      %4450 = vmatmul.mubr.f32.gmra.mrb[0].mxu0 %v3332
      %v4451 = vpop.f32.mrb[0].mxu0
      %v4452 = vadd.f32 %v2905, %v4451
      %v4453 = vpop.f32.mrb[0].mxu0
      %4454 = vmatprep.mubr.f32.mxu0 0.0
      %4455 = vmatmul.mubr.f32.gmra.mrb[0].mxu0 %v3335
      %v4456 = vpop.f32.mrb[0].mxu0
      %v4457 = vadd.f32 %v2905, %v4456
      %v4458 = vpop.f32.mrb[0].mxu0
      %4459 = vmatprep.mubr.f32.mxu0 0.0
      %4460 = vmatmul.mubr.f32.gmra.mrb[0].mxu0 %v3338
      %v4461 = vpop.f32.mrb[0].mxu0
      %v4462 = vadd.f32 %v2905, %v4461
      %v4463 = vpop.f32.mrb[0].mxu0
      %4464 = vmatprep.mubr.f32.mxu0 0.0
      %4465 = vmatmul.mubr.f32.gmra.mrb[0].mxu0 %v3341
      %v4466 = vpop.f32.mrb[0].mxu0
      %v4467 = vadd.f32 %v2905, %v4466
      %v4468 = vpop.f32.mrb[0].mxu0
      %4469 = vmatprep.mubr.f32.mxu0 0.0
      %4470 = vmatmul.mubr.f32.gmra.mrb[0].mxu0 %v3344
      %v4471 = vpop.f32.mrb[0].mxu0
      %v4472 = vadd.f32 %v2905, %v4471
      %v4473 = vpop.f32.mrb[0].mxu0
      %4474 = vmatprep.mubr.f32.mxu0 0.0
      %4475 = vmatmul.mubr.f32.gmra.mrb[0].mxu0 %v3347
      %v4476 = vpop.f32.mrb[0].mxu0
      %v4477 = vadd.f32 %v2905, %v4476
      %v4478 = vpop.f32.mrb[0].mxu0
      %4479 = vmatprep.mubr.f32.mxu0 0.0
      %4480 = vmatmul.mubr.f32.gmra.mrb[0].mxu0 %v3350
      %v4481 = vpop.f32.mrb[0].mxu0
      %v4482 = vadd.f32 %v2905, %v4481
      %v4483 = vpop.f32.mrb[0].mxu0
      %4484 = vmatprep.mubr.f32.mxu0 0.0
      %4485 = vmatmul.mubr.f32.gmra.mrb[0].mxu0 %v3353
      %v4486 = vpop.f32.mrb[0].mxu0
      %v4487 = vadd.f32 %v2905, %v4486
      %v4488 = vpop.f32.mrb[0].mxu0
      %4489 = vmatprep.mubr.f32.mxu0 0.0
      %4490 = vmatmul.mubr.f32.gmra.mrb[0].mxu0 %v3356
      %v4491 = vpop.f32.mrb[0].mxu0
      %v4492 = vadd.f32 %v2905, %v4491
      %v4493 = vpop.f32.mrb[0].mxu0
      %4494 = vmatprep.mubr.f32.mxu0 0.0
      %4495 = vmatmul.mubr.f32.gmra.mrb[0].mxu0 %v3359
      %v4496 = vpop.f32.mrb[0].mxu0
      %v4497 = vadd.f32 %v2905, %v4496
      %v4498 = vpop.f32.mrb[0].mxu0
      %4499 = vmatprep.mubr.f32.mxu0 0.0
      %4500 = vmatmul.mubr.f32.gmra.mrb[0].mxu0 %v3362
      %v4501 = vpop.f32.mrb[0].mxu0
      %v4502 = vadd.f32 %v2905, %v4501
      %v4503 = vpop.f32.mrb[0].mxu0
      %4504 = vmatprep.mubr.f32.mxu0 0.0
      %4505 = vmatmul.mubr.f32.gmra.mrb[0].mxu0 %v3365
      %v4506 = vpop.f32.mrb[0].mxu0
      %v4507 = vadd.f32 %v2905, %v4506
      %v4508 = vpop.f32.mrb[0].mxu0
      %4509 = vmatprep.mubr.f32.mxu0 0.0
      %4510 = vmatmul.mubr.f32.gmra.mrb[0].mxu0 %v3368
      %v4511 = vpop.f32.mrb[0].mxu0
      %v4512 = vadd.f32 %v2905, %v4511
      %v4513 = vpop.f32.mrb[0].mxu0
      %4514 = vmatprep.mubr.f32.mxu0 0.0
      %4515 = vmatmul.mubr.f32.gmra.mrb[0].mxu0 %v3371
      %v4516 = vpop.f32.mrb[0].mxu0
      %v4517 = vadd.f32 %v2905, %v4516
      %v4518 = vpop.f32.mrb[0].mxu0
      %4519 = vmatprep.mubr.f32.mxu0 0.0
      %4520 = vmatmul.mubr.f32.gmra.mrb[0].mxu0 %v3374
      %v4521 = vpop.f32.mrb[0].mxu0
      %v4522 = vadd.f32 %v2905, %v4521
      %v4523 = vpop.f32.mrb[0].mxu0
      %4524 = vmatprep.mubr.f32.mxu0 0.0
      %4525 = vmatmul.mubr.f32.gmra.mrb[0].mxu0 %v3377
      %v4526 = vpop.f32.mrb[0].mxu0
      %v4527 = vadd.f32 %v2905, %v4526
      %v4528 = vpop.f32.mrb[0].mxu0
      %4529 = vmatprep.mubr.f32.mxu0 0.0
      %4530 = vmatmul.mubr.f32.gmra.mrb[0].mxu0 %v3380
      %v4531 = vpop.f32.mrb[0].mxu0
      %v4532 = vadd.f32 %v2905, %v4531
      %v4533 = vpop.f32.mrb[0].mxu0
      %4534 = vmatprep.mubr.f32.mxu0 0.0
      %4535 = vmatmul.mubr.f32.gmra.mrb[0].mxu0 %v3383
      %v4536 = vpop.f32.mrb[0].mxu0
      %v4537 = vadd.f32 %v2905, %v4536
      %v4538 = vpop.f32.mrb[0].mxu0
      %4539 = vmatprep.mubr.f32.mxu0 0.0
      %4540 = vmatmul.mubr.f32.gmra.mrb[0].mxu0 %v3386
      %v4541 = vpop.f32.mrb[0].mxu0
      %v4542 = vadd.f32 %v2905, %v4541
      %v4543 = vpop.f32.mrb[0].mxu0
      %4544 = vmatprep.mubr.f32.mxu0 0.0
      %4545 = vmatmul.mubr.f32.gmra.mrb[0].mxu0 %v3389
      %v4546 = vpop.f32.mrb[0].mxu0
      %v4547 = vadd.f32 %v2905, %v4546
      %v4548 = vpop.f32.mrb[0].mxu0
      %4549 = vmatprep.mubr.f32.mxu0 0.0
      %4550 = vmatmul.mubr.f32.gmra.mrb[0].mxu0 %v3392
      %v4551 = vpop.f32.mrb[0].mxu0
      %v4552 = vadd.f32 %v2905, %v4551
      %v4553 = vpop.f32.mrb[0].mxu0
      %4554 = vmatprep.mubr.f32.mxu0 0.0
      %4555 = vmatmul.mubr.f32.gmra.mrb[0].mxu0 %v3395
      %v4556 = vpop.f32.mrb[0].mxu0
      %v4557 = vadd.f32 %v2905, %v4556
      %v4558 = vpop.f32.mrb[0].mxu0
      %4559 = vmatprep.mubr.f32.mxu0 0.0
      %4560 = vmatmul.mubr.f32.gmra.mrb[0].mxu0 %v3398
      %v4561 = vpop.f32.mrb[0].mxu0
      %v4562 = vadd.f32 %v2905, %v4561
      %v4563 = vpop.f32.mrb[0].mxu0
      %4564 = vmatprep.mubr.f32.mxu0 0.0
      %4565 = vmatmul.mubr.f32.gmra.mrb[0].mxu0 %v3401
      %v4566 = vpop.f32.mrb[0].mxu0
      %v4567 = vadd.f32 %v2905, %v4566
      %v4568 = vpop.f32.mrb[0].mxu0
      %4569 = vmatprep.mubr.f32.mxu0 0.0
      %4570 = vmatmul.mubr.f32.gmra.mrb[0].mxu0 %v3404
      %v4571 = vpop.f32.mrb[0].mxu0
      %v4572 = vadd.f32 %v2905, %v4571
      %v4573 = vpop.f32.mrb[0].mxu0
      %4574 = vmatprep.mubr.f32.mxu0 0.0
      %4575 = vmatmul.mubr.f32.gmra.mrb[0].mxu0 %v3407
      %v4576 = vpop.f32.mrb[0].mxu0
      %v4577 = vadd.f32 %v2905, %v4576
      %v4578 = vpop.f32.mrb[0].mxu0
      %4579 = vmatprep.mubr.f32.mxu0 0.0
      %4580 = vmatmul.mubr.f32.gmra.mrb[0].mxu0 %v3410
      %v4581 = vpop.f32.mrb[0].mxu0
      %v4582 = vadd.f32 %v2905, %v4581
      %v4583 = vpop.f32.mrb[0].mxu0
      %4584 = vmatprep.mubr.f32.mxu0 0.0
      %4585 = vmatmul.mubr.f32.gmra.mrb[0].mxu0 %v3413
      %v4586 = vpop.f32.mrb[0].mxu0
      %v4587 = vadd.f32 %v2905, %v4586
      %v4588 = vpop.f32.mrb[0].mxu0
      %4589 = vmatprep.mubr.f32.mxu0 0.0
      %4590 = vmatmul.mubr.f32.gmra.mrb[0].mxu0 %v3416
      %v4591 = vpop.f32.mrb[0].mxu0
      %v4592 = vadd.f32 %v2905, %v4591
      %v4593 = vpop.f32.mrb[0].mxu0
      %4594 = vmatprep.mubr.f32.mxu0 0.0
      %4595 = vmatmul.mubr.f32.gmra.mrb[0].mxu0 %v3419
      %v4596 = vpop.f32.mrb[0].mxu0
      %v4597 = vadd.f32 %v2905, %v4596
      %v4598 = vpop.f32.mrb[0].mxu0
      %4599 = vmatprep.mubr.f32.mxu0 0.0
      %4600 = vmatmul.mubr.f32.gmra.mrb[0].mxu0 %v3422
      %v4601 = vpop.f32.mrb[0].mxu0
      %v4602 = vadd.f32 %v2905, %v4601
      %v4603 = vpop.f32.mrb[0].mxu0
      %4604 = vmatprep.mubr.f32.mxu0 0.0
      %4605 = vmatmul.mubr.f32.gmra.mrb[0].mxu0 %v3425
      %v4606 = vpop.f32.mrb[0].mxu0
      %v4607 = vadd.f32 %v2905, %v4606
      %v4608 = vpop.f32.mrb[0].mxu0
      %4609 = vmatprep.mubr.f32.mxu0 0.0
      %4610 = vmatmul.mubr.f32.gmra.mrb[0].mxu0 %v3428
      %v4611 = vpop.f32.mrb[0].mxu0
      %v4612 = vadd.f32 %v2905, %v4611
      %v4613 = vpop.f32.mrb[0].mxu0
      %4614 = vmatprep.mubr.f32.mxu0 0.0
      %4615 = vmatmul.mubr.f32.gmra.mrb[0].mxu0 %v3431
      %v4616 = vpop.f32.mrb[0].mxu0
      %v4617 = vadd.f32 %v2905, %v4616
      %v4618 = vpop.f32.mrb[0].mxu0
      %4619 = vmatprep.mubr.f32.mxu0 0.0
      %4620 = vmatmul.mubr.f32.gmra.mrb[0].mxu0 %v3434
      %v4621 = vpop.f32.mrb[0].mxu0
      %v4622 = vadd.f32 %v2905, %v4621
      %v4623 = vpop.f32.mrb[0].mxu0
      %4624 = vmatprep.mubr.f32.mxu0 0.0
      %4625 = vmatmul.mubr.f32.gmra.mrb[0].mxu0 %v3437
      %v4626 = vpop.f32.mrb[0].mxu0
      %v4627 = vadd.f32 %v2905, %v4626
      %v4628 = vpop.f32.mrb[0].mxu0
      %4629 = vmatprep.mubr.f32.mxu0 0.0
      %4630 = vmatmul.mubr.f32.gmra.mrb[0].mxu0 %v3440
      %v4631 = vpop.f32.mrb[0].mxu0
      %v4632 = vadd.f32 %v2905, %v4631
      %v4633 = vpop.f32.mrb[0].mxu0
      %4634 = vmatprep.mubr.f32.mxu0 0.0
      %4635 = vmatmul.mubr.f32.gmra.mrb[0].mxu0 %v3443
      %v4636 = vpop.f32.mrb[0].mxu0
      %v4637 = vadd.f32 %v2905, %v4636
      %v4638 = vpop.f32.mrb[0].mxu0
      %4639 = vmatprep.mubr.f32.mxu0 0.0
      %4640 = vmatmul.mubr.f32.gmra.mrb[0].mxu0 %v3446
      %v4641 = vpop.f32.mrb[0].mxu0
      %v4642 = vadd.f32 %v2905, %v4641
      %v4643 = vpop.f32.mrb[0].mxu0
      %4644 = vmatprep.mubr.f32.mxu0 0.0
      %4645 = vmatmul.mubr.f32.gmra.mrb[0].mxu0 %v3449
      %v4646 = vpop.f32.mrb[0].mxu0
      %v4647 = vadd.f32 %v2905, %v4646
      %v4648 = vpop.f32.mrb[0].mxu0
      %4649 = vmatprep.mubr.f32.mxu0 0.0
      %4650 = vmatmul.mubr.f32.gmra.mrb[0].mxu0 %v3452
      %v4651 = vpop.f32.mrb[0].mxu0
      %v4652 = vadd.f32 %v2905, %v4651
      %v4653 = vpop.f32.mrb[0].mxu0
      %4654 = vmatprep.mubr.f32.mxu0 0.0
      %4655 = vmatmul.mubr.f32.gmra.mrb[0].mxu0 %v3455
      %v4656 = vpop.f32.mrb[0].mxu0
      %v4657 = vadd.f32 %v2905, %v4656
      %v4658 = vpop.f32.mrb[0].mxu0
      %4659 = vmatprep.mubr.f32.mxu0 0.0
      %4660 = vmatmul.mubr.f32.gmra.mrb[0].mxu0 %v3458
      %v4661 = vpop.f32.mrb[0].mxu0
      %v4662 = vadd.f32 %v2905, %v4661
      %v4663 = vpop.f32.mrb[0].mxu0
      %4664 = vmatprep.mubr.f32.mxu0 0.0
      %4665 = vmatmul.mubr.f32.gmra.mrb[0].mxu0 %v3461
      %v4666 = vpop.f32.mrb[0].mxu0
      %v4667 = vadd.f32 %v2905, %v4666
      %v4668 = vpop.f32.mrb[0].mxu0
      %4669 = vmatprep.mubr.f32.mxu0 0.0
      %4670 = vmatmul.mubr.f32.gmra.mrb[0].mxu0 %v3464
      %v4671 = vpop.f32.mrb[0].mxu0
      %v4672 = vadd.f32 %v2905, %v4671
      %v4673 = vpop.f32.mrb[0].mxu0
      %4674 = vmatprep.mubr.f32.mxu0 0.0
      %4675 = vmatmul.mubr.f32.gmra.mrb[0].mxu0 %v3467
      %v4676 = vpop.f32.mrb[0].mxu0
      %v4677 = vadd.f32 %v2905, %v4676
      %v4678 = vpop.f32.mrb[0].mxu0
      %4679 = vmatprep.mubr.f32.mxu0 0.0
      %4680 = vmatmul.mubr.f32.gmra.mrb[0].mxu0 %v3470
      %v4681 = vpop.f32.mrb[0].mxu0
      %v4682 = vadd.f32 %v2905, %v4681
      %v4683 = vpop.f32.mrb[0].mxu0
      %4684 = vmatprep.mubr.f32.mxu0 0.0
      %4685 = vmatmul.mubr.f32.gmra.mrb[0].mxu0 %v3473
      %v4686 = vpop.f32.mrb[0].mxu0
      %v4687 = vadd.f32 %v2905, %v4686
      %v4688 = vpop.f32.mrb[0].mxu0
      %4689 = vmatprep.mubr.f32.mxu0 0.0
      %4690 = vmatmul.mubr.f32.gmra.mrb[0].mxu0 %v3476
      %v4691 = vpop.f32.mrb[0].mxu0
      %v4692 = vadd.f32 %v2905, %v4691
      %v4693 = vpop.f32.mrb[0].mxu0
      %4694 = vmatprep.mubr.f32.mxu0 0.0
      %4695 = vmatmul.mubr.f32.gmra.mrb[0].mxu0 %v3479
      %v4696 = vpop.f32.mrb[0].mxu0
      %v4697 = vadd.f32 %v2905, %v4696
      %v4698 = vpop.f32.mrb[0].mxu0
      %4699 = vmatprep.mubr.f32.mxu0 0.0
      %4700 = vmatmul.mubr.f32.gmra.mrb[0].mxu0 %v3482
      %v4701 = vpop.f32.mrb[0].mxu0
      %v4702 = vadd.f32 %v2905, %v4701
      %v4703 = vpop.f32.mrb[0].mxu0
      %4704 = vmatprep.mubr.f32.mxu0 0.0
      %4705 = vmatmul.mubr.f32.gmra.mrb[0].mxu0 %v3485
      %v4706 = vpop.f32.mrb[0].mxu0
      %v4707 = vadd.f32 %v2905, %v4706
      %v4708 = vpop.f32.mrb[0].mxu0
      %4709 = vmatprep.mubr.f32.mxu0 0.0
      %4710 = vmatmul.mubr.f32.gmra.mrb[0].mxu0 %v3488
      %v4711 = vpop.f32.mrb[0].mxu0
      %v4712 = vadd.f32 %v2905, %v4711
      %v4713 = vpop.f32.mrb[0].mxu0
      %4714 = vmatprep.mubr.f32.mxu0 0.0
      %4715 = vmatmul.mubr.f32.gmra.mrb[0].mxu0 %v3491
      %v4716 = vpop.f32.mrb[0].mxu0
      %v4717 = vadd.f32 %v2905, %v4716
      %v4718 = vpop.f32.mrb[0].mxu0
      %4719 = vmatprep.mubr.f32.mxu0 0.0
      %4720 = vmatmul.mubr.f32.gmra.mrb[0].mxu0 %v3494
      %v4721 = vpop.f32.mrb[0].mxu0
      %v4722 = vadd.f32 %v2905, %v4721
      %v4723 = vpop.f32.mrb[0].mxu0
      %4724 = vmatprep.mubr.f32.mxu0 0.0
      %4725 = vmatmul.mubr.f32.gmra.mrb[0].mxu0 %v3497
      %v4726 = vpop.f32.mrb[0].mxu0
      %v4727 = vadd.f32 %v2905, %v4726
      %v4728 = vpop.f32.mrb[0].mxu0
      %4729 = vmatprep.mubr.f32.mxu0 0.0
      %4730 = vmatmul.mubr.f32.gmra.mrb[0].mxu0 %v3500
      %v4731 = vpop.f32.mrb[0].mxu0
      %v4732 = vadd.f32 %v2905, %v4731
      %v4733 = vpop.f32.mrb[0].mxu0
      %4734 = vmatprep.mubr.f32.mxu0 0.0
      %4735 = vmatmul.mubr.f32.gmra.mrb[0].mxu0 %v3503
      %v4736 = vpop.f32.mrb[0].mxu0
      %v4737 = vadd.f32 %v2905, %v4736
      %v4738 = vpop.f32.mrb[0].mxu0
      %4739 = vmatprep.mubr.f32.mxu0 0.0
      %4740 = vmatmul.mubr.f32.gmra.mrb[0].mxu0 %v3506
      %v4741 = vpop.f32.mrb[0].mxu0
      %v4742 = vadd.f32 %v2905, %v4741
      %v4743 = vpop.f32.mrb[0].mxu0
      %4744 = vmatprep.mubr.f32.mxu0 0.0
      %4745 = vmatmul.mubr.f32.gmra.mrb[0].mxu0 %v3509
      %v4746 = vpop.f32.mrb[0].mxu0
      %v4747 = vadd.f32 %v2905, %v4746
      %v4748 = vpop.f32.mrb[0].mxu0
      %4749 = vmatprep.mubr.f32.mxu0 0.0
      %4750 = vmatmul.mubr.f32.gmra.mrb[0].mxu0 %v3512
      %v4751 = vpop.f32.mrb[0].mxu0
      %v4752 = vadd.f32 %v2905, %v4751
      %v4753 = vpop.f32.mrb[0].mxu0
      %4754 = vmatprep.mubr.f32.mxu0 0.0
      %4755 = vmatmul.mubr.f32.gmra.mrb[0].mxu0 %v3515
      %v4756 = vpop.f32.mrb[0].mxu0
      %v4757 = vadd.f32 %v2905, %v4756
      %v4758 = vpop.f32.mrb[0].mxu0
      %4759 = vmatprep.mubr.f32.mxu0 0.0
      %4760 = vmatmul.mubr.f32.gmra.mrb[0].mxu0 %v3518
      %v4761 = vpop.f32.mrb[0].mxu0
      %v4762 = vadd.f32 %v2905, %v4761
      %v4763 = vpop.f32.mrb[0].mxu0
      %4764 = vmatprep.mubr.f32.mxu0 0.0
      %4765 = vmatmul.mubr.f32.gmra.mrb[0].mxu0 %v3521
      %v4766 = vpop.f32.mrb[0].mxu0
      %v4767 = vadd.f32 %v2905, %v4766
      %v4768 = vpop.f32.mrb[0].mxu0
      %4769 = vmatprep.mubr.f32.mxu0 0.0
      %4770 = vmatmul.mubr.f32.gmra.mrb[0].mxu0 %v3524
      %v4771 = vpop.f32.mrb[0].mxu0
      %v4772 = vadd.f32 %v2905, %v4771
      %v4773 = vpop.f32.mrb[0].mxu0
      %4774 = vmatprep.mubr.f32.mxu0 0.0
      %4775 = vmatmul.mubr.f32.gmra.mrb[0].mxu0 %v3527
      %v4776 = vpop.f32.mrb[0].mxu0
      %v4777 = vadd.f32 %v2905, %v4776
      %v4778 = vpop.f32.mrb[0].mxu0
      %4779 = vmatprep.mubr.f32.mxu0 0.0
      %4780 = vmatmul.mubr.f32.gmra.mrb[0].mxu0 %v3530
      %v4781 = vpop.f32.mrb[0].mxu0
      %v4782 = vadd.f32 %v2905, %v4781
      %v4783 = vpop.f32.mrb[0].mxu0
      %4784 = vmatprep.mubr.f32.mxu0 0.0
      %4785 = vmatmul.mubr.f32.gmra.mrb[0].mxu0 %v3533
      %v4786 = vpop.f32.mrb[0].mxu0
      %v4787 = vadd.f32 %v2905, %v4786
      %v4788 = vpop.f32.mrb[0].mxu0
      %4789 = vmatprep.mubr.f32.mxu0 0.0
      %4790 = vmatmul.mubr.f32.gmra.mrb[0].mxu0 %v3536
      %v4791 = vpop.f32.mrb[0].mxu0
      %v4792 = vadd.f32 %v2905, %v4791
      %v4793 = vpop.f32.mrb[0].mxu0
      %4794 = vmatprep.mubr.f32.mxu0 0.0
      %4795 = vmatmul.mubr.f32.gmra.mrb[0].mxu0 %v3539
      %v4796 = vpop.f32.mrb[0].mxu0
      %v4797 = vadd.f32 %v2905, %v4796
      %v4798 = vpop.f32.mrb[0].mxu0
      %4799 = vmatprep.mubr.f32.mxu0 0.0
      %4800 = vmatmul.mubr.f32.gmra.mrb[0].mxu0 %v3542
      %v4801 = vpop.f32.mrb[0].mxu0
      %v4802 = vadd.f32 %v2905, %v4801
      %v4803 = vpop.f32.mrb[0].mxu0
      %4804 = vmatprep.mubr.f32.mxu0 0.0
      %4805 = vmatmul.mubr.f32.gmra.mrb[0].mxu0 %v3545
      %v4806 = vpop.f32.mrb[0].mxu0
      %v4807 = vadd.f32 %v2905, %v4806
      %v4808 = vpop.f32.mrb[0].mxu0
      %4809 = vmatprep.mubr.f32.mxu0 0.0
      %4810 = vmatmul.mubr.f32.gmra.mrb[0].mxu0 %v3548
      %v4811 = vpop.f32.mrb[0].mxu0
      %v4812 = vadd.f32 %v2905, %v4811
      %v4813 = vpop.f32.mrb[0].mxu0
      %4814 = vmatprep.mubr.f32.mxu0 0.0
      %4815 = vmatmul.mubr.f32.gmra.mrb[0].mxu0 %v3551
      %v4816 = vpop.f32.mrb[0].mxu0
      %v4817 = vadd.f32 %v2905, %v4816
      %v4818 = vpop.f32.mrb[0].mxu0
      %4819 = vmatprep.mubr.f32.mxu0 0.0
      %4820 = vmatmul.mubr.f32.gmra.mrb[0].mxu0 %v3554
      %v4821 = vpop.f32.mrb[0].mxu0
      %v4822 = vadd.f32 %v2905, %v4821
      %v4823 = vpop.f32.mrb[0].mxu0
      %4824 = vmatprep.mubr.f32.mxu0 0.0
      %4825 = vmatmul.mubr.f32.gmra.mrb[0].mxu0 %v3557
      %v4826 = vpop.f32.mrb[0].mxu0
      %v4827 = vadd.f32 %v2905, %v4826
      %v4828 = vpop.f32.mrb[0].mxu0
      %4829 = vmatprep.mubr.f32.mxu0 0.0
      %4830 = vmatmul.mubr.f32.gmra.mrb[0].mxu0 %v3560
      %v4831 = vpop.f32.mrb[0].mxu0
      %v4832 = vadd.f32 %v2905, %v4831
      %v4833 = vpop.f32.mrb[0].mxu0
      %4834 = vmatprep.mubr.f32.mxu0 0.0
      %4835 = vmatmul.mubr.f32.gmra.mrb[0].mxu0 %v3563
      %v4836 = vpop.f32.mrb[0].mxu0
      %v4837 = vadd.f32 %v2905, %v4836
      %v4838 = vpop.f32.mrb[0].mxu0
      %4839 = vmatprep.mubr.f32.mxu0 0.0
      %4840 = vmatmul.mubr.f32.gmra.mrb[0].mxu0 %v3566
      %v4841 = vpop.f32.mrb[0].mxu0
      %v4842 = vadd.f32 %v2905, %v4841
      %v4843 = vpop.f32.mrb[0].mxu0
      %4844 = vmatprep.mubr.f32.mxu0 0.0
      %4845 = vmatmul.mubr.f32.gmra.mrb[0].mxu0 %v3569
      %v4846 = vpop.f32.mrb[0].mxu0
      %v4847 = vadd.f32 %v2905, %v4846
      %v4848 = vpop.f32.mrb[0].mxu0
      %4849 = vmatprep.mubr.f32.mxu0 0.0
      %4850 = vmatmul.mubr.f32.gmra.mrb[0].mxu0 %v3572
      %v4851 = vpop.f32.mrb[0].mxu0
      %v4852 = vadd.f32 %v2905, %v4851
      %v4853 = vpop.f32.mrb[0].mxu0
      %4854 = vmatprep.mubr.f32.mxu0 0.0
      %4855 = vmatmul.mubr.f32.gmra.mrb[0].mxu0 %v3575
      %v4856 = vpop.f32.mrb[0].mxu0
      %v4857 = vadd.f32 %v2905, %v4856
      %v4858 = vpop.f32.mrb[0].mxu0
      %4859 = vmatprep.mubr.f32.mxu0 0.0
      %4860 = vmatmul.mubr.f32.gmra.mrb[0].mxu0 %v3578
      %v4861 = vpop.f32.mrb[0].mxu0
      %v4862 = vadd.f32 %v2905, %v4861
      %v4863 = vpop.f32.mrb[0].mxu0
      %4864 = vmatprep.mubr.f32.mxu0 0.0
      %4865 = vmatmul.mubr.f32.gmra.mrb[0].mxu0 %v3581
      %v4866 = vpop.f32.mrb[0].mxu0
      %v4867 = vadd.f32 %v2905, %v4866
      %v4868 = vpop.f32.mrb[0].mxu0
      %4869 = vmatprep.mubr.f32.mxu0 0.0
      %4870 = vmatmul.mubr.f32.gmra.mrb[0].mxu0 %v3584
      %v4871 = vpop.f32.mrb[0].mxu0
      %v4872 = vadd.f32 %v2905, %v4871
      %v4873 = vpop.f32.mrb[0].mxu0
      %4874 = vmatprep.mubr.f32.mxu0 0.0
      %4875 = vmatmul.mubr.f32.gmra.mrb[0].mxu0 %v3587
      %v4876 = vpop.f32.mrb[0].mxu0
      %v4877 = vadd.f32 %v2905, %v4876
      %v4878 = vpop.f32.mrb[0].mxu0
      %4879 = vmatprep.mubr.f32.mxu0 0.0
      %4880 = vmatmul.mubr.f32.gmra.mrb[0].mxu0 %v3590
      %v4881 = vpop.f32.mrb[0].mxu0
      %v4882 = vadd.f32 %v2905, %v4881
      %v4883 = vpop.f32.mrb[0].mxu0
      %4884 = vmatprep.mubr.f32.mxu0 0.0
      %4885 = vmatmul.mubr.f32.gmra.mrb[0].mxu0 %v3593
      %v4886 = vpop.f32.mrb[0].mxu0
      %v4887 = vadd.f32 %v2905, %v4886
      %v4888 = vpop.f32.mrb[0].mxu0
      %4889 = vmatprep.mubr.f32.mxu0 0.0
      %4890 = vmatmul.mubr.f32.gmra.mrb[0].mxu0 %v3596
      %v4891 = vpop.f32.mrb[0].mxu0
      %v4892 = vadd.f32 %v2905, %v4891
      %v4893 = vpop.f32.mrb[0].mxu0
      %4894 = vmatprep.mubr.f32.mxu0 0.0
      %4895 = vmatmul.mubr.f32.gmra.mrb[0].mxu0 %v3599
      %v4896 = vpop.f32.mrb[0].mxu0
      %v4897 = vadd.f32 %v2905, %v4896
      %v4898 = vpop.f32.mrb[0].mxu0
      %4899 = vmatprep.mubr.f32.mxu0 0.0
      %4900 = vmatmul.mubr.f32.gmra.mrb[0].mxu0 %v3602
      %v4901 = vpop.f32.mrb[0].mxu0
      %v4902 = vadd.f32 %v2905, %v4901
      %v4903 = vpop.f32.mrb[0].mxu0
      %4904 = vmatprep.mubr.f32.mxu0 0.0
      %4905 = vmatmul.mubr.f32.gmra.mrb[0].mxu0 %v3605
      %v4906 = vpop.f32.mrb[0].mxu0
      %v4907 = vadd.f32 %v2905, %v4906
      %v4908 = vpop.f32.mrb[0].mxu0
      %4909 = vmatprep.mubr.f32.mxu0 0.0
      %4910 = vmatmul.mubr.f32.gmra.mrb[0].mxu0 %v3608
      %v4911 = vpop.f32.mrb[0].mxu0
      %v4912 = vadd.f32 %v2905, %v4911
      %v4913 = vpop.f32.mrb[0].mxu0
      %4914 = vmatprep.mubr.f32.mxu0 0.0
      %4915 = vmatmul.mubr.f32.gmra.mrb[0].mxu0 %v3611
      %v4916 = vpop.f32.mrb[0].mxu0
      %v4917 = vadd.f32 %v2905, %v4916
      %v4918 = vpop.f32.mrb[0].mxu0
      %4919 = vmatprep.mubr.f32.mxu0 0.0
      %4920 = vmatmul.mubr.f32.gmra.mrb[0].mxu0 %v3614
      %v4921 = vpop.f32.mrb[0].mxu0
      %v4922 = vadd.f32 %v2905, %v4921
      %v4923 = vpop.f32.mrb[0].mxu0
      %4924 = vmatprep.mubr.f32.mxu0 0.0
      %4925 = vmatmul.mubr.f32.gmra.mrb[0].mxu0 %v3617
      %v4926 = vpop.f32.mrb[0].mxu0
      %v4927 = vadd.f32 %v2905, %v4926
      %v4928 = vpop.f32.mrb[0].mxu0
      %4929 = vmatprep.mubr.f32.mxu0 0.0
      %4930 = vmatmul.mubr.f32.gmra.mrb[0].mxu0 %v3620
      %v4931 = vpop.f32.mrb[0].mxu0
      %v4932 = vadd.f32 %v2905, %v4931
      %v4933 = vpop.f32.mrb[0].mxu0
      %4934 = vmatprep.mubr.f32.mxu0 0.0
      %4935 = vmatmul.mubr.f32.gmra.mrb[0].mxu0 %v3623
      %v4936 = vpop.f32.mrb[0].mxu0
      %v4937 = vadd.f32 %v2905, %v4936
      %v4938 = vpop.f32.mrb[0].mxu0
      %4939 = vmatprep.mubr.f32.mxu0 0.0
      %4940 = vmatmul.mubr.f32.gmra.mrb[0].mxu0 %v3626
      %v4941 = vpop.f32.mrb[0].mxu0
      %v4942 = vadd.f32 %v2905, %v4941
      %v4943 = vpop.f32.mrb[0].mxu0
      %4944 = vmatprep.mubr.f32.mxu0 0.0
      %4945 = vmatmul.mubr.f32.gmra.mrb[0].mxu0 %v3629
      %v4946 = vpop.f32.mrb[0].mxu0
      %v4947 = vadd.f32 %v2905, %v4946
      %v4948 = vpop.f32.mrb[0].mxu0
      %4949 = vmatprep.mubr.f32.mxu0 0.0
      %4950 = vmatmul.mubr.f32.gmra.mrb[0].mxu0 %v3632
      %v4951 = vpop.f32.mrb[0].mxu0
      %v4952 = vadd.f32 %v2905, %v4951
      %v4953 = vpop.f32.mrb[0].mxu0
      %4954 = vmatprep.mubr.f32.mxu0 0.0
      %4955 = vmatmul.mubr.f32.gmra.mrb[0].mxu0 %v3635
      %v4956 = vpop.f32.mrb[0].mxu0
      %v4957 = vadd.f32 %v2905, %v4956
      %v4958 = vpop.f32.mrb[0].mxu0
      %4959 = vmatprep.mubr.f32.mxu0 0.0
      %4960 = vmatmul.mubr.f32.gmra.mrb[0].mxu0 %v3638
      %v4961 = vpop.f32.mrb[0].mxu0
      %v4962 = vadd.f32 %v2905, %v4961
      %v4963 = vpop.f32.mrb[0].mxu0
      %4964 = vmatprep.mubr.f32.mxu0 0.0
      %4965 = vmatmul.mubr.f32.gmra.mrb[0].mxu0 %v3641
      %v4966 = vpop.f32.mrb[0].mxu0
      %v4967 = vadd.f32 %v2905, %v4966
      %v4968 = vpop.f32.mrb[0].mxu0
      %4969 = vmatprep.mubr.f32.mxu0 0.0
      %4970 = vmatmul.mubr.f32.gmra.mrb[0].mxu0 %v3644
      %v4971 = vpop.f32.mrb[0].mxu0
      %v4972 = vadd.f32 %v2905, %v4971
      %v4973 = vpop.f32.mrb[0].mxu0
      %4974 = vmatprep.mubr.f32.mxu0 0.0
      %4975 = vmatmul.mubr.f32.gmra.mrb[0].mxu0 %v3647
      %v4976 = vpop.f32.mrb[0].mxu0
      %v4977 = vadd.f32 %v2905, %v4976
      %v4978 = vpop.f32.mrb[0].mxu0
      %4979 = vmatprep.mubr.f32.mxu0 0.0
      %4980 = vmatmul.mubr.f32.gmra.mrb[0].mxu0 %v3650
      %v4981 = vpop.f32.mrb[0].mxu0
      %v4982 = vadd.f32 %v2905, %v4981
      %v4983 = vpop.f32.mrb[0].mxu0
      %4984 = vmatprep.mubr.f32.mxu0 0.0
      %4985 = vmatmul.mubr.f32.gmra.mrb[0].mxu0 %v3653
      %v4986 = vpop.f32.mrb[0].mxu0
      %v4987 = vadd.f32 %v2905, %v4986
      %v4988 = vpop.f32.mrb[0].mxu0
      %4989 = vmatprep.mubr.f32.mxu0 0.0
      %4990 = vmatmul.mubr.f32.gmra.mrb[0].mxu0 %v3656
      %v4991 = vpop.f32.mrb[0].mxu0
      %v4992 = vadd.f32 %v2905, %v4991
      %v4993 = vpop.f32.mrb[0].mxu0
      %4994 = vmatprep.mubr.f32.mxu0 0.0
      %4995 = vmatmul.mubr.f32.gmra.mrb[0].mxu0 %v3659
      %v4996 = vpop.f32.mrb[0].mxu0
      %v4997 = vadd.f32 %v2905, %v4996
      %v4998 = vpop.f32.mrb[0].mxu0
      %4999 = vmatprep.mubr.f32.mxu0 0.0
      %5000 = vmatmul.mubr.f32.gmra.mrb[0].mxu0 %v3662
      %v5001 = vpop.f32.mrb[0].mxu0
      %v5002 = vadd.f32 %v2905, %v5001
      %v5003 = vpop.f32.mrb[0].mxu0
      %5004 = vmatprep.mubr.f32.mxu0 0.0
      %5005 = vmatmul.mubr.f32.gmra.mrb[0].mxu0 %v3665
      %v5006 = vpop.f32.mrb[0].mxu0
      %v5007 = vadd.f32 %v2905, %v5006
      %v5008 = vpop.f32.mrb[0].mxu0
      %5009 = vmatprep.mubr.f32.mxu0 0.0
      %5010 = vmatmul.mubr.f32.gmra.mrb[0].mxu0 %v3668
      %v5011 = vpop.f32.mrb[0].mxu0
      %v5012 = vadd.f32 %v2905, %v5011
      %v5013 = vpop.f32.mrb[0].mxu0
      %5014 = vmatprep.mubr.f32.mxu0 0.0
      %5015 = vmatmul.mubr.f32.gmra.mrb[0].mxu0 %v3671
      %v5016 = vpop.f32.mrb[0].mxu0
      %v5017 = vadd.f32 %v2905, %v5016
      %v5018 = vpop.f32.mrb[0].mxu0
      %5019 = vmatprep.mubr.f32.mxu0 0.0
      %5020 = vmatmul.mubr.f32.gmra.mrb[0].mxu0 %v3674
      %v5021 = vpop.f32.mrb[0].mxu0
      %v5022 = vadd.f32 %v2905, %v5021
      %v5023 = vpop.f32.mrb[0].mxu0
      %5024 = vdwg.mxu0
      %v5025 = vmax.f32 %v3747, 0.0
      %v5026 = vmax.f32 %v3752, 0.0
      %v5027 = vmax.f32 %v3757, 0.0
      %v5028 = vmax.f32 %v3762, 0.0
      %v5029 = vmax.f32 %v3767, 0.0
      %v5030 = vmax.f32 %v3772, 0.0
      %v5031 = vmax.f32 %v3777, 0.0
      %v5032 = vmax.f32 %v3782, 0.0
      %v5033 = vmax.f32 %v3787, 0.0
      %v5034 = vmax.f32 %v3792, 0.0
      %v5035 = vmax.f32 %v3797, 0.0
      %v5036 = vmax.f32 %v3802, 0.0
      %v5037 = vmax.f32 %v3807, 0.0
      %v5038 = vmax.f32 %v3812, 0.0
      %v5039 = vmax.f32 %v3817, 0.0
      %v5040 = vmax.f32 %v3822, 0.0
      %v5041 = vmax.f32 %v3827, 0.0
      %v5042 = vmax.f32 %v3832, 0.0
      %v5043 = vmax.f32 %v3837, 0.0
      %v5044 = vmax.f32 %v3842, 0.0
      %v5045 = vmax.f32 %v3847, 0.0
      %v5046 = vmax.f32 %v3852, 0.0
      %v5047 = vmax.f32 %v3857, 0.0
      %v5048 = vmax.f32 %v3862, 0.0
      %v5049 = vmax.f32 %v3867, 0.0
      %v5050 = vmax.f32 %v3872, 0.0
      %v5051 = vmax.f32 %v3877, 0.0
      %v5052 = vmax.f32 %v3882, 0.0
      %v5053 = vmax.f32 %v3887, 0.0
      %v5054 = vmax.f32 %v3892, 0.0
      %v5055 = vmax.f32 %v3897, 0.0
      %v5056 = vmax.f32 %v3902, 0.0
      %v5057 = vmax.f32 %v3907, 0.0
      %v5058 = vmax.f32 %v3912, 0.0
      %v5059 = vmax.f32 %v3917, 0.0
      %v5060 = vmax.f32 %v3922, 0.0
      %v5061 = vmax.f32 %v3927, 0.0
      %v5062 = vmax.f32 %v3932, 0.0
      %v5063 = vmax.f32 %v3937, 0.0
      %v5064 = vmax.f32 %v3942, 0.0
      %v5065 = vmax.f32 %v3947, 0.0
      %v5066 = vmax.f32 %v3952, 0.0
      %v5067 = vmax.f32 %v3957, 0.0
      %v5068 = vmax.f32 %v3962, 0.0
      %v5069 = vmax.f32 %v3967, 0.0
      %v5070 = vmax.f32 %v3972, 0.0
      %v5071 = vmax.f32 %v3977, 0.0
      %v5072 = vmax.f32 %v3982, 0.0
      %v5073 = vmax.f32 %v3987, 0.0
      %v5074 = vmax.f32 %v3992, 0.0
      %v5075 = vmax.f32 %v3997, 0.0
      %v5076 = vmax.f32 %v4002, 0.0
      %v5077 = vmax.f32 %v4007, 0.0
      %v5078 = vmax.f32 %v4012, 0.0
      %v5079 = vmax.f32 %v4017, 0.0
      %v5080 = vmax.f32 %v4022, 0.0
      %v5081 = vmax.f32 %v4027, 0.0
      %v5082 = vmax.f32 %v4032, 0.0
      %v5083 = vmax.f32 %v4037, 0.0
      %v5084 = vmax.f32 %v4042, 0.0
      %v5085 = vmax.f32 %v4047, 0.0
      %v5086 = vmax.f32 %v4052, 0.0
      %v5087 = vmax.f32 %v4057, 0.0
      %v5088 = vmax.f32 %v4062, 0.0
      %v5089 = vmax.f32 %v4067, 0.0
      %v5090 = vmax.f32 %v4072, 0.0
      %v5091 = vmax.f32 %v4077, 0.0
      %v5092 = vmax.f32 %v4082, 0.0
      %v5093 = vmax.f32 %v4087, 0.0
      %v5094 = vmax.f32 %v4092, 0.0
      %v5095 = vmax.f32 %v4097, 0.0
      %v5096 = vmax.f32 %v4102, 0.0
      %v5097 = vmax.f32 %v4107, 0.0
      %v5098 = vmax.f32 %v4112, 0.0
      %v5099 = vmax.f32 %v4117, 0.0
      %v5100 = vmax.f32 %v4122, 0.0
      %v5101 = vmax.f32 %v4127, 0.0
      %v5102 = vmax.f32 %v4132, 0.0
      %v5103 = vmax.f32 %v4137, 0.0
      %v5104 = vmax.f32 %v4142, 0.0
      %v5105 = vmax.f32 %v4147, 0.0
      %v5106 = vmax.f32 %v4152, 0.0
      %v5107 = vmax.f32 %v4157, 0.0
      %v5108 = vmax.f32 %v4162, 0.0
      %v5109 = vmax.f32 %v4167, 0.0
      %v5110 = vmax.f32 %v4172, 0.0
      %v5111 = vmax.f32 %v4177, 0.0
      %v5112 = vmax.f32 %v4182, 0.0
      %v5113 = vmax.f32 %v4187, 0.0
      %v5114 = vmax.f32 %v4192, 0.0
      %v5115 = vmax.f32 %v4197, 0.0
      %v5116 = vmax.f32 %v4202, 0.0
      %v5117 = vmax.f32 %v4207, 0.0
      %v5118 = vmax.f32 %v4212, 0.0
      %v5119 = vmax.f32 %v4217, 0.0
      %v5120 = vmax.f32 %v4222, 0.0
      %v5121 = vmax.f32 %v4227, 0.0
      %v5122 = vmax.f32 %v4232, 0.0
      %v5123 = vmax.f32 %v4237, 0.0
      %v5124 = vmax.f32 %v4242, 0.0
      %v5125 = vmax.f32 %v4247, 0.0
      %v5126 = vmax.f32 %v4252, 0.0
      %v5127 = vmax.f32 %v4257, 0.0
      %v5128 = vmax.f32 %v4262, 0.0
      %v5129 = vmax.f32 %v4267, 0.0
      %v5130 = vmax.f32 %v4272, 0.0
      %v5131 = vmax.f32 %v4277, 0.0
      %v5132 = vmax.f32 %v4282, 0.0
      %v5133 = vmax.f32 %v4287, 0.0
      %v5134 = vmax.f32 %v4292, 0.0
      %v5135 = vmax.f32 %v4297, 0.0
      %v5136 = vmax.f32 %v4302, 0.0
      %v5137 = vmax.f32 %v4307, 0.0
      %v5138 = vmax.f32 %v4312, 0.0
      %v5139 = vmax.f32 %v4317, 0.0
      %v5140 = vmax.f32 %v4322, 0.0
      %v5141 = vmax.f32 %v4327, 0.0
      %v5142 = vmax.f32 %v4332, 0.0
      %v5143 = vmax.f32 %v4337, 0.0
      %v5144 = vmax.f32 %v4342, 0.0
      %v5145 = vmax.f32 %v4347, 0.0
      %v5146 = vmax.f32 %v4352, 0.0
      %v5147 = vmax.f32 %v4357, 0.0
      %v5148 = vmax.f32 %v4362, 0.0
      %v5149 = vmax.f32 %v4367, 0.0
      %v5150 = vmax.f32 %v4372, 0.0
      %v5151 = vmax.f32 %v4377, 0.0
      %v5152 = vmax.f32 %v4382, 0.0
      %v5153 = vmax.f32 %v4387, 0.0
      %v5154 = vmax.f32 %v4392, 0.0
      %v5155 = vmax.f32 %v4397, 0.0
      %v5156 = vmax.f32 %v4402, 0.0
      %v5157 = vmax.f32 %v4407, 0.0
      %v5158 = vmax.f32 %v4412, 0.0
      %v5159 = vmax.f32 %v4417, 0.0
      %v5160 = vmax.f32 %v4422, 0.0
      %v5161 = vmax.f32 %v4427, 0.0
      %v5162 = vmax.f32 %v4432, 0.0
      %v5163 = vmax.f32 %v4437, 0.0
      %v5164 = vmax.f32 %v4442, 0.0
      %v5165 = vmax.f32 %v4447, 0.0
      %v5166 = vmax.f32 %v4452, 0.0
      %v5167 = vmax.f32 %v4457, 0.0
      %v5168 = vmax.f32 %v4462, 0.0
      %v5169 = vmax.f32 %v4467, 0.0
      %v5170 = vmax.f32 %v4472, 0.0
      %v5171 = vmax.f32 %v4477, 0.0
      %v5172 = vmax.f32 %v4482, 0.0
      %v5173 = vmax.f32 %v4487, 0.0
      %v5174 = vmax.f32 %v4492, 0.0
      %v5175 = vmax.f32 %v4497, 0.0
      %v5176 = vmax.f32 %v4502, 0.0
      %v5177 = vmax.f32 %v4507, 0.0
      %v5178 = vmax.f32 %v4512, 0.0
      %v5179 = vmax.f32 %v4517, 0.0
      %v5180 = vmax.f32 %v4522, 0.0
      %v5181 = vmax.f32 %v4527, 0.0
      %v5182 = vmax.f32 %v4532, 0.0
      %v5183 = vmax.f32 %v4537, 0.0
      %v5184 = vmax.f32 %v4542, 0.0
      %v5185 = vmax.f32 %v4547, 0.0
      %v5186 = vmax.f32 %v4552, 0.0
      %v5187 = vmax.f32 %v4557, 0.0
      %v5188 = vmax.f32 %v4562, 0.0
      %v5189 = vmax.f32 %v4567, 0.0
      %v5190 = vmax.f32 %v4572, 0.0
      %v5191 = vmax.f32 %v4577, 0.0
      %v5192 = vmax.f32 %v4582, 0.0
      %v5193 = vmax.f32 %v4587, 0.0
      %v5194 = vmax.f32 %v4592, 0.0
      %v5195 = vmax.f32 %v4597, 0.0
      %v5196 = vmax.f32 %v4602, 0.0
      %v5197 = vmax.f32 %v4607, 0.0
      %v5198 = vmax.f32 %v4612, 0.0
      %v5199 = vmax.f32 %v4617, 0.0
      %v5200 = vmax.f32 %v4622, 0.0
      %v5201 = vmax.f32 %v4627, 0.0
      %v5202 = vmax.f32 %v4632, 0.0
      %v5203 = vmax.f32 %v4637, 0.0
      %v5204 = vmax.f32 %v4642, 0.0
      %v5205 = vmax.f32 %v4647, 0.0
      %v5206 = vmax.f32 %v4652, 0.0
      %v5207 = vmax.f32 %v4657, 0.0
      %v5208 = vmax.f32 %v4662, 0.0
      %v5209 = vmax.f32 %v4667, 0.0
      %v5210 = vmax.f32 %v4672, 0.0
      %v5211 = vmax.f32 %v4677, 0.0
      %v5212 = vmax.f32 %v4682, 0.0
      %v5213 = vmax.f32 %v4687, 0.0
      %v5214 = vmax.f32 %v4692, 0.0
      %v5215 = vmax.f32 %v4697, 0.0
      %v5216 = vmax.f32 %v4702, 0.0
      %v5217 = vmax.f32 %v4707, 0.0
      %v5218 = vmax.f32 %v4712, 0.0
      %v5219 = vmax.f32 %v4717, 0.0
      %v5220 = vmax.f32 %v4722, 0.0
      %v5221 = vmax.f32 %v4727, 0.0
      %v5222 = vmax.f32 %v4732, 0.0
      %v5223 = vmax.f32 %v4737, 0.0
      %v5224 = vmax.f32 %v4742, 0.0
      %v5225 = vmax.f32 %v4747, 0.0
      %v5226 = vmax.f32 %v4752, 0.0
      %v5227 = vmax.f32 %v4757, 0.0
      %v5228 = vmax.f32 %v4762, 0.0
      %v5229 = vmax.f32 %v4767, 0.0
      %v5230 = vmax.f32 %v4772, 0.0
      %v5231 = vmax.f32 %v4777, 0.0
      %v5232 = vmax.f32 %v4782, 0.0
      %v5233 = vmax.f32 %v4787, 0.0
      %v5234 = vmax.f32 %v4792, 0.0
      %v5235 = vmax.f32 %v4797, 0.0
      %v5236 = vmax.f32 %v4802, 0.0
      %v5237 = vmax.f32 %v4807, 0.0
      %v5238 = vmax.f32 %v4812, 0.0
      %v5239 = vmax.f32 %v4817, 0.0
      %v5240 = vmax.f32 %v4822, 0.0
      %v5241 = vmax.f32 %v4827, 0.0
      %v5242 = vmax.f32 %v4832, 0.0
      %v5243 = vmax.f32 %v4837, 0.0
      %v5244 = vmax.f32 %v4842, 0.0
      %v5245 = vmax.f32 %v4847, 0.0
      %v5246 = vmax.f32 %v4852, 0.0
      %v5247 = vmax.f32 %v4857, 0.0
      %v5248 = vmax.f32 %v4862, 0.0
      %v5249 = vmax.f32 %v4867, 0.0
      %v5250 = vmax.f32 %v4872, 0.0
      %v5251 = vmax.f32 %v4877, 0.0
      %v5252 = vmax.f32 %v4882, 0.0
      %v5253 = vmax.f32 %v4887, 0.0
      %v5254 = vmax.f32 %v4892, 0.0
      %v5255 = vmax.f32 %v4897, 0.0
      %v5256 = vmax.f32 %v4902, 0.0
      %v5257 = vmax.f32 %v4907, 0.0
      %v5258 = vmax.f32 %v4912, 0.0
      %v5259 = vmax.f32 %v4917, 0.0
      %v5260 = vmax.f32 %v4922, 0.0
      %v5261 = vmax.f32 %v4927, 0.0
      %v5262 = vmax.f32 %v4932, 0.0
      %v5263 = vmax.f32 %v4937, 0.0
      %v5264 = vmax.f32 %v4942, 0.0
      %v5265 = vmax.f32 %v4947, 0.0
      %v5266 = vmax.f32 %v4952, 0.0
      %v5267 = vmax.f32 %v4957, 0.0
      %v5268 = vmax.f32 %v4962, 0.0
      %v5269 = vmax.f32 %v4967, 0.0
      %v5270 = vmax.f32 %v4972, 0.0
      %v5271 = vmax.f32 %v4977, 0.0
      %v5272 = vmax.f32 %v4982, 0.0
      %v5273 = vmax.f32 %v4987, 0.0
      %v5274 = vmax.f32 %v4992, 0.0
      %v5275 = vmax.f32 %v4997, 0.0
      %v5276 = vmax.f32 %v5002, 0.0
      %v5277 = vmax.f32 %v5007, 0.0
      %v5278 = vmax.f32 %v5012, 0.0
      %v5279 = vmax.f32 %v5017, 0.0
      %v5280 = vmax.f32 %v5022, 0.0
      %vm5281 = vcmask 261120
      %v5282 = vsel %vm5281, %v5025, -inf
      %v5283 = vrot.slane %v5282, 4
      %v5284 = vmax.f32 %v5282, %v5283
      %v5285 = vrot.slane %v5284, 2
      %v5286 = vmax.f32 %v5284, %v5285
      %v5287 = vrot.slane %v5286, 1
      %v5288 = vmax.f32 %v5286, %v5287
      %v5289 = vsel %vm5281, %v5026, -inf
      %v5290 = vrot.slane %v5289, 4
      %v5291 = vmax.f32 %v5289, %v5290
      %v5292 = vrot.slane %v5291, 2
      %v5293 = vmax.f32 %v5291, %v5292
      %v5294 = vrot.slane %v5293, 1
      %v5295 = vmax.f32 %v5293, %v5294
      %v5296 = vsel %vm5281, %v5027, -inf
      %v5297 = vrot.slane %v5296, 4
      %v5298 = vmax.f32 %v5296, %v5297
      %v5299 = vrot.slane %v5298, 2
      %v5300 = vmax.f32 %v5298, %v5299
      %v5301 = vrot.slane %v5300, 1
      %v5302 = vmax.f32 %v5300, %v5301
      %v5303 = vsel %vm5281, %v5028, -inf
      %v5304 = vrot.slane %v5303, 4
      %v5305 = vmax.f32 %v5303, %v5304
      %v5306 = vrot.slane %v5305, 2
      %v5307 = vmax.f32 %v5305, %v5306
      %v5308 = vrot.slane %v5307, 1
      %v5309 = vmax.f32 %v5307, %v5308
      %v5310 = vsel %vm5281, %v5029, -inf
      %v5311 = vrot.slane %v5310, 4
      %v5312 = vmax.f32 %v5310, %v5311
      %v5313 = vrot.slane %v5312, 2
      %v5314 = vmax.f32 %v5312, %v5313
      %v5315 = vrot.slane %v5314, 1
      %v5316 = vmax.f32 %v5314, %v5315
      %v5317 = vsel %vm5281, %v5030, -inf
      %v5318 = vrot.slane %v5317, 4
      %v5319 = vmax.f32 %v5317, %v5318
      %v5320 = vrot.slane %v5319, 2
      %v5321 = vmax.f32 %v5319, %v5320
      %v5322 = vrot.slane %v5321, 1
      %v5323 = vmax.f32 %v5321, %v5322
      %v5324 = vsel %vm5281, %v5031, -inf
      %v5325 = vrot.slane %v5324, 4
      %v5326 = vmax.f32 %v5324, %v5325
      %v5327 = vrot.slane %v5326, 2
      %v5328 = vmax.f32 %v5326, %v5327
      %v5329 = vrot.slane %v5328, 1
      %v5330 = vmax.f32 %v5328, %v5329
      %v5331 = vsel %vm5281, %v5032, -inf
      %v5332 = vrot.slane %v5331, 4
      %v5333 = vmax.f32 %v5331, %v5332
      %v5334 = vrot.slane %v5333, 2
      %v5335 = vmax.f32 %v5333, %v5334
      %v5336 = vrot.slane %v5335, 1
      %v5337 = vmax.f32 %v5335, %v5336
      %v5338 = vsel %vm5281, %v5033, -inf
      %v5339 = vrot.slane %v5338, 4
      %v5340 = vmax.f32 %v5338, %v5339
      %v5341 = vrot.slane %v5340, 2
      %v5342 = vmax.f32 %v5340, %v5341
      %v5343 = vrot.slane %v5342, 1
      %v5344 = vmax.f32 %v5342, %v5343
      %v5345 = vsel %vm5281, %v5034, -inf
      %v5346 = vrot.slane %v5345, 4
      %v5347 = vmax.f32 %v5345, %v5346
      %v5348 = vrot.slane %v5347, 2
      %v5349 = vmax.f32 %v5347, %v5348
      %v5350 = vrot.slane %v5349, 1
      %v5351 = vmax.f32 %v5349, %v5350
      %v5352 = vsel %vm5281, %v5035, -inf
      %v5353 = vrot.slane %v5352, 4
      %v5354 = vmax.f32 %v5352, %v5353
      %v5355 = vrot.slane %v5354, 2
      %v5356 = vmax.f32 %v5354, %v5355
      %v5357 = vrot.slane %v5356, 1
      %v5358 = vmax.f32 %v5356, %v5357
      %v5359 = vsel %vm5281, %v5036, -inf
      %v5360 = vrot.slane %v5359, 4
      %v5361 = vmax.f32 %v5359, %v5360
      %v5362 = vrot.slane %v5361, 2
      %v5363 = vmax.f32 %v5361, %v5362
      %v5364 = vrot.slane %v5363, 1
      %v5365 = vmax.f32 %v5363, %v5364
      %v5366 = vsel %vm5281, %v5037, -inf
      %v5367 = vrot.slane %v5366, 4
      %v5368 = vmax.f32 %v5366, %v5367
      %v5369 = vrot.slane %v5368, 2
      %v5370 = vmax.f32 %v5368, %v5369
      %v5371 = vrot.slane %v5370, 1
      %v5372 = vmax.f32 %v5370, %v5371
      %v5373 = vsel %vm5281, %v5038, -inf
      %v5374 = vrot.slane %v5373, 4
      %v5375 = vmax.f32 %v5373, %v5374
      %v5376 = vrot.slane %v5375, 2
      %v5377 = vmax.f32 %v5375, %v5376
      %v5378 = vrot.slane %v5377, 1
      %v5379 = vmax.f32 %v5377, %v5378
      %v5380 = vsel %vm5281, %v5039, -inf
      %v5381 = vrot.slane %v5380, 4
      %v5382 = vmax.f32 %v5380, %v5381
      %v5383 = vrot.slane %v5382, 2
      %v5384 = vmax.f32 %v5382, %v5383
      %v5385 = vrot.slane %v5384, 1
      %v5386 = vmax.f32 %v5384, %v5385
      %v5387 = vsel %vm5281, %v5040, -inf
      %v5388 = vrot.slane %v5387, 4
      %v5389 = vmax.f32 %v5387, %v5388
      %v5390 = vrot.slane %v5389, 2
      %v5391 = vmax.f32 %v5389, %v5390
      %v5392 = vrot.slane %v5391, 1
      %v5393 = vmax.f32 %v5391, %v5392
      %v5394 = vsel %vm5281, %v5041, -inf
      %v5395 = vrot.slane %v5394, 4
      %v5396 = vmax.f32 %v5394, %v5395
      %v5397 = vrot.slane %v5396, 2
      %v5398 = vmax.f32 %v5396, %v5397
      %v5399 = vrot.slane %v5398, 1
      %v5400 = vmax.f32 %v5398, %v5399
      %v5401 = vsel %vm5281, %v5042, -inf
      %v5402 = vrot.slane %v5401, 4
      %v5403 = vmax.f32 %v5401, %v5402
      %v5404 = vrot.slane %v5403, 2
      %v5405 = vmax.f32 %v5403, %v5404
      %v5406 = vrot.slane %v5405, 1
      %v5407 = vmax.f32 %v5405, %v5406
      %v5408 = vsel %vm5281, %v5043, -inf
      %v5409 = vrot.slane %v5408, 4
      %v5410 = vmax.f32 %v5408, %v5409
      %v5411 = vrot.slane %v5410, 2
      %v5412 = vmax.f32 %v5410, %v5411
      %v5413 = vrot.slane %v5412, 1
      %v5414 = vmax.f32 %v5412, %v5413
      %v5415 = vsel %vm5281, %v5044, -inf
      %v5416 = vrot.slane %v5415, 4
      %v5417 = vmax.f32 %v5415, %v5416
      %v5418 = vrot.slane %v5417, 2
      %v5419 = vmax.f32 %v5417, %v5418
      %v5420 = vrot.slane %v5419, 1
      %v5421 = vmax.f32 %v5419, %v5420
      %v5422 = vsel %vm5281, %v5045, -inf
      %v5423 = vrot.slane %v5422, 4
      %v5424 = vmax.f32 %v5422, %v5423
      %v5425 = vrot.slane %v5424, 2
      %v5426 = vmax.f32 %v5424, %v5425
      %v5427 = vrot.slane %v5426, 1
      %v5428 = vmax.f32 %v5426, %v5427
      %v5429 = vsel %vm5281, %v5046, -inf
      %v5430 = vrot.slane %v5429, 4
      %v5431 = vmax.f32 %v5429, %v5430
      %v5432 = vrot.slane %v5431, 2
      %v5433 = vmax.f32 %v5431, %v5432
      %v5434 = vrot.slane %v5433, 1
      %v5435 = vmax.f32 %v5433, %v5434
      %v5436 = vsel %vm5281, %v5047, -inf
      %v5437 = vrot.slane %v5436, 4
      %v5438 = vmax.f32 %v5436, %v5437
      %v5439 = vrot.slane %v5438, 2
      %v5440 = vmax.f32 %v5438, %v5439
      %v5441 = vrot.slane %v5440, 1
      %v5442 = vmax.f32 %v5440, %v5441
      %v5443 = vsel %vm5281, %v5048, -inf
      %v5444 = vrot.slane %v5443, 4
      %v5445 = vmax.f32 %v5443, %v5444
      %v5446 = vrot.slane %v5445, 2
      %v5447 = vmax.f32 %v5445, %v5446
      %v5448 = vrot.slane %v5447, 1
      %v5449 = vmax.f32 %v5447, %v5448
      %v5450 = vsel %vm5281, %v5049, -inf
      %v5451 = vrot.slane %v5450, 4
      %v5452 = vmax.f32 %v5450, %v5451
      %v5453 = vrot.slane %v5452, 2
      %v5454 = vmax.f32 %v5452, %v5453
      %v5455 = vrot.slane %v5454, 1
      %v5456 = vmax.f32 %v5454, %v5455
      %v5457 = vsel %vm5281, %v5050, -inf
      %v5458 = vrot.slane %v5457, 4
      %v5459 = vmax.f32 %v5457, %v5458
      %v5460 = vrot.slane %v5459, 2
      %v5461 = vmax.f32 %v5459, %v5460
      %v5462 = vrot.slane %v5461, 1
      %v5463 = vmax.f32 %v5461, %v5462
      %v5464 = vsel %vm5281, %v5051, -inf
      %v5465 = vrot.slane %v5464, 4
      %v5466 = vmax.f32 %v5464, %v5465
      %v5467 = vrot.slane %v5466, 2
      %v5468 = vmax.f32 %v5466, %v5467
      %v5469 = vrot.slane %v5468, 1
      %v5470 = vmax.f32 %v5468, %v5469
      %v5471 = vsel %vm5281, %v5052, -inf
      %v5472 = vrot.slane %v5471, 4
      %v5473 = vmax.f32 %v5471, %v5472
      %v5474 = vrot.slane %v5473, 2
      %v5475 = vmax.f32 %v5473, %v5474
      %v5476 = vrot.slane %v5475, 1
      %v5477 = vmax.f32 %v5475, %v5476
      %v5478 = vsel %vm5281, %v5053, -inf
      %v5479 = vrot.slane %v5478, 4
      %v5480 = vmax.f32 %v5478, %v5479
      %v5481 = vrot.slane %v5480, 2
      %v5482 = vmax.f32 %v5480, %v5481
      %v5483 = vrot.slane %v5482, 1
      %v5484 = vmax.f32 %v5482, %v5483
      %v5485 = vsel %vm5281, %v5054, -inf
      %v5486 = vrot.slane %v5485, 4
      %v5487 = vmax.f32 %v5485, %v5486
      %v5488 = vrot.slane %v5487, 2
      %v5489 = vmax.f32 %v5487, %v5488
      %v5490 = vrot.slane %v5489, 1
      %v5491 = vmax.f32 %v5489, %v5490
      %v5492 = vsel %vm5281, %v5055, -inf
      %v5493 = vrot.slane %v5492, 4
      %v5494 = vmax.f32 %v5492, %v5493
      %v5495 = vrot.slane %v5494, 2
      %v5496 = vmax.f32 %v5494, %v5495
      %v5497 = vrot.slane %v5496, 1
      %v5498 = vmax.f32 %v5496, %v5497
      %v5499 = vsel %vm5281, %v5056, -inf
      %v5500 = vrot.slane %v5499, 4
      %v5501 = vmax.f32 %v5499, %v5500
      %v5502 = vrot.slane %v5501, 2
      %v5503 = vmax.f32 %v5501, %v5502
      %v5504 = vrot.slane %v5503, 1
      %v5505 = vmax.f32 %v5503, %v5504
      %v5506 = vsel %vm5281, %v5057, -inf
      %v5507 = vrot.slane %v5506, 4
      %v5508 = vmax.f32 %v5506, %v5507
      %v5509 = vrot.slane %v5508, 2
      %v5510 = vmax.f32 %v5508, %v5509
      %v5511 = vrot.slane %v5510, 1
      %v5512 = vmax.f32 %v5510, %v5511
      %v5513 = vsel %vm5281, %v5058, -inf
      %v5514 = vrot.slane %v5513, 4
      %v5515 = vmax.f32 %v5513, %v5514
      %v5516 = vrot.slane %v5515, 2
      %v5517 = vmax.f32 %v5515, %v5516
      %v5518 = vrot.slane %v5517, 1
      %v5519 = vmax.f32 %v5517, %v5518
      %v5520 = vsel %vm5281, %v5059, -inf
      %v5521 = vrot.slane %v5520, 4
      %v5522 = vmax.f32 %v5520, %v5521
      %v5523 = vrot.slane %v5522, 2
      %v5524 = vmax.f32 %v5522, %v5523
      %v5525 = vrot.slane %v5524, 1
      %v5526 = vmax.f32 %v5524, %v5525
      %v5527 = vsel %vm5281, %v5060, -inf
      %v5528 = vrot.slane %v5527, 4
      %v5529 = vmax.f32 %v5527, %v5528
      %v5530 = vrot.slane %v5529, 2
      %v5531 = vmax.f32 %v5529, %v5530
      %v5532 = vrot.slane %v5531, 1
      %v5533 = vmax.f32 %v5531, %v5532
      %v5534 = vsel %vm5281, %v5061, -inf
      %v5535 = vrot.slane %v5534, 4
      %v5536 = vmax.f32 %v5534, %v5535
      %v5537 = vrot.slane %v5536, 2
      %v5538 = vmax.f32 %v5536, %v5537
      %v5539 = vrot.slane %v5538, 1
      %v5540 = vmax.f32 %v5538, %v5539
      %v5541 = vsel %vm5281, %v5062, -inf
      %v5542 = vrot.slane %v5541, 4
      %v5543 = vmax.f32 %v5541, %v5542
      %v5544 = vrot.slane %v5543, 2
      %v5545 = vmax.f32 %v5543, %v5544
      %v5546 = vrot.slane %v5545, 1
      %v5547 = vmax.f32 %v5545, %v5546
      %v5548 = vsel %vm5281, %v5063, -inf
      %v5549 = vrot.slane %v5548, 4
      %v5550 = vmax.f32 %v5548, %v5549
      %v5551 = vrot.slane %v5550, 2
      %v5552 = vmax.f32 %v5550, %v5551
      %v5553 = vrot.slane %v5552, 1
      %v5554 = vmax.f32 %v5552, %v5553
      %v5555 = vsel %vm5281, %v5064, -inf
      %v5556 = vrot.slane %v5555, 4
      %v5557 = vmax.f32 %v5555, %v5556
      %v5558 = vrot.slane %v5557, 2
      %v5559 = vmax.f32 %v5557, %v5558
      %v5560 = vrot.slane %v5559, 1
      %v5561 = vmax.f32 %v5559, %v5560
      %v5562 = vsel %vm5281, %v5065, -inf
      %v5563 = vrot.slane %v5562, 4
      %v5564 = vmax.f32 %v5562, %v5563
      %v5565 = vrot.slane %v5564, 2
      %v5566 = vmax.f32 %v5564, %v5565
      %v5567 = vrot.slane %v5566, 1
      %v5568 = vmax.f32 %v5566, %v5567
      %v5569 = vsel %vm5281, %v5066, -inf
      %v5570 = vrot.slane %v5569, 4
      %v5571 = vmax.f32 %v5569, %v5570
      %v5572 = vrot.slane %v5571, 2
      %v5573 = vmax.f32 %v5571, %v5572
      %v5574 = vrot.slane %v5573, 1
      %v5575 = vmax.f32 %v5573, %v5574
      %v5576 = vsel %vm5281, %v5067, -inf
      %v5577 = vrot.slane %v5576, 4
      %v5578 = vmax.f32 %v5576, %v5577
      %v5579 = vrot.slane %v5578, 2
      %v5580 = vmax.f32 %v5578, %v5579
      %v5581 = vrot.slane %v5580, 1
      %v5582 = vmax.f32 %v5580, %v5581
      %v5583 = vsel %vm5281, %v5068, -inf
      %v5584 = vrot.slane %v5583, 4
      %v5585 = vmax.f32 %v5583, %v5584
      %v5586 = vrot.slane %v5585, 2
      %v5587 = vmax.f32 %v5585, %v5586
      %v5588 = vrot.slane %v5587, 1
      %v5589 = vmax.f32 %v5587, %v5588
      %v5590 = vsel %vm5281, %v5069, -inf
      %v5591 = vrot.slane %v5590, 4
      %v5592 = vmax.f32 %v5590, %v5591
      %v5593 = vrot.slane %v5592, 2
      %v5594 = vmax.f32 %v5592, %v5593
      %v5595 = vrot.slane %v5594, 1
      %v5596 = vmax.f32 %v5594, %v5595
      %v5597 = vsel %vm5281, %v5070, -inf
      %v5598 = vrot.slane %v5597, 4
      %v5599 = vmax.f32 %v5597, %v5598
      %v5600 = vrot.slane %v5599, 2
      %v5601 = vmax.f32 %v5599, %v5600
      %v5602 = vrot.slane %v5601, 1
      %v5603 = vmax.f32 %v5601, %v5602
      %v5604 = vsel %vm5281, %v5071, -inf
      %v5605 = vrot.slane %v5604, 4
      %v5606 = vmax.f32 %v5604, %v5605
      %v5607 = vrot.slane %v5606, 2
      %v5608 = vmax.f32 %v5606, %v5607
      %v5609 = vrot.slane %v5608, 1
      %v5610 = vmax.f32 %v5608, %v5609
      %v5611 = vsel %vm5281, %v5072, -inf
      %v5612 = vrot.slane %v5611, 4
      %v5613 = vmax.f32 %v5611, %v5612
      %v5614 = vrot.slane %v5613, 2
      %v5615 = vmax.f32 %v5613, %v5614
      %v5616 = vrot.slane %v5615, 1
      %v5617 = vmax.f32 %v5615, %v5616
      %v5618 = vsel %vm5281, %v5073, -inf
      %v5619 = vrot.slane %v5618, 4
      %v5620 = vmax.f32 %v5618, %v5619
      %v5621 = vrot.slane %v5620, 2
      %v5622 = vmax.f32 %v5620, %v5621
      %v5623 = vrot.slane %v5622, 1
      %v5624 = vmax.f32 %v5622, %v5623
      %v5625 = vsel %vm5281, %v5074, -inf
      %v5626 = vrot.slane %v5625, 4
      %v5627 = vmax.f32 %v5625, %v5626
      %v5628 = vrot.slane %v5627, 2
      %v5629 = vmax.f32 %v5627, %v5628
      %v5630 = vrot.slane %v5629, 1
      %v5631 = vmax.f32 %v5629, %v5630
      %v5632 = vsel %vm5281, %v5075, -inf
      %v5633 = vrot.slane %v5632, 4
      %v5634 = vmax.f32 %v5632, %v5633
      %v5635 = vrot.slane %v5634, 2
      %v5636 = vmax.f32 %v5634, %v5635
      %v5637 = vrot.slane %v5636, 1
      %v5638 = vmax.f32 %v5636, %v5637
      %v5639 = vsel %vm5281, %v5076, -inf
      %v5640 = vrot.slane %v5639, 4
      %v5641 = vmax.f32 %v5639, %v5640
      %v5642 = vrot.slane %v5641, 2
      %v5643 = vmax.f32 %v5641, %v5642
      %v5644 = vrot.slane %v5643, 1
      %v5645 = vmax.f32 %v5643, %v5644
      %v5646 = vsel %vm5281, %v5077, -inf
      %v5647 = vrot.slane %v5646, 4
      %v5648 = vmax.f32 %v5646, %v5647
      %v5649 = vrot.slane %v5648, 2
      %v5650 = vmax.f32 %v5648, %v5649
      %v5651 = vrot.slane %v5650, 1
      %v5652 = vmax.f32 %v5650, %v5651
      %v5653 = vsel %vm5281, %v5078, -inf
      %v5654 = vrot.slane %v5653, 4
      %v5655 = vmax.f32 %v5653, %v5654
      %v5656 = vrot.slane %v5655, 2
      %v5657 = vmax.f32 %v5655, %v5656
      %v5658 = vrot.slane %v5657, 1
      %v5659 = vmax.f32 %v5657, %v5658
      %v5660 = vsel %vm5281, %v5079, -inf
      %v5661 = vrot.slane %v5660, 4
      %v5662 = vmax.f32 %v5660, %v5661
      %v5663 = vrot.slane %v5662, 2
      %v5664 = vmax.f32 %v5662, %v5663
      %v5665 = vrot.slane %v5664, 1
      %v5666 = vmax.f32 %v5664, %v5665
      %v5667 = vsel %vm5281, %v5080, -inf
      %v5668 = vrot.slane %v5667, 4
      %v5669 = vmax.f32 %v5667, %v5668
      %v5670 = vrot.slane %v5669, 2
      %v5671 = vmax.f32 %v5669, %v5670
      %v5672 = vrot.slane %v5671, 1
      %v5673 = vmax.f32 %v5671, %v5672
      %v5674 = vsel %vm5281, %v5081, -inf
      %v5675 = vrot.slane %v5674, 4
      %v5676 = vmax.f32 %v5674, %v5675
      %v5677 = vrot.slane %v5676, 2
      %v5678 = vmax.f32 %v5676, %v5677
      %v5679 = vrot.slane %v5678, 1
      %v5680 = vmax.f32 %v5678, %v5679
      %v5681 = vsel %vm5281, %v5082, -inf
      %v5682 = vrot.slane %v5681, 4
      %v5683 = vmax.f32 %v5681, %v5682
      %v5684 = vrot.slane %v5683, 2
      %v5685 = vmax.f32 %v5683, %v5684
      %v5686 = vrot.slane %v5685, 1
      %v5687 = vmax.f32 %v5685, %v5686
      %v5688 = vsel %vm5281, %v5083, -inf
      %v5689 = vrot.slane %v5688, 4
      %v5690 = vmax.f32 %v5688, %v5689
      %v5691 = vrot.slane %v5690, 2
      %v5692 = vmax.f32 %v5690, %v5691
      %v5693 = vrot.slane %v5692, 1
      %v5694 = vmax.f32 %v5692, %v5693
      %v5695 = vsel %vm5281, %v5084, -inf
      %v5696 = vrot.slane %v5695, 4
      %v5697 = vmax.f32 %v5695, %v5696
      %v5698 = vrot.slane %v5697, 2
      %v5699 = vmax.f32 %v5697, %v5698
      %v5700 = vrot.slane %v5699, 1
      %v5701 = vmax.f32 %v5699, %v5700
      %v5702 = vsel %vm5281, %v5085, -inf
      %v5703 = vrot.slane %v5702, 4
      %v5704 = vmax.f32 %v5702, %v5703
      %v5705 = vrot.slane %v5704, 2
      %v5706 = vmax.f32 %v5704, %v5705
      %v5707 = vrot.slane %v5706, 1
      %v5708 = vmax.f32 %v5706, %v5707
      %v5709 = vsel %vm5281, %v5086, -inf
      %v5710 = vrot.slane %v5709, 4
      %v5711 = vmax.f32 %v5709, %v5710
      %v5712 = vrot.slane %v5711, 2
      %v5713 = vmax.f32 %v5711, %v5712
      %v5714 = vrot.slane %v5713, 1
      %v5715 = vmax.f32 %v5713, %v5714
      %v5716 = vsel %vm5281, %v5087, -inf
      %v5717 = vrot.slane %v5716, 4
      %v5718 = vmax.f32 %v5716, %v5717
      %v5719 = vrot.slane %v5718, 2
      %v5720 = vmax.f32 %v5718, %v5719
      %v5721 = vrot.slane %v5720, 1
      %v5722 = vmax.f32 %v5720, %v5721
      %v5723 = vsel %vm5281, %v5088, -inf
      %v5724 = vrot.slane %v5723, 4
      %v5725 = vmax.f32 %v5723, %v5724
      %v5726 = vrot.slane %v5725, 2
      %v5727 = vmax.f32 %v5725, %v5726
      %v5728 = vrot.slane %v5727, 1
      %v5729 = vmax.f32 %v5727, %v5728
      %v5730 = vsel %vm5281, %v5089, -inf
      %v5731 = vrot.slane %v5730, 4
      %v5732 = vmax.f32 %v5730, %v5731
      %v5733 = vrot.slane %v5732, 2
      %v5734 = vmax.f32 %v5732, %v5733
      %v5735 = vrot.slane %v5734, 1
      %v5736 = vmax.f32 %v5734, %v5735
      %v5737 = vsel %vm5281, %v5090, -inf
      %v5738 = vrot.slane %v5737, 4
      %v5739 = vmax.f32 %v5737, %v5738
      %v5740 = vrot.slane %v5739, 2
      %v5741 = vmax.f32 %v5739, %v5740
      %v5742 = vrot.slane %v5741, 1
      %v5743 = vmax.f32 %v5741, %v5742
      %v5744 = vsel %vm5281, %v5091, -inf
      %v5745 = vrot.slane %v5744, 4
      %v5746 = vmax.f32 %v5744, %v5745
      %v5747 = vrot.slane %v5746, 2
      %v5748 = vmax.f32 %v5746, %v5747
      %v5749 = vrot.slane %v5748, 1
      %v5750 = vmax.f32 %v5748, %v5749
      %v5751 = vsel %vm5281, %v5092, -inf
      %v5752 = vrot.slane %v5751, 4
      %v5753 = vmax.f32 %v5751, %v5752
      %v5754 = vrot.slane %v5753, 2
      %v5755 = vmax.f32 %v5753, %v5754
      %v5756 = vrot.slane %v5755, 1
      %v5757 = vmax.f32 %v5755, %v5756
      %v5758 = vsel %vm5281, %v5093, -inf
      %v5759 = vrot.slane %v5758, 4
      %v5760 = vmax.f32 %v5758, %v5759
      %v5761 = vrot.slane %v5760, 2
      %v5762 = vmax.f32 %v5760, %v5761
      %v5763 = vrot.slane %v5762, 1
      %v5764 = vmax.f32 %v5762, %v5763
      %v5765 = vsel %vm5281, %v5094, -inf
      %v5766 = vrot.slane %v5765, 4
      %v5767 = vmax.f32 %v5765, %v5766
      %v5768 = vrot.slane %v5767, 2
      %v5769 = vmax.f32 %v5767, %v5768
      %v5770 = vrot.slane %v5769, 1
      %v5771 = vmax.f32 %v5769, %v5770
      %v5772 = vsel %vm5281, %v5095, -inf
      %v5773 = vrot.slane %v5772, 4
      %v5774 = vmax.f32 %v5772, %v5773
      %v5775 = vrot.slane %v5774, 2
      %v5776 = vmax.f32 %v5774, %v5775
      %v5777 = vrot.slane %v5776, 1
      %v5778 = vmax.f32 %v5776, %v5777
      %v5779 = vsel %vm5281, %v5096, -inf
      %v5780 = vrot.slane %v5779, 4
      %v5781 = vmax.f32 %v5779, %v5780
      %v5782 = vrot.slane %v5781, 2
      %v5783 = vmax.f32 %v5781, %v5782
      %v5784 = vrot.slane %v5783, 1
      %v5785 = vmax.f32 %v5783, %v5784
      %v5786 = vsel %vm5281, %v5097, -inf
      %v5787 = vrot.slane %v5786, 4
      %v5788 = vmax.f32 %v5786, %v5787
      %v5789 = vrot.slane %v5788, 2
      %v5790 = vmax.f32 %v5788, %v5789
      %v5791 = vrot.slane %v5790, 1
      %v5792 = vmax.f32 %v5790, %v5791
      %v5793 = vsel %vm5281, %v5098, -inf
      %v5794 = vrot.slane %v5793, 4
      %v5795 = vmax.f32 %v5793, %v5794
      %v5796 = vrot.slane %v5795, 2
      %v5797 = vmax.f32 %v5795, %v5796
      %v5798 = vrot.slane %v5797, 1
      %v5799 = vmax.f32 %v5797, %v5798
      %v5800 = vsel %vm5281, %v5099, -inf
      %v5801 = vrot.slane %v5800, 4
      %v5802 = vmax.f32 %v5800, %v5801
      %v5803 = vrot.slane %v5802, 2
      %v5804 = vmax.f32 %v5802, %v5803
      %v5805 = vrot.slane %v5804, 1
      %v5806 = vmax.f32 %v5804, %v5805
      %v5807 = vsel %vm5281, %v5100, -inf
      %v5808 = vrot.slane %v5807, 4
      %v5809 = vmax.f32 %v5807, %v5808
      %v5810 = vrot.slane %v5809, 2
      %v5811 = vmax.f32 %v5809, %v5810
      %v5812 = vrot.slane %v5811, 1
      %v5813 = vmax.f32 %v5811, %v5812
      %v5814 = vsel %vm5281, %v5101, -inf
      %v5815 = vrot.slane %v5814, 4
      %v5816 = vmax.f32 %v5814, %v5815
      %v5817 = vrot.slane %v5816, 2
      %v5818 = vmax.f32 %v5816, %v5817
      %v5819 = vrot.slane %v5818, 1
      %v5820 = vmax.f32 %v5818, %v5819
      %v5821 = vsel %vm5281, %v5102, -inf
      %v5822 = vrot.slane %v5821, 4
      %v5823 = vmax.f32 %v5821, %v5822
      %v5824 = vrot.slane %v5823, 2
      %v5825 = vmax.f32 %v5823, %v5824
      %v5826 = vrot.slane %v5825, 1
      %v5827 = vmax.f32 %v5825, %v5826
      %v5828 = vsel %vm5281, %v5103, -inf
      %v5829 = vrot.slane %v5828, 4
      %v5830 = vmax.f32 %v5828, %v5829
      %v5831 = vrot.slane %v5830, 2
      %v5832 = vmax.f32 %v5830, %v5831
      %v5833 = vrot.slane %v5832, 1
      %v5834 = vmax.f32 %v5832, %v5833
      %v5835 = vsel %vm5281, %v5104, -inf
      %v5836 = vrot.slane %v5835, 4
      %v5837 = vmax.f32 %v5835, %v5836
      %v5838 = vrot.slane %v5837, 2
      %v5839 = vmax.f32 %v5837, %v5838
      %v5840 = vrot.slane %v5839, 1
      %v5841 = vmax.f32 %v5839, %v5840
      %v5842 = vsel %vm5281, %v5105, -inf
      %v5843 = vrot.slane %v5842, 4
      %v5844 = vmax.f32 %v5842, %v5843
      %v5845 = vrot.slane %v5844, 2
      %v5846 = vmax.f32 %v5844, %v5845
      %v5847 = vrot.slane %v5846, 1
      %v5848 = vmax.f32 %v5846, %v5847
      %v5849 = vsel %vm5281, %v5106, -inf
      %v5850 = vrot.slane %v5849, 4
      %v5851 = vmax.f32 %v5849, %v5850
      %v5852 = vrot.slane %v5851, 2
      %v5853 = vmax.f32 %v5851, %v5852
      %v5854 = vrot.slane %v5853, 1
      %v5855 = vmax.f32 %v5853, %v5854
      %v5856 = vsel %vm5281, %v5107, -inf
      %v5857 = vrot.slane %v5856, 4
      %v5858 = vmax.f32 %v5856, %v5857
      %v5859 = vrot.slane %v5858, 2
      %v5860 = vmax.f32 %v5858, %v5859
      %v5861 = vrot.slane %v5860, 1
      %v5862 = vmax.f32 %v5860, %v5861
      %v5863 = vsel %vm5281, %v5108, -inf
      %v5864 = vrot.slane %v5863, 4
      %v5865 = vmax.f32 %v5863, %v5864
      %v5866 = vrot.slane %v5865, 2
      %v5867 = vmax.f32 %v5865, %v5866
      %v5868 = vrot.slane %v5867, 1
      %v5869 = vmax.f32 %v5867, %v5868
      %v5870 = vsel %vm5281, %v5109, -inf
      %v5871 = vrot.slane %v5870, 4
      %v5872 = vmax.f32 %v5870, %v5871
      %v5873 = vrot.slane %v5872, 2
      %v5874 = vmax.f32 %v5872, %v5873
      %v5875 = vrot.slane %v5874, 1
      %v5876 = vmax.f32 %v5874, %v5875
      %v5877 = vsel %vm5281, %v5110, -inf
      %v5878 = vrot.slane %v5877, 4
      %v5879 = vmax.f32 %v5877, %v5878
      %v5880 = vrot.slane %v5879, 2
      %v5881 = vmax.f32 %v5879, %v5880
      %v5882 = vrot.slane %v5881, 1
      %v5883 = vmax.f32 %v5881, %v5882
      %v5884 = vsel %vm5281, %v5111, -inf
      %v5885 = vrot.slane %v5884, 4
      %v5886 = vmax.f32 %v5884, %v5885
      %v5887 = vrot.slane %v5886, 2
      %v5888 = vmax.f32 %v5886, %v5887
      %v5889 = vrot.slane %v5888, 1
      %v5890 = vmax.f32 %v5888, %v5889
      %v5891 = vsel %vm5281, %v5112, -inf
      %v5892 = vrot.slane %v5891, 4
      %v5893 = vmax.f32 %v5891, %v5892
      %v5894 = vrot.slane %v5893, 2
      %v5895 = vmax.f32 %v5893, %v5894
      %v5896 = vrot.slane %v5895, 1
      %v5897 = vmax.f32 %v5895, %v5896
      %v5898 = vsel %vm5281, %v5113, -inf
      %v5899 = vrot.slane %v5898, 4
      %v5900 = vmax.f32 %v5898, %v5899
      %v5901 = vrot.slane %v5900, 2
      %v5902 = vmax.f32 %v5900, %v5901
      %v5903 = vrot.slane %v5902, 1
      %v5904 = vmax.f32 %v5902, %v5903
      %v5905 = vsel %vm5281, %v5114, -inf
      %v5906 = vrot.slane %v5905, 4
      %v5907 = vmax.f32 %v5905, %v5906
      %v5908 = vrot.slane %v5907, 2
      %v5909 = vmax.f32 %v5907, %v5908
      %v5910 = vrot.slane %v5909, 1
      %v5911 = vmax.f32 %v5909, %v5910
      %v5912 = vsel %vm5281, %v5115, -inf
      %v5913 = vrot.slane %v5912, 4
      %v5914 = vmax.f32 %v5912, %v5913
      %v5915 = vrot.slane %v5914, 2
      %v5916 = vmax.f32 %v5914, %v5915
      %v5917 = vrot.slane %v5916, 1
      %v5918 = vmax.f32 %v5916, %v5917
      %v5919 = vsel %vm5281, %v5116, -inf
      %v5920 = vrot.slane %v5919, 4
      %v5921 = vmax.f32 %v5919, %v5920
      %v5922 = vrot.slane %v5921, 2
      %v5923 = vmax.f32 %v5921, %v5922
      %v5924 = vrot.slane %v5923, 1
      %v5925 = vmax.f32 %v5923, %v5924
      %v5926 = vsel %vm5281, %v5117, -inf
      %v5927 = vrot.slane %v5926, 4
      %v5928 = vmax.f32 %v5926, %v5927
      %v5929 = vrot.slane %v5928, 2
      %v5930 = vmax.f32 %v5928, %v5929
      %v5931 = vrot.slane %v5930, 1
      %v5932 = vmax.f32 %v5930, %v5931
      %v5933 = vsel %vm5281, %v5118, -inf
      %v5934 = vrot.slane %v5933, 4
      %v5935 = vmax.f32 %v5933, %v5934
      %v5936 = vrot.slane %v5935, 2
      %v5937 = vmax.f32 %v5935, %v5936
      %v5938 = vrot.slane %v5937, 1
      %v5939 = vmax.f32 %v5937, %v5938
      %v5940 = vsel %vm5281, %v5119, -inf
      %v5941 = vrot.slane %v5940, 4
      %v5942 = vmax.f32 %v5940, %v5941
      %v5943 = vrot.slane %v5942, 2
      %v5944 = vmax.f32 %v5942, %v5943
      %v5945 = vrot.slane %v5944, 1
      %v5946 = vmax.f32 %v5944, %v5945
      %v5947 = vsel %vm5281, %v5120, -inf
      %v5948 = vrot.slane %v5947, 4
      %v5949 = vmax.f32 %v5947, %v5948
      %v5950 = vrot.slane %v5949, 2
      %v5951 = vmax.f32 %v5949, %v5950
      %v5952 = vrot.slane %v5951, 1
      %v5953 = vmax.f32 %v5951, %v5952
      %v5954 = vsel %vm5281, %v5121, -inf
      %v5955 = vrot.slane %v5954, 4
      %v5956 = vmax.f32 %v5954, %v5955
      %v5957 = vrot.slane %v5956, 2
      %v5958 = vmax.f32 %v5956, %v5957
      %v5959 = vrot.slane %v5958, 1
      %v5960 = vmax.f32 %v5958, %v5959
      %v5961 = vsel %vm5281, %v5122, -inf
      %v5962 = vrot.slane %v5961, 4
      %v5963 = vmax.f32 %v5961, %v5962
      %v5964 = vrot.slane %v5963, 2
      %v5965 = vmax.f32 %v5963, %v5964
      %v5966 = vrot.slane %v5965, 1
      %v5967 = vmax.f32 %v5965, %v5966
      %v5968 = vsel %vm5281, %v5123, -inf
      %v5969 = vrot.slane %v5968, 4
      %v5970 = vmax.f32 %v5968, %v5969
      %v5971 = vrot.slane %v5970, 2
      %v5972 = vmax.f32 %v5970, %v5971
      %v5973 = vrot.slane %v5972, 1
      %v5974 = vmax.f32 %v5972, %v5973
      %v5975 = vsel %vm5281, %v5124, -inf
      %v5976 = vrot.slane %v5975, 4
      %v5977 = vmax.f32 %v5975, %v5976
      %v5978 = vrot.slane %v5977, 2
      %v5979 = vmax.f32 %v5977, %v5978
      %v5980 = vrot.slane %v5979, 1
      %v5981 = vmax.f32 %v5979, %v5980
      %v5982 = vsel %vm5281, %v5125, -inf
      %v5983 = vrot.slane %v5982, 4
      %v5984 = vmax.f32 %v5982, %v5983
      %v5985 = vrot.slane %v5984, 2
      %v5986 = vmax.f32 %v5984, %v5985
      %v5987 = vrot.slane %v5986, 1
      %v5988 = vmax.f32 %v5986, %v5987
      %v5989 = vsel %vm5281, %v5126, -inf
      %v5990 = vrot.slane %v5989, 4
      %v5991 = vmax.f32 %v5989, %v5990
      %v5992 = vrot.slane %v5991, 2
      %v5993 = vmax.f32 %v5991, %v5992
      %v5994 = vrot.slane %v5993, 1
      %v5995 = vmax.f32 %v5993, %v5994
      %v5996 = vsel %vm5281, %v5127, -inf
      %v5997 = vrot.slane %v5996, 4
      %v5998 = vmax.f32 %v5996, %v5997
      %v5999 = vrot.slane %v5998, 2
      %v6000 = vmax.f32 %v5998, %v5999
      %v6001 = vrot.slane %v6000, 1
      %v6002 = vmax.f32 %v6000, %v6001
      %v6003 = vsel %vm5281, %v5128, -inf
      %v6004 = vrot.slane %v6003, 4
      %v6005 = vmax.f32 %v6003, %v6004
      %v6006 = vrot.slane %v6005, 2
      %v6007 = vmax.f32 %v6005, %v6006
      %v6008 = vrot.slane %v6007, 1
      %v6009 = vmax.f32 %v6007, %v6008
      %v6010 = vsel %vm5281, %v5129, -inf
      %v6011 = vrot.slane %v6010, 4
      %v6012 = vmax.f32 %v6010, %v6011
      %v6013 = vrot.slane %v6012, 2
      %v6014 = vmax.f32 %v6012, %v6013
      %v6015 = vrot.slane %v6014, 1
      %v6016 = vmax.f32 %v6014, %v6015
      %v6017 = vsel %vm5281, %v5130, -inf
      %v6018 = vrot.slane %v6017, 4
      %v6019 = vmax.f32 %v6017, %v6018
      %v6020 = vrot.slane %v6019, 2
      %v6021 = vmax.f32 %v6019, %v6020
      %v6022 = vrot.slane %v6021, 1
      %v6023 = vmax.f32 %v6021, %v6022
      %v6024 = vsel %vm5281, %v5131, -inf
      %v6025 = vrot.slane %v6024, 4
      %v6026 = vmax.f32 %v6024, %v6025
      %v6027 = vrot.slane %v6026, 2
      %v6028 = vmax.f32 %v6026, %v6027
      %v6029 = vrot.slane %v6028, 1
      %v6030 = vmax.f32 %v6028, %v6029
      %v6031 = vsel %vm5281, %v5132, -inf
      %v6032 = vrot.slane %v6031, 4
      %v6033 = vmax.f32 %v6031, %v6032
      %v6034 = vrot.slane %v6033, 2
      %v6035 = vmax.f32 %v6033, %v6034
      %v6036 = vrot.slane %v6035, 1
      %v6037 = vmax.f32 %v6035, %v6036
      %v6038 = vsel %vm5281, %v5133, -inf
      %v6039 = vrot.slane %v6038, 4
      %v6040 = vmax.f32 %v6038, %v6039
      %v6041 = vrot.slane %v6040, 2
      %v6042 = vmax.f32 %v6040, %v6041
      %v6043 = vrot.slane %v6042, 1
      %v6044 = vmax.f32 %v6042, %v6043
      %v6045 = vsel %vm5281, %v5134, -inf
      %v6046 = vrot.slane %v6045, 4
      %v6047 = vmax.f32 %v6045, %v6046
      %v6048 = vrot.slane %v6047, 2
      %v6049 = vmax.f32 %v6047, %v6048
      %v6050 = vrot.slane %v6049, 1
      %v6051 = vmax.f32 %v6049, %v6050
      %v6052 = vsel %vm5281, %v5135, -inf
      %v6053 = vrot.slane %v6052, 4
      %v6054 = vmax.f32 %v6052, %v6053
      %v6055 = vrot.slane %v6054, 2
      %v6056 = vmax.f32 %v6054, %v6055
      %v6057 = vrot.slane %v6056, 1
      %v6058 = vmax.f32 %v6056, %v6057
      %v6059 = vsel %vm5281, %v5136, -inf
      %v6060 = vrot.slane %v6059, 4
      %v6061 = vmax.f32 %v6059, %v6060
      %v6062 = vrot.slane %v6061, 2
      %v6063 = vmax.f32 %v6061, %v6062
      %v6064 = vrot.slane %v6063, 1
      %v6065 = vmax.f32 %v6063, %v6064
      %v6066 = vsel %vm5281, %v5137, -inf
      %v6067 = vrot.slane %v6066, 4
      %v6068 = vmax.f32 %v6066, %v6067
      %v6069 = vrot.slane %v6068, 2
      %v6070 = vmax.f32 %v6068, %v6069
      %v6071 = vrot.slane %v6070, 1
      %v6072 = vmax.f32 %v6070, %v6071
      %v6073 = vsel %vm5281, %v5138, -inf
      %v6074 = vrot.slane %v6073, 4
      %v6075 = vmax.f32 %v6073, %v6074
      %v6076 = vrot.slane %v6075, 2
      %v6077 = vmax.f32 %v6075, %v6076
      %v6078 = vrot.slane %v6077, 1
      %v6079 = vmax.f32 %v6077, %v6078
      %v6080 = vsel %vm5281, %v5139, -inf
      %v6081 = vrot.slane %v6080, 4
      %v6082 = vmax.f32 %v6080, %v6081
      %v6083 = vrot.slane %v6082, 2
      %v6084 = vmax.f32 %v6082, %v6083
      %v6085 = vrot.slane %v6084, 1
      %v6086 = vmax.f32 %v6084, %v6085
      %v6087 = vsel %vm5281, %v5140, -inf
      %v6088 = vrot.slane %v6087, 4
      %v6089 = vmax.f32 %v6087, %v6088
      %v6090 = vrot.slane %v6089, 2
      %v6091 = vmax.f32 %v6089, %v6090
      %v6092 = vrot.slane %v6091, 1
      %v6093 = vmax.f32 %v6091, %v6092
      %v6094 = vsel %vm5281, %v5141, -inf
      %v6095 = vrot.slane %v6094, 4
      %v6096 = vmax.f32 %v6094, %v6095
      %v6097 = vrot.slane %v6096, 2
      %v6098 = vmax.f32 %v6096, %v6097
      %v6099 = vrot.slane %v6098, 1
      %v6100 = vmax.f32 %v6098, %v6099
      %v6101 = vsel %vm5281, %v5142, -inf
      %v6102 = vrot.slane %v6101, 4
      %v6103 = vmax.f32 %v6101, %v6102
      %v6104 = vrot.slane %v6103, 2
      %v6105 = vmax.f32 %v6103, %v6104
      %v6106 = vrot.slane %v6105, 1
      %v6107 = vmax.f32 %v6105, %v6106
      %v6108 = vsel %vm5281, %v5143, -inf
      %v6109 = vrot.slane %v6108, 4
      %v6110 = vmax.f32 %v6108, %v6109
      %v6111 = vrot.slane %v6110, 2
      %v6112 = vmax.f32 %v6110, %v6111
      %v6113 = vrot.slane %v6112, 1
      %v6114 = vmax.f32 %v6112, %v6113
      %v6115 = vsel %vm5281, %v5144, -inf
      %v6116 = vrot.slane %v6115, 4
      %v6117 = vmax.f32 %v6115, %v6116
      %v6118 = vrot.slane %v6117, 2
      %v6119 = vmax.f32 %v6117, %v6118
      %v6120 = vrot.slane %v6119, 1
      %v6121 = vmax.f32 %v6119, %v6120
      %v6122 = vsel %vm5281, %v5145, -inf
      %v6123 = vrot.slane %v6122, 4
      %v6124 = vmax.f32 %v6122, %v6123
      %v6125 = vrot.slane %v6124, 2
      %v6126 = vmax.f32 %v6124, %v6125
      %v6127 = vrot.slane %v6126, 1
      %v6128 = vmax.f32 %v6126, %v6127
      %v6129 = vsel %vm5281, %v5146, -inf
      %v6130 = vrot.slane %v6129, 4
      %v6131 = vmax.f32 %v6129, %v6130
      %v6132 = vrot.slane %v6131, 2
      %v6133 = vmax.f32 %v6131, %v6132
      %v6134 = vrot.slane %v6133, 1
      %v6135 = vmax.f32 %v6133, %v6134
      %v6136 = vsel %vm5281, %v5147, -inf
      %v6137 = vrot.slane %v6136, 4
      %v6138 = vmax.f32 %v6136, %v6137
      %v6139 = vrot.slane %v6138, 2
      %v6140 = vmax.f32 %v6138, %v6139
      %v6141 = vrot.slane %v6140, 1
      %v6142 = vmax.f32 %v6140, %v6141
      %v6143 = vsel %vm5281, %v5148, -inf
      %v6144 = vrot.slane %v6143, 4
      %v6145 = vmax.f32 %v6143, %v6144
      %v6146 = vrot.slane %v6145, 2
      %v6147 = vmax.f32 %v6145, %v6146
      %v6148 = vrot.slane %v6147, 1
      %v6149 = vmax.f32 %v6147, %v6148
      %v6150 = vsel %vm5281, %v5149, -inf
      %v6151 = vrot.slane %v6150, 4
      %v6152 = vmax.f32 %v6150, %v6151
      %v6153 = vrot.slane %v6152, 2
      %v6154 = vmax.f32 %v6152, %v6153
      %v6155 = vrot.slane %v6154, 1
      %v6156 = vmax.f32 %v6154, %v6155
      %v6157 = vsel %vm5281, %v5150, -inf
      %v6158 = vrot.slane %v6157, 4
      %v6159 = vmax.f32 %v6157, %v6158
      %v6160 = vrot.slane %v6159, 2
      %v6161 = vmax.f32 %v6159, %v6160
      %v6162 = vrot.slane %v6161, 1
      %v6163 = vmax.f32 %v6161, %v6162
      %v6164 = vsel %vm5281, %v5151, -inf
      %v6165 = vrot.slane %v6164, 4
      %v6166 = vmax.f32 %v6164, %v6165
      %v6167 = vrot.slane %v6166, 2
      %v6168 = vmax.f32 %v6166, %v6167
      %v6169 = vrot.slane %v6168, 1
      %v6170 = vmax.f32 %v6168, %v6169
      %v6171 = vsel %vm5281, %v5152, -inf
      %v6172 = vrot.slane %v6171, 4
      %v6173 = vmax.f32 %v6171, %v6172
      %v6174 = vrot.slane %v6173, 2
      %v6175 = vmax.f32 %v6173, %v6174
      %v6176 = vrot.slane %v6175, 1
      %v6177 = vmax.f32 %v6175, %v6176
      %v6178 = vsel %vm5281, %v5153, -inf
      %v6179 = vrot.slane %v6178, 4
      %v6180 = vmax.f32 %v6178, %v6179
      %v6181 = vrot.slane %v6180, 2
      %v6182 = vmax.f32 %v6180, %v6181
      %v6183 = vrot.slane %v6182, 1
      %v6184 = vmax.f32 %v6182, %v6183
      %v6185 = vsel %vm5281, %v5154, -inf
      %v6186 = vrot.slane %v6185, 4
      %v6187 = vmax.f32 %v6185, %v6186
      %v6188 = vrot.slane %v6187, 2
      %v6189 = vmax.f32 %v6187, %v6188
      %v6190 = vrot.slane %v6189, 1
      %v6191 = vmax.f32 %v6189, %v6190
      %v6192 = vsel %vm5281, %v5155, -inf
      %v6193 = vrot.slane %v6192, 4
      %v6194 = vmax.f32 %v6192, %v6193
      %v6195 = vrot.slane %v6194, 2
      %v6196 = vmax.f32 %v6194, %v6195
      %v6197 = vrot.slane %v6196, 1
      %v6198 = vmax.f32 %v6196, %v6197
      %v6199 = vsel %vm5281, %v5156, -inf
      %v6200 = vrot.slane %v6199, 4
      %v6201 = vmax.f32 %v6199, %v6200
      %v6202 = vrot.slane %v6201, 2
      %v6203 = vmax.f32 %v6201, %v6202
      %v6204 = vrot.slane %v6203, 1
      %v6205 = vmax.f32 %v6203, %v6204
      %v6206 = vsel %vm5281, %v5157, -inf
      %v6207 = vrot.slane %v6206, 4
      %v6208 = vmax.f32 %v6206, %v6207
      %v6209 = vrot.slane %v6208, 2
      %v6210 = vmax.f32 %v6208, %v6209
      %v6211 = vrot.slane %v6210, 1
      %v6212 = vmax.f32 %v6210, %v6211
      %v6213 = vsel %vm5281, %v5158, -inf
      %v6214 = vrot.slane %v6213, 4
      %v6215 = vmax.f32 %v6213, %v6214
      %v6216 = vrot.slane %v6215, 2
      %v6217 = vmax.f32 %v6215, %v6216
      %v6218 = vrot.slane %v6217, 1
      %v6219 = vmax.f32 %v6217, %v6218
      %v6220 = vsel %vm5281, %v5159, -inf
      %v6221 = vrot.slane %v6220, 4
      %v6222 = vmax.f32 %v6220, %v6221
      %v6223 = vrot.slane %v6222, 2
      %v6224 = vmax.f32 %v6222, %v6223
      %v6225 = vrot.slane %v6224, 1
      %v6226 = vmax.f32 %v6224, %v6225
      %v6227 = vsel %vm5281, %v5160, -inf
      %v6228 = vrot.slane %v6227, 4
      %v6229 = vmax.f32 %v6227, %v6228
      %v6230 = vrot.slane %v6229, 2
      %v6231 = vmax.f32 %v6229, %v6230
      %v6232 = vrot.slane %v6231, 1
      %v6233 = vmax.f32 %v6231, %v6232
      %v6234 = vsel %vm5281, %v5161, -inf
      %v6235 = vrot.slane %v6234, 4
      %v6236 = vmax.f32 %v6234, %v6235
      %v6237 = vrot.slane %v6236, 2
      %v6238 = vmax.f32 %v6236, %v6237
      %v6239 = vrot.slane %v6238, 1
      %v6240 = vmax.f32 %v6238, %v6239
      %v6241 = vsel %vm5281, %v5162, -inf
      %v6242 = vrot.slane %v6241, 4
      %v6243 = vmax.f32 %v6241, %v6242
      %v6244 = vrot.slane %v6243, 2
      %v6245 = vmax.f32 %v6243, %v6244
      %v6246 = vrot.slane %v6245, 1
      %v6247 = vmax.f32 %v6245, %v6246
      %v6248 = vsel %vm5281, %v5163, -inf
      %v6249 = vrot.slane %v6248, 4
      %v6250 = vmax.f32 %v6248, %v6249
      %v6251 = vrot.slane %v6250, 2
      %v6252 = vmax.f32 %v6250, %v6251
      %v6253 = vrot.slane %v6252, 1
      %v6254 = vmax.f32 %v6252, %v6253
      %v6255 = vsel %vm5281, %v5164, -inf
      %v6256 = vrot.slane %v6255, 4
      %v6257 = vmax.f32 %v6255, %v6256
      %v6258 = vrot.slane %v6257, 2
      %v6259 = vmax.f32 %v6257, %v6258
      %v6260 = vrot.slane %v6259, 1
      %v6261 = vmax.f32 %v6259, %v6260
      %v6262 = vsel %vm5281, %v5165, -inf
      %v6263 = vrot.slane %v6262, 4
      %v6264 = vmax.f32 %v6262, %v6263
      %v6265 = vrot.slane %v6264, 2
      %v6266 = vmax.f32 %v6264, %v6265
      %v6267 = vrot.slane %v6266, 1
      %v6268 = vmax.f32 %v6266, %v6267
      %v6269 = vsel %vm5281, %v5166, -inf
      %v6270 = vrot.slane %v6269, 4
      %v6271 = vmax.f32 %v6269, %v6270
      %v6272 = vrot.slane %v6271, 2
      %v6273 = vmax.f32 %v6271, %v6272
      %v6274 = vrot.slane %v6273, 1
      %v6275 = vmax.f32 %v6273, %v6274
      %v6276 = vsel %vm5281, %v5167, -inf
      %v6277 = vrot.slane %v6276, 4
      %v6278 = vmax.f32 %v6276, %v6277
      %v6279 = vrot.slane %v6278, 2
      %v6280 = vmax.f32 %v6278, %v6279
      %v6281 = vrot.slane %v6280, 1
      %v6282 = vmax.f32 %v6280, %v6281
      %v6283 = vsel %vm5281, %v5168, -inf
      %v6284 = vrot.slane %v6283, 4
      %v6285 = vmax.f32 %v6283, %v6284
      %v6286 = vrot.slane %v6285, 2
      %v6287 = vmax.f32 %v6285, %v6286
      %v6288 = vrot.slane %v6287, 1
      %v6289 = vmax.f32 %v6287, %v6288
      %v6290 = vsel %vm5281, %v5169, -inf
      %v6291 = vrot.slane %v6290, 4
      %v6292 = vmax.f32 %v6290, %v6291
      %v6293 = vrot.slane %v6292, 2
      %v6294 = vmax.f32 %v6292, %v6293
      %v6295 = vrot.slane %v6294, 1
      %v6296 = vmax.f32 %v6294, %v6295
      %v6297 = vsel %vm5281, %v5170, -inf
      %v6298 = vrot.slane %v6297, 4
      %v6299 = vmax.f32 %v6297, %v6298
      %v6300 = vrot.slane %v6299, 2
      %v6301 = vmax.f32 %v6299, %v6300
      %v6302 = vrot.slane %v6301, 1
      %v6303 = vmax.f32 %v6301, %v6302
      %v6304 = vsel %vm5281, %v5171, -inf
      %v6305 = vrot.slane %v6304, 4
      %v6306 = vmax.f32 %v6304, %v6305
      %v6307 = vrot.slane %v6306, 2
      %v6308 = vmax.f32 %v6306, %v6307
      %v6309 = vrot.slane %v6308, 1
      %v6310 = vmax.f32 %v6308, %v6309
      %v6311 = vsel %vm5281, %v5172, -inf
      %v6312 = vrot.slane %v6311, 4
      %v6313 = vmax.f32 %v6311, %v6312
      %v6314 = vrot.slane %v6313, 2
      %v6315 = vmax.f32 %v6313, %v6314
      %v6316 = vrot.slane %v6315, 1
      %v6317 = vmax.f32 %v6315, %v6316
      %v6318 = vsel %vm5281, %v5173, -inf
      %v6319 = vrot.slane %v6318, 4
      %v6320 = vmax.f32 %v6318, %v6319
      %v6321 = vrot.slane %v6320, 2
      %v6322 = vmax.f32 %v6320, %v6321
      %v6323 = vrot.slane %v6322, 1
      %v6324 = vmax.f32 %v6322, %v6323
      %v6325 = vsel %vm5281, %v5174, -inf
      %v6326 = vrot.slane %v6325, 4
      %v6327 = vmax.f32 %v6325, %v6326
      %v6328 = vrot.slane %v6327, 2
      %v6329 = vmax.f32 %v6327, %v6328
      %v6330 = vrot.slane %v6329, 1
      %v6331 = vmax.f32 %v6329, %v6330
      %v6332 = vsel %vm5281, %v5175, -inf
      %v6333 = vrot.slane %v6332, 4
      %v6334 = vmax.f32 %v6332, %v6333
      %v6335 = vrot.slane %v6334, 2
      %v6336 = vmax.f32 %v6334, %v6335
      %v6337 = vrot.slane %v6336, 1
      %v6338 = vmax.f32 %v6336, %v6337
      %v6339 = vsel %vm5281, %v5176, -inf
      %v6340 = vrot.slane %v6339, 4
      %v6341 = vmax.f32 %v6339, %v6340
      %v6342 = vrot.slane %v6341, 2
      %v6343 = vmax.f32 %v6341, %v6342
      %v6344 = vrot.slane %v6343, 1
      %v6345 = vmax.f32 %v6343, %v6344
      %v6346 = vsel %vm5281, %v5177, -inf
      %v6347 = vrot.slane %v6346, 4
      %v6348 = vmax.f32 %v6346, %v6347
      %v6349 = vrot.slane %v6348, 2
      %v6350 = vmax.f32 %v6348, %v6349
      %v6351 = vrot.slane %v6350, 1
      %v6352 = vmax.f32 %v6350, %v6351
      %v6353 = vsel %vm5281, %v5178, -inf
      %v6354 = vrot.slane %v6353, 4
      %v6355 = vmax.f32 %v6353, %v6354
      %v6356 = vrot.slane %v6355, 2
      %v6357 = vmax.f32 %v6355, %v6356
      %v6358 = vrot.slane %v6357, 1
      %v6359 = vmax.f32 %v6357, %v6358
      %v6360 = vsel %vm5281, %v5179, -inf
      %v6361 = vrot.slane %v6360, 4
      %v6362 = vmax.f32 %v6360, %v6361
      %v6363 = vrot.slane %v6362, 2
      %v6364 = vmax.f32 %v6362, %v6363
      %v6365 = vrot.slane %v6364, 1
      %v6366 = vmax.f32 %v6364, %v6365
      %v6367 = vsel %vm5281, %v5180, -inf
      %v6368 = vrot.slane %v6367, 4
      %v6369 = vmax.f32 %v6367, %v6368
      %v6370 = vrot.slane %v6369, 2
      %v6371 = vmax.f32 %v6369, %v6370
      %v6372 = vrot.slane %v6371, 1
      %v6373 = vmax.f32 %v6371, %v6372
      %v6374 = vsel %vm5281, %v5181, -inf
      %v6375 = vrot.slane %v6374, 4
      %v6376 = vmax.f32 %v6374, %v6375
      %v6377 = vrot.slane %v6376, 2
      %v6378 = vmax.f32 %v6376, %v6377
      %v6379 = vrot.slane %v6378, 1
      %v6380 = vmax.f32 %v6378, %v6379
      %v6381 = vsel %vm5281, %v5182, -inf
      %v6382 = vrot.slane %v6381, 4
      %v6383 = vmax.f32 %v6381, %v6382
      %v6384 = vrot.slane %v6383, 2
      %v6385 = vmax.f32 %v6383, %v6384
      %v6386 = vrot.slane %v6385, 1
      %v6387 = vmax.f32 %v6385, %v6386
      %v6388 = vsel %vm5281, %v5183, -inf
      %v6389 = vrot.slane %v6388, 4
      %v6390 = vmax.f32 %v6388, %v6389
      %v6391 = vrot.slane %v6390, 2
      %v6392 = vmax.f32 %v6390, %v6391
      %v6393 = vrot.slane %v6392, 1
      %v6394 = vmax.f32 %v6392, %v6393
      %v6395 = vsel %vm5281, %v5184, -inf
      %v6396 = vrot.slane %v6395, 4
      %v6397 = vmax.f32 %v6395, %v6396
      %v6398 = vrot.slane %v6397, 2
      %v6399 = vmax.f32 %v6397, %v6398
      %v6400 = vrot.slane %v6399, 1
      %v6401 = vmax.f32 %v6399, %v6400
      %v6402 = vsel %vm5281, %v5185, -inf
      %v6403 = vrot.slane %v6402, 4
      %v6404 = vmax.f32 %v6402, %v6403
      %v6405 = vrot.slane %v6404, 2
      %v6406 = vmax.f32 %v6404, %v6405
      %v6407 = vrot.slane %v6406, 1
      %v6408 = vmax.f32 %v6406, %v6407
      %v6409 = vsel %vm5281, %v5186, -inf
      %v6410 = vrot.slane %v6409, 4
      %v6411 = vmax.f32 %v6409, %v6410
      %v6412 = vrot.slane %v6411, 2
      %v6413 = vmax.f32 %v6411, %v6412
      %v6414 = vrot.slane %v6413, 1
      %v6415 = vmax.f32 %v6413, %v6414
      %v6416 = vsel %vm5281, %v5187, -inf
      %v6417 = vrot.slane %v6416, 4
      %v6418 = vmax.f32 %v6416, %v6417
      %v6419 = vrot.slane %v6418, 2
      %v6420 = vmax.f32 %v6418, %v6419
      %v6421 = vrot.slane %v6420, 1
      %v6422 = vmax.f32 %v6420, %v6421
      %v6423 = vsel %vm5281, %v5188, -inf
      %v6424 = vrot.slane %v6423, 4
      %v6425 = vmax.f32 %v6423, %v6424
      %v6426 = vrot.slane %v6425, 2
      %v6427 = vmax.f32 %v6425, %v6426
      %v6428 = vrot.slane %v6427, 1
      %v6429 = vmax.f32 %v6427, %v6428
      %v6430 = vsel %vm5281, %v5189, -inf
      %v6431 = vrot.slane %v6430, 4
      %v6432 = vmax.f32 %v6430, %v6431
      %v6433 = vrot.slane %v6432, 2
      %v6434 = vmax.f32 %v6432, %v6433
      %v6435 = vrot.slane %v6434, 1
      %v6436 = vmax.f32 %v6434, %v6435
      %v6437 = vsel %vm5281, %v5190, -inf
      %v6438 = vrot.slane %v6437, 4
      %v6439 = vmax.f32 %v6437, %v6438
      %v6440 = vrot.slane %v6439, 2
      %v6441 = vmax.f32 %v6439, %v6440
      %v6442 = vrot.slane %v6441, 1
      %v6443 = vmax.f32 %v6441, %v6442
      %v6444 = vsel %vm5281, %v5191, -inf
      %v6445 = vrot.slane %v6444, 4
      %v6446 = vmax.f32 %v6444, %v6445
      %v6447 = vrot.slane %v6446, 2
      %v6448 = vmax.f32 %v6446, %v6447
      %v6449 = vrot.slane %v6448, 1
      %v6450 = vmax.f32 %v6448, %v6449
      %v6451 = vsel %vm5281, %v5192, -inf
      %v6452 = vrot.slane %v6451, 4
      %v6453 = vmax.f32 %v6451, %v6452
      %v6454 = vrot.slane %v6453, 2
      %v6455 = vmax.f32 %v6453, %v6454
      %v6456 = vrot.slane %v6455, 1
      %v6457 = vmax.f32 %v6455, %v6456
      %v6458 = vsel %vm5281, %v5193, -inf
      %v6459 = vrot.slane %v6458, 4
      %v6460 = vmax.f32 %v6458, %v6459
      %v6461 = vrot.slane %v6460, 2
      %v6462 = vmax.f32 %v6460, %v6461
      %v6463 = vrot.slane %v6462, 1
      %v6464 = vmax.f32 %v6462, %v6463
      %v6465 = vsel %vm5281, %v5194, -inf
      %v6466 = vrot.slane %v6465, 4
      %v6467 = vmax.f32 %v6465, %v6466
      %v6468 = vrot.slane %v6467, 2
      %v6469 = vmax.f32 %v6467, %v6468
      %v6470 = vrot.slane %v6469, 1
      %v6471 = vmax.f32 %v6469, %v6470
      %v6472 = vsel %vm5281, %v5195, -inf
      %v6473 = vrot.slane %v6472, 4
      %v6474 = vmax.f32 %v6472, %v6473
      %v6475 = vrot.slane %v6474, 2
      %v6476 = vmax.f32 %v6474, %v6475
      %v6477 = vrot.slane %v6476, 1
      %v6478 = vmax.f32 %v6476, %v6477
      %v6479 = vsel %vm5281, %v5196, -inf
      %v6480 = vrot.slane %v6479, 4
      %v6481 = vmax.f32 %v6479, %v6480
      %v6482 = vrot.slane %v6481, 2
      %v6483 = vmax.f32 %v6481, %v6482
      %v6484 = vrot.slane %v6483, 1
      %v6485 = vmax.f32 %v6483, %v6484
      %v6486 = vsel %vm5281, %v5197, -inf
      %v6487 = vrot.slane %v6486, 4
      %v6488 = vmax.f32 %v6486, %v6487
      %v6489 = vrot.slane %v6488, 2
      %v6490 = vmax.f32 %v6488, %v6489
      %v6491 = vrot.slane %v6490, 1
      %v6492 = vmax.f32 %v6490, %v6491
      %v6493 = vsel %vm5281, %v5198, -inf
      %v6494 = vrot.slane %v6493, 4
      %v6495 = vmax.f32 %v6493, %v6494
      %v6496 = vrot.slane %v6495, 2
      %v6497 = vmax.f32 %v6495, %v6496
      %v6498 = vrot.slane %v6497, 1
      %v6499 = vmax.f32 %v6497, %v6498
      %v6500 = vsel %vm5281, %v5199, -inf
      %v6501 = vrot.slane %v6500, 4
      %v6502 = vmax.f32 %v6500, %v6501
      %v6503 = vrot.slane %v6502, 2
      %v6504 = vmax.f32 %v6502, %v6503
      %v6505 = vrot.slane %v6504, 1
      %v6506 = vmax.f32 %v6504, %v6505
      %v6507 = vsel %vm5281, %v5200, -inf
      %v6508 = vrot.slane %v6507, 4
      %v6509 = vmax.f32 %v6507, %v6508
      %v6510 = vrot.slane %v6509, 2
      %v6511 = vmax.f32 %v6509, %v6510
      %v6512 = vrot.slane %v6511, 1
      %v6513 = vmax.f32 %v6511, %v6512
      %v6514 = vsel %vm5281, %v5201, -inf
      %v6515 = vrot.slane %v6514, 4
      %v6516 = vmax.f32 %v6514, %v6515
      %v6517 = vrot.slane %v6516, 2
      %v6518 = vmax.f32 %v6516, %v6517
      %v6519 = vrot.slane %v6518, 1
      %v6520 = vmax.f32 %v6518, %v6519
      %v6521 = vsel %vm5281, %v5202, -inf
      %v6522 = vrot.slane %v6521, 4
      %v6523 = vmax.f32 %v6521, %v6522
      %v6524 = vrot.slane %v6523, 2
      %v6525 = vmax.f32 %v6523, %v6524
      %v6526 = vrot.slane %v6525, 1
      %v6527 = vmax.f32 %v6525, %v6526
      %v6528 = vsel %vm5281, %v5203, -inf
      %v6529 = vrot.slane %v6528, 4
      %v6530 = vmax.f32 %v6528, %v6529
      %v6531 = vrot.slane %v6530, 2
      %v6532 = vmax.f32 %v6530, %v6531
      %v6533 = vrot.slane %v6532, 1
      %v6534 = vmax.f32 %v6532, %v6533
      %v6535 = vsel %vm5281, %v5204, -inf
      %v6536 = vrot.slane %v6535, 4
      %v6537 = vmax.f32 %v6535, %v6536
      %v6538 = vrot.slane %v6537, 2
      %v6539 = vmax.f32 %v6537, %v6538
      %v6540 = vrot.slane %v6539, 1
      %v6541 = vmax.f32 %v6539, %v6540
      %v6542 = vsel %vm5281, %v5205, -inf
      %v6543 = vrot.slane %v6542, 4
      %v6544 = vmax.f32 %v6542, %v6543
      %v6545 = vrot.slane %v6544, 2
      %v6546 = vmax.f32 %v6544, %v6545
      %v6547 = vrot.slane %v6546, 1
      %v6548 = vmax.f32 %v6546, %v6547
      %v6549 = vsel %vm5281, %v5206, -inf
      %v6550 = vrot.slane %v6549, 4
      %v6551 = vmax.f32 %v6549, %v6550
      %v6552 = vrot.slane %v6551, 2
      %v6553 = vmax.f32 %v6551, %v6552
      %v6554 = vrot.slane %v6553, 1
      %v6555 = vmax.f32 %v6553, %v6554
      %v6556 = vsel %vm5281, %v5207, -inf
      %v6557 = vrot.slane %v6556, 4
      %v6558 = vmax.f32 %v6556, %v6557
      %v6559 = vrot.slane %v6558, 2
      %v6560 = vmax.f32 %v6558, %v6559
      %v6561 = vrot.slane %v6560, 1
      %v6562 = vmax.f32 %v6560, %v6561
      %v6563 = vsel %vm5281, %v5208, -inf
      %v6564 = vrot.slane %v6563, 4
      %v6565 = vmax.f32 %v6563, %v6564
      %v6566 = vrot.slane %v6565, 2
      %v6567 = vmax.f32 %v6565, %v6566
      %v6568 = vrot.slane %v6567, 1
      %v6569 = vmax.f32 %v6567, %v6568
      %v6570 = vsel %vm5281, %v5209, -inf
      %v6571 = vrot.slane %v6570, 4
      %v6572 = vmax.f32 %v6570, %v6571
      %v6573 = vrot.slane %v6572, 2
      %v6574 = vmax.f32 %v6572, %v6573
      %v6575 = vrot.slane %v6574, 1
      %v6576 = vmax.f32 %v6574, %v6575
      %v6577 = vsel %vm5281, %v5210, -inf
      %v6578 = vrot.slane %v6577, 4
      %v6579 = vmax.f32 %v6577, %v6578
      %v6580 = vrot.slane %v6579, 2
      %v6581 = vmax.f32 %v6579, %v6580
      %v6582 = vrot.slane %v6581, 1
      %v6583 = vmax.f32 %v6581, %v6582
      %v6584 = vsel %vm5281, %v5211, -inf
      %v6585 = vrot.slane %v6584, 4
      %v6586 = vmax.f32 %v6584, %v6585
      %v6587 = vrot.slane %v6586, 2
      %v6588 = vmax.f32 %v6586, %v6587
      %v6589 = vrot.slane %v6588, 1
      %v6590 = vmax.f32 %v6588, %v6589
      %v6591 = vsel %vm5281, %v5212, -inf
      %v6592 = vrot.slane %v6591, 4
      %v6593 = vmax.f32 %v6591, %v6592
      %v6594 = vrot.slane %v6593, 2
      %v6595 = vmax.f32 %v6593, %v6594
      %v6596 = vrot.slane %v6595, 1
      %v6597 = vmax.f32 %v6595, %v6596
      %v6598 = vsel %vm5281, %v5213, -inf
      %v6599 = vrot.slane %v6598, 4
      %v6600 = vmax.f32 %v6598, %v6599
      %v6601 = vrot.slane %v6600, 2
      %v6602 = vmax.f32 %v6600, %v6601
      %v6603 = vrot.slane %v6602, 1
      %v6604 = vmax.f32 %v6602, %v6603
      %v6605 = vsel %vm5281, %v5214, -inf
      %v6606 = vrot.slane %v6605, 4
      %v6607 = vmax.f32 %v6605, %v6606
      %v6608 = vrot.slane %v6607, 2
      %v6609 = vmax.f32 %v6607, %v6608
      %v6610 = vrot.slane %v6609, 1
      %v6611 = vmax.f32 %v6609, %v6610
      %v6612 = vsel %vm5281, %v5215, -inf
      %v6613 = vrot.slane %v6612, 4
      %v6614 = vmax.f32 %v6612, %v6613
      %v6615 = vrot.slane %v6614, 2
      %v6616 = vmax.f32 %v6614, %v6615
      %v6617 = vrot.slane %v6616, 1
      %v6618 = vmax.f32 %v6616, %v6617
      %v6619 = vsel %vm5281, %v5216, -inf
      %v6620 = vrot.slane %v6619, 4
      %v6621 = vmax.f32 %v6619, %v6620
      %v6622 = vrot.slane %v6621, 2
      %v6623 = vmax.f32 %v6621, %v6622
      %v6624 = vrot.slane %v6623, 1
      %v6625 = vmax.f32 %v6623, %v6624
      %v6626 = vsel %vm5281, %v5217, -inf
      %v6627 = vrot.slane %v6626, 4
      %v6628 = vmax.f32 %v6626, %v6627
      %v6629 = vrot.slane %v6628, 2
      %v6630 = vmax.f32 %v6628, %v6629
      %v6631 = vrot.slane %v6630, 1
      %v6632 = vmax.f32 %v6630, %v6631
      %v6633 = vsel %vm5281, %v5218, -inf
      %v6634 = vrot.slane %v6633, 4
      %v6635 = vmax.f32 %v6633, %v6634
      %v6636 = vrot.slane %v6635, 2
      %v6637 = vmax.f32 %v6635, %v6636
      %v6638 = vrot.slane %v6637, 1
      %v6639 = vmax.f32 %v6637, %v6638
      %v6640 = vsel %vm5281, %v5219, -inf
      %v6641 = vrot.slane %v6640, 4
      %v6642 = vmax.f32 %v6640, %v6641
      %v6643 = vrot.slane %v6642, 2
      %v6644 = vmax.f32 %v6642, %v6643
      %v6645 = vrot.slane %v6644, 1
      %v6646 = vmax.f32 %v6644, %v6645
      %v6647 = vsel %vm5281, %v5220, -inf
      %v6648 = vrot.slane %v6647, 4
      %v6649 = vmax.f32 %v6647, %v6648
      %v6650 = vrot.slane %v6649, 2
      %v6651 = vmax.f32 %v6649, %v6650
      %v6652 = vrot.slane %v6651, 1
      %v6653 = vmax.f32 %v6651, %v6652
      %v6654 = vsel %vm5281, %v5221, -inf
      %v6655 = vrot.slane %v6654, 4
      %v6656 = vmax.f32 %v6654, %v6655
      %v6657 = vrot.slane %v6656, 2
      %v6658 = vmax.f32 %v6656, %v6657
      %v6659 = vrot.slane %v6658, 1
      %v6660 = vmax.f32 %v6658, %v6659
      %v6661 = vsel %vm5281, %v5222, -inf
      %v6662 = vrot.slane %v6661, 4
      %v6663 = vmax.f32 %v6661, %v6662
      %v6664 = vrot.slane %v6663, 2
      %v6665 = vmax.f32 %v6663, %v6664
      %v6666 = vrot.slane %v6665, 1
      %v6667 = vmax.f32 %v6665, %v6666
      %v6668 = vsel %vm5281, %v5223, -inf
      %v6669 = vrot.slane %v6668, 4
      %v6670 = vmax.f32 %v6668, %v6669
      %v6671 = vrot.slane %v6670, 2
      %v6672 = vmax.f32 %v6670, %v6671
      %v6673 = vrot.slane %v6672, 1
      %v6674 = vmax.f32 %v6672, %v6673
      %v6675 = vsel %vm5281, %v5224, -inf
      %v6676 = vrot.slane %v6675, 4
      %v6677 = vmax.f32 %v6675, %v6676
      %v6678 = vrot.slane %v6677, 2
      %v6679 = vmax.f32 %v6677, %v6678
      %v6680 = vrot.slane %v6679, 1
      %v6681 = vmax.f32 %v6679, %v6680
      %v6682 = vsel %vm5281, %v5225, -inf
      %v6683 = vrot.slane %v6682, 4
      %v6684 = vmax.f32 %v6682, %v6683
      %v6685 = vrot.slane %v6684, 2
      %v6686 = vmax.f32 %v6684, %v6685
      %v6687 = vrot.slane %v6686, 1
      %v6688 = vmax.f32 %v6686, %v6687
      %v6689 = vsel %vm5281, %v5226, -inf
      %v6690 = vrot.slane %v6689, 4
      %v6691 = vmax.f32 %v6689, %v6690
      %v6692 = vrot.slane %v6691, 2
      %v6693 = vmax.f32 %v6691, %v6692
      %v6694 = vrot.slane %v6693, 1
      %v6695 = vmax.f32 %v6693, %v6694
      %v6696 = vsel %vm5281, %v5227, -inf
      %v6697 = vrot.slane %v6696, 4
      %v6698 = vmax.f32 %v6696, %v6697
      %v6699 = vrot.slane %v6698, 2
      %v6700 = vmax.f32 %v6698, %v6699
      %v6701 = vrot.slane %v6700, 1
      %v6702 = vmax.f32 %v6700, %v6701
      %v6703 = vsel %vm5281, %v5228, -inf
      %v6704 = vrot.slane %v6703, 4
      %v6705 = vmax.f32 %v6703, %v6704
      %v6706 = vrot.slane %v6705, 2
      %v6707 = vmax.f32 %v6705, %v6706
      %v6708 = vrot.slane %v6707, 1
      %v6709 = vmax.f32 %v6707, %v6708
      %v6710 = vsel %vm5281, %v5229, -inf
      %v6711 = vrot.slane %v6710, 4
      %v6712 = vmax.f32 %v6710, %v6711
      %v6713 = vrot.slane %v6712, 2
      %v6714 = vmax.f32 %v6712, %v6713
      %v6715 = vrot.slane %v6714, 1
      %v6716 = vmax.f32 %v6714, %v6715
      %v6717 = vsel %vm5281, %v5230, -inf
      %v6718 = vrot.slane %v6717, 4
      %v6719 = vmax.f32 %v6717, %v6718
      %v6720 = vrot.slane %v6719, 2
      %v6721 = vmax.f32 %v6719, %v6720
      %v6722 = vrot.slane %v6721, 1
      %v6723 = vmax.f32 %v6721, %v6722
      %v6724 = vsel %vm5281, %v5231, -inf
      %v6725 = vrot.slane %v6724, 4
      %v6726 = vmax.f32 %v6724, %v6725
      %v6727 = vrot.slane %v6726, 2
      %v6728 = vmax.f32 %v6726, %v6727
      %v6729 = vrot.slane %v6728, 1
      %v6730 = vmax.f32 %v6728, %v6729
      %v6731 = vsel %vm5281, %v5232, -inf
      %v6732 = vrot.slane %v6731, 4
      %v6733 = vmax.f32 %v6731, %v6732
      %v6734 = vrot.slane %v6733, 2
      %v6735 = vmax.f32 %v6733, %v6734
      %v6736 = vrot.slane %v6735, 1
      %v6737 = vmax.f32 %v6735, %v6736
      %v6738 = vsel %vm5281, %v5233, -inf
      %v6739 = vrot.slane %v6738, 4
      %v6740 = vmax.f32 %v6738, %v6739
      %v6741 = vrot.slane %v6740, 2
      %v6742 = vmax.f32 %v6740, %v6741
      %v6743 = vrot.slane %v6742, 1
      %v6744 = vmax.f32 %v6742, %v6743
      %v6745 = vsel %vm5281, %v5234, -inf
      %v6746 = vrot.slane %v6745, 4
      %v6747 = vmax.f32 %v6745, %v6746
      %v6748 = vrot.slane %v6747, 2
      %v6749 = vmax.f32 %v6747, %v6748
      %v6750 = vrot.slane %v6749, 1
      %v6751 = vmax.f32 %v6749, %v6750
      %v6752 = vsel %vm5281, %v5235, -inf
      %v6753 = vrot.slane %v6752, 4
      %v6754 = vmax.f32 %v6752, %v6753
      %v6755 = vrot.slane %v6754, 2
      %v6756 = vmax.f32 %v6754, %v6755
      %v6757 = vrot.slane %v6756, 1
      %v6758 = vmax.f32 %v6756, %v6757
      %v6759 = vsel %vm5281, %v5236, -inf
      %v6760 = vrot.slane %v6759, 4
      %v6761 = vmax.f32 %v6759, %v6760
      %v6762 = vrot.slane %v6761, 2
      %v6763 = vmax.f32 %v6761, %v6762
      %v6764 = vrot.slane %v6763, 1
      %v6765 = vmax.f32 %v6763, %v6764
      %v6766 = vsel %vm5281, %v5237, -inf
      %v6767 = vrot.slane %v6766, 4
      %v6768 = vmax.f32 %v6766, %v6767
      %v6769 = vrot.slane %v6768, 2
      %v6770 = vmax.f32 %v6768, %v6769
      %v6771 = vrot.slane %v6770, 1
      %v6772 = vmax.f32 %v6770, %v6771
      %v6773 = vsel %vm5281, %v5238, -inf
      %v6774 = vrot.slane %v6773, 4
      %v6775 = vmax.f32 %v6773, %v6774
      %v6776 = vrot.slane %v6775, 2
      %v6777 = vmax.f32 %v6775, %v6776
      %v6778 = vrot.slane %v6777, 1
      %v6779 = vmax.f32 %v6777, %v6778
      %v6780 = vsel %vm5281, %v5239, -inf
      %v6781 = vrot.slane %v6780, 4
      %v6782 = vmax.f32 %v6780, %v6781
      %v6783 = vrot.slane %v6782, 2
      %v6784 = vmax.f32 %v6782, %v6783
      %v6785 = vrot.slane %v6784, 1
      %v6786 = vmax.f32 %v6784, %v6785
      %v6787 = vsel %vm5281, %v5240, -inf
      %v6788 = vrot.slane %v6787, 4
      %v6789 = vmax.f32 %v6787, %v6788
      %v6790 = vrot.slane %v6789, 2
      %v6791 = vmax.f32 %v6789, %v6790
      %v6792 = vrot.slane %v6791, 1
      %v6793 = vmax.f32 %v6791, %v6792
      %v6794 = vsel %vm5281, %v5241, -inf
      %v6795 = vrot.slane %v6794, 4
      %v6796 = vmax.f32 %v6794, %v6795
      %v6797 = vrot.slane %v6796, 2
      %v6798 = vmax.f32 %v6796, %v6797
      %v6799 = vrot.slane %v6798, 1
      %v6800 = vmax.f32 %v6798, %v6799
      %v6801 = vsel %vm5281, %v5242, -inf
      %v6802 = vrot.slane %v6801, 4
      %v6803 = vmax.f32 %v6801, %v6802
      %v6804 = vrot.slane %v6803, 2
      %v6805 = vmax.f32 %v6803, %v6804
      %v6806 = vrot.slane %v6805, 1
      %v6807 = vmax.f32 %v6805, %v6806
      %v6808 = vsel %vm5281, %v5243, -inf
      %v6809 = vrot.slane %v6808, 4
      %v6810 = vmax.f32 %v6808, %v6809
      %v6811 = vrot.slane %v6810, 2
      %v6812 = vmax.f32 %v6810, %v6811
      %v6813 = vrot.slane %v6812, 1
      %v6814 = vmax.f32 %v6812, %v6813
      %v6815 = vsel %vm5281, %v5244, -inf
      %v6816 = vrot.slane %v6815, 4
      %v6817 = vmax.f32 %v6815, %v6816
      %v6818 = vrot.slane %v6817, 2
      %v6819 = vmax.f32 %v6817, %v6818
      %v6820 = vrot.slane %v6819, 1
      %v6821 = vmax.f32 %v6819, %v6820
      %v6822 = vsel %vm5281, %v5245, -inf
      %v6823 = vrot.slane %v6822, 4
      %v6824 = vmax.f32 %v6822, %v6823
      %v6825 = vrot.slane %v6824, 2
      %v6826 = vmax.f32 %v6824, %v6825
      %v6827 = vrot.slane %v6826, 1
      %v6828 = vmax.f32 %v6826, %v6827
      %v6829 = vsel %vm5281, %v5246, -inf
      %v6830 = vrot.slane %v6829, 4
      %v6831 = vmax.f32 %v6829, %v6830
      %v6832 = vrot.slane %v6831, 2
      %v6833 = vmax.f32 %v6831, %v6832
      %v6834 = vrot.slane %v6833, 1
      %v6835 = vmax.f32 %v6833, %v6834
      %v6836 = vsel %vm5281, %v5247, -inf
      %v6837 = vrot.slane %v6836, 4
      %v6838 = vmax.f32 %v6836, %v6837
      %v6839 = vrot.slane %v6838, 2
      %v6840 = vmax.f32 %v6838, %v6839
      %v6841 = vrot.slane %v6840, 1
      %v6842 = vmax.f32 %v6840, %v6841
      %v6843 = vsel %vm5281, %v5248, -inf
      %v6844 = vrot.slane %v6843, 4
      %v6845 = vmax.f32 %v6843, %v6844
      %v6846 = vrot.slane %v6845, 2
      %v6847 = vmax.f32 %v6845, %v6846
      %v6848 = vrot.slane %v6847, 1
      %v6849 = vmax.f32 %v6847, %v6848
      %v6850 = vsel %vm5281, %v5249, -inf
      %v6851 = vrot.slane %v6850, 4
      %v6852 = vmax.f32 %v6850, %v6851
      %v6853 = vrot.slane %v6852, 2
      %v6854 = vmax.f32 %v6852, %v6853
      %v6855 = vrot.slane %v6854, 1
      %v6856 = vmax.f32 %v6854, %v6855
      %v6857 = vsel %vm5281, %v5250, -inf
      %v6858 = vrot.slane %v6857, 4
      %v6859 = vmax.f32 %v6857, %v6858
      %v6860 = vrot.slane %v6859, 2
      %v6861 = vmax.f32 %v6859, %v6860
      %v6862 = vrot.slane %v6861, 1
      %v6863 = vmax.f32 %v6861, %v6862
      %v6864 = vsel %vm5281, %v5251, -inf
      %v6865 = vrot.slane %v6864, 4
      %v6866 = vmax.f32 %v6864, %v6865
      %v6867 = vrot.slane %v6866, 2
      %v6868 = vmax.f32 %v6866, %v6867
      %v6869 = vrot.slane %v6868, 1
      %v6870 = vmax.f32 %v6868, %v6869
      %v6871 = vsel %vm5281, %v5252, -inf
      %v6872 = vrot.slane %v6871, 4
      %v6873 = vmax.f32 %v6871, %v6872
      %v6874 = vrot.slane %v6873, 2
      %v6875 = vmax.f32 %v6873, %v6874
      %v6876 = vrot.slane %v6875, 1
      %v6877 = vmax.f32 %v6875, %v6876
      %v6878 = vsel %vm5281, %v5253, -inf
      %v6879 = vrot.slane %v6878, 4
      %v6880 = vmax.f32 %v6878, %v6879
      %v6881 = vrot.slane %v6880, 2
      %v6882 = vmax.f32 %v6880, %v6881
      %v6883 = vrot.slane %v6882, 1
      %v6884 = vmax.f32 %v6882, %v6883
      %v6885 = vsel %vm5281, %v5254, -inf
      %v6886 = vrot.slane %v6885, 4
      %v6887 = vmax.f32 %v6885, %v6886
      %v6888 = vrot.slane %v6887, 2
      %v6889 = vmax.f32 %v6887, %v6888
      %v6890 = vrot.slane %v6889, 1
      %v6891 = vmax.f32 %v6889, %v6890
      %v6892 = vsel %vm5281, %v5255, -inf
      %v6893 = vrot.slane %v6892, 4
      %v6894 = vmax.f32 %v6892, %v6893
      %v6895 = vrot.slane %v6894, 2
      %v6896 = vmax.f32 %v6894, %v6895
      %v6897 = vrot.slane %v6896, 1
      %v6898 = vmax.f32 %v6896, %v6897
      %v6899 = vsel %vm5281, %v5256, -inf
      %v6900 = vrot.slane %v6899, 4
      %v6901 = vmax.f32 %v6899, %v6900
      %v6902 = vrot.slane %v6901, 2
      %v6903 = vmax.f32 %v6901, %v6902
      %v6904 = vrot.slane %v6903, 1
      %v6905 = vmax.f32 %v6903, %v6904
      %v6906 = vsel %vm5281, %v5257, -inf
      %v6907 = vrot.slane %v6906, 4
      %v6908 = vmax.f32 %v6906, %v6907
      %v6909 = vrot.slane %v6908, 2
      %v6910 = vmax.f32 %v6908, %v6909
      %v6911 = vrot.slane %v6910, 1
      %v6912 = vmax.f32 %v6910, %v6911
      %v6913 = vsel %vm5281, %v5258, -inf
      %v6914 = vrot.slane %v6913, 4
      %v6915 = vmax.f32 %v6913, %v6914
      %v6916 = vrot.slane %v6915, 2
      %v6917 = vmax.f32 %v6915, %v6916
      %v6918 = vrot.slane %v6917, 1
      %v6919 = vmax.f32 %v6917, %v6918
      %v6920 = vsel %vm5281, %v5259, -inf
      %v6921 = vrot.slane %v6920, 4
      %v6922 = vmax.f32 %v6920, %v6921
      %v6923 = vrot.slane %v6922, 2
      %v6924 = vmax.f32 %v6922, %v6923
      %v6925 = vrot.slane %v6924, 1
      %v6926 = vmax.f32 %v6924, %v6925
      %v6927 = vsel %vm5281, %v5260, -inf
      %v6928 = vrot.slane %v6927, 4
      %v6929 = vmax.f32 %v6927, %v6928
      %v6930 = vrot.slane %v6929, 2
      %v6931 = vmax.f32 %v6929, %v6930
      %v6932 = vrot.slane %v6931, 1
      %v6933 = vmax.f32 %v6931, %v6932
      %v6934 = vsel %vm5281, %v5261, -inf
      %v6935 = vrot.slane %v6934, 4
      %v6936 = vmax.f32 %v6934, %v6935
      %v6937 = vrot.slane %v6936, 2
      %v6938 = vmax.f32 %v6936, %v6937
      %v6939 = vrot.slane %v6938, 1
      %v6940 = vmax.f32 %v6938, %v6939
      %v6941 = vsel %vm5281, %v5262, -inf
      %v6942 = vrot.slane %v6941, 4
      %v6943 = vmax.f32 %v6941, %v6942
      %v6944 = vrot.slane %v6943, 2
      %v6945 = vmax.f32 %v6943, %v6944
      %v6946 = vrot.slane %v6945, 1
      %v6947 = vmax.f32 %v6945, %v6946
      %v6948 = vsel %vm5281, %v5263, -inf
      %v6949 = vrot.slane %v6948, 4
      %v6950 = vmax.f32 %v6948, %v6949
      %v6951 = vrot.slane %v6950, 2
      %v6952 = vmax.f32 %v6950, %v6951
      %v6953 = vrot.slane %v6952, 1
      %v6954 = vmax.f32 %v6952, %v6953
      %v6955 = vsel %vm5281, %v5264, -inf
      %v6956 = vrot.slane %v6955, 4
      %v6957 = vmax.f32 %v6955, %v6956
      %v6958 = vrot.slane %v6957, 2
      %v6959 = vmax.f32 %v6957, %v6958
      %v6960 = vrot.slane %v6959, 1
      %v6961 = vmax.f32 %v6959, %v6960
      %v6962 = vsel %vm5281, %v5265, -inf
      %v6963 = vrot.slane %v6962, 4
      %v6964 = vmax.f32 %v6962, %v6963
      %v6965 = vrot.slane %v6964, 2
      %v6966 = vmax.f32 %v6964, %v6965
      %v6967 = vrot.slane %v6966, 1
      %v6968 = vmax.f32 %v6966, %v6967
      %v6969 = vsel %vm5281, %v5266, -inf
      %v6970 = vrot.slane %v6969, 4
      %v6971 = vmax.f32 %v6969, %v6970
      %v6972 = vrot.slane %v6971, 2
      %v6973 = vmax.f32 %v6971, %v6972
      %v6974 = vrot.slane %v6973, 1
      %v6975 = vmax.f32 %v6973, %v6974
      %v6976 = vsel %vm5281, %v5267, -inf
      %v6977 = vrot.slane %v6976, 4
      %v6978 = vmax.f32 %v6976, %v6977
      %v6979 = vrot.slane %v6978, 2
      %v6980 = vmax.f32 %v6978, %v6979
      %v6981 = vrot.slane %v6980, 1
      %v6982 = vmax.f32 %v6980, %v6981
      %v6983 = vsel %vm5281, %v5268, -inf
      %v6984 = vrot.slane %v6983, 4
      %v6985 = vmax.f32 %v6983, %v6984
      %v6986 = vrot.slane %v6985, 2
      %v6987 = vmax.f32 %v6985, %v6986
      %v6988 = vrot.slane %v6987, 1
      %v6989 = vmax.f32 %v6987, %v6988
      %v6990 = vsel %vm5281, %v5269, -inf
      %v6991 = vrot.slane %v6990, 4
      %v6992 = vmax.f32 %v6990, %v6991
      %v6993 = vrot.slane %v6992, 2
      %v6994 = vmax.f32 %v6992, %v6993
      %v6995 = vrot.slane %v6994, 1
      %v6996 = vmax.f32 %v6994, %v6995
      %v6997 = vsel %vm5281, %v5270, -inf
      %v6998 = vrot.slane %v6997, 4
      %v6999 = vmax.f32 %v6997, %v6998
      %v7000 = vrot.slane %v6999, 2
      %v7001 = vmax.f32 %v6999, %v7000
      %v7002 = vrot.slane %v7001, 1
      %v7003 = vmax.f32 %v7001, %v7002
      %v7004 = vsel %vm5281, %v5271, -inf
      %v7005 = vrot.slane %v7004, 4
      %v7006 = vmax.f32 %v7004, %v7005
      %v7007 = vrot.slane %v7006, 2
      %v7008 = vmax.f32 %v7006, %v7007
      %v7009 = vrot.slane %v7008, 1
      %v7010 = vmax.f32 %v7008, %v7009
      %v7011 = vsel %vm5281, %v5272, -inf
      %v7012 = vrot.slane %v7011, 4
      %v7013 = vmax.f32 %v7011, %v7012
      %v7014 = vrot.slane %v7013, 2
      %v7015 = vmax.f32 %v7013, %v7014
      %v7016 = vrot.slane %v7015, 1
      %v7017 = vmax.f32 %v7015, %v7016
      %v7018 = vsel %vm5281, %v5273, -inf
      %v7019 = vrot.slane %v7018, 4
      %v7020 = vmax.f32 %v7018, %v7019
      %v7021 = vrot.slane %v7020, 2
      %v7022 = vmax.f32 %v7020, %v7021
      %v7023 = vrot.slane %v7022, 1
      %v7024 = vmax.f32 %v7022, %v7023
      %v7025 = vsel %vm5281, %v5274, -inf
      %v7026 = vrot.slane %v7025, 4
      %v7027 = vmax.f32 %v7025, %v7026
      %v7028 = vrot.slane %v7027, 2
      %v7029 = vmax.f32 %v7027, %v7028
      %v7030 = vrot.slane %v7029, 1
      %v7031 = vmax.f32 %v7029, %v7030
      %v7032 = vsel %vm5281, %v5275, -inf
      %v7033 = vrot.slane %v7032, 4
      %v7034 = vmax.f32 %v7032, %v7033
      %v7035 = vrot.slane %v7034, 2
      %v7036 = vmax.f32 %v7034, %v7035
      %v7037 = vrot.slane %v7036, 1
      %v7038 = vmax.f32 %v7036, %v7037
      %v7039 = vsel %vm5281, %v5276, -inf
      %v7040 = vrot.slane %v7039, 4
      %v7041 = vmax.f32 %v7039, %v7040
      %v7042 = vrot.slane %v7041, 2
      %v7043 = vmax.f32 %v7041, %v7042
      %v7044 = vrot.slane %v7043, 1
      %v7045 = vmax.f32 %v7043, %v7044
      %v7046 = vsel %vm5281, %v5277, -inf
      %v7047 = vrot.slane %v7046, 4
      %v7048 = vmax.f32 %v7046, %v7047
      %v7049 = vrot.slane %v7048, 2
      %v7050 = vmax.f32 %v7048, %v7049
      %v7051 = vrot.slane %v7050, 1
      %v7052 = vmax.f32 %v7050, %v7051
      %v7053 = vsel %vm5281, %v5278, -inf
      %v7054 = vrot.slane %v7053, 4
      %v7055 = vmax.f32 %v7053, %v7054
      %v7056 = vrot.slane %v7055, 2
      %v7057 = vmax.f32 %v7055, %v7056
      %v7058 = vrot.slane %v7057, 1
      %v7059 = vmax.f32 %v7057, %v7058
      %v7060 = vsel %vm5281, %v5279, -inf
      %v7061 = vrot.slane %v7060, 4
      %v7062 = vmax.f32 %v7060, %v7061
      %v7063 = vrot.slane %v7062, 2
      %v7064 = vmax.f32 %v7062, %v7063
      %v7065 = vrot.slane %v7064, 1
      %v7066 = vmax.f32 %v7064, %v7065
      %v7067 = vsel %vm5281, %v5280, -inf
      %v7068 = vrot.slane %v7067, 4
      %v7069 = vmax.f32 %v7067, %v7068
      %v7070 = vrot.slane %v7069, 2
      %v7071 = vmax.f32 %v7069, %v7070
      %v7072 = vrot.slane %v7071, 1
      %v7073 = vmax.f32 %v7071, %v7072
      %v7074 = vld [vmem:[%s4] sm:$0xff]
      %v7075 = vld [vmem:[%s4 + $0x8] sm:$0xff]
      %v7076 = vld [vmem:[%s4 + $0x10] sm:$0xff]
      %v7077 = vld [vmem:[%s4 + $0x18] sm:$0xff]
      %v7079 = vsel %vm5281, %v5025, 0
      %v7082 = vsel %vm5281, %v5026, 0
      %v7085 = vsel %vm5281, %v5027, 0
      %v7088 = vsel %vm5281, %v5028, 0
      %v7091 = vsel %vm5281, %v5029, 0
      %v7094 = vsel %vm5281, %v5030, 0
      %v7097 = vsel %vm5281, %v5031, 0
      %v7100 = vsel %vm5281, %v5032, 0
      %v7103 = vsel %vm5281, %v5033, 0
      %v7106 = vsel %vm5281, %v5034, 0
      %v7109 = vsel %vm5281, %v5035, 0
      %v7112 = vsel %vm5281, %v5036, 0
      %v7115 = vsel %vm5281, %v5037, 0
      %v7118 = vsel %vm5281, %v5038, 0
      %v7121 = vsel %vm5281, %v5039, 0
      %v7124 = vsel %vm5281, %v5040, 0
      %v7127 = vsel %vm5281, %v5041, 0
      %v7130 = vsel %vm5281, %v5042, 0
      %v7133 = vsel %vm5281, %v5043, 0
      %v7136 = vsel %vm5281, %v5044, 0
      %v7139 = vsel %vm5281, %v5045, 0
      %v7142 = vsel %vm5281, %v5046, 0
      %v7145 = vsel %vm5281, %v5047, 0
      %v7148 = vsel %vm5281, %v5048, 0
      %v7151 = vsel %vm5281, %v5049, 0
      %v7154 = vsel %vm5281, %v5050, 0
      %v7157 = vsel %vm5281, %v5051, 0
      %v7160 = vsel %vm5281, %v5052, 0
      %v7163 = vsel %vm5281, %v5053, 0
      %v7166 = vsel %vm5281, %v5054, 0
      %v7169 = vsel %vm5281, %v5055, 0
      %v7172 = vsel %vm5281, %v5056, 0
      %v7175 = vsel %vm5281, %v5057, 0
      %v7178 = vsel %vm5281, %v5058, 0
      %v7181 = vsel %vm5281, %v5059, 0
      %v7184 = vsel %vm5281, %v5060, 0
      %v7187 = vsel %vm5281, %v5061, 0
      %v7190 = vsel %vm5281, %v5062, 0
      %v7193 = vsel %vm5281, %v5063, 0
      %v7196 = vsel %vm5281, %v5064, 0
      %v7199 = vsel %vm5281, %v5065, 0
      %v7202 = vsel %vm5281, %v5066, 0
      %v7205 = vsel %vm5281, %v5067, 0
      %v7208 = vsel %vm5281, %v5068, 0
      %v7211 = vsel %vm5281, %v5069, 0
      %v7214 = vsel %vm5281, %v5070, 0
      %v7217 = vsel %vm5281, %v5071, 0
      %v7220 = vsel %vm5281, %v5072, 0
      %v7223 = vsel %vm5281, %v5073, 0
      %v7226 = vsel %vm5281, %v5074, 0
      %v7229 = vsel %vm5281, %v5075, 0
      %v7232 = vsel %vm5281, %v5076, 0
      %v7235 = vsel %vm5281, %v5077, 0
      %v7238 = vsel %vm5281, %v5078, 0
      %v7241 = vsel %vm5281, %v5079, 0
      %v7244 = vsel %vm5281, %v5080, 0
      %v7247 = vsel %vm5281, %v5081, 0
      %v7250 = vsel %vm5281, %v5082, 0
      %v7253 = vsel %vm5281, %v5083, 0
      %v7256 = vsel %vm5281, %v5084, 0
      %v7259 = vsel %vm5281, %v5085, 0
      %v7262 = vsel %vm5281, %v5086, 0
      %v7265 = vsel %vm5281, %v5087, 0
      %v7268 = vsel %vm5281, %v5088, 0
      %v7271 = vsel %vm5281, %v5089, 0
      %v7274 = vsel %vm5281, %v5090, 0
      %v7277 = vsel %vm5281, %v5091, 0
      %v7280 = vsel %vm5281, %v5092, 0
      %v7283 = vsel %vm5281, %v5093, 0
      %v7286 = vsel %vm5281, %v5094, 0
      %v7289 = vsel %vm5281, %v5095, 0
      %v7292 = vsel %vm5281, %v5096, 0
      %v7295 = vsel %vm5281, %v5097, 0
      %v7298 = vsel %vm5281, %v5098, 0
      %v7301 = vsel %vm5281, %v5099, 0
      %v7304 = vsel %vm5281, %v5100, 0
      %v7307 = vsel %vm5281, %v5101, 0
      %v7310 = vsel %vm5281, %v5102, 0
      %v7313 = vsel %vm5281, %v5103, 0
      %v7316 = vsel %vm5281, %v5104, 0
      %v7319 = vsel %vm5281, %v5105, 0
      %v7322 = vsel %vm5281, %v5106, 0
      %v7325 = vsel %vm5281, %v5107, 0
      %v7328 = vsel %vm5281, %v5108, 0
      %v7331 = vsel %vm5281, %v5109, 0
      %v7334 = vsel %vm5281, %v5110, 0
      %v7337 = vsel %vm5281, %v5111, 0
      %v7340 = vsel %vm5281, %v5112, 0
      %v7343 = vsel %vm5281, %v5113, 0
      %v7346 = vsel %vm5281, %v5114, 0
      %v7349 = vsel %vm5281, %v5115, 0
      %v7352 = vsel %vm5281, %v5116, 0
      %v7355 = vsel %vm5281, %v5117, 0
      %v7358 = vsel %vm5281, %v5118, 0
      %v7361 = vsel %vm5281, %v5119, 0
      %v7364 = vsel %vm5281, %v5120, 0
      %v7367 = vsel %vm5281, %v5121, 0
      %v7370 = vsel %vm5281, %v5122, 0
      %v7373 = vsel %vm5281, %v5123, 0
      %v7376 = vsel %vm5281, %v5124, 0
      %v7379 = vsel %vm5281, %v5125, 0
      %v7382 = vsel %vm5281, %v5126, 0
      %v7385 = vsel %vm5281, %v5127, 0
      %v7388 = vsel %vm5281, %v5128, 0
      %v7391 = vsel %vm5281, %v5129, 0
      %v7394 = vsel %vm5281, %v5130, 0
      %v7397 = vsel %vm5281, %v5131, 0
      %v7400 = vsel %vm5281, %v5132, 0
      %v7403 = vsel %vm5281, %v5133, 0
      %v7406 = vsel %vm5281, %v5134, 0
      %v7409 = vsel %vm5281, %v5135, 0
      %v7412 = vsel %vm5281, %v5136, 0
      %v7415 = vsel %vm5281, %v5137, 0
      %v7418 = vsel %vm5281, %v5138, 0
      %v7421 = vsel %vm5281, %v5139, 0
      %v7424 = vsel %vm5281, %v5140, 0
      %v7427 = vsel %vm5281, %v5141, 0
      %v7430 = vsel %vm5281, %v5142, 0
      %v7433 = vsel %vm5281, %v5143, 0
      %v7436 = vsel %vm5281, %v5144, 0
      %v7439 = vsel %vm5281, %v5145, 0
      %v7442 = vsel %vm5281, %v5146, 0
      %v7445 = vsel %vm5281, %v5147, 0
      %v7448 = vsel %vm5281, %v5148, 0
      %v7451 = vsel %vm5281, %v5149, 0
      %v7454 = vsel %vm5281, %v5150, 0
      %v7457 = vsel %vm5281, %v5151, 0
      %v7460 = vsel %vm5281, %v5152, 0
      %v7463 = vsel %vm5281, %v5153, 0
      %v7466 = vsel %vm5281, %v5154, 0
      %v7469 = vsel %vm5281, %v5155, 0
      %v7472 = vsel %vm5281, %v5156, 0
      %v7475 = vsel %vm5281, %v5157, 0
      %v7478 = vsel %vm5281, %v5158, 0
      %v7481 = vsel %vm5281, %v5159, 0
      %v7484 = vsel %vm5281, %v5160, 0
      %v7487 = vsel %vm5281, %v5161, 0
      %v7490 = vsel %vm5281, %v5162, 0
      %v7493 = vsel %vm5281, %v5163, 0
      %v7496 = vsel %vm5281, %v5164, 0
      %v7499 = vsel %vm5281, %v5165, 0
      %v7502 = vsel %vm5281, %v5166, 0
      %v7505 = vsel %vm5281, %v5167, 0
      %v7508 = vsel %vm5281, %v5168, 0
      %v7511 = vsel %vm5281, %v5169, 0
      %v7514 = vsel %vm5281, %v5170, 0
      %v7517 = vsel %vm5281, %v5171, 0
      %v7520 = vsel %vm5281, %v5172, 0
      %v7523 = vsel %vm5281, %v5173, 0
      %v7526 = vsel %vm5281, %v5174, 0
      %v7529 = vsel %vm5281, %v5175, 0
      %v7532 = vsel %vm5281, %v5176, 0
      %v7535 = vsel %vm5281, %v5177, 0
      %v7538 = vsel %vm5281, %v5178, 0
      %v7541 = vsel %vm5281, %v5179, 0
      %v7544 = vsel %vm5281, %v5180, 0
      %v7547 = vsel %vm5281, %v5181, 0
      %v7550 = vsel %vm5281, %v5182, 0
      %v7553 = vsel %vm5281, %v5183, 0
      %v7556 = vsel %vm5281, %v5184, 0
      %v7559 = vsel %vm5281, %v5185, 0
      %v7562 = vsel %vm5281, %v5186, 0
      %v7565 = vsel %vm5281, %v5187, 0
      %v7568 = vsel %vm5281, %v5188, 0
      %v7571 = vsel %vm5281, %v5189, 0
      %v7574 = vsel %vm5281, %v5190, 0
      %v7577 = vsel %vm5281, %v5191, 0
      %v7580 = vsel %vm5281, %v5192, 0
      %v7583 = vsel %vm5281, %v5193, 0
      %v7586 = vsel %vm5281, %v5194, 0
      %v7589 = vsel %vm5281, %v5195, 0
      %v7592 = vsel %vm5281, %v5196, 0
      %v7595 = vsel %vm5281, %v5197, 0
      %v7598 = vsel %vm5281, %v5198, 0
      %v7601 = vsel %vm5281, %v5199, 0
      %v7604 = vsel %vm5281, %v5200, 0
      %v7607 = vsel %vm5281, %v5201, 0
      %v7610 = vsel %vm5281, %v5202, 0
      %v7613 = vsel %vm5281, %v5203, 0
      %v7616 = vsel %vm5281, %v5204, 0
      %v7619 = vsel %vm5281, %v5205, 0
      %v7622 = vsel %vm5281, %v5206, 0
      %v7625 = vsel %vm5281, %v5207, 0
      %v7628 = vsel %vm5281, %v5208, 0
      %v7631 = vsel %vm5281, %v5209, 0
      %v7634 = vsel %vm5281, %v5210, 0
      %v7637 = vsel %vm5281, %v5211, 0
      %v7640 = vsel %vm5281, %v5212, 0
      %v7643 = vsel %vm5281, %v5213, 0
      %v7646 = vsel %vm5281, %v5214, 0
      %v7649 = vsel %vm5281, %v5215, 0
      %v7652 = vsel %vm5281, %v5216, 0
      %v7655 = vsel %vm5281, %v5217, 0
      %v7658 = vsel %vm5281, %v5218, 0
      %v7661 = vsel %vm5281, %v5219, 0
      %v7664 = vsel %vm5281, %v5220, 0
      %v7667 = vsel %vm5281, %v5221, 0
      %v7670 = vsel %vm5281, %v5222, 0
      %v7673 = vsel %vm5281, %v5223, 0
      %v7676 = vsel %vm5281, %v5224, 0
      %v7679 = vsel %vm5281, %v5225, 0
      %v7682 = vsel %vm5281, %v5226, 0
      %v7685 = vsel %vm5281, %v5227, 0
      %v7688 = vsel %vm5281, %v5228, 0
      %v7691 = vsel %vm5281, %v5229, 0
      %v7694 = vsel %vm5281, %v5230, 0
      %v7697 = vsel %vm5281, %v5231, 0
      %v7700 = vsel %vm5281, %v5232, 0
      %v7703 = vsel %vm5281, %v5233, 0
      %v7706 = vsel %vm5281, %v5234, 0
      %v7709 = vsel %vm5281, %v5235, 0
      %v7712 = vsel %vm5281, %v5236, 0
      %v7715 = vsel %vm5281, %v5237, 0
      %v7718 = vsel %vm5281, %v5238, 0
      %v7721 = vsel %vm5281, %v5239, 0
      %v7724 = vsel %vm5281, %v5240, 0
      %v7727 = vsel %vm5281, %v5241, 0
      %v7730 = vsel %vm5281, %v5242, 0
      %v7733 = vsel %vm5281, %v5243, 0
      %v7736 = vsel %vm5281, %v5244, 0
      %v7739 = vsel %vm5281, %v5245, 0
      %v7742 = vsel %vm5281, %v5246, 0
      %v7745 = vsel %vm5281, %v5247, 0
      %v7748 = vsel %vm5281, %v5248, 0
      %v7751 = vsel %vm5281, %v5249, 0
      %v7754 = vsel %vm5281, %v5250, 0
      %v7757 = vsel %vm5281, %v5251, 0
      %v7760 = vsel %vm5281, %v5252, 0
      %v7763 = vsel %vm5281, %v5253, 0
      %v7766 = vsel %vm5281, %v5254, 0
      %v7769 = vsel %vm5281, %v5255, 0
      %v7772 = vsel %vm5281, %v5256, 0
      %v7775 = vsel %vm5281, %v5257, 0
      %v7778 = vsel %vm5281, %v5258, 0
      %v7781 = vsel %vm5281, %v5259, 0
      %v7784 = vsel %vm5281, %v5260, 0
      %v7787 = vsel %vm5281, %v5261, 0
      %v7790 = vsel %vm5281, %v5262, 0
      %v7793 = vsel %vm5281, %v5263, 0
      %v7796 = vsel %vm5281, %v5264, 0
      %v7799 = vsel %vm5281, %v5265, 0
      %v7802 = vsel %vm5281, %v5266, 0
      %v7805 = vsel %vm5281, %v5267, 0
      %v7808 = vsel %vm5281, %v5268, 0
      %v7811 = vsel %vm5281, %v5269, 0
      %v7814 = vsel %vm5281, %v5270, 0
      %v7817 = vsel %vm5281, %v5271, 0
      %v7820 = vsel %vm5281, %v5272, 0
      %v7823 = vsel %vm5281, %v5273, 0
      %v7826 = vsel %vm5281, %v5274, 0
      %v7829 = vsel %vm5281, %v5275, 0
      %v7832 = vsel %vm5281, %v5276, 0
      %v7835 = vsel %vm5281, %v5277, 0
      %v7838 = vsel %vm5281, %v5278, 0
      %v7841 = vsel %vm5281, %v5279, 0
      %v7844 = vsel %vm5281, %v5280, 0
      %7846 = vmatprep.subr.mxu0 0.0
      %7847 = vmatpush1.msra.mxu0 %v7074
      %7848 = vmatprep.subr.mxu0 0.0
      %7849 = vmatpush1.msra.mxu0 %v7075
      %7850 = vmatprep.subr.mxu0 0.0
      %7851 = vmatpush1.msra.mxu0 %v7076
      %7852 = vmatprep.subr.mxu0 0.0
      %7853 = vmatpush1.msra.mxu0 %v7077
      %7854 = vmatprep.subr.mxu0 0.0
      %7855 = vmatpush1.msra.mxu0 0.0
      %7856 = vmatprep.subr.mxu0 0.0
      %7857 = vmatpush1.msra.mxu0 0.0
      %7858 = vmatprep.subr.mxu0 0.0
      %7859 = vmatpush1.msra.mxu0 0.0
      %7860 = vmatprep.subr.mxu0 0.0
      %7861 = vmatpush1.msra.mxu0 0.0
      %7862 = vmatprep.subr.mxu0 0.0
      %7863 = vmatpush1.msra.mxu0 0.0
      %7864 = vmatprep.subr.mxu0 0.0
      %7865 = vmatpush1.msra.mxu0 0.0
      %7866 = vmatprep.subr.mxu0 0.0
      %7867 = vmatpush1.msra.mxu0 0.0
      %7868 = vmatprep.subr.mxu0 0.0
      %7869 = vmatpush1.msra.mxu0 0.0
      %7870 = vmatprep.subr.mxu0 0.0
      %7871 = vmatpush1.msra.mxu0 0.0
      %7872 = vmatprep.subr.mxu0 0.0
      %7873 = vmatpush1.msra.mxu0 0.0
      %7874 = vmatprep.subr.mxu0 0.0
      %7875 = vmatpush1.msra.mxu0 0.0
      %7876 = vmatprep.subr.mxu0 0.0
      %7877 = vmatpush1.msra.mxu0 0.0
      %7878 = vmatprep.subr.mxu0 0.0
      %7879 = vmatpush1.msra.mxu0 0.0
      %7880 = vmatprep.subr.mxu0 0.0
      %7881 = vmatpush1.msra.mxu0 0.0
      %7882 = vmatprep.subr.mxu0 0.0
      %7883 = vmatpush1.msra.mxu0 0.0
      %7884 = vmatprep.subr.mxu0 0.0
      %7885 = vmatpush1.msra.mxu0 0.0
      %7886 = vmatprep.subr.mxu0 0.0
      %7887 = vmatpush1.msra.mxu0 0.0
      %7888 = vmatprep.subr.mxu0 0.0
      %7889 = vmatpush1.msra.mxu0 0.0
      %7890 = vmatprep.subr.mxu0 0.0
      %7891 = vmatpush1.msra.mxu0 0.0
      %7892 = vmatprep.subr.mxu0 0.0
      %7893 = vmatpush1.msra.mxu0 0.0
      %7894 = vmatprep.subr.mxu0 0.0
      %7895 = vmatpush1.msra.mxu0 0.0
      %7896 = vmatprep.subr.mxu0 0.0
      %7897 = vmatpush1.msra.mxu0 0.0
      %7898 = vmatprep.subr.mxu0 0.0
      %7899 = vmatpush1.msra.mxu0 0.0
      %7900 = vmatprep.subr.mxu0 0.0
      %7901 = vmatpush1.msra.mxu0 0.0
      %7902 = vmatprep.subr.mxu0 0.0
      %7903 = vmatpush1.msra.mxu0 0.0
      %7904 = vmatprep.subr.mxu0 0.0
      %7905 = vmatpush1.msra.mxu0 0.0
      %7906 = vmatprep.subr.mxu0 0.0
      %7907 = vmatpush1.msra.mxu0 0.0
      %7908 = vmatprep.subr.mxu0 0.0
      %7909 = vmatpush1.msra.mxu0 0.0
      %7910 = vmatprep.mubr.f32.mxu0 0.0
      %7911 = vmatmul.mubr.f32.gmra.mrb[0].mxu0 %v7079
      %v7912 = vpop.f32.mrb[0].mxu0
      %v7913 = vadd.f32 0.0, %v7912
      %v7914 = vpop.f32.mrb[0].mxu0
      %7915 = vmatprep.mubr.f32.mxu0 0.0
      %7916 = vmatmul.mubr.f32.gmra.mrb[0].mxu0 %v7082
      %v7917 = vpop.f32.mrb[0].mxu0
      %v7918 = vadd.f32 0.0, %v7917
      %v7919 = vpop.f32.mrb[0].mxu0
      %7920 = vmatprep.mubr.f32.mxu0 0.0
      %7921 = vmatmul.mubr.f32.gmra.mrb[0].mxu0 %v7085
      %v7922 = vpop.f32.mrb[0].mxu0
      %v7923 = vadd.f32 0.0, %v7922
      %v7924 = vpop.f32.mrb[0].mxu0
      %7925 = vmatprep.mubr.f32.mxu0 0.0
      %7926 = vmatmul.mubr.f32.gmra.mrb[0].mxu0 %v7088
      %v7927 = vpop.f32.mrb[0].mxu0
      %v7928 = vadd.f32 0.0, %v7927
      %v7929 = vpop.f32.mrb[0].mxu0
      %7930 = vmatprep.mubr.f32.mxu0 0.0
      %7931 = vmatmul.mubr.f32.gmra.mrb[0].mxu0 %v7091
      %v7932 = vpop.f32.mrb[0].mxu0
      %v7933 = vadd.f32 0.0, %v7932
      %v7934 = vpop.f32.mrb[0].mxu0
      %7935 = vmatprep.mubr.f32.mxu0 0.0
      %7936 = vmatmul.mubr.f32.gmra.mrb[0].mxu0 %v7094
      %v7937 = vpop.f32.mrb[0].mxu0
      %v7938 = vadd.f32 0.0, %v7937
      %v7939 = vpop.f32.mrb[0].mxu0
      %7940 = vmatprep.mubr.f32.mxu0 0.0
      %7941 = vmatmul.mubr.f32.gmra.mrb[0].mxu0 %v7097
      %v7942 = vpop.f32.mrb[0].mxu0
      %v7943 = vadd.f32 0.0, %v7942
      %v7944 = vpop.f32.mrb[0].mxu0
      %7945 = vmatprep.mubr.f32.mxu0 0.0
      %7946 = vmatmul.mubr.f32.gmra.mrb[0].mxu0 %v7100
      %v7947 = vpop.f32.mrb[0].mxu0
      %v7948 = vadd.f32 0.0, %v7947
      %v7949 = vpop.f32.mrb[0].mxu0
      %7950 = vmatprep.mubr.f32.mxu0 0.0
      %7951 = vmatmul.mubr.f32.gmra.mrb[0].mxu0 %v7103
      %v7952 = vpop.f32.mrb[0].mxu0
      %v7953 = vadd.f32 0.0, %v7952
      %v7954 = vpop.f32.mrb[0].mxu0
      %7955 = vmatprep.mubr.f32.mxu0 0.0
      %7956 = vmatmul.mubr.f32.gmra.mrb[0].mxu0 %v7106
      %v7957 = vpop.f32.mrb[0].mxu0
      %v7958 = vadd.f32 0.0, %v7957
      %v7959 = vpop.f32.mrb[0].mxu0
      %7960 = vmatprep.mubr.f32.mxu0 0.0
      %7961 = vmatmul.mubr.f32.gmra.mrb[0].mxu0 %v7109
      %v7962 = vpop.f32.mrb[0].mxu0
      %v7963 = vadd.f32 0.0, %v7962
      %v7964 = vpop.f32.mrb[0].mxu0
      %7965 = vmatprep.mubr.f32.mxu0 0.0
      %7966 = vmatmul.mubr.f32.gmra.mrb[0].mxu0 %v7112
      %v7967 = vpop.f32.mrb[0].mxu0
      %v7968 = vadd.f32 0.0, %v7967
      %v7969 = vpop.f32.mrb[0].mxu0
      %7970 = vmatprep.mubr.f32.mxu0 0.0
      %7971 = vmatmul.mubr.f32.gmra.mrb[0].mxu0 %v7115
      %v7972 = vpop.f32.mrb[0].mxu0
      %v7973 = vadd.f32 0.0, %v7972
      %v7974 = vpop.f32.mrb[0].mxu0
      %7975 = vmatprep.mubr.f32.mxu0 0.0
      %7976 = vmatmul.mubr.f32.gmra.mrb[0].mxu0 %v7118
      %v7977 = vpop.f32.mrb[0].mxu0
      %v7978 = vadd.f32 0.0, %v7977
      %v7979 = vpop.f32.mrb[0].mxu0
      %7980 = vmatprep.mubr.f32.mxu0 0.0
      %7981 = vmatmul.mubr.f32.gmra.mrb[0].mxu0 %v7121
      %v7982 = vpop.f32.mrb[0].mxu0
      %v7983 = vadd.f32 0.0, %v7982
      %v7984 = vpop.f32.mrb[0].mxu0
      %7985 = vmatprep.mubr.f32.mxu0 0.0
      %7986 = vmatmul.mubr.f32.gmra.mrb[0].mxu0 %v7124
      %v7987 = vpop.f32.mrb[0].mxu0
      %v7988 = vadd.f32 0.0, %v7987
      %v7989 = vpop.f32.mrb[0].mxu0
      %7990 = vmatprep.mubr.f32.mxu0 0.0
      %7991 = vmatmul.mubr.f32.gmra.mrb[0].mxu0 %v7127
      %v7992 = vpop.f32.mrb[0].mxu0
      %v7993 = vadd.f32 0.0, %v7992
      %v7994 = vpop.f32.mrb[0].mxu0
      %7995 = vmatprep.mubr.f32.mxu0 0.0
      %7996 = vmatmul.mubr.f32.gmra.mrb[0].mxu0 %v7130
      %v7997 = vpop.f32.mrb[0].mxu0
      %v7998 = vadd.f32 0.0, %v7997
      %v7999 = vpop.f32.mrb[0].mxu0
      %8000 = vmatprep.mubr.f32.mxu0 0.0
      %8001 = vmatmul.mubr.f32.gmra.mrb[0].mxu0 %v7133
      %v8002 = vpop.f32.mrb[0].mxu0
      %v8003 = vadd.f32 0.0, %v8002
      %v8004 = vpop.f32.mrb[0].mxu0
      %8005 = vmatprep.mubr.f32.mxu0 0.0
      %8006 = vmatmul.mubr.f32.gmra.mrb[0].mxu0 %v7136
      %v8007 = vpop.f32.mrb[0].mxu0
      %v8008 = vadd.f32 0.0, %v8007
      %v8009 = vpop.f32.mrb[0].mxu0
      %8010 = vmatprep.mubr.f32.mxu0 0.0
      %8011 = vmatmul.mubr.f32.gmra.mrb[0].mxu0 %v7139
      %v8012 = vpop.f32.mrb[0].mxu0
      %v8013 = vadd.f32 0.0, %v8012
      %v8014 = vpop.f32.mrb[0].mxu0
      %8015 = vmatprep.mubr.f32.mxu0 0.0
      %8016 = vmatmul.mubr.f32.gmra.mrb[0].mxu0 %v7142
      %v8017 = vpop.f32.mrb[0].mxu0
      %v8018 = vadd.f32 0.0, %v8017
      %v8019 = vpop.f32.mrb[0].mxu0
      %8020 = vmatprep.mubr.f32.mxu0 0.0
      %8021 = vmatmul.mubr.f32.gmra.mrb[0].mxu0 %v7145
      %v8022 = vpop.f32.mrb[0].mxu0
      %v8023 = vadd.f32 0.0, %v8022
      %v8024 = vpop.f32.mrb[0].mxu0
      %8025 = vmatprep.mubr.f32.mxu0 0.0
      %8026 = vmatmul.mubr.f32.gmra.mrb[0].mxu0 %v7148
      %v8027 = vpop.f32.mrb[0].mxu0
      %v8028 = vadd.f32 0.0, %v8027
      %v8029 = vpop.f32.mrb[0].mxu0
      %8030 = vmatprep.mubr.f32.mxu0 0.0
      %8031 = vmatmul.mubr.f32.gmra.mrb[0].mxu0 %v7151
      %v8032 = vpop.f32.mrb[0].mxu0
      %v8033 = vadd.f32 0.0, %v8032
      %v8034 = vpop.f32.mrb[0].mxu0
      %8035 = vmatprep.mubr.f32.mxu0 0.0
      %8036 = vmatmul.mubr.f32.gmra.mrb[0].mxu0 %v7154
      %v8037 = vpop.f32.mrb[0].mxu0
      %v8038 = vadd.f32 0.0, %v8037
      %v8039 = vpop.f32.mrb[0].mxu0
      %8040 = vmatprep.mubr.f32.mxu0 0.0
      %8041 = vmatmul.mubr.f32.gmra.mrb[0].mxu0 %v7157
      %v8042 = vpop.f32.mrb[0].mxu0
      %v8043 = vadd.f32 0.0, %v8042
      %v8044 = vpop.f32.mrb[0].mxu0
      %8045 = vmatprep.mubr.f32.mxu0 0.0
      %8046 = vmatmul.mubr.f32.gmra.mrb[0].mxu0 %v7160
      %v8047 = vpop.f32.mrb[0].mxu0
      %v8048 = vadd.f32 0.0, %v8047
      %v8049 = vpop.f32.mrb[0].mxu0
      %8050 = vmatprep.mubr.f32.mxu0 0.0
      %8051 = vmatmul.mubr.f32.gmra.mrb[0].mxu0 %v7163
      %v8052 = vpop.f32.mrb[0].mxu0
      %v8053 = vadd.f32 0.0, %v8052
      %v8054 = vpop.f32.mrb[0].mxu0
      %8055 = vmatprep.mubr.f32.mxu0 0.0
      %8056 = vmatmul.mubr.f32.gmra.mrb[0].mxu0 %v7166
      %v8057 = vpop.f32.mrb[0].mxu0
      %v8058 = vadd.f32 0.0, %v8057
      %v8059 = vpop.f32.mrb[0].mxu0
      %8060 = vmatprep.mubr.f32.mxu0 0.0
      %8061 = vmatmul.mubr.f32.gmra.mrb[0].mxu0 %v7169
      %v8062 = vpop.f32.mrb[0].mxu0
      %v8063 = vadd.f32 0.0, %v8062
      %v8064 = vpop.f32.mrb[0].mxu0
      %8065 = vmatprep.mubr.f32.mxu0 0.0
      %8066 = vmatmul.mubr.f32.gmra.mrb[0].mxu0 %v7172
      %v8067 = vpop.f32.mrb[0].mxu0
      %v8068 = vadd.f32 0.0, %v8067
      %v8069 = vpop.f32.mrb[0].mxu0
      %8070 = vmatprep.mubr.f32.mxu0 0.0
      %8071 = vmatmul.mubr.f32.gmra.mrb[0].mxu0 %v7175
      %v8072 = vpop.f32.mrb[0].mxu0
      %v8073 = vadd.f32 0.0, %v8072
      %v8074 = vpop.f32.mrb[0].mxu0
      %8075 = vmatprep.mubr.f32.mxu0 0.0
      %8076 = vmatmul.mubr.f32.gmra.mrb[0].mxu0 %v7178
      %v8077 = vpop.f32.mrb[0].mxu0
      %v8078 = vadd.f32 0.0, %v8077
      %v8079 = vpop.f32.mrb[0].mxu0
      %8080 = vmatprep.mubr.f32.mxu0 0.0
      %8081 = vmatmul.mubr.f32.gmra.mrb[0].mxu0 %v7181
      %v8082 = vpop.f32.mrb[0].mxu0
      %v8083 = vadd.f32 0.0, %v8082
      %v8084 = vpop.f32.mrb[0].mxu0
      %8085 = vmatprep.mubr.f32.mxu0 0.0
      %8086 = vmatmul.mubr.f32.gmra.mrb[0].mxu0 %v7184
      %v8087 = vpop.f32.mrb[0].mxu0
      %v8088 = vadd.f32 0.0, %v8087
      %v8089 = vpop.f32.mrb[0].mxu0
      %8090 = vmatprep.mubr.f32.mxu0 0.0
      %8091 = vmatmul.mubr.f32.gmra.mrb[0].mxu0 %v7187
      %v8092 = vpop.f32.mrb[0].mxu0
      %v8093 = vadd.f32 0.0, %v8092
      %v8094 = vpop.f32.mrb[0].mxu0
      %8095 = vmatprep.mubr.f32.mxu0 0.0
      %8096 = vmatmul.mubr.f32.gmra.mrb[0].mxu0 %v7190
      %v8097 = vpop.f32.mrb[0].mxu0
      %v8098 = vadd.f32 0.0, %v8097
      %v8099 = vpop.f32.mrb[0].mxu0
      %8100 = vmatprep.mubr.f32.mxu0 0.0
      %8101 = vmatmul.mubr.f32.gmra.mrb[0].mxu0 %v7193
      %v8102 = vpop.f32.mrb[0].mxu0
      %v8103 = vadd.f32 0.0, %v8102
      %v8104 = vpop.f32.mrb[0].mxu0
      %8105 = vmatprep.mubr.f32.mxu0 0.0
      %8106 = vmatmul.mubr.f32.gmra.mrb[0].mxu0 %v7196
      %v8107 = vpop.f32.mrb[0].mxu0
      %v8108 = vadd.f32 0.0, %v8107
      %v8109 = vpop.f32.mrb[0].mxu0
      %8110 = vmatprep.mubr.f32.mxu0 0.0
      %8111 = vmatmul.mubr.f32.gmra.mrb[0].mxu0 %v7199
      %v8112 = vpop.f32.mrb[0].mxu0
      %v8113 = vadd.f32 0.0, %v8112
      %v8114 = vpop.f32.mrb[0].mxu0
      %8115 = vmatprep.mubr.f32.mxu0 0.0
      %8116 = vmatmul.mubr.f32.gmra.mrb[0].mxu0 %v7202
      %v8117 = vpop.f32.mrb[0].mxu0
      %v8118 = vadd.f32 0.0, %v8117
      %v8119 = vpop.f32.mrb[0].mxu0
      %8120 = vmatprep.mubr.f32.mxu0 0.0
      %8121 = vmatmul.mubr.f32.gmra.mrb[0].mxu0 %v7205
      %v8122 = vpop.f32.mrb[0].mxu0
      %v8123 = vadd.f32 0.0, %v8122
      %v8124 = vpop.f32.mrb[0].mxu0
      %8125 = vmatprep.mubr.f32.mxu0 0.0
      %8126 = vmatmul.mubr.f32.gmra.mrb[0].mxu0 %v7208
      %v8127 = vpop.f32.mrb[0].mxu0
      %v8128 = vadd.f32 0.0, %v8127
      %v8129 = vpop.f32.mrb[0].mxu0
      %8130 = vmatprep.mubr.f32.mxu0 0.0
      %8131 = vmatmul.mubr.f32.gmra.mrb[0].mxu0 %v7211
      %v8132 = vpop.f32.mrb[0].mxu0
      %v8133 = vadd.f32 0.0, %v8132
      %v8134 = vpop.f32.mrb[0].mxu0
      %8135 = vmatprep.mubr.f32.mxu0 0.0
      %8136 = vmatmul.mubr.f32.gmra.mrb[0].mxu0 %v7214
      %v8137 = vpop.f32.mrb[0].mxu0
      %v8138 = vadd.f32 0.0, %v8137
      %v8139 = vpop.f32.mrb[0].mxu0
      %8140 = vmatprep.mubr.f32.mxu0 0.0
      %8141 = vmatmul.mubr.f32.gmra.mrb[0].mxu0 %v7217
      %v8142 = vpop.f32.mrb[0].mxu0
      %v8143 = vadd.f32 0.0, %v8142
      %v8144 = vpop.f32.mrb[0].mxu0
      %8145 = vmatprep.mubr.f32.mxu0 0.0
      %8146 = vmatmul.mubr.f32.gmra.mrb[0].mxu0 %v7220
      %v8147 = vpop.f32.mrb[0].mxu0
      %v8148 = vadd.f32 0.0, %v8147
      %v8149 = vpop.f32.mrb[0].mxu0
      %8150 = vmatprep.mubr.f32.mxu0 0.0
      %8151 = vmatmul.mubr.f32.gmra.mrb[0].mxu0 %v7223
      %v8152 = vpop.f32.mrb[0].mxu0
      %v8153 = vadd.f32 0.0, %v8152
      %v8154 = vpop.f32.mrb[0].mxu0
      %8155 = vmatprep.mubr.f32.mxu0 0.0
      %8156 = vmatmul.mubr.f32.gmra.mrb[0].mxu0 %v7226
      %v8157 = vpop.f32.mrb[0].mxu0
      %v8158 = vadd.f32 0.0, %v8157
      %v8159 = vpop.f32.mrb[0].mxu0
      %8160 = vmatprep.mubr.f32.mxu0 0.0
      %8161 = vmatmul.mubr.f32.gmra.mrb[0].mxu0 %v7229
      %v8162 = vpop.f32.mrb[0].mxu0
      %v8163 = vadd.f32 0.0, %v8162
      %v8164 = vpop.f32.mrb[0].mxu0
      %8165 = vmatprep.mubr.f32.mxu0 0.0
      %8166 = vmatmul.mubr.f32.gmra.mrb[0].mxu0 %v7232
      %v8167 = vpop.f32.mrb[0].mxu0
      %v8168 = vadd.f32 0.0, %v8167
      %v8169 = vpop.f32.mrb[0].mxu0
      %8170 = vmatprep.mubr.f32.mxu0 0.0
      %8171 = vmatmul.mubr.f32.gmra.mrb[0].mxu0 %v7235
      %v8172 = vpop.f32.mrb[0].mxu0
      %v8173 = vadd.f32 0.0, %v8172
      %v8174 = vpop.f32.mrb[0].mxu0
      %8175 = vmatprep.mubr.f32.mxu0 0.0
      %8176 = vmatmul.mubr.f32.gmra.mrb[0].mxu0 %v7238
      %v8177 = vpop.f32.mrb[0].mxu0
      %v8178 = vadd.f32 0.0, %v8177
      %v8179 = vpop.f32.mrb[0].mxu0
      %8180 = vmatprep.mubr.f32.mxu0 0.0
      %8181 = vmatmul.mubr.f32.gmra.mrb[0].mxu0 %v7241
      %v8182 = vpop.f32.mrb[0].mxu0
      %v8183 = vadd.f32 0.0, %v8182
      %v8184 = vpop.f32.mrb[0].mxu0
      %8185 = vmatprep.mubr.f32.mxu0 0.0
      %8186 = vmatmul.mubr.f32.gmra.mrb[0].mxu0 %v7244
      %v8187 = vpop.f32.mrb[0].mxu0
      %v8188 = vadd.f32 0.0, %v8187
      %v8189 = vpop.f32.mrb[0].mxu0
      %8190 = vmatprep.mubr.f32.mxu0 0.0
      %8191 = vmatmul.mubr.f32.gmra.mrb[0].mxu0 %v7247
      %v8192 = vpop.f32.mrb[0].mxu0
      %v8193 = vadd.f32 0.0, %v8192
      %v8194 = vpop.f32.mrb[0].mxu0
      %8195 = vmatprep.mubr.f32.mxu0 0.0
      %8196 = vmatmul.mubr.f32.gmra.mrb[0].mxu0 %v7250
      %v8197 = vpop.f32.mrb[0].mxu0
      %v8198 = vadd.f32 0.0, %v8197
      %v8199 = vpop.f32.mrb[0].mxu0
      %8200 = vmatprep.mubr.f32.mxu0 0.0
      %8201 = vmatmul.mubr.f32.gmra.mrb[0].mxu0 %v7253
      %v8202 = vpop.f32.mrb[0].mxu0
      %v8203 = vadd.f32 0.0, %v8202
      %v8204 = vpop.f32.mrb[0].mxu0
      %8205 = vmatprep.mubr.f32.mxu0 0.0
      %8206 = vmatmul.mubr.f32.gmra.mrb[0].mxu0 %v7256
      %v8207 = vpop.f32.mrb[0].mxu0
      %v8208 = vadd.f32 0.0, %v8207
      %v8209 = vpop.f32.mrb[0].mxu0
      %8210 = vmatprep.mubr.f32.mxu0 0.0
      %8211 = vmatmul.mubr.f32.gmra.mrb[0].mxu0 %v7259
      %v8212 = vpop.f32.mrb[0].mxu0
      %v8213 = vadd.f32 0.0, %v8212
      %v8214 = vpop.f32.mrb[0].mxu0
      %8215 = vmatprep.mubr.f32.mxu0 0.0
      %8216 = vmatmul.mubr.f32.gmra.mrb[0].mxu0 %v7262
      %v8217 = vpop.f32.mrb[0].mxu0
      %v8218 = vadd.f32 0.0, %v8217
      %v8219 = vpop.f32.mrb[0].mxu0
      %8220 = vmatprep.mubr.f32.mxu0 0.0
      %8221 = vmatmul.mubr.f32.gmra.mrb[0].mxu0 %v7265
      %v8222 = vpop.f32.mrb[0].mxu0
      %v8223 = vadd.f32 0.0, %v8222
      %v8224 = vpop.f32.mrb[0].mxu0
      %8225 = vmatprep.mubr.f32.mxu0 0.0
      %8226 = vmatmul.mubr.f32.gmra.mrb[0].mxu0 %v7268
      %v8227 = vpop.f32.mrb[0].mxu0
      %v8228 = vadd.f32 0.0, %v8227
      %v8229 = vpop.f32.mrb[0].mxu0
      %8230 = vmatprep.mubr.f32.mxu0 0.0
      %8231 = vmatmul.mubr.f32.gmra.mrb[0].mxu0 %v7271
      %v8232 = vpop.f32.mrb[0].mxu0
      %v8233 = vadd.f32 0.0, %v8232
      %v8234 = vpop.f32.mrb[0].mxu0
      %8235 = vmatprep.mubr.f32.mxu0 0.0
      %8236 = vmatmul.mubr.f32.gmra.mrb[0].mxu0 %v7274
      %v8237 = vpop.f32.mrb[0].mxu0
      %v8238 = vadd.f32 0.0, %v8237
      %v8239 = vpop.f32.mrb[0].mxu0
      %8240 = vmatprep.mubr.f32.mxu0 0.0
      %8241 = vmatmul.mubr.f32.gmra.mrb[0].mxu0 %v7277
      %v8242 = vpop.f32.mrb[0].mxu0
      %v8243 = vadd.f32 0.0, %v8242
      %v8244 = vpop.f32.mrb[0].mxu0
      %8245 = vmatprep.mubr.f32.mxu0 0.0
      %8246 = vmatmul.mubr.f32.gmra.mrb[0].mxu0 %v7280
      %v8247 = vpop.f32.mrb[0].mxu0
      %v8248 = vadd.f32 0.0, %v8247
      %v8249 = vpop.f32.mrb[0].mxu0
      %8250 = vmatprep.mubr.f32.mxu0 0.0
      %8251 = vmatmul.mubr.f32.gmra.mrb[0].mxu0 %v7283
      %v8252 = vpop.f32.mrb[0].mxu0
      %v8253 = vadd.f32 0.0, %v8252
      %v8254 = vpop.f32.mrb[0].mxu0
      %8255 = vmatprep.mubr.f32.mxu0 0.0
      %8256 = vmatmul.mubr.f32.gmra.mrb[0].mxu0 %v7286
      %v8257 = vpop.f32.mrb[0].mxu0
      %v8258 = vadd.f32 0.0, %v8257
      %v8259 = vpop.f32.mrb[0].mxu0
      %8260 = vmatprep.mubr.f32.mxu0 0.0
      %8261 = vmatmul.mubr.f32.gmra.mrb[0].mxu0 %v7289
      %v8262 = vpop.f32.mrb[0].mxu0
      %v8263 = vadd.f32 0.0, %v8262
      %v8264 = vpop.f32.mrb[0].mxu0
      %8265 = vmatprep.mubr.f32.mxu0 0.0
      %8266 = vmatmul.mubr.f32.gmra.mrb[0].mxu0 %v7292
      %v8267 = vpop.f32.mrb[0].mxu0
      %v8268 = vadd.f32 0.0, %v8267
      %v8269 = vpop.f32.mrb[0].mxu0
      %8270 = vmatprep.mubr.f32.mxu0 0.0
      %8271 = vmatmul.mubr.f32.gmra.mrb[0].mxu0 %v7295
      %v8272 = vpop.f32.mrb[0].mxu0
      %v8273 = vadd.f32 0.0, %v8272
      %v8274 = vpop.f32.mrb[0].mxu0
      %8275 = vmatprep.mubr.f32.mxu0 0.0
      %8276 = vmatmul.mubr.f32.gmra.mrb[0].mxu0 %v7298
      %v8277 = vpop.f32.mrb[0].mxu0
      %v8278 = vadd.f32 0.0, %v8277
      %v8279 = vpop.f32.mrb[0].mxu0
      %8280 = vmatprep.mubr.f32.mxu0 0.0
      %8281 = vmatmul.mubr.f32.gmra.mrb[0].mxu0 %v7301
      %v8282 = vpop.f32.mrb[0].mxu0
      %v8283 = vadd.f32 0.0, %v8282
      %v8284 = vpop.f32.mrb[0].mxu0
      %8285 = vmatprep.mubr.f32.mxu0 0.0
      %8286 = vmatmul.mubr.f32.gmra.mrb[0].mxu0 %v7304
      %v8287 = vpop.f32.mrb[0].mxu0
      %v8288 = vadd.f32 0.0, %v8287
      %v8289 = vpop.f32.mrb[0].mxu0
      %8290 = vmatprep.mubr.f32.mxu0 0.0
      %8291 = vmatmul.mubr.f32.gmra.mrb[0].mxu0 %v7307
      %v8292 = vpop.f32.mrb[0].mxu0
      %v8293 = vadd.f32 0.0, %v8292
      %v8294 = vpop.f32.mrb[0].mxu0
      %8295 = vmatprep.mubr.f32.mxu0 0.0
      %8296 = vmatmul.mubr.f32.gmra.mrb[0].mxu0 %v7310
      %v8297 = vpop.f32.mrb[0].mxu0
      %v8298 = vadd.f32 0.0, %v8297
      %v8299 = vpop.f32.mrb[0].mxu0
      %8300 = vmatprep.mubr.f32.mxu0 0.0
      %8301 = vmatmul.mubr.f32.gmra.mrb[0].mxu0 %v7313
      %v8302 = vpop.f32.mrb[0].mxu0
      %v8303 = vadd.f32 0.0, %v8302
      %v8304 = vpop.f32.mrb[0].mxu0
      %8305 = vmatprep.mubr.f32.mxu0 0.0
      %8306 = vmatmul.mubr.f32.gmra.mrb[0].mxu0 %v7316
      %v8307 = vpop.f32.mrb[0].mxu0
      %v8308 = vadd.f32 0.0, %v8307
      %v8309 = vpop.f32.mrb[0].mxu0
      %8310 = vmatprep.mubr.f32.mxu0 0.0
      %8311 = vmatmul.mubr.f32.gmra.mrb[0].mxu0 %v7319
      %v8312 = vpop.f32.mrb[0].mxu0
      %v8313 = vadd.f32 0.0, %v8312
      %v8314 = vpop.f32.mrb[0].mxu0
      %8315 = vmatprep.mubr.f32.mxu0 0.0
      %8316 = vmatmul.mubr.f32.gmra.mrb[0].mxu0 %v7322
      %v8317 = vpop.f32.mrb[0].mxu0
      %v8318 = vadd.f32 0.0, %v8317
      %v8319 = vpop.f32.mrb[0].mxu0
      %8320 = vmatprep.mubr.f32.mxu0 0.0
      %8321 = vmatmul.mubr.f32.gmra.mrb[0].mxu0 %v7325
      %v8322 = vpop.f32.mrb[0].mxu0
      %v8323 = vadd.f32 0.0, %v8322
      %v8324 = vpop.f32.mrb[0].mxu0
      %8325 = vmatprep.mubr.f32.mxu0 0.0
      %8326 = vmatmul.mubr.f32.gmra.mrb[0].mxu0 %v7328
      %v8327 = vpop.f32.mrb[0].mxu0
      %v8328 = vadd.f32 0.0, %v8327
      %v8329 = vpop.f32.mrb[0].mxu0
      %8330 = vmatprep.mubr.f32.mxu0 0.0
      %8331 = vmatmul.mubr.f32.gmra.mrb[0].mxu0 %v7331
      %v8332 = vpop.f32.mrb[0].mxu0
      %v8333 = vadd.f32 0.0, %v8332
      %v8334 = vpop.f32.mrb[0].mxu0
      %8335 = vmatprep.mubr.f32.mxu0 0.0
      %8336 = vmatmul.mubr.f32.gmra.mrb[0].mxu0 %v7334
      %v8337 = vpop.f32.mrb[0].mxu0
      %v8338 = vadd.f32 0.0, %v8337
      %v8339 = vpop.f32.mrb[0].mxu0
      %8340 = vmatprep.mubr.f32.mxu0 0.0
      %8341 = vmatmul.mubr.f32.gmra.mrb[0].mxu0 %v7337
      %v8342 = vpop.f32.mrb[0].mxu0
      %v8343 = vadd.f32 0.0, %v8342
      %v8344 = vpop.f32.mrb[0].mxu0
      %8345 = vmatprep.mubr.f32.mxu0 0.0
      %8346 = vmatmul.mubr.f32.gmra.mrb[0].mxu0 %v7340
      %v8347 = vpop.f32.mrb[0].mxu0
      %v8348 = vadd.f32 0.0, %v8347
      %v8349 = vpop.f32.mrb[0].mxu0
      %8350 = vmatprep.mubr.f32.mxu0 0.0
      %8351 = vmatmul.mubr.f32.gmra.mrb[0].mxu0 %v7343
      %v8352 = vpop.f32.mrb[0].mxu0
      %v8353 = vadd.f32 0.0, %v8352
      %v8354 = vpop.f32.mrb[0].mxu0
      %8355 = vmatprep.mubr.f32.mxu0 0.0
      %8356 = vmatmul.mubr.f32.gmra.mrb[0].mxu0 %v7346
      %v8357 = vpop.f32.mrb[0].mxu0
      %v8358 = vadd.f32 0.0, %v8357
      %v8359 = vpop.f32.mrb[0].mxu0
      %8360 = vmatprep.mubr.f32.mxu0 0.0
      %8361 = vmatmul.mubr.f32.gmra.mrb[0].mxu0 %v7349
      %v8362 = vpop.f32.mrb[0].mxu0
      %v8363 = vadd.f32 0.0, %v8362
      %v8364 = vpop.f32.mrb[0].mxu0
      %8365 = vmatprep.mubr.f32.mxu0 0.0
      %8366 = vmatmul.mubr.f32.gmra.mrb[0].mxu0 %v7352
      %v8367 = vpop.f32.mrb[0].mxu0
      %v8368 = vadd.f32 0.0, %v8367
      %v8369 = vpop.f32.mrb[0].mxu0
      %8370 = vmatprep.mubr.f32.mxu0 0.0
      %8371 = vmatmul.mubr.f32.gmra.mrb[0].mxu0 %v7355
      %v8372 = vpop.f32.mrb[0].mxu0
      %v8373 = vadd.f32 0.0, %v8372
      %v8374 = vpop.f32.mrb[0].mxu0
      %8375 = vmatprep.mubr.f32.mxu0 0.0
      %8376 = vmatmul.mubr.f32.gmra.mrb[0].mxu0 %v7358
      %v8377 = vpop.f32.mrb[0].mxu0
      %v8378 = vadd.f32 0.0, %v8377
      %v8379 = vpop.f32.mrb[0].mxu0
      %8380 = vmatprep.mubr.f32.mxu0 0.0
      %8381 = vmatmul.mubr.f32.gmra.mrb[0].mxu0 %v7361
      %v8382 = vpop.f32.mrb[0].mxu0
      %v8383 = vadd.f32 0.0, %v8382
      %v8384 = vpop.f32.mrb[0].mxu0
      %8385 = vmatprep.mubr.f32.mxu0 0.0
      %8386 = vmatmul.mubr.f32.gmra.mrb[0].mxu0 %v7364
      %v8387 = vpop.f32.mrb[0].mxu0
      %v8388 = vadd.f32 0.0, %v8387
      %v8389 = vpop.f32.mrb[0].mxu0
      %8390 = vmatprep.mubr.f32.mxu0 0.0
      %8391 = vmatmul.mubr.f32.gmra.mrb[0].mxu0 %v7367
      %v8392 = vpop.f32.mrb[0].mxu0
      %v8393 = vadd.f32 0.0, %v8392
      %v8394 = vpop.f32.mrb[0].mxu0
      %8395 = vmatprep.mubr.f32.mxu0 0.0
      %8396 = vmatmul.mubr.f32.gmra.mrb[0].mxu0 %v7370
      %v8397 = vpop.f32.mrb[0].mxu0
      %v8398 = vadd.f32 0.0, %v8397
      %v8399 = vpop.f32.mrb[0].mxu0
      %8400 = vmatprep.mubr.f32.mxu0 0.0
      %8401 = vmatmul.mubr.f32.gmra.mrb[0].mxu0 %v7373
      %v8402 = vpop.f32.mrb[0].mxu0
      %v8403 = vadd.f32 0.0, %v8402
      %v8404 = vpop.f32.mrb[0].mxu0
      %8405 = vmatprep.mubr.f32.mxu0 0.0
      %8406 = vmatmul.mubr.f32.gmra.mrb[0].mxu0 %v7376
      %v8407 = vpop.f32.mrb[0].mxu0
      %v8408 = vadd.f32 0.0, %v8407
      %v8409 = vpop.f32.mrb[0].mxu0
      %8410 = vmatprep.mubr.f32.mxu0 0.0
      %8411 = vmatmul.mubr.f32.gmra.mrb[0].mxu0 %v7379
      %v8412 = vpop.f32.mrb[0].mxu0
      %v8413 = vadd.f32 0.0, %v8412
      %v8414 = vpop.f32.mrb[0].mxu0
      %8415 = vmatprep.mubr.f32.mxu0 0.0
      %8416 = vmatmul.mubr.f32.gmra.mrb[0].mxu0 %v7382
      %v8417 = vpop.f32.mrb[0].mxu0
      %v8418 = vadd.f32 0.0, %v8417
      %v8419 = vpop.f32.mrb[0].mxu0
      %8420 = vmatprep.mubr.f32.mxu0 0.0
      %8421 = vmatmul.mubr.f32.gmra.mrb[0].mxu0 %v7385
      %v8422 = vpop.f32.mrb[0].mxu0
      %v8423 = vadd.f32 0.0, %v8422
      %v8424 = vpop.f32.mrb[0].mxu0
      %8425 = vmatprep.mubr.f32.mxu0 0.0
      %8426 = vmatmul.mubr.f32.gmra.mrb[0].mxu0 %v7388
      %v8427 = vpop.f32.mrb[0].mxu0
      %v8428 = vadd.f32 0.0, %v8427
      %v8429 = vpop.f32.mrb[0].mxu0
      %8430 = vmatprep.mubr.f32.mxu0 0.0
      %8431 = vmatmul.mubr.f32.gmra.mrb[0].mxu0 %v7391
      %v8432 = vpop.f32.mrb[0].mxu0
      %v8433 = vadd.f32 0.0, %v8432
      %v8434 = vpop.f32.mrb[0].mxu0
      %8435 = vmatprep.mubr.f32.mxu0 0.0
      %8436 = vmatmul.mubr.f32.gmra.mrb[0].mxu0 %v7394
      %v8437 = vpop.f32.mrb[0].mxu0
      %v8438 = vadd.f32 0.0, %v8437
      %v8439 = vpop.f32.mrb[0].mxu0
      %8440 = vmatprep.mubr.f32.mxu0 0.0
      %8441 = vmatmul.mubr.f32.gmra.mrb[0].mxu0 %v7397
      %v8442 = vpop.f32.mrb[0].mxu0
      %v8443 = vadd.f32 0.0, %v8442
      %v8444 = vpop.f32.mrb[0].mxu0
      %8445 = vmatprep.mubr.f32.mxu0 0.0
      %8446 = vmatmul.mubr.f32.gmra.mrb[0].mxu0 %v7400
      %v8447 = vpop.f32.mrb[0].mxu0
      %v8448 = vadd.f32 0.0, %v8447
      %v8449 = vpop.f32.mrb[0].mxu0
      %8450 = vmatprep.mubr.f32.mxu0 0.0
      %8451 = vmatmul.mubr.f32.gmra.mrb[0].mxu0 %v7403
      %v8452 = vpop.f32.mrb[0].mxu0
      %v8453 = vadd.f32 0.0, %v8452
      %v8454 = vpop.f32.mrb[0].mxu0
      %8455 = vmatprep.mubr.f32.mxu0 0.0
      %8456 = vmatmul.mubr.f32.gmra.mrb[0].mxu0 %v7406
      %v8457 = vpop.f32.mrb[0].mxu0
      %v8458 = vadd.f32 0.0, %v8457
      %v8459 = vpop.f32.mrb[0].mxu0
      %8460 = vmatprep.mubr.f32.mxu0 0.0
      %8461 = vmatmul.mubr.f32.gmra.mrb[0].mxu0 %v7409
      %v8462 = vpop.f32.mrb[0].mxu0
      %v8463 = vadd.f32 0.0, %v8462
      %v8464 = vpop.f32.mrb[0].mxu0
      %8465 = vmatprep.mubr.f32.mxu0 0.0
      %8466 = vmatmul.mubr.f32.gmra.mrb[0].mxu0 %v7412
      %v8467 = vpop.f32.mrb[0].mxu0
      %v8468 = vadd.f32 0.0, %v8467
      %v8469 = vpop.f32.mrb[0].mxu0
      %8470 = vmatprep.mubr.f32.mxu0 0.0
      %8471 = vmatmul.mubr.f32.gmra.mrb[0].mxu0 %v7415
      %v8472 = vpop.f32.mrb[0].mxu0
      %v8473 = vadd.f32 0.0, %v8472
      %v8474 = vpop.f32.mrb[0].mxu0
      %8475 = vmatprep.mubr.f32.mxu0 0.0
      %8476 = vmatmul.mubr.f32.gmra.mrb[0].mxu0 %v7418
      %v8477 = vpop.f32.mrb[0].mxu0
      %v8478 = vadd.f32 0.0, %v8477
      %v8479 = vpop.f32.mrb[0].mxu0
      %8480 = vmatprep.mubr.f32.mxu0 0.0
      %8481 = vmatmul.mubr.f32.gmra.mrb[0].mxu0 %v7421
      %v8482 = vpop.f32.mrb[0].mxu0
      %v8483 = vadd.f32 0.0, %v8482
      %v8484 = vpop.f32.mrb[0].mxu0
      %8485 = vmatprep.mubr.f32.mxu0 0.0
      %8486 = vmatmul.mubr.f32.gmra.mrb[0].mxu0 %v7424
      %v8487 = vpop.f32.mrb[0].mxu0
      %v8488 = vadd.f32 0.0, %v8487
      %v8489 = vpop.f32.mrb[0].mxu0
      %8490 = vmatprep.mubr.f32.mxu0 0.0
      %8491 = vmatmul.mubr.f32.gmra.mrb[0].mxu0 %v7427
      %v8492 = vpop.f32.mrb[0].mxu0
      %v8493 = vadd.f32 0.0, %v8492
      %v8494 = vpop.f32.mrb[0].mxu0
      %8495 = vmatprep.mubr.f32.mxu0 0.0
      %8496 = vmatmul.mubr.f32.gmra.mrb[0].mxu0 %v7430
      %v8497 = vpop.f32.mrb[0].mxu0
      %v8498 = vadd.f32 0.0, %v8497
      %v8499 = vpop.f32.mrb[0].mxu0
      %8500 = vmatprep.mubr.f32.mxu0 0.0
      %8501 = vmatmul.mubr.f32.gmra.mrb[0].mxu0 %v7433
      %v8502 = vpop.f32.mrb[0].mxu0
      %v8503 = vadd.f32 0.0, %v8502
      %v8504 = vpop.f32.mrb[0].mxu0
      %8505 = vmatprep.mubr.f32.mxu0 0.0
      %8506 = vmatmul.mubr.f32.gmra.mrb[0].mxu0 %v7436
      %v8507 = vpop.f32.mrb[0].mxu0
      %v8508 = vadd.f32 0.0, %v8507
      %v8509 = vpop.f32.mrb[0].mxu0
      %8510 = vmatprep.mubr.f32.mxu0 0.0
      %8511 = vmatmul.mubr.f32.gmra.mrb[0].mxu0 %v7439
      %v8512 = vpop.f32.mrb[0].mxu0
      %v8513 = vadd.f32 0.0, %v8512
      %v8514 = vpop.f32.mrb[0].mxu0
      %8515 = vmatprep.mubr.f32.mxu0 0.0
      %8516 = vmatmul.mubr.f32.gmra.mrb[0].mxu0 %v7442
      %v8517 = vpop.f32.mrb[0].mxu0
      %v8518 = vadd.f32 0.0, %v8517
      %v8519 = vpop.f32.mrb[0].mxu0
      %8520 = vmatprep.mubr.f32.mxu0 0.0
      %8521 = vmatmul.mubr.f32.gmra.mrb[0].mxu0 %v7445
      %v8522 = vpop.f32.mrb[0].mxu0
      %v8523 = vadd.f32 0.0, %v8522
      %v8524 = vpop.f32.mrb[0].mxu0
      %8525 = vmatprep.mubr.f32.mxu0 0.0
      %8526 = vmatmul.mubr.f32.gmra.mrb[0].mxu0 %v7448
      %v8527 = vpop.f32.mrb[0].mxu0
      %v8528 = vadd.f32 0.0, %v8527
      %v8529 = vpop.f32.mrb[0].mxu0
      %8530 = vmatprep.mubr.f32.mxu0 0.0
      %8531 = vmatmul.mubr.f32.gmra.mrb[0].mxu0 %v7451
      %v8532 = vpop.f32.mrb[0].mxu0
      %v8533 = vadd.f32 0.0, %v8532
      %v8534 = vpop.f32.mrb[0].mxu0
      %8535 = vmatprep.mubr.f32.mxu0 0.0
      %8536 = vmatmul.mubr.f32.gmra.mrb[0].mxu0 %v7454
      %v8537 = vpop.f32.mrb[0].mxu0
      %v8538 = vadd.f32 0.0, %v8537
      %v8539 = vpop.f32.mrb[0].mxu0
      %8540 = vmatprep.mubr.f32.mxu0 0.0
      %8541 = vmatmul.mubr.f32.gmra.mrb[0].mxu0 %v7457
      %v8542 = vpop.f32.mrb[0].mxu0
      %v8543 = vadd.f32 0.0, %v8542
      %v8544 = vpop.f32.mrb[0].mxu0
      %8545 = vmatprep.mubr.f32.mxu0 0.0
      %8546 = vmatmul.mubr.f32.gmra.mrb[0].mxu0 %v7460
      %v8547 = vpop.f32.mrb[0].mxu0
      %v8548 = vadd.f32 0.0, %v8547
      %v8549 = vpop.f32.mrb[0].mxu0
      %8550 = vmatprep.mubr.f32.mxu0 0.0
      %8551 = vmatmul.mubr.f32.gmra.mrb[0].mxu0 %v7463
      %v8552 = vpop.f32.mrb[0].mxu0
      %v8553 = vadd.f32 0.0, %v8552
      %v8554 = vpop.f32.mrb[0].mxu0
      %8555 = vmatprep.mubr.f32.mxu0 0.0
      %8556 = vmatmul.mubr.f32.gmra.mrb[0].mxu0 %v7466
      %v8557 = vpop.f32.mrb[0].mxu0
      %v8558 = vadd.f32 0.0, %v8557
      %v8559 = vpop.f32.mrb[0].mxu0
      %8560 = vmatprep.mubr.f32.mxu0 0.0
      %8561 = vmatmul.mubr.f32.gmra.mrb[0].mxu0 %v7469
      %v8562 = vpop.f32.mrb[0].mxu0
      %v8563 = vadd.f32 0.0, %v8562
      %v8564 = vpop.f32.mrb[0].mxu0
      %8565 = vmatprep.mubr.f32.mxu0 0.0
      %8566 = vmatmul.mubr.f32.gmra.mrb[0].mxu0 %v7472
      %v8567 = vpop.f32.mrb[0].mxu0
      %v8568 = vadd.f32 0.0, %v8567
      %v8569 = vpop.f32.mrb[0].mxu0
      %8570 = vmatprep.mubr.f32.mxu0 0.0
      %8571 = vmatmul.mubr.f32.gmra.mrb[0].mxu0 %v7475
      %v8572 = vpop.f32.mrb[0].mxu0
      %v8573 = vadd.f32 0.0, %v8572
      %v8574 = vpop.f32.mrb[0].mxu0
      %8575 = vmatprep.mubr.f32.mxu0 0.0
      %8576 = vmatmul.mubr.f32.gmra.mrb[0].mxu0 %v7478
      %v8577 = vpop.f32.mrb[0].mxu0
      %v8578 = vadd.f32 0.0, %v8577
      %v8579 = vpop.f32.mrb[0].mxu0
      %8580 = vmatprep.mubr.f32.mxu0 0.0
      %8581 = vmatmul.mubr.f32.gmra.mrb[0].mxu0 %v7481
      %v8582 = vpop.f32.mrb[0].mxu0
      %v8583 = vadd.f32 0.0, %v8582
      %v8584 = vpop.f32.mrb[0].mxu0
      %8585 = vmatprep.mubr.f32.mxu0 0.0
      %8586 = vmatmul.mubr.f32.gmra.mrb[0].mxu0 %v7484
      %v8587 = vpop.f32.mrb[0].mxu0
      %v8588 = vadd.f32 0.0, %v8587
      %v8589 = vpop.f32.mrb[0].mxu0
      %8590 = vmatprep.mubr.f32.mxu0 0.0
      %8591 = vmatmul.mubr.f32.gmra.mrb[0].mxu0 %v7487
      %v8592 = vpop.f32.mrb[0].mxu0
      %v8593 = vadd.f32 0.0, %v8592
      %v8594 = vpop.f32.mrb[0].mxu0
      %8595 = vmatprep.mubr.f32.mxu0 0.0
      %8596 = vmatmul.mubr.f32.gmra.mrb[0].mxu0 %v7490
      %v8597 = vpop.f32.mrb[0].mxu0
      %v8598 = vadd.f32 0.0, %v8597
      %v8599 = vpop.f32.mrb[0].mxu0
      %8600 = vmatprep.mubr.f32.mxu0 0.0
      %8601 = vmatmul.mubr.f32.gmra.mrb[0].mxu0 %v7493
      %v8602 = vpop.f32.mrb[0].mxu0
      %v8603 = vadd.f32 0.0, %v8602
      %v8604 = vpop.f32.mrb[0].mxu0
      %8605 = vmatprep.mubr.f32.mxu0 0.0
      %8606 = vmatmul.mubr.f32.gmra.mrb[0].mxu0 %v7496
      %v8607 = vpop.f32.mrb[0].mxu0
      %v8608 = vadd.f32 0.0, %v8607
      %v8609 = vpop.f32.mrb[0].mxu0
      %8610 = vmatprep.mubr.f32.mxu0 0.0
      %8611 = vmatmul.mubr.f32.gmra.mrb[0].mxu0 %v7499
      %v8612 = vpop.f32.mrb[0].mxu0
      %v8613 = vadd.f32 0.0, %v8612
      %v8614 = vpop.f32.mrb[0].mxu0
      %8615 = vmatprep.mubr.f32.mxu0 0.0
      %8616 = vmatmul.mubr.f32.gmra.mrb[0].mxu0 %v7502
      %v8617 = vpop.f32.mrb[0].mxu0
      %v8618 = vadd.f32 0.0, %v8617
      %v8619 = vpop.f32.mrb[0].mxu0
      %8620 = vmatprep.mubr.f32.mxu0 0.0
      %8621 = vmatmul.mubr.f32.gmra.mrb[0].mxu0 %v7505
      %v8622 = vpop.f32.mrb[0].mxu0
      %v8623 = vadd.f32 0.0, %v8622
      %v8624 = vpop.f32.mrb[0].mxu0
      %8625 = vmatprep.mubr.f32.mxu0 0.0
      %8626 = vmatmul.mubr.f32.gmra.mrb[0].mxu0 %v7508
      %v8627 = vpop.f32.mrb[0].mxu0
      %v8628 = vadd.f32 0.0, %v8627
      %v8629 = vpop.f32.mrb[0].mxu0
      %8630 = vmatprep.mubr.f32.mxu0 0.0
      %8631 = vmatmul.mubr.f32.gmra.mrb[0].mxu0 %v7511
      %v8632 = vpop.f32.mrb[0].mxu0
      %v8633 = vadd.f32 0.0, %v8632
      %v8634 = vpop.f32.mrb[0].mxu0
      %8635 = vmatprep.mubr.f32.mxu0 0.0
      %8636 = vmatmul.mubr.f32.gmra.mrb[0].mxu0 %v7514
      %v8637 = vpop.f32.mrb[0].mxu0
      %v8638 = vadd.f32 0.0, %v8637
      %v8639 = vpop.f32.mrb[0].mxu0
      %8640 = vmatprep.mubr.f32.mxu0 0.0
      %8641 = vmatmul.mubr.f32.gmra.mrb[0].mxu0 %v7517
      %v8642 = vpop.f32.mrb[0].mxu0
      %v8643 = vadd.f32 0.0, %v8642
      %v8644 = vpop.f32.mrb[0].mxu0
      %8645 = vmatprep.mubr.f32.mxu0 0.0
      %8646 = vmatmul.mubr.f32.gmra.mrb[0].mxu0 %v7520
      %v8647 = vpop.f32.mrb[0].mxu0
      %v8648 = vadd.f32 0.0, %v8647
      %v8649 = vpop.f32.mrb[0].mxu0
      %8650 = vmatprep.mubr.f32.mxu0 0.0
      %8651 = vmatmul.mubr.f32.gmra.mrb[0].mxu0 %v7523
      %v8652 = vpop.f32.mrb[0].mxu0
      %v8653 = vadd.f32 0.0, %v8652
      %v8654 = vpop.f32.mrb[0].mxu0
      %8655 = vmatprep.mubr.f32.mxu0 0.0
      %8656 = vmatmul.mubr.f32.gmra.mrb[0].mxu0 %v7526
      %v8657 = vpop.f32.mrb[0].mxu0
      %v8658 = vadd.f32 0.0, %v8657
      %v8659 = vpop.f32.mrb[0].mxu0
      %8660 = vmatprep.mubr.f32.mxu0 0.0
      %8661 = vmatmul.mubr.f32.gmra.mrb[0].mxu0 %v7529
      %v8662 = vpop.f32.mrb[0].mxu0
      %v8663 = vadd.f32 0.0, %v8662
      %v8664 = vpop.f32.mrb[0].mxu0
      %8665 = vmatprep.mubr.f32.mxu0 0.0
      %8666 = vmatmul.mubr.f32.gmra.mrb[0].mxu0 %v7532
      %v8667 = vpop.f32.mrb[0].mxu0
      %v8668 = vadd.f32 0.0, %v8667
      %v8669 = vpop.f32.mrb[0].mxu0
      %8670 = vmatprep.mubr.f32.mxu0 0.0
      %8671 = vmatmul.mubr.f32.gmra.mrb[0].mxu0 %v7535
      %v8672 = vpop.f32.mrb[0].mxu0
      %v8673 = vadd.f32 0.0, %v8672
      %v8674 = vpop.f32.mrb[0].mxu0
      %8675 = vmatprep.mubr.f32.mxu0 0.0
      %8676 = vmatmul.mubr.f32.gmra.mrb[0].mxu0 %v7538
      %v8677 = vpop.f32.mrb[0].mxu0
      %v8678 = vadd.f32 0.0, %v8677
      %v8679 = vpop.f32.mrb[0].mxu0
      %8680 = vmatprep.mubr.f32.mxu0 0.0
      %8681 = vmatmul.mubr.f32.gmra.mrb[0].mxu0 %v7541
      %v8682 = vpop.f32.mrb[0].mxu0
      %v8683 = vadd.f32 0.0, %v8682
      %v8684 = vpop.f32.mrb[0].mxu0
      %8685 = vmatprep.mubr.f32.mxu0 0.0
      %8686 = vmatmul.mubr.f32.gmra.mrb[0].mxu0 %v7544
      %v8687 = vpop.f32.mrb[0].mxu0
      %v8688 = vadd.f32 0.0, %v8687
      %v8689 = vpop.f32.mrb[0].mxu0
      %8690 = vmatprep.mubr.f32.mxu0 0.0
      %8691 = vmatmul.mubr.f32.gmra.mrb[0].mxu0 %v7547
      %v8692 = vpop.f32.mrb[0].mxu0
      %v8693 = vadd.f32 0.0, %v8692
      %v8694 = vpop.f32.mrb[0].mxu0
      %8695 = vmatprep.mubr.f32.mxu0 0.0
      %8696 = vmatmul.mubr.f32.gmra.mrb[0].mxu0 %v7550
      %v8697 = vpop.f32.mrb[0].mxu0
      %v8698 = vadd.f32 0.0, %v8697
      %v8699 = vpop.f32.mrb[0].mxu0
      %8700 = vmatprep.mubr.f32.mxu0 0.0
      %8701 = vmatmul.mubr.f32.gmra.mrb[0].mxu0 %v7553
      %v8702 = vpop.f32.mrb[0].mxu0
      %v8703 = vadd.f32 0.0, %v8702
      %v8704 = vpop.f32.mrb[0].mxu0
      %8705 = vmatprep.mubr.f32.mxu0 0.0
      %8706 = vmatmul.mubr.f32.gmra.mrb[0].mxu0 %v7556
      %v8707 = vpop.f32.mrb[0].mxu0
      %v8708 = vadd.f32 0.0, %v8707
      %v8709 = vpop.f32.mrb[0].mxu0
      %8710 = vmatprep.mubr.f32.mxu0 0.0
      %8711 = vmatmul.mubr.f32.gmra.mrb[0].mxu0 %v7559
      %v8712 = vpop.f32.mrb[0].mxu0
      %v8713 = vadd.f32 0.0, %v8712
      %v8714 = vpop.f32.mrb[0].mxu0
      %8715 = vmatprep.mubr.f32.mxu0 0.0
      %8716 = vmatmul.mubr.f32.gmra.mrb[0].mxu0 %v7562
      %v8717 = vpop.f32.mrb[0].mxu0
      %v8718 = vadd.f32 0.0, %v8717
      %v8719 = vpop.f32.mrb[0].mxu0
      %8720 = vmatprep.mubr.f32.mxu0 0.0
      %8721 = vmatmul.mubr.f32.gmra.mrb[0].mxu0 %v7565
      %v8722 = vpop.f32.mrb[0].mxu0
      %v8723 = vadd.f32 0.0, %v8722
      %v8724 = vpop.f32.mrb[0].mxu0
      %8725 = vmatprep.mubr.f32.mxu0 0.0
      %8726 = vmatmul.mubr.f32.gmra.mrb[0].mxu0 %v7568
      %v8727 = vpop.f32.mrb[0].mxu0
      %v8728 = vadd.f32 0.0, %v8727
      %v8729 = vpop.f32.mrb[0].mxu0
      %8730 = vmatprep.mubr.f32.mxu0 0.0
      %8731 = vmatmul.mubr.f32.gmra.mrb[0].mxu0 %v7571
      %v8732 = vpop.f32.mrb[0].mxu0
      %v8733 = vadd.f32 0.0, %v8732
      %v8734 = vpop.f32.mrb[0].mxu0
      %8735 = vmatprep.mubr.f32.mxu0 0.0
      %8736 = vmatmul.mubr.f32.gmra.mrb[0].mxu0 %v7574
      %v8737 = vpop.f32.mrb[0].mxu0
      %v8738 = vadd.f32 0.0, %v8737
      %v8739 = vpop.f32.mrb[0].mxu0
      %8740 = vmatprep.mubr.f32.mxu0 0.0
      %8741 = vmatmul.mubr.f32.gmra.mrb[0].mxu0 %v7577
      %v8742 = vpop.f32.mrb[0].mxu0
      %v8743 = vadd.f32 0.0, %v8742
      %v8744 = vpop.f32.mrb[0].mxu0
      %8745 = vmatprep.mubr.f32.mxu0 0.0
      %8746 = vmatmul.mubr.f32.gmra.mrb[0].mxu0 %v7580
      %v8747 = vpop.f32.mrb[0].mxu0
      %v8748 = vadd.f32 0.0, %v8747
      %v8749 = vpop.f32.mrb[0].mxu0
      %8750 = vmatprep.mubr.f32.mxu0 0.0
      %8751 = vmatmul.mubr.f32.gmra.mrb[0].mxu0 %v7583
      %v8752 = vpop.f32.mrb[0].mxu0
      %v8753 = vadd.f32 0.0, %v8752
      %v8754 = vpop.f32.mrb[0].mxu0
      %8755 = vmatprep.mubr.f32.mxu0 0.0
      %8756 = vmatmul.mubr.f32.gmra.mrb[0].mxu0 %v7586
      %v8757 = vpop.f32.mrb[0].mxu0
      %v8758 = vadd.f32 0.0, %v8757
      %v8759 = vpop.f32.mrb[0].mxu0
      %8760 = vmatprep.mubr.f32.mxu0 0.0
      %8761 = vmatmul.mubr.f32.gmra.mrb[0].mxu0 %v7589
      %v8762 = vpop.f32.mrb[0].mxu0
      %v8763 = vadd.f32 0.0, %v8762
      %v8764 = vpop.f32.mrb[0].mxu0
      %8765 = vmatprep.mubr.f32.mxu0 0.0
      %8766 = vmatmul.mubr.f32.gmra.mrb[0].mxu0 %v7592
      %v8767 = vpop.f32.mrb[0].mxu0
      %v8768 = vadd.f32 0.0, %v8767
      %v8769 = vpop.f32.mrb[0].mxu0
      %8770 = vmatprep.mubr.f32.mxu0 0.0
      %8771 = vmatmul.mubr.f32.gmra.mrb[0].mxu0 %v7595
      %v8772 = vpop.f32.mrb[0].mxu0
      %v8773 = vadd.f32 0.0, %v8772
      %v8774 = vpop.f32.mrb[0].mxu0
      %8775 = vmatprep.mubr.f32.mxu0 0.0
      %8776 = vmatmul.mubr.f32.gmra.mrb[0].mxu0 %v7598
      %v8777 = vpop.f32.mrb[0].mxu0
      %v8778 = vadd.f32 0.0, %v8777
      %v8779 = vpop.f32.mrb[0].mxu0
      %8780 = vmatprep.mubr.f32.mxu0 0.0
      %8781 = vmatmul.mubr.f32.gmra.mrb[0].mxu0 %v7601
      %v8782 = vpop.f32.mrb[0].mxu0
      %v8783 = vadd.f32 0.0, %v8782
      %v8784 = vpop.f32.mrb[0].mxu0
      %8785 = vmatprep.mubr.f32.mxu0 0.0
      %8786 = vmatmul.mubr.f32.gmra.mrb[0].mxu0 %v7604
      %v8787 = vpop.f32.mrb[0].mxu0
      %v8788 = vadd.f32 0.0, %v8787
      %v8789 = vpop.f32.mrb[0].mxu0
      %8790 = vmatprep.mubr.f32.mxu0 0.0
      %8791 = vmatmul.mubr.f32.gmra.mrb[0].mxu0 %v7607
      %v8792 = vpop.f32.mrb[0].mxu0
      %v8793 = vadd.f32 0.0, %v8792
      %v8794 = vpop.f32.mrb[0].mxu0
      %8795 = vmatprep.mubr.f32.mxu0 0.0
      %8796 = vmatmul.mubr.f32.gmra.mrb[0].mxu0 %v7610
      %v8797 = vpop.f32.mrb[0].mxu0
      %v8798 = vadd.f32 0.0, %v8797
      %v8799 = vpop.f32.mrb[0].mxu0
      %8800 = vmatprep.mubr.f32.mxu0 0.0
      %8801 = vmatmul.mubr.f32.gmra.mrb[0].mxu0 %v7613
      %v8802 = vpop.f32.mrb[0].mxu0
      %v8803 = vadd.f32 0.0, %v8802
      %v8804 = vpop.f32.mrb[0].mxu0
      %8805 = vmatprep.mubr.f32.mxu0 0.0
      %8806 = vmatmul.mubr.f32.gmra.mrb[0].mxu0 %v7616
      %v8807 = vpop.f32.mrb[0].mxu0
      %v8808 = vadd.f32 0.0, %v8807
      %v8809 = vpop.f32.mrb[0].mxu0
      %8810 = vmatprep.mubr.f32.mxu0 0.0
      %8811 = vmatmul.mubr.f32.gmra.mrb[0].mxu0 %v7619
      %v8812 = vpop.f32.mrb[0].mxu0
      %v8813 = vadd.f32 0.0, %v8812
      %v8814 = vpop.f32.mrb[0].mxu0
      %8815 = vmatprep.mubr.f32.mxu0 0.0
      %8816 = vmatmul.mubr.f32.gmra.mrb[0].mxu0 %v7622
      %v8817 = vpop.f32.mrb[0].mxu0
      %v8818 = vadd.f32 0.0, %v8817
      %v8819 = vpop.f32.mrb[0].mxu0
      %8820 = vmatprep.mubr.f32.mxu0 0.0
      %8821 = vmatmul.mubr.f32.gmra.mrb[0].mxu0 %v7625
      %v8822 = vpop.f32.mrb[0].mxu0
      %v8823 = vadd.f32 0.0, %v8822
      %v8824 = vpop.f32.mrb[0].mxu0
      %8825 = vmatprep.mubr.f32.mxu0 0.0
      %8826 = vmatmul.mubr.f32.gmra.mrb[0].mxu0 %v7628
      %v8827 = vpop.f32.mrb[0].mxu0
      %v8828 = vadd.f32 0.0, %v8827
      %v8829 = vpop.f32.mrb[0].mxu0
      %8830 = vmatprep.mubr.f32.mxu0 0.0
      %8831 = vmatmul.mubr.f32.gmra.mrb[0].mxu0 %v7631
      %v8832 = vpop.f32.mrb[0].mxu0
      %v8833 = vadd.f32 0.0, %v8832
      %v8834 = vpop.f32.mrb[0].mxu0
      %8835 = vmatprep.mubr.f32.mxu0 0.0
      %8836 = vmatmul.mubr.f32.gmra.mrb[0].mxu0 %v7634
      %v8837 = vpop.f32.mrb[0].mxu0
      %v8838 = vadd.f32 0.0, %v8837
      %v8839 = vpop.f32.mrb[0].mxu0
      %8840 = vmatprep.mubr.f32.mxu0 0.0
      %8841 = vmatmul.mubr.f32.gmra.mrb[0].mxu0 %v7637
      %v8842 = vpop.f32.mrb[0].mxu0
      %v8843 = vadd.f32 0.0, %v8842
      %v8844 = vpop.f32.mrb[0].mxu0
      %8845 = vmatprep.mubr.f32.mxu0 0.0
      %8846 = vmatmul.mubr.f32.gmra.mrb[0].mxu0 %v7640
      %v8847 = vpop.f32.mrb[0].mxu0
      %v8848 = vadd.f32 0.0, %v8847
      %v8849 = vpop.f32.mrb[0].mxu0
      %8850 = vmatprep.mubr.f32.mxu0 0.0
      %8851 = vmatmul.mubr.f32.gmra.mrb[0].mxu0 %v7643
      %v8852 = vpop.f32.mrb[0].mxu0
      %v8853 = vadd.f32 0.0, %v8852
      %v8854 = vpop.f32.mrb[0].mxu0
      %8855 = vmatprep.mubr.f32.mxu0 0.0
      %8856 = vmatmul.mubr.f32.gmra.mrb[0].mxu0 %v7646
      %v8857 = vpop.f32.mrb[0].mxu0
      %v8858 = vadd.f32 0.0, %v8857
      %v8859 = vpop.f32.mrb[0].mxu0
      %8860 = vmatprep.mubr.f32.mxu0 0.0
      %8861 = vmatmul.mubr.f32.gmra.mrb[0].mxu0 %v7649
      %v8862 = vpop.f32.mrb[0].mxu0
      %v8863 = vadd.f32 0.0, %v8862
      %v8864 = vpop.f32.mrb[0].mxu0
      %8865 = vmatprep.mubr.f32.mxu0 0.0
      %8866 = vmatmul.mubr.f32.gmra.mrb[0].mxu0 %v7652
      %v8867 = vpop.f32.mrb[0].mxu0
      %v8868 = vadd.f32 0.0, %v8867
      %v8869 = vpop.f32.mrb[0].mxu0
      %8870 = vmatprep.mubr.f32.mxu0 0.0
      %8871 = vmatmul.mubr.f32.gmra.mrb[0].mxu0 %v7655
      %v8872 = vpop.f32.mrb[0].mxu0
      %v8873 = vadd.f32 0.0, %v8872
      %v8874 = vpop.f32.mrb[0].mxu0
      %8875 = vmatprep.mubr.f32.mxu0 0.0
      %8876 = vmatmul.mubr.f32.gmra.mrb[0].mxu0 %v7658
      %v8877 = vpop.f32.mrb[0].mxu0
      %v8878 = vadd.f32 0.0, %v8877
      %v8879 = vpop.f32.mrb[0].mxu0
      %8880 = vmatprep.mubr.f32.mxu0 0.0
      %8881 = vmatmul.mubr.f32.gmra.mrb[0].mxu0 %v7661
      %v8882 = vpop.f32.mrb[0].mxu0
      %v8883 = vadd.f32 0.0, %v8882
      %v8884 = vpop.f32.mrb[0].mxu0
      %8885 = vmatprep.mubr.f32.mxu0 0.0
      %8886 = vmatmul.mubr.f32.gmra.mrb[0].mxu0 %v7664
      %v8887 = vpop.f32.mrb[0].mxu0
      %v8888 = vadd.f32 0.0, %v8887
      %v8889 = vpop.f32.mrb[0].mxu0
      %8890 = vmatprep.mubr.f32.mxu0 0.0
      %8891 = vmatmul.mubr.f32.gmra.mrb[0].mxu0 %v7667
      %v8892 = vpop.f32.mrb[0].mxu0
      %v8893 = vadd.f32 0.0, %v8892
      %v8894 = vpop.f32.mrb[0].mxu0
      %8895 = vmatprep.mubr.f32.mxu0 0.0
      %8896 = vmatmul.mubr.f32.gmra.mrb[0].mxu0 %v7670
      %v8897 = vpop.f32.mrb[0].mxu0
      %v8898 = vadd.f32 0.0, %v8897
      %v8899 = vpop.f32.mrb[0].mxu0
      %8900 = vmatprep.mubr.f32.mxu0 0.0
      %8901 = vmatmul.mubr.f32.gmra.mrb[0].mxu0 %v7673
      %v8902 = vpop.f32.mrb[0].mxu0
      %v8903 = vadd.f32 0.0, %v8902
      %v8904 = vpop.f32.mrb[0].mxu0
      %8905 = vmatprep.mubr.f32.mxu0 0.0
      %8906 = vmatmul.mubr.f32.gmra.mrb[0].mxu0 %v7676
      %v8907 = vpop.f32.mrb[0].mxu0
      %v8908 = vadd.f32 0.0, %v8907
      %v8909 = vpop.f32.mrb[0].mxu0
      %8910 = vmatprep.mubr.f32.mxu0 0.0
      %8911 = vmatmul.mubr.f32.gmra.mrb[0].mxu0 %v7679
      %v8912 = vpop.f32.mrb[0].mxu0
      %v8913 = vadd.f32 0.0, %v8912
      %v8914 = vpop.f32.mrb[0].mxu0
      %8915 = vmatprep.mubr.f32.mxu0 0.0
      %8916 = vmatmul.mubr.f32.gmra.mrb[0].mxu0 %v7682
      %v8917 = vpop.f32.mrb[0].mxu0
      %v8918 = vadd.f32 0.0, %v8917
      %v8919 = vpop.f32.mrb[0].mxu0
      %8920 = vmatprep.mubr.f32.mxu0 0.0
      %8921 = vmatmul.mubr.f32.gmra.mrb[0].mxu0 %v7685
      %v8922 = vpop.f32.mrb[0].mxu0
      %v8923 = vadd.f32 0.0, %v8922
      %v8924 = vpop.f32.mrb[0].mxu0
      %8925 = vmatprep.mubr.f32.mxu0 0.0
      %8926 = vmatmul.mubr.f32.gmra.mrb[0].mxu0 %v7688
      %v8927 = vpop.f32.mrb[0].mxu0
      %v8928 = vadd.f32 0.0, %v8927
      %v8929 = vpop.f32.mrb[0].mxu0
      %8930 = vmatprep.mubr.f32.mxu0 0.0
      %8931 = vmatmul.mubr.f32.gmra.mrb[0].mxu0 %v7691
      %v8932 = vpop.f32.mrb[0].mxu0
      %v8933 = vadd.f32 0.0, %v8932
      %v8934 = vpop.f32.mrb[0].mxu0
      %8935 = vmatprep.mubr.f32.mxu0 0.0
      %8936 = vmatmul.mubr.f32.gmra.mrb[0].mxu0 %v7694
      %v8937 = vpop.f32.mrb[0].mxu0
      %v8938 = vadd.f32 0.0, %v8937
      %v8939 = vpop.f32.mrb[0].mxu0
      %8940 = vmatprep.mubr.f32.mxu0 0.0
      %8941 = vmatmul.mubr.f32.gmra.mrb[0].mxu0 %v7697
      %v8942 = vpop.f32.mrb[0].mxu0
      %v8943 = vadd.f32 0.0, %v8942
      %v8944 = vpop.f32.mrb[0].mxu0
      %8945 = vmatprep.mubr.f32.mxu0 0.0
      %8946 = vmatmul.mubr.f32.gmra.mrb[0].mxu0 %v7700
      %v8947 = vpop.f32.mrb[0].mxu0
      %v8948 = vadd.f32 0.0, %v8947
      %v8949 = vpop.f32.mrb[0].mxu0
      %8950 = vmatprep.mubr.f32.mxu0 0.0
      %8951 = vmatmul.mubr.f32.gmra.mrb[0].mxu0 %v7703
      %v8952 = vpop.f32.mrb[0].mxu0
      %v8953 = vadd.f32 0.0, %v8952
      %v8954 = vpop.f32.mrb[0].mxu0
      %8955 = vmatprep.mubr.f32.mxu0 0.0
      %8956 = vmatmul.mubr.f32.gmra.mrb[0].mxu0 %v7706
      %v8957 = vpop.f32.mrb[0].mxu0
      %v8958 = vadd.f32 0.0, %v8957
      %v8959 = vpop.f32.mrb[0].mxu0
      %8960 = vmatprep.mubr.f32.mxu0 0.0
      %8961 = vmatmul.mubr.f32.gmra.mrb[0].mxu0 %v7709
      %v8962 = vpop.f32.mrb[0].mxu0
      %v8963 = vadd.f32 0.0, %v8962
      %v8964 = vpop.f32.mrb[0].mxu0
      %8965 = vmatprep.mubr.f32.mxu0 0.0
      %8966 = vmatmul.mubr.f32.gmra.mrb[0].mxu0 %v7712
      %v8967 = vpop.f32.mrb[0].mxu0
      %v8968 = vadd.f32 0.0, %v8967
      %v8969 = vpop.f32.mrb[0].mxu0
      %8970 = vmatprep.mubr.f32.mxu0 0.0
      %8971 = vmatmul.mubr.f32.gmra.mrb[0].mxu0 %v7715
      %v8972 = vpop.f32.mrb[0].mxu0
      %v8973 = vadd.f32 0.0, %v8972
      %v8974 = vpop.f32.mrb[0].mxu0
      %8975 = vmatprep.mubr.f32.mxu0 0.0
      %8976 = vmatmul.mubr.f32.gmra.mrb[0].mxu0 %v7718
      %v8977 = vpop.f32.mrb[0].mxu0
      %v8978 = vadd.f32 0.0, %v8977
      %v8979 = vpop.f32.mrb[0].mxu0
      %8980 = vmatprep.mubr.f32.mxu0 0.0
      %8981 = vmatmul.mubr.f32.gmra.mrb[0].mxu0 %v7721
      %v8982 = vpop.f32.mrb[0].mxu0
      %v8983 = vadd.f32 0.0, %v8982
      %v8984 = vpop.f32.mrb[0].mxu0
      %8985 = vmatprep.mubr.f32.mxu0 0.0
      %8986 = vmatmul.mubr.f32.gmra.mrb[0].mxu0 %v7724
      %v8987 = vpop.f32.mrb[0].mxu0
      %v8988 = vadd.f32 0.0, %v8987
      %v8989 = vpop.f32.mrb[0].mxu0
      %8990 = vmatprep.mubr.f32.mxu0 0.0
      %8991 = vmatmul.mubr.f32.gmra.mrb[0].mxu0 %v7727
      %v8992 = vpop.f32.mrb[0].mxu0
      %v8993 = vadd.f32 0.0, %v8992
      %v8994 = vpop.f32.mrb[0].mxu0
      %8995 = vmatprep.mubr.f32.mxu0 0.0
      %8996 = vmatmul.mubr.f32.gmra.mrb[0].mxu0 %v7730
      %v8997 = vpop.f32.mrb[0].mxu0
      %v8998 = vadd.f32 0.0, %v8997
      %v8999 = vpop.f32.mrb[0].mxu0
      %9000 = vmatprep.mubr.f32.mxu0 0.0
      %9001 = vmatmul.mubr.f32.gmra.mrb[0].mxu0 %v7733
      %v9002 = vpop.f32.mrb[0].mxu0
      %v9003 = vadd.f32 0.0, %v9002
      %v9004 = vpop.f32.mrb[0].mxu0
      %9005 = vmatprep.mubr.f32.mxu0 0.0
      %9006 = vmatmul.mubr.f32.gmra.mrb[0].mxu0 %v7736
      %v9007 = vpop.f32.mrb[0].mxu0
      %v9008 = vadd.f32 0.0, %v9007
      %v9009 = vpop.f32.mrb[0].mxu0
      %9010 = vmatprep.mubr.f32.mxu0 0.0
      %9011 = vmatmul.mubr.f32.gmra.mrb[0].mxu0 %v7739
      %v9012 = vpop.f32.mrb[0].mxu0
      %v9013 = vadd.f32 0.0, %v9012
      %v9014 = vpop.f32.mrb[0].mxu0
      %9015 = vmatprep.mubr.f32.mxu0 0.0
      %9016 = vmatmul.mubr.f32.gmra.mrb[0].mxu0 %v7742
      %v9017 = vpop.f32.mrb[0].mxu0
      %v9018 = vadd.f32 0.0, %v9017
      %v9019 = vpop.f32.mrb[0].mxu0
      %9020 = vmatprep.mubr.f32.mxu0 0.0
      %9021 = vmatmul.mubr.f32.gmra.mrb[0].mxu0 %v7745
      %v9022 = vpop.f32.mrb[0].mxu0
      %v9023 = vadd.f32 0.0, %v9022
      %v9024 = vpop.f32.mrb[0].mxu0
      %9025 = vmatprep.mubr.f32.mxu0 0.0
      %9026 = vmatmul.mubr.f32.gmra.mrb[0].mxu0 %v7748
      %v9027 = vpop.f32.mrb[0].mxu0
      %v9028 = vadd.f32 0.0, %v9027
      %v9029 = vpop.f32.mrb[0].mxu0
      %9030 = vmatprep.mubr.f32.mxu0 0.0
      %9031 = vmatmul.mubr.f32.gmra.mrb[0].mxu0 %v7751
      %v9032 = vpop.f32.mrb[0].mxu0
      %v9033 = vadd.f32 0.0, %v9032
      %v9034 = vpop.f32.mrb[0].mxu0
      %9035 = vmatprep.mubr.f32.mxu0 0.0
      %9036 = vmatmul.mubr.f32.gmra.mrb[0].mxu0 %v7754
      %v9037 = vpop.f32.mrb[0].mxu0
      %v9038 = vadd.f32 0.0, %v9037
      %v9039 = vpop.f32.mrb[0].mxu0
      %9040 = vmatprep.mubr.f32.mxu0 0.0
      %9041 = vmatmul.mubr.f32.gmra.mrb[0].mxu0 %v7757
      %v9042 = vpop.f32.mrb[0].mxu0
      %v9043 = vadd.f32 0.0, %v9042
      %v9044 = vpop.f32.mrb[0].mxu0
      %9045 = vmatprep.mubr.f32.mxu0 0.0
      %9046 = vmatmul.mubr.f32.gmra.mrb[0].mxu0 %v7760
      %v9047 = vpop.f32.mrb[0].mxu0
      %v9048 = vadd.f32 0.0, %v9047
      %v9049 = vpop.f32.mrb[0].mxu0
      %9050 = vmatprep.mubr.f32.mxu0 0.0
      %9051 = vmatmul.mubr.f32.gmra.mrb[0].mxu0 %v7763
      %v9052 = vpop.f32.mrb[0].mxu0
      %v9053 = vadd.f32 0.0, %v9052
      %v9054 = vpop.f32.mrb[0].mxu0
      %9055 = vmatprep.mubr.f32.mxu0 0.0
      %9056 = vmatmul.mubr.f32.gmra.mrb[0].mxu0 %v7766
      %v9057 = vpop.f32.mrb[0].mxu0
      %v9058 = vadd.f32 0.0, %v9057
      %v9059 = vpop.f32.mrb[0].mxu0
      %9060 = vmatprep.mubr.f32.mxu0 0.0
      %9061 = vmatmul.mubr.f32.gmra.mrb[0].mxu0 %v7769
      %v9062 = vpop.f32.mrb[0].mxu0
      %v9063 = vadd.f32 0.0, %v9062
      %v9064 = vpop.f32.mrb[0].mxu0
      %9065 = vmatprep.mubr.f32.mxu0 0.0
      %9066 = vmatmul.mubr.f32.gmra.mrb[0].mxu0 %v7772
      %v9067 = vpop.f32.mrb[0].mxu0
      %v9068 = vadd.f32 0.0, %v9067
      %v9069 = vpop.f32.mrb[0].mxu0
      %9070 = vmatprep.mubr.f32.mxu0 0.0
      %9071 = vmatmul.mubr.f32.gmra.mrb[0].mxu0 %v7775
      %v9072 = vpop.f32.mrb[0].mxu0
      %v9073 = vadd.f32 0.0, %v9072
      %v9074 = vpop.f32.mrb[0].mxu0
      %9075 = vmatprep.mubr.f32.mxu0 0.0
      %9076 = vmatmul.mubr.f32.gmra.mrb[0].mxu0 %v7778
      %v9077 = vpop.f32.mrb[0].mxu0
      %v9078 = vadd.f32 0.0, %v9077
      %v9079 = vpop.f32.mrb[0].mxu0
      %9080 = vmatprep.mubr.f32.mxu0 0.0
      %9081 = vmatmul.mubr.f32.gmra.mrb[0].mxu0 %v7781
      %v9082 = vpop.f32.mrb[0].mxu0
      %v9083 = vadd.f32 0.0, %v9082
      %v9084 = vpop.f32.mrb[0].mxu0
      %9085 = vmatprep.mubr.f32.mxu0 0.0
      %9086 = vmatmul.mubr.f32.gmra.mrb[0].mxu0 %v7784
      %v9087 = vpop.f32.mrb[0].mxu0
      %v9088 = vadd.f32 0.0, %v9087
      %v9089 = vpop.f32.mrb[0].mxu0
      %9090 = vmatprep.mubr.f32.mxu0 0.0
      %9091 = vmatmul.mubr.f32.gmra.mrb[0].mxu0 %v7787
      %v9092 = vpop.f32.mrb[0].mxu0
      %v9093 = vadd.f32 0.0, %v9092
      %v9094 = vpop.f32.mrb[0].mxu0
      %9095 = vmatprep.mubr.f32.mxu0 0.0
      %9096 = vmatmul.mubr.f32.gmra.mrb[0].mxu0 %v7790
      %v9097 = vpop.f32.mrb[0].mxu0
      %v9098 = vadd.f32 0.0, %v9097
      %v9099 = vpop.f32.mrb[0].mxu0
      %9100 = vmatprep.mubr.f32.mxu0 0.0
      %9101 = vmatmul.mubr.f32.gmra.mrb[0].mxu0 %v7793
      %v9102 = vpop.f32.mrb[0].mxu0
      %v9103 = vadd.f32 0.0, %v9102
      %v9104 = vpop.f32.mrb[0].mxu0
      %9105 = vmatprep.mubr.f32.mxu0 0.0
      %9106 = vmatmul.mubr.f32.gmra.mrb[0].mxu0 %v7796
      %v9107 = vpop.f32.mrb[0].mxu0
      %v9108 = vadd.f32 0.0, %v9107
      %v9109 = vpop.f32.mrb[0].mxu0
      %9110 = vmatprep.mubr.f32.mxu0 0.0
      %9111 = vmatmul.mubr.f32.gmra.mrb[0].mxu0 %v7799
      %v9112 = vpop.f32.mrb[0].mxu0
      %v9113 = vadd.f32 0.0, %v9112
      %v9114 = vpop.f32.mrb[0].mxu0
      %9115 = vmatprep.mubr.f32.mxu0 0.0
      %9116 = vmatmul.mubr.f32.gmra.mrb[0].mxu0 %v7802
      %v9117 = vpop.f32.mrb[0].mxu0
      %v9118 = vadd.f32 0.0, %v9117
      %v9119 = vpop.f32.mrb[0].mxu0
      %9120 = vmatprep.mubr.f32.mxu0 0.0
      %9121 = vmatmul.mubr.f32.gmra.mrb[0].mxu0 %v7805
      %v9122 = vpop.f32.mrb[0].mxu0
      %v9123 = vadd.f32 0.0, %v9122
      %v9124 = vpop.f32.mrb[0].mxu0
      %9125 = vmatprep.mubr.f32.mxu0 0.0
      %9126 = vmatmul.mubr.f32.gmra.mrb[0].mxu0 %v7808
      %v9127 = vpop.f32.mrb[0].mxu0
      %v9128 = vadd.f32 0.0, %v9127
      %v9129 = vpop.f32.mrb[0].mxu0
      %9130 = vmatprep.mubr.f32.mxu0 0.0
      %9131 = vmatmul.mubr.f32.gmra.mrb[0].mxu0 %v7811
      %v9132 = vpop.f32.mrb[0].mxu0
      %v9133 = vadd.f32 0.0, %v9132
      %v9134 = vpop.f32.mrb[0].mxu0
      %9135 = vmatprep.mubr.f32.mxu0 0.0
      %9136 = vmatmul.mubr.f32.gmra.mrb[0].mxu0 %v7814
      %v9137 = vpop.f32.mrb[0].mxu0
      %v9138 = vadd.f32 0.0, %v9137
      %v9139 = vpop.f32.mrb[0].mxu0
      %9140 = vmatprep.mubr.f32.mxu0 0.0
      %9141 = vmatmul.mubr.f32.gmra.mrb[0].mxu0 %v7817
      %v9142 = vpop.f32.mrb[0].mxu0
      %v9143 = vadd.f32 0.0, %v9142
      %v9144 = vpop.f32.mrb[0].mxu0
      %9145 = vmatprep.mubr.f32.mxu0 0.0
      %9146 = vmatmul.mubr.f32.gmra.mrb[0].mxu0 %v7820
      %v9147 = vpop.f32.mrb[0].mxu0
      %v9148 = vadd.f32 0.0, %v9147
      %v9149 = vpop.f32.mrb[0].mxu0
      %9150 = vmatprep.mubr.f32.mxu0 0.0
      %9151 = vmatmul.mubr.f32.gmra.mrb[0].mxu0 %v7823
      %v9152 = vpop.f32.mrb[0].mxu0
      %v9153 = vadd.f32 0.0, %v9152
      %v9154 = vpop.f32.mrb[0].mxu0
      %9155 = vmatprep.mubr.f32.mxu0 0.0
      %9156 = vmatmul.mubr.f32.gmra.mrb[0].mxu0 %v7826
      %v9157 = vpop.f32.mrb[0].mxu0
      %v9158 = vadd.f32 0.0, %v9157
      %v9159 = vpop.f32.mrb[0].mxu0
      %9160 = vmatprep.mubr.f32.mxu0 0.0
      %9161 = vmatmul.mubr.f32.gmra.mrb[0].mxu0 %v7829
      %v9162 = vpop.f32.mrb[0].mxu0
      %v9163 = vadd.f32 0.0, %v9162
      %v9164 = vpop.f32.mrb[0].mxu0
      %9165 = vmatprep.mubr.f32.mxu0 0.0
      %9166 = vmatmul.mubr.f32.gmra.mrb[0].mxu0 %v7832
      %v9167 = vpop.f32.mrb[0].mxu0
      %v9168 = vadd.f32 0.0, %v9167
      %v9169 = vpop.f32.mrb[0].mxu0
      %9170 = vmatprep.mubr.f32.mxu0 0.0
      %9171 = vmatmul.mubr.f32.gmra.mrb[0].mxu0 %v7835
      %v9172 = vpop.f32.mrb[0].mxu0
      %v9173 = vadd.f32 0.0, %v9172
      %v9174 = vpop.f32.mrb[0].mxu0
      %9175 = vmatprep.mubr.f32.mxu0 0.0
      %9176 = vmatmul.mubr.f32.gmra.mrb[0].mxu0 %v7838
      %v9177 = vpop.f32.mrb[0].mxu0
      %v9178 = vadd.f32 0.0, %v9177
      %v9179 = vpop.f32.mrb[0].mxu0
      %9180 = vmatprep.mubr.f32.mxu0 0.0
      %9181 = vmatmul.mubr.f32.gmra.mrb[0].mxu0 %v7841
      %v9182 = vpop.f32.mrb[0].mxu0
      %v9183 = vadd.f32 0.0, %v9182
      %v9184 = vpop.f32.mrb[0].mxu0
      %9185 = vmatprep.mubr.f32.mxu0 0.0
      %9186 = vmatmul.mubr.f32.gmra.mrb[0].mxu0 %v7844
      %v9187 = vpop.f32.mrb[0].mxu0
      %v9188 = vadd.f32 0.0, %v9187
      %v9189 = vpop.f32.mrb[0].mxu0
      %9190 = vdwg.mxu0
      %vm9191 = vcmask 523264
      %v9192 = vsel %vm9191, %v7913, -inf
      %v9193 = vrot.slane %v9192, 4
      %v9194 = vmax.f32 %v9192, %v9193
      %v9195 = vrot.slane %v9194, 2
      %v9196 = vmax.f32 %v9194, %v9195
      %v9197 = vrot.slane %v9196, 1
      %v9198 = vmax.f32 %v9196, %v9197
      %v9199 = vsel %vm9191, %v7918, -inf
      %v9200 = vrot.slane %v9199, 4
      %v9201 = vmax.f32 %v9199, %v9200
      %v9202 = vrot.slane %v9201, 2
      %v9203 = vmax.f32 %v9201, %v9202
      %v9204 = vrot.slane %v9203, 1
      %v9205 = vmax.f32 %v9203, %v9204
      %v9206 = vsel %vm9191, %v7923, -inf
      %v9207 = vrot.slane %v9206, 4
      %v9208 = vmax.f32 %v9206, %v9207
      %v9209 = vrot.slane %v9208, 2
      %v9210 = vmax.f32 %v9208, %v9209
      %v9211 = vrot.slane %v9210, 1
      %v9212 = vmax.f32 %v9210, %v9211
      %v9213 = vsel %vm9191, %v7928, -inf
      %v9214 = vrot.slane %v9213, 4
      %v9215 = vmax.f32 %v9213, %v9214
      %v9216 = vrot.slane %v9215, 2
      %v9217 = vmax.f32 %v9215, %v9216
      %v9218 = vrot.slane %v9217, 1
      %v9219 = vmax.f32 %v9217, %v9218
      %v9220 = vsel %vm9191, %v7933, -inf
      %v9221 = vrot.slane %v9220, 4
      %v9222 = vmax.f32 %v9220, %v9221
      %v9223 = vrot.slane %v9222, 2
      %v9224 = vmax.f32 %v9222, %v9223
      %v9225 = vrot.slane %v9224, 1
      %v9226 = vmax.f32 %v9224, %v9225
      %v9227 = vsel %vm9191, %v7938, -inf
      %v9228 = vrot.slane %v9227, 4
      %v9229 = vmax.f32 %v9227, %v9228
      %v9230 = vrot.slane %v9229, 2
      %v9231 = vmax.f32 %v9229, %v9230
      %v9232 = vrot.slane %v9231, 1
      %v9233 = vmax.f32 %v9231, %v9232
      %v9234 = vsel %vm9191, %v7943, -inf
      %v9235 = vrot.slane %v9234, 4
      %v9236 = vmax.f32 %v9234, %v9235
      %v9237 = vrot.slane %v9236, 2
      %v9238 = vmax.f32 %v9236, %v9237
      %v9239 = vrot.slane %v9238, 1
      %v9240 = vmax.f32 %v9238, %v9239
      %v9241 = vsel %vm9191, %v7948, -inf
      %v9242 = vrot.slane %v9241, 4
      %v9243 = vmax.f32 %v9241, %v9242
      %v9244 = vrot.slane %v9243, 2
      %v9245 = vmax.f32 %v9243, %v9244
      %v9246 = vrot.slane %v9245, 1
      %v9247 = vmax.f32 %v9245, %v9246
      %v9248 = vsel %vm9191, %v7953, -inf
      %v9249 = vrot.slane %v9248, 4
      %v9250 = vmax.f32 %v9248, %v9249
      %v9251 = vrot.slane %v9250, 2
      %v9252 = vmax.f32 %v9250, %v9251
      %v9253 = vrot.slane %v9252, 1
      %v9254 = vmax.f32 %v9252, %v9253
      %v9255 = vsel %vm9191, %v7958, -inf
      %v9256 = vrot.slane %v9255, 4
      %v9257 = vmax.f32 %v9255, %v9256
      %v9258 = vrot.slane %v9257, 2
      %v9259 = vmax.f32 %v9257, %v9258
      %v9260 = vrot.slane %v9259, 1
      %v9261 = vmax.f32 %v9259, %v9260
      %v9262 = vsel %vm9191, %v7963, -inf
      %v9263 = vrot.slane %v9262, 4
      %v9264 = vmax.f32 %v9262, %v9263
      %v9265 = vrot.slane %v9264, 2
      %v9266 = vmax.f32 %v9264, %v9265
      %v9267 = vrot.slane %v9266, 1
      %v9268 = vmax.f32 %v9266, %v9267
      %v9269 = vsel %vm9191, %v7968, -inf
      %v9270 = vrot.slane %v9269, 4
      %v9271 = vmax.f32 %v9269, %v9270
      %v9272 = vrot.slane %v9271, 2
      %v9273 = vmax.f32 %v9271, %v9272
      %v9274 = vrot.slane %v9273, 1
      %v9275 = vmax.f32 %v9273, %v9274
      %v9276 = vsel %vm9191, %v7973, -inf
      %v9277 = vrot.slane %v9276, 4
      %v9278 = vmax.f32 %v9276, %v9277
      %v9279 = vrot.slane %v9278, 2
      %v9280 = vmax.f32 %v9278, %v9279
      %v9281 = vrot.slane %v9280, 1
      %v9282 = vmax.f32 %v9280, %v9281
      %v9283 = vsel %vm9191, %v7978, -inf
      %v9284 = vrot.slane %v9283, 4
      %v9285 = vmax.f32 %v9283, %v9284
      %v9286 = vrot.slane %v9285, 2
      %v9287 = vmax.f32 %v9285, %v9286
      %v9288 = vrot.slane %v9287, 1
      %v9289 = vmax.f32 %v9287, %v9288
      %v9290 = vsel %vm9191, %v7983, -inf
      %v9291 = vrot.slane %v9290, 4
      %v9292 = vmax.f32 %v9290, %v9291
      %v9293 = vrot.slane %v9292, 2
      %v9294 = vmax.f32 %v9292, %v9293
      %v9295 = vrot.slane %v9294, 1
      %v9296 = vmax.f32 %v9294, %v9295
      %v9297 = vsel %vm9191, %v7988, -inf
      %v9298 = vrot.slane %v9297, 4
      %v9299 = vmax.f32 %v9297, %v9298
      %v9300 = vrot.slane %v9299, 2
      %v9301 = vmax.f32 %v9299, %v9300
      %v9302 = vrot.slane %v9301, 1
      %v9303 = vmax.f32 %v9301, %v9302
      %v9304 = vsel %vm9191, %v7993, -inf
      %v9305 = vrot.slane %v9304, 4
      %v9306 = vmax.f32 %v9304, %v9305
      %v9307 = vrot.slane %v9306, 2
      %v9308 = vmax.f32 %v9306, %v9307
      %v9309 = vrot.slane %v9308, 1
      %v9310 = vmax.f32 %v9308, %v9309
      %v9311 = vsel %vm9191, %v7998, -inf
      %v9312 = vrot.slane %v9311, 4
      %v9313 = vmax.f32 %v9311, %v9312
      %v9314 = vrot.slane %v9313, 2
      %v9315 = vmax.f32 %v9313, %v9314
      %v9316 = vrot.slane %v9315, 1
      %v9317 = vmax.f32 %v9315, %v9316
      %v9318 = vsel %vm9191, %v8003, -inf
      %v9319 = vrot.slane %v9318, 4
      %v9320 = vmax.f32 %v9318, %v9319
      %v9321 = vrot.slane %v9320, 2
      %v9322 = vmax.f32 %v9320, %v9321
      %v9323 = vrot.slane %v9322, 1
      %v9324 = vmax.f32 %v9322, %v9323
      %v9325 = vsel %vm9191, %v8008, -inf
      %v9326 = vrot.slane %v9325, 4
      %v9327 = vmax.f32 %v9325, %v9326
      %v9328 = vrot.slane %v9327, 2
      %v9329 = vmax.f32 %v9327, %v9328
      %v9330 = vrot.slane %v9329, 1
      %v9331 = vmax.f32 %v9329, %v9330
      %v9332 = vsel %vm9191, %v8013, -inf
      %v9333 = vrot.slane %v9332, 4
      %v9334 = vmax.f32 %v9332, %v9333
      %v9335 = vrot.slane %v9334, 2
      %v9336 = vmax.f32 %v9334, %v9335
      %v9337 = vrot.slane %v9336, 1
      %v9338 = vmax.f32 %v9336, %v9337
      %v9339 = vsel %vm9191, %v8018, -inf
      %v9340 = vrot.slane %v9339, 4
      %v9341 = vmax.f32 %v9339, %v9340
      %v9342 = vrot.slane %v9341, 2
      %v9343 = vmax.f32 %v9341, %v9342
      %v9344 = vrot.slane %v9343, 1
      %v9345 = vmax.f32 %v9343, %v9344
      %v9346 = vsel %vm9191, %v8023, -inf
      %v9347 = vrot.slane %v9346, 4
      %v9348 = vmax.f32 %v9346, %v9347
      %v9349 = vrot.slane %v9348, 2
      %v9350 = vmax.f32 %v9348, %v9349
      %v9351 = vrot.slane %v9350, 1
      %v9352 = vmax.f32 %v9350, %v9351
      %v9353 = vsel %vm9191, %v8028, -inf
      %v9354 = vrot.slane %v9353, 4
      %v9355 = vmax.f32 %v9353, %v9354
      %v9356 = vrot.slane %v9355, 2
      %v9357 = vmax.f32 %v9355, %v9356
      %v9358 = vrot.slane %v9357, 1
      %v9359 = vmax.f32 %v9357, %v9358
      %v9360 = vsel %vm9191, %v8033, -inf
      %v9361 = vrot.slane %v9360, 4
      %v9362 = vmax.f32 %v9360, %v9361
      %v9363 = vrot.slane %v9362, 2
      %v9364 = vmax.f32 %v9362, %v9363
      %v9365 = vrot.slane %v9364, 1
      %v9366 = vmax.f32 %v9364, %v9365
      %v9367 = vsel %vm9191, %v8038, -inf
      %v9368 = vrot.slane %v9367, 4
      %v9369 = vmax.f32 %v9367, %v9368
      %v9370 = vrot.slane %v9369, 2
      %v9371 = vmax.f32 %v9369, %v9370
      %v9372 = vrot.slane %v9371, 1
      %v9373 = vmax.f32 %v9371, %v9372
      %v9374 = vsel %vm9191, %v8043, -inf
      %v9375 = vrot.slane %v9374, 4
      %v9376 = vmax.f32 %v9374, %v9375
      %v9377 = vrot.slane %v9376, 2
      %v9378 = vmax.f32 %v9376, %v9377
      %v9379 = vrot.slane %v9378, 1
      %v9380 = vmax.f32 %v9378, %v9379
      %v9381 = vsel %vm9191, %v8048, -inf
      %v9382 = vrot.slane %v9381, 4
      %v9383 = vmax.f32 %v9381, %v9382
      %v9384 = vrot.slane %v9383, 2
      %v9385 = vmax.f32 %v9383, %v9384
      %v9386 = vrot.slane %v9385, 1
      %v9387 = vmax.f32 %v9385, %v9386
      %v9388 = vsel %vm9191, %v8053, -inf
      %v9389 = vrot.slane %v9388, 4
      %v9390 = vmax.f32 %v9388, %v9389
      %v9391 = vrot.slane %v9390, 2
      %v9392 = vmax.f32 %v9390, %v9391
      %v9393 = vrot.slane %v9392, 1
      %v9394 = vmax.f32 %v9392, %v9393
      %v9395 = vsel %vm9191, %v8058, -inf
      %v9396 = vrot.slane %v9395, 4
      %v9397 = vmax.f32 %v9395, %v9396
      %v9398 = vrot.slane %v9397, 2
      %v9399 = vmax.f32 %v9397, %v9398
      %v9400 = vrot.slane %v9399, 1
      %v9401 = vmax.f32 %v9399, %v9400
      %v9402 = vsel %vm9191, %v8063, -inf
      %v9403 = vrot.slane %v9402, 4
      %v9404 = vmax.f32 %v9402, %v9403
      %v9405 = vrot.slane %v9404, 2
      %v9406 = vmax.f32 %v9404, %v9405
      %v9407 = vrot.slane %v9406, 1
      %v9408 = vmax.f32 %v9406, %v9407
      %v9409 = vsel %vm9191, %v8068, -inf
      %v9410 = vrot.slane %v9409, 4
      %v9411 = vmax.f32 %v9409, %v9410
      %v9412 = vrot.slane %v9411, 2
      %v9413 = vmax.f32 %v9411, %v9412
      %v9414 = vrot.slane %v9413, 1
      %v9415 = vmax.f32 %v9413, %v9414
      %v9416 = vsel %vm9191, %v8073, -inf
      %v9417 = vrot.slane %v9416, 4
      %v9418 = vmax.f32 %v9416, %v9417
      %v9419 = vrot.slane %v9418, 2
      %v9420 = vmax.f32 %v9418, %v9419
      %v9421 = vrot.slane %v9420, 1
      %v9422 = vmax.f32 %v9420, %v9421
      %v9423 = vsel %vm9191, %v8078, -inf
      %v9424 = vrot.slane %v9423, 4
      %v9425 = vmax.f32 %v9423, %v9424
      %v9426 = vrot.slane %v9425, 2
      %v9427 = vmax.f32 %v9425, %v9426
      %v9428 = vrot.slane %v9427, 1
      %v9429 = vmax.f32 %v9427, %v9428
      %v9430 = vsel %vm9191, %v8083, -inf
      %v9431 = vrot.slane %v9430, 4
      %v9432 = vmax.f32 %v9430, %v9431
      %v9433 = vrot.slane %v9432, 2
      %v9434 = vmax.f32 %v9432, %v9433
      %v9435 = vrot.slane %v9434, 1
      %v9436 = vmax.f32 %v9434, %v9435
      %v9437 = vsel %vm9191, %v8088, -inf
      %v9438 = vrot.slane %v9437, 4
      %v9439 = vmax.f32 %v9437, %v9438
      %v9440 = vrot.slane %v9439, 2
      %v9441 = vmax.f32 %v9439, %v9440
      %v9442 = vrot.slane %v9441, 1
      %v9443 = vmax.f32 %v9441, %v9442
      %v9444 = vsel %vm9191, %v8093, -inf
      %v9445 = vrot.slane %v9444, 4
      %v9446 = vmax.f32 %v9444, %v9445
      %v9447 = vrot.slane %v9446, 2
      %v9448 = vmax.f32 %v9446, %v9447
      %v9449 = vrot.slane %v9448, 1
      %v9450 = vmax.f32 %v9448, %v9449
      %v9451 = vsel %vm9191, %v8098, -inf
      %v9452 = vrot.slane %v9451, 4
      %v9453 = vmax.f32 %v9451, %v9452
      %v9454 = vrot.slane %v9453, 2
      %v9455 = vmax.f32 %v9453, %v9454
      %v9456 = vrot.slane %v9455, 1
      %v9457 = vmax.f32 %v9455, %v9456
      %v9458 = vsel %vm9191, %v8103, -inf
      %v9459 = vrot.slane %v9458, 4
      %v9460 = vmax.f32 %v9458, %v9459
      %v9461 = vrot.slane %v9460, 2
      %v9462 = vmax.f32 %v9460, %v9461
      %v9463 = vrot.slane %v9462, 1
      %v9464 = vmax.f32 %v9462, %v9463
      %v9465 = vsel %vm9191, %v8108, -inf
      %v9466 = vrot.slane %v9465, 4
      %v9467 = vmax.f32 %v9465, %v9466
      %v9468 = vrot.slane %v9467, 2
      %v9469 = vmax.f32 %v9467, %v9468
      %v9470 = vrot.slane %v9469, 1
      %v9471 = vmax.f32 %v9469, %v9470
      %v9472 = vsel %vm9191, %v8113, -inf
      %v9473 = vrot.slane %v9472, 4
      %v9474 = vmax.f32 %v9472, %v9473
      %v9475 = vrot.slane %v9474, 2
      %v9476 = vmax.f32 %v9474, %v9475
      %v9477 = vrot.slane %v9476, 1
      %v9478 = vmax.f32 %v9476, %v9477
      %v9479 = vsel %vm9191, %v8118, -inf
      %v9480 = vrot.slane %v9479, 4
      %v9481 = vmax.f32 %v9479, %v9480
      %v9482 = vrot.slane %v9481, 2
      %v9483 = vmax.f32 %v9481, %v9482
      %v9484 = vrot.slane %v9483, 1
      %v9485 = vmax.f32 %v9483, %v9484
      %v9486 = vsel %vm9191, %v8123, -inf
      %v9487 = vrot.slane %v9486, 4
      %v9488 = vmax.f32 %v9486, %v9487
      %v9489 = vrot.slane %v9488, 2
      %v9490 = vmax.f32 %v9488, %v9489
      %v9491 = vrot.slane %v9490, 1
      %v9492 = vmax.f32 %v9490, %v9491
      %v9493 = vsel %vm9191, %v8128, -inf
      %v9494 = vrot.slane %v9493, 4
      %v9495 = vmax.f32 %v9493, %v9494
      %v9496 = vrot.slane %v9495, 2
      %v9497 = vmax.f32 %v9495, %v9496
      %v9498 = vrot.slane %v9497, 1
      %v9499 = vmax.f32 %v9497, %v9498
      %v9500 = vsel %vm9191, %v8133, -inf
      %v9501 = vrot.slane %v9500, 4
      %v9502 = vmax.f32 %v9500, %v9501
      %v9503 = vrot.slane %v9502, 2
      %v9504 = vmax.f32 %v9502, %v9503
      %v9505 = vrot.slane %v9504, 1
      %v9506 = vmax.f32 %v9504, %v9505
      %v9507 = vsel %vm9191, %v8138, -inf
      %v9508 = vrot.slane %v9507, 4
      %v9509 = vmax.f32 %v9507, %v9508
      %v9510 = vrot.slane %v9509, 2
      %v9511 = vmax.f32 %v9509, %v9510
      %v9512 = vrot.slane %v9511, 1
      %v9513 = vmax.f32 %v9511, %v9512
      %v9514 = vsel %vm9191, %v8143, -inf
      %v9515 = vrot.slane %v9514, 4
      %v9516 = vmax.f32 %v9514, %v9515
      %v9517 = vrot.slane %v9516, 2
      %v9518 = vmax.f32 %v9516, %v9517
      %v9519 = vrot.slane %v9518, 1
      %v9520 = vmax.f32 %v9518, %v9519
      %v9521 = vsel %vm9191, %v8148, -inf
      %v9522 = vrot.slane %v9521, 4
      %v9523 = vmax.f32 %v9521, %v9522
      %v9524 = vrot.slane %v9523, 2
      %v9525 = vmax.f32 %v9523, %v9524
      %v9526 = vrot.slane %v9525, 1
      %v9527 = vmax.f32 %v9525, %v9526
      %v9528 = vsel %vm9191, %v8153, -inf
      %v9529 = vrot.slane %v9528, 4
      %v9530 = vmax.f32 %v9528, %v9529
      %v9531 = vrot.slane %v9530, 2
      %v9532 = vmax.f32 %v9530, %v9531
      %v9533 = vrot.slane %v9532, 1
      %v9534 = vmax.f32 %v9532, %v9533
      %v9535 = vsel %vm9191, %v8158, -inf
      %v9536 = vrot.slane %v9535, 4
      %v9537 = vmax.f32 %v9535, %v9536
      %v9538 = vrot.slane %v9537, 2
      %v9539 = vmax.f32 %v9537, %v9538
      %v9540 = vrot.slane %v9539, 1
      %v9541 = vmax.f32 %v9539, %v9540
      %v9542 = vsel %vm9191, %v8163, -inf
      %v9543 = vrot.slane %v9542, 4
      %v9544 = vmax.f32 %v9542, %v9543
      %v9545 = vrot.slane %v9544, 2
      %v9546 = vmax.f32 %v9544, %v9545
      %v9547 = vrot.slane %v9546, 1
      %v9548 = vmax.f32 %v9546, %v9547
      %v9549 = vsel %vm9191, %v8168, -inf
      %v9550 = vrot.slane %v9549, 4
      %v9551 = vmax.f32 %v9549, %v9550
      %v9552 = vrot.slane %v9551, 2
      %v9553 = vmax.f32 %v9551, %v9552
      %v9554 = vrot.slane %v9553, 1
      %v9555 = vmax.f32 %v9553, %v9554
      %v9556 = vsel %vm9191, %v8173, -inf
      %v9557 = vrot.slane %v9556, 4
      %v9558 = vmax.f32 %v9556, %v9557
      %v9559 = vrot.slane %v9558, 2
      %v9560 = vmax.f32 %v9558, %v9559
      %v9561 = vrot.slane %v9560, 1
      %v9562 = vmax.f32 %v9560, %v9561
      %v9563 = vsel %vm9191, %v8178, -inf
      %v9564 = vrot.slane %v9563, 4
      %v9565 = vmax.f32 %v9563, %v9564
      %v9566 = vrot.slane %v9565, 2
      %v9567 = vmax.f32 %v9565, %v9566
      %v9568 = vrot.slane %v9567, 1
      %v9569 = vmax.f32 %v9567, %v9568
      %v9570 = vsel %vm9191, %v8183, -inf
      %v9571 = vrot.slane %v9570, 4
      %v9572 = vmax.f32 %v9570, %v9571
      %v9573 = vrot.slane %v9572, 2
      %v9574 = vmax.f32 %v9572, %v9573
      %v9575 = vrot.slane %v9574, 1
      %v9576 = vmax.f32 %v9574, %v9575
      %v9577 = vsel %vm9191, %v8188, -inf
      %v9578 = vrot.slane %v9577, 4
      %v9579 = vmax.f32 %v9577, %v9578
      %v9580 = vrot.slane %v9579, 2
      %v9581 = vmax.f32 %v9579, %v9580
      %v9582 = vrot.slane %v9581, 1
      %v9583 = vmax.f32 %v9581, %v9582
      %v9584 = vsel %vm9191, %v8193, -inf
      %v9585 = vrot.slane %v9584, 4
      %v9586 = vmax.f32 %v9584, %v9585
      %v9587 = vrot.slane %v9586, 2
      %v9588 = vmax.f32 %v9586, %v9587
      %v9589 = vrot.slane %v9588, 1
      %v9590 = vmax.f32 %v9588, %v9589
      %v9591 = vsel %vm9191, %v8198, -inf
      %v9592 = vrot.slane %v9591, 4
      %v9593 = vmax.f32 %v9591, %v9592
      %v9594 = vrot.slane %v9593, 2
      %v9595 = vmax.f32 %v9593, %v9594
      %v9596 = vrot.slane %v9595, 1
      %v9597 = vmax.f32 %v9595, %v9596
      %v9598 = vsel %vm9191, %v8203, -inf
      %v9599 = vrot.slane %v9598, 4
      %v9600 = vmax.f32 %v9598, %v9599
      %v9601 = vrot.slane %v9600, 2
      %v9602 = vmax.f32 %v9600, %v9601
      %v9603 = vrot.slane %v9602, 1
      %v9604 = vmax.f32 %v9602, %v9603
      %v9605 = vsel %vm9191, %v8208, -inf
      %v9606 = vrot.slane %v9605, 4
      %v9607 = vmax.f32 %v9605, %v9606
      %v9608 = vrot.slane %v9607, 2
      %v9609 = vmax.f32 %v9607, %v9608
      %v9610 = vrot.slane %v9609, 1
      %v9611 = vmax.f32 %v9609, %v9610
      %v9612 = vsel %vm9191, %v8213, -inf
      %v9613 = vrot.slane %v9612, 4
      %v9614 = vmax.f32 %v9612, %v9613
      %v9615 = vrot.slane %v9614, 2
      %v9616 = vmax.f32 %v9614, %v9615
      %v9617 = vrot.slane %v9616, 1
      %v9618 = vmax.f32 %v9616, %v9617
      %v9619 = vsel %vm9191, %v8218, -inf
      %v9620 = vrot.slane %v9619, 4
      %v9621 = vmax.f32 %v9619, %v9620
      %v9622 = vrot.slane %v9621, 2
      %v9623 = vmax.f32 %v9621, %v9622
      %v9624 = vrot.slane %v9623, 1
      %v9625 = vmax.f32 %v9623, %v9624
      %v9626 = vsel %vm9191, %v8223, -inf
      %v9627 = vrot.slane %v9626, 4
      %v9628 = vmax.f32 %v9626, %v9627
      %v9629 = vrot.slane %v9628, 2
      %v9630 = vmax.f32 %v9628, %v9629
      %v9631 = vrot.slane %v9630, 1
      %v9632 = vmax.f32 %v9630, %v9631
      %v9633 = vsel %vm9191, %v8228, -inf
      %v9634 = vrot.slane %v9633, 4
      %v9635 = vmax.f32 %v9633, %v9634
      %v9636 = vrot.slane %v9635, 2
      %v9637 = vmax.f32 %v9635, %v9636
      %v9638 = vrot.slane %v9637, 1
      %v9639 = vmax.f32 %v9637, %v9638
      %v9640 = vsel %vm9191, %v8233, -inf
      %v9641 = vrot.slane %v9640, 4
      %v9642 = vmax.f32 %v9640, %v9641
      %v9643 = vrot.slane %v9642, 2
      %v9644 = vmax.f32 %v9642, %v9643
      %v9645 = vrot.slane %v9644, 1
      %v9646 = vmax.f32 %v9644, %v9645
      %v9647 = vsel %vm9191, %v8238, -inf
      %v9648 = vrot.slane %v9647, 4
      %v9649 = vmax.f32 %v9647, %v9648
      %v9650 = vrot.slane %v9649, 2
      %v9651 = vmax.f32 %v9649, %v9650
      %v9652 = vrot.slane %v9651, 1
      %v9653 = vmax.f32 %v9651, %v9652
      %v9654 = vsel %vm9191, %v8243, -inf
      %v9655 = vrot.slane %v9654, 4
      %v9656 = vmax.f32 %v9654, %v9655
      %v9657 = vrot.slane %v9656, 2
      %v9658 = vmax.f32 %v9656, %v9657
      %v9659 = vrot.slane %v9658, 1
      %v9660 = vmax.f32 %v9658, %v9659
      %v9661 = vsel %vm9191, %v8248, -inf
      %v9662 = vrot.slane %v9661, 4
      %v9663 = vmax.f32 %v9661, %v9662
      %v9664 = vrot.slane %v9663, 2
      %v9665 = vmax.f32 %v9663, %v9664
      %v9666 = vrot.slane %v9665, 1
      %v9667 = vmax.f32 %v9665, %v9666
      %v9668 = vsel %vm9191, %v8253, -inf
      %v9669 = vrot.slane %v9668, 4
      %v9670 = vmax.f32 %v9668, %v9669
      %v9671 = vrot.slane %v9670, 2
      %v9672 = vmax.f32 %v9670, %v9671
      %v9673 = vrot.slane %v9672, 1
      %v9674 = vmax.f32 %v9672, %v9673
      %v9675 = vsel %vm9191, %v8258, -inf
      %v9676 = vrot.slane %v9675, 4
      %v9677 = vmax.f32 %v9675, %v9676
      %v9678 = vrot.slane %v9677, 2
      %v9679 = vmax.f32 %v9677, %v9678
      %v9680 = vrot.slane %v9679, 1
      %v9681 = vmax.f32 %v9679, %v9680
      %v9682 = vsel %vm9191, %v8263, -inf
      %v9683 = vrot.slane %v9682, 4
      %v9684 = vmax.f32 %v9682, %v9683
      %v9685 = vrot.slane %v9684, 2
      %v9686 = vmax.f32 %v9684, %v9685
      %v9687 = vrot.slane %v9686, 1
      %v9688 = vmax.f32 %v9686, %v9687
      %v9689 = vsel %vm9191, %v8268, -inf
      %v9690 = vrot.slane %v9689, 4
      %v9691 = vmax.f32 %v9689, %v9690
      %v9692 = vrot.slane %v9691, 2
      %v9693 = vmax.f32 %v9691, %v9692
      %v9694 = vrot.slane %v9693, 1
      %v9695 = vmax.f32 %v9693, %v9694
      %v9696 = vsel %vm9191, %v8273, -inf
      %v9697 = vrot.slane %v9696, 4
      %v9698 = vmax.f32 %v9696, %v9697
      %v9699 = vrot.slane %v9698, 2
      %v9700 = vmax.f32 %v9698, %v9699
      %v9701 = vrot.slane %v9700, 1
      %v9702 = vmax.f32 %v9700, %v9701
      %v9703 = vsel %vm9191, %v8278, -inf
      %v9704 = vrot.slane %v9703, 4
      %v9705 = vmax.f32 %v9703, %v9704
      %v9706 = vrot.slane %v9705, 2
      %v9707 = vmax.f32 %v9705, %v9706
      %v9708 = vrot.slane %v9707, 1
      %v9709 = vmax.f32 %v9707, %v9708
      %v9710 = vsel %vm9191, %v8283, -inf
      %v9711 = vrot.slane %v9710, 4
      %v9712 = vmax.f32 %v9710, %v9711
      %v9713 = vrot.slane %v9712, 2
      %v9714 = vmax.f32 %v9712, %v9713
      %v9715 = vrot.slane %v9714, 1
      %v9716 = vmax.f32 %v9714, %v9715
      %v9717 = vsel %vm9191, %v8288, -inf
      %v9718 = vrot.slane %v9717, 4
      %v9719 = vmax.f32 %v9717, %v9718
      %v9720 = vrot.slane %v9719, 2
      %v9721 = vmax.f32 %v9719, %v9720
      %v9722 = vrot.slane %v9721, 1
      %v9723 = vmax.f32 %v9721, %v9722
      %v9724 = vsel %vm9191, %v8293, -inf
      %v9725 = vrot.slane %v9724, 4
      %v9726 = vmax.f32 %v9724, %v9725
      %v9727 = vrot.slane %v9726, 2
      %v9728 = vmax.f32 %v9726, %v9727
      %v9729 = vrot.slane %v9728, 1
      %v9730 = vmax.f32 %v9728, %v9729
      %v9731 = vsel %vm9191, %v8298, -inf
      %v9732 = vrot.slane %v9731, 4
      %v9733 = vmax.f32 %v9731, %v9732
      %v9734 = vrot.slane %v9733, 2
      %v9735 = vmax.f32 %v9733, %v9734
      %v9736 = vrot.slane %v9735, 1
      %v9737 = vmax.f32 %v9735, %v9736
      %v9738 = vsel %vm9191, %v8303, -inf
      %v9739 = vrot.slane %v9738, 4
      %v9740 = vmax.f32 %v9738, %v9739
      %v9741 = vrot.slane %v9740, 2
      %v9742 = vmax.f32 %v9740, %v9741
      %v9743 = vrot.slane %v9742, 1
      %v9744 = vmax.f32 %v9742, %v9743
      %v9745 = vsel %vm9191, %v8308, -inf
      %v9746 = vrot.slane %v9745, 4
      %v9747 = vmax.f32 %v9745, %v9746
      %v9748 = vrot.slane %v9747, 2
      %v9749 = vmax.f32 %v9747, %v9748
      %v9750 = vrot.slane %v9749, 1
      %v9751 = vmax.f32 %v9749, %v9750
      %v9752 = vsel %vm9191, %v8313, -inf
      %v9753 = vrot.slane %v9752, 4
      %v9754 = vmax.f32 %v9752, %v9753
      %v9755 = vrot.slane %v9754, 2
      %v9756 = vmax.f32 %v9754, %v9755
      %v9757 = vrot.slane %v9756, 1
      %v9758 = vmax.f32 %v9756, %v9757
      %v9759 = vsel %vm9191, %v8318, -inf
      %v9760 = vrot.slane %v9759, 4
      %v9761 = vmax.f32 %v9759, %v9760
      %v9762 = vrot.slane %v9761, 2
      %v9763 = vmax.f32 %v9761, %v9762
      %v9764 = vrot.slane %v9763, 1
      %v9765 = vmax.f32 %v9763, %v9764
      %v9766 = vsel %vm9191, %v8323, -inf
      %v9767 = vrot.slane %v9766, 4
      %v9768 = vmax.f32 %v9766, %v9767
      %v9769 = vrot.slane %v9768, 2
      %v9770 = vmax.f32 %v9768, %v9769
      %v9771 = vrot.slane %v9770, 1
      %v9772 = vmax.f32 %v9770, %v9771
      %v9773 = vsel %vm9191, %v8328, -inf
      %v9774 = vrot.slane %v9773, 4
      %v9775 = vmax.f32 %v9773, %v9774
      %v9776 = vrot.slane %v9775, 2
      %v9777 = vmax.f32 %v9775, %v9776
      %v9778 = vrot.slane %v9777, 1
      %v9779 = vmax.f32 %v9777, %v9778
      %v9780 = vsel %vm9191, %v8333, -inf
      %v9781 = vrot.slane %v9780, 4
      %v9782 = vmax.f32 %v9780, %v9781
      %v9783 = vrot.slane %v9782, 2
      %v9784 = vmax.f32 %v9782, %v9783
      %v9785 = vrot.slane %v9784, 1
      %v9786 = vmax.f32 %v9784, %v9785
      %v9787 = vsel %vm9191, %v8338, -inf
      %v9788 = vrot.slane %v9787, 4
      %v9789 = vmax.f32 %v9787, %v9788
      %v9790 = vrot.slane %v9789, 2
      %v9791 = vmax.f32 %v9789, %v9790
      %v9792 = vrot.slane %v9791, 1
      %v9793 = vmax.f32 %v9791, %v9792
      %v9794 = vsel %vm9191, %v8343, -inf
      %v9795 = vrot.slane %v9794, 4
      %v9796 = vmax.f32 %v9794, %v9795
      %v9797 = vrot.slane %v9796, 2
      %v9798 = vmax.f32 %v9796, %v9797
      %v9799 = vrot.slane %v9798, 1
      %v9800 = vmax.f32 %v9798, %v9799
      %v9801 = vsel %vm9191, %v8348, -inf
      %v9802 = vrot.slane %v9801, 4
      %v9803 = vmax.f32 %v9801, %v9802
      %v9804 = vrot.slane %v9803, 2
      %v9805 = vmax.f32 %v9803, %v9804
      %v9806 = vrot.slane %v9805, 1
      %v9807 = vmax.f32 %v9805, %v9806
      %v9808 = vsel %vm9191, %v8353, -inf
      %v9809 = vrot.slane %v9808, 4
      %v9810 = vmax.f32 %v9808, %v9809
      %v9811 = vrot.slane %v9810, 2
      %v9812 = vmax.f32 %v9810, %v9811
      %v9813 = vrot.slane %v9812, 1
      %v9814 = vmax.f32 %v9812, %v9813
      %v9815 = vsel %vm9191, %v8358, -inf
      %v9816 = vrot.slane %v9815, 4
      %v9817 = vmax.f32 %v9815, %v9816
      %v9818 = vrot.slane %v9817, 2
      %v9819 = vmax.f32 %v9817, %v9818
      %v9820 = vrot.slane %v9819, 1
      %v9821 = vmax.f32 %v9819, %v9820
      %v9822 = vsel %vm9191, %v8363, -inf
      %v9823 = vrot.slane %v9822, 4
      %v9824 = vmax.f32 %v9822, %v9823
      %v9825 = vrot.slane %v9824, 2
      %v9826 = vmax.f32 %v9824, %v9825
      %v9827 = vrot.slane %v9826, 1
      %v9828 = vmax.f32 %v9826, %v9827
      %v9829 = vsel %vm9191, %v8368, -inf
      %v9830 = vrot.slane %v9829, 4
      %v9831 = vmax.f32 %v9829, %v9830
      %v9832 = vrot.slane %v9831, 2
      %v9833 = vmax.f32 %v9831, %v9832
      %v9834 = vrot.slane %v9833, 1
      %v9835 = vmax.f32 %v9833, %v9834
      %v9836 = vsel %vm9191, %v8373, -inf
      %v9837 = vrot.slane %v9836, 4
      %v9838 = vmax.f32 %v9836, %v9837
      %v9839 = vrot.slane %v9838, 2
      %v9840 = vmax.f32 %v9838, %v9839
      %v9841 = vrot.slane %v9840, 1
      %v9842 = vmax.f32 %v9840, %v9841
      %v9843 = vsel %vm9191, %v8378, -inf
      %v9844 = vrot.slane %v9843, 4
      %v9845 = vmax.f32 %v9843, %v9844
      %v9846 = vrot.slane %v9845, 2
      %v9847 = vmax.f32 %v9845, %v9846
      %v9848 = vrot.slane %v9847, 1
      %v9849 = vmax.f32 %v9847, %v9848
      %v9850 = vsel %vm9191, %v8383, -inf
      %v9851 = vrot.slane %v9850, 4
      %v9852 = vmax.f32 %v9850, %v9851
      %v9853 = vrot.slane %v9852, 2
      %v9854 = vmax.f32 %v9852, %v9853
      %v9855 = vrot.slane %v9854, 1
      %v9856 = vmax.f32 %v9854, %v9855
      %v9857 = vsel %vm9191, %v8388, -inf
      %v9858 = vrot.slane %v9857, 4
      %v9859 = vmax.f32 %v9857, %v9858
      %v9860 = vrot.slane %v9859, 2
      %v9861 = vmax.f32 %v9859, %v9860
      %v9862 = vrot.slane %v9861, 1
      %v9863 = vmax.f32 %v9861, %v9862
      %v9864 = vsel %vm9191, %v8393, -inf
      %v9865 = vrot.slane %v9864, 4
      %v9866 = vmax.f32 %v9864, %v9865
      %v9867 = vrot.slane %v9866, 2
      %v9868 = vmax.f32 %v9866, %v9867
      %v9869 = vrot.slane %v9868, 1
      %v9870 = vmax.f32 %v9868, %v9869
      %v9871 = vsel %vm9191, %v8398, -inf
      %v9872 = vrot.slane %v9871, 4
      %v9873 = vmax.f32 %v9871, %v9872
      %v9874 = vrot.slane %v9873, 2
      %v9875 = vmax.f32 %v9873, %v9874
      %v9876 = vrot.slane %v9875, 1
      %v9877 = vmax.f32 %v9875, %v9876
      %v9878 = vsel %vm9191, %v8403, -inf
      %v9879 = vrot.slane %v9878, 4
      %v9880 = vmax.f32 %v9878, %v9879
      %v9881 = vrot.slane %v9880, 2
      %v9882 = vmax.f32 %v9880, %v9881
      %v9883 = vrot.slane %v9882, 1
      %v9884 = vmax.f32 %v9882, %v9883
      %v9885 = vsel %vm9191, %v8408, -inf
      %v9886 = vrot.slane %v9885, 4
      %v9887 = vmax.f32 %v9885, %v9886
      %v9888 = vrot.slane %v9887, 2
      %v9889 = vmax.f32 %v9887, %v9888
      %v9890 = vrot.slane %v9889, 1
      %v9891 = vmax.f32 %v9889, %v9890
      %v9892 = vsel %vm9191, %v8413, -inf
      %v9893 = vrot.slane %v9892, 4
      %v9894 = vmax.f32 %v9892, %v9893
      %v9895 = vrot.slane %v9894, 2
      %v9896 = vmax.f32 %v9894, %v9895
      %v9897 = vrot.slane %v9896, 1
      %v9898 = vmax.f32 %v9896, %v9897
      %v9899 = vsel %vm9191, %v8418, -inf
      %v9900 = vrot.slane %v9899, 4
      %v9901 = vmax.f32 %v9899, %v9900
      %v9902 = vrot.slane %v9901, 2
      %v9903 = vmax.f32 %v9901, %v9902
      %v9904 = vrot.slane %v9903, 1
      %v9905 = vmax.f32 %v9903, %v9904
      %v9906 = vsel %vm9191, %v8423, -inf
      %v9907 = vrot.slane %v9906, 4
      %v9908 = vmax.f32 %v9906, %v9907
      %v9909 = vrot.slane %v9908, 2
      %v9910 = vmax.f32 %v9908, %v9909
      %v9911 = vrot.slane %v9910, 1
      %v9912 = vmax.f32 %v9910, %v9911
      %v9913 = vsel %vm9191, %v8428, -inf
      %v9914 = vrot.slane %v9913, 4
      %v9915 = vmax.f32 %v9913, %v9914
      %v9916 = vrot.slane %v9915, 2
      %v9917 = vmax.f32 %v9915, %v9916
      %v9918 = vrot.slane %v9917, 1
      %v9919 = vmax.f32 %v9917, %v9918
      %v9920 = vsel %vm9191, %v8433, -inf
      %v9921 = vrot.slane %v9920, 4
      %v9922 = vmax.f32 %v9920, %v9921
      %v9923 = vrot.slane %v9922, 2
      %v9924 = vmax.f32 %v9922, %v9923
      %v9925 = vrot.slane %v9924, 1
      %v9926 = vmax.f32 %v9924, %v9925
      %v9927 = vsel %vm9191, %v8438, -inf
      %v9928 = vrot.slane %v9927, 4
      %v9929 = vmax.f32 %v9927, %v9928
      %v9930 = vrot.slane %v9929, 2
      %v9931 = vmax.f32 %v9929, %v9930
      %v9932 = vrot.slane %v9931, 1
      %v9933 = vmax.f32 %v9931, %v9932
      %v9934 = vsel %vm9191, %v8443, -inf
      %v9935 = vrot.slane %v9934, 4
      %v9936 = vmax.f32 %v9934, %v9935
      %v9937 = vrot.slane %v9936, 2
      %v9938 = vmax.f32 %v9936, %v9937
      %v9939 = vrot.slane %v9938, 1
      %v9940 = vmax.f32 %v9938, %v9939
      %v9941 = vsel %vm9191, %v8448, -inf
      %v9942 = vrot.slane %v9941, 4
      %v9943 = vmax.f32 %v9941, %v9942
      %v9944 = vrot.slane %v9943, 2
      %v9945 = vmax.f32 %v9943, %v9944
      %v9946 = vrot.slane %v9945, 1
      %v9947 = vmax.f32 %v9945, %v9946
      %v9948 = vsel %vm9191, %v8453, -inf
      %v9949 = vrot.slane %v9948, 4
      %v9950 = vmax.f32 %v9948, %v9949
      %v9951 = vrot.slane %v9950, 2
      %v9952 = vmax.f32 %v9950, %v9951
      %v9953 = vrot.slane %v9952, 1
      %v9954 = vmax.f32 %v9952, %v9953
      %v9955 = vsel %vm9191, %v8458, -inf
      %v9956 = vrot.slane %v9955, 4
      %v9957 = vmax.f32 %v9955, %v9956
      %v9958 = vrot.slane %v9957, 2
      %v9959 = vmax.f32 %v9957, %v9958
      %v9960 = vrot.slane %v9959, 1
      %v9961 = vmax.f32 %v9959, %v9960
      %v9962 = vsel %vm9191, %v8463, -inf
      %v9963 = vrot.slane %v9962, 4
      %v9964 = vmax.f32 %v9962, %v9963
      %v9965 = vrot.slane %v9964, 2
      %v9966 = vmax.f32 %v9964, %v9965
      %v9967 = vrot.slane %v9966, 1
      %v9968 = vmax.f32 %v9966, %v9967
      %v9969 = vsel %vm9191, %v8468, -inf
      %v9970 = vrot.slane %v9969, 4
      %v9971 = vmax.f32 %v9969, %v9970
      %v9972 = vrot.slane %v9971, 2
      %v9973 = vmax.f32 %v9971, %v9972
      %v9974 = vrot.slane %v9973, 1
      %v9975 = vmax.f32 %v9973, %v9974
      %v9976 = vsel %vm9191, %v8473, -inf
      %v9977 = vrot.slane %v9976, 4
      %v9978 = vmax.f32 %v9976, %v9977
      %v9979 = vrot.slane %v9978, 2
      %v9980 = vmax.f32 %v9978, %v9979
      %v9981 = vrot.slane %v9980, 1
      %v9982 = vmax.f32 %v9980, %v9981
      %v9983 = vsel %vm9191, %v8478, -inf
      %v9984 = vrot.slane %v9983, 4
      %v9985 = vmax.f32 %v9983, %v9984
      %v9986 = vrot.slane %v9985, 2
      %v9987 = vmax.f32 %v9985, %v9986
      %v9988 = vrot.slane %v9987, 1
      %v9989 = vmax.f32 %v9987, %v9988
      %v9990 = vsel %vm9191, %v8483, -inf
      %v9991 = vrot.slane %v9990, 4
      %v9992 = vmax.f32 %v9990, %v9991
      %v9993 = vrot.slane %v9992, 2
      %v9994 = vmax.f32 %v9992, %v9993
      %v9995 = vrot.slane %v9994, 1
      %v9996 = vmax.f32 %v9994, %v9995
      %v9997 = vsel %vm9191, %v8488, -inf
      %v9998 = vrot.slane %v9997, 4
      %v9999 = vmax.f32 %v9997, %v9998
      %v10000 = vrot.slane %v9999, 2
      %v10001 = vmax.f32 %v9999, %v10000
      %v10002 = vrot.slane %v10001, 1
      %v10003 = vmax.f32 %v10001, %v10002
      %v10004 = vsel %vm9191, %v8493, -inf
      %v10005 = vrot.slane %v10004, 4
      %v10006 = vmax.f32 %v10004, %v10005
      %v10007 = vrot.slane %v10006, 2
      %v10008 = vmax.f32 %v10006, %v10007
      %v10009 = vrot.slane %v10008, 1
      %v10010 = vmax.f32 %v10008, %v10009
      %v10011 = vsel %vm9191, %v8498, -inf
      %v10012 = vrot.slane %v10011, 4
      %v10013 = vmax.f32 %v10011, %v10012
      %v10014 = vrot.slane %v10013, 2
      %v10015 = vmax.f32 %v10013, %v10014
      %v10016 = vrot.slane %v10015, 1
      %v10017 = vmax.f32 %v10015, %v10016
      %v10018 = vsel %vm9191, %v8503, -inf
      %v10019 = vrot.slane %v10018, 4
      %v10020 = vmax.f32 %v10018, %v10019
      %v10021 = vrot.slane %v10020, 2
      %v10022 = vmax.f32 %v10020, %v10021
      %v10023 = vrot.slane %v10022, 1
      %v10024 = vmax.f32 %v10022, %v10023
      %v10025 = vsel %vm9191, %v8508, -inf
      %v10026 = vrot.slane %v10025, 4
      %v10027 = vmax.f32 %v10025, %v10026
      %v10028 = vrot.slane %v10027, 2
      %v10029 = vmax.f32 %v10027, %v10028
      %v10030 = vrot.slane %v10029, 1
      %v10031 = vmax.f32 %v10029, %v10030
      %v10032 = vsel %vm9191, %v8513, -inf
      %v10033 = vrot.slane %v10032, 4
      %v10034 = vmax.f32 %v10032, %v10033
      %v10035 = vrot.slane %v10034, 2
      %v10036 = vmax.f32 %v10034, %v10035
      %v10037 = vrot.slane %v10036, 1
      %v10038 = vmax.f32 %v10036, %v10037
      %v10039 = vsel %vm9191, %v8518, -inf
      %v10040 = vrot.slane %v10039, 4
      %v10041 = vmax.f32 %v10039, %v10040
      %v10042 = vrot.slane %v10041, 2
      %v10043 = vmax.f32 %v10041, %v10042
      %v10044 = vrot.slane %v10043, 1
      %v10045 = vmax.f32 %v10043, %v10044
      %v10046 = vsel %vm9191, %v8523, -inf
      %v10047 = vrot.slane %v10046, 4
      %v10048 = vmax.f32 %v10046, %v10047
      %v10049 = vrot.slane %v10048, 2
      %v10050 = vmax.f32 %v10048, %v10049
      %v10051 = vrot.slane %v10050, 1
      %v10052 = vmax.f32 %v10050, %v10051
      %v10053 = vsel %vm9191, %v8528, -inf
      %v10054 = vrot.slane %v10053, 4
      %v10055 = vmax.f32 %v10053, %v10054
      %v10056 = vrot.slane %v10055, 2
      %v10057 = vmax.f32 %v10055, %v10056
      %v10058 = vrot.slane %v10057, 1
      %v10059 = vmax.f32 %v10057, %v10058
      %v10060 = vsel %vm9191, %v8533, -inf
      %v10061 = vrot.slane %v10060, 4
      %v10062 = vmax.f32 %v10060, %v10061
      %v10063 = vrot.slane %v10062, 2
      %v10064 = vmax.f32 %v10062, %v10063
      %v10065 = vrot.slane %v10064, 1
      %v10066 = vmax.f32 %v10064, %v10065
      %v10067 = vsel %vm9191, %v8538, -inf
      %v10068 = vrot.slane %v10067, 4
      %v10069 = vmax.f32 %v10067, %v10068
      %v10070 = vrot.slane %v10069, 2
      %v10071 = vmax.f32 %v10069, %v10070
      %v10072 = vrot.slane %v10071, 1
      %v10073 = vmax.f32 %v10071, %v10072
      %v10074 = vsel %vm9191, %v8543, -inf
      %v10075 = vrot.slane %v10074, 4
      %v10076 = vmax.f32 %v10074, %v10075
      %v10077 = vrot.slane %v10076, 2
      %v10078 = vmax.f32 %v10076, %v10077
      %v10079 = vrot.slane %v10078, 1
      %v10080 = vmax.f32 %v10078, %v10079
      %v10081 = vsel %vm9191, %v8548, -inf
      %v10082 = vrot.slane %v10081, 4
      %v10083 = vmax.f32 %v10081, %v10082
      %v10084 = vrot.slane %v10083, 2
      %v10085 = vmax.f32 %v10083, %v10084
      %v10086 = vrot.slane %v10085, 1
      %v10087 = vmax.f32 %v10085, %v10086
      %v10088 = vsel %vm9191, %v8553, -inf
      %v10089 = vrot.slane %v10088, 4
      %v10090 = vmax.f32 %v10088, %v10089
      %v10091 = vrot.slane %v10090, 2
      %v10092 = vmax.f32 %v10090, %v10091
      %v10093 = vrot.slane %v10092, 1
      %v10094 = vmax.f32 %v10092, %v10093
      %v10095 = vsel %vm9191, %v8558, -inf
      %v10096 = vrot.slane %v10095, 4
      %v10097 = vmax.f32 %v10095, %v10096
      %v10098 = vrot.slane %v10097, 2
      %v10099 = vmax.f32 %v10097, %v10098
      %v10100 = vrot.slane %v10099, 1
      %v10101 = vmax.f32 %v10099, %v10100
      %v10102 = vsel %vm9191, %v8563, -inf
      %v10103 = vrot.slane %v10102, 4
      %v10104 = vmax.f32 %v10102, %v10103
      %v10105 = vrot.slane %v10104, 2
      %v10106 = vmax.f32 %v10104, %v10105
      %v10107 = vrot.slane %v10106, 1
      %v10108 = vmax.f32 %v10106, %v10107
      %v10109 = vsel %vm9191, %v8568, -inf
      %v10110 = vrot.slane %v10109, 4
      %v10111 = vmax.f32 %v10109, %v10110
      %v10112 = vrot.slane %v10111, 2
      %v10113 = vmax.f32 %v10111, %v10112
      %v10114 = vrot.slane %v10113, 1
      %v10115 = vmax.f32 %v10113, %v10114
      %v10116 = vsel %vm9191, %v8573, -inf
      %v10117 = vrot.slane %v10116, 4
      %v10118 = vmax.f32 %v10116, %v10117
      %v10119 = vrot.slane %v10118, 2
      %v10120 = vmax.f32 %v10118, %v10119
      %v10121 = vrot.slane %v10120, 1
      %v10122 = vmax.f32 %v10120, %v10121
      %v10123 = vsel %vm9191, %v8578, -inf
      %v10124 = vrot.slane %v10123, 4
      %v10125 = vmax.f32 %v10123, %v10124
      %v10126 = vrot.slane %v10125, 2
      %v10127 = vmax.f32 %v10125, %v10126
      %v10128 = vrot.slane %v10127, 1
      %v10129 = vmax.f32 %v10127, %v10128
      %v10130 = vsel %vm9191, %v8583, -inf
      %v10131 = vrot.slane %v10130, 4
      %v10132 = vmax.f32 %v10130, %v10131
      %v10133 = vrot.slane %v10132, 2
      %v10134 = vmax.f32 %v10132, %v10133
      %v10135 = vrot.slane %v10134, 1
      %v10136 = vmax.f32 %v10134, %v10135
      %v10137 = vsel %vm9191, %v8588, -inf
      %v10138 = vrot.slane %v10137, 4
      %v10139 = vmax.f32 %v10137, %v10138
      %v10140 = vrot.slane %v10139, 2
      %v10141 = vmax.f32 %v10139, %v10140
      %v10142 = vrot.slane %v10141, 1
      %v10143 = vmax.f32 %v10141, %v10142
      %v10144 = vsel %vm9191, %v8593, -inf
      %v10145 = vrot.slane %v10144, 4
      %v10146 = vmax.f32 %v10144, %v10145
      %v10147 = vrot.slane %v10146, 2
      %v10148 = vmax.f32 %v10146, %v10147
      %v10149 = vrot.slane %v10148, 1
      %v10150 = vmax.f32 %v10148, %v10149
      %v10151 = vsel %vm9191, %v8598, -inf
      %v10152 = vrot.slane %v10151, 4
      %v10153 = vmax.f32 %v10151, %v10152
      %v10154 = vrot.slane %v10153, 2
      %v10155 = vmax.f32 %v10153, %v10154
      %v10156 = vrot.slane %v10155, 1
      %v10157 = vmax.f32 %v10155, %v10156
      %v10158 = vsel %vm9191, %v8603, -inf
      %v10159 = vrot.slane %v10158, 4
      %v10160 = vmax.f32 %v10158, %v10159
      %v10161 = vrot.slane %v10160, 2
      %v10162 = vmax.f32 %v10160, %v10161
      %v10163 = vrot.slane %v10162, 1
      %v10164 = vmax.f32 %v10162, %v10163
      %v10165 = vsel %vm9191, %v8608, -inf
      %v10166 = vrot.slane %v10165, 4
      %v10167 = vmax.f32 %v10165, %v10166
      %v10168 = vrot.slane %v10167, 2
      %v10169 = vmax.f32 %v10167, %v10168
      %v10170 = vrot.slane %v10169, 1
      %v10171 = vmax.f32 %v10169, %v10170
      %v10172 = vsel %vm9191, %v8613, -inf
      %v10173 = vrot.slane %v10172, 4
      %v10174 = vmax.f32 %v10172, %v10173
      %v10175 = vrot.slane %v10174, 2
      %v10176 = vmax.f32 %v10174, %v10175
      %v10177 = vrot.slane %v10176, 1
      %v10178 = vmax.f32 %v10176, %v10177
      %v10179 = vsel %vm9191, %v8618, -inf
      %v10180 = vrot.slane %v10179, 4
      %v10181 = vmax.f32 %v10179, %v10180
      %v10182 = vrot.slane %v10181, 2
      %v10183 = vmax.f32 %v10181, %v10182
      %v10184 = vrot.slane %v10183, 1
      %v10185 = vmax.f32 %v10183, %v10184
      %v10186 = vsel %vm9191, %v8623, -inf
      %v10187 = vrot.slane %v10186, 4
      %v10188 = vmax.f32 %v10186, %v10187
      %v10189 = vrot.slane %v10188, 2
      %v10190 = vmax.f32 %v10188, %v10189
      %v10191 = vrot.slane %v10190, 1
      %v10192 = vmax.f32 %v10190, %v10191
      %v10193 = vsel %vm9191, %v8628, -inf
      %v10194 = vrot.slane %v10193, 4
      %v10195 = vmax.f32 %v10193, %v10194
      %v10196 = vrot.slane %v10195, 2
      %v10197 = vmax.f32 %v10195, %v10196
      %v10198 = vrot.slane %v10197, 1
      %v10199 = vmax.f32 %v10197, %v10198
      %v10200 = vsel %vm9191, %v8633, -inf
      %v10201 = vrot.slane %v10200, 4
      %v10202 = vmax.f32 %v10200, %v10201
      %v10203 = vrot.slane %v10202, 2
      %v10204 = vmax.f32 %v10202, %v10203
      %v10205 = vrot.slane %v10204, 1
      %v10206 = vmax.f32 %v10204, %v10205
      %v10207 = vsel %vm9191, %v8638, -inf
      %v10208 = vrot.slane %v10207, 4
      %v10209 = vmax.f32 %v10207, %v10208
      %v10210 = vrot.slane %v10209, 2
      %v10211 = vmax.f32 %v10209, %v10210
      %v10212 = vrot.slane %v10211, 1
      %v10213 = vmax.f32 %v10211, %v10212
      %v10214 = vsel %vm9191, %v8643, -inf
      %v10215 = vrot.slane %v10214, 4
      %v10216 = vmax.f32 %v10214, %v10215
      %v10217 = vrot.slane %v10216, 2
      %v10218 = vmax.f32 %v10216, %v10217
      %v10219 = vrot.slane %v10218, 1
      %v10220 = vmax.f32 %v10218, %v10219
      %v10221 = vsel %vm9191, %v8648, -inf
      %v10222 = vrot.slane %v10221, 4
      %v10223 = vmax.f32 %v10221, %v10222
      %v10224 = vrot.slane %v10223, 2
      %v10225 = vmax.f32 %v10223, %v10224
      %v10226 = vrot.slane %v10225, 1
      %v10227 = vmax.f32 %v10225, %v10226
      %v10228 = vsel %vm9191, %v8653, -inf
      %v10229 = vrot.slane %v10228, 4
      %v10230 = vmax.f32 %v10228, %v10229
      %v10231 = vrot.slane %v10230, 2
      %v10232 = vmax.f32 %v10230, %v10231
      %v10233 = vrot.slane %v10232, 1
      %v10234 = vmax.f32 %v10232, %v10233
      %v10235 = vsel %vm9191, %v8658, -inf
      %v10236 = vrot.slane %v10235, 4
      %v10237 = vmax.f32 %v10235, %v10236
      %v10238 = vrot.slane %v10237, 2
      %v10239 = vmax.f32 %v10237, %v10238
      %v10240 = vrot.slane %v10239, 1
      %v10241 = vmax.f32 %v10239, %v10240
      %v10242 = vsel %vm9191, %v8663, -inf
      %v10243 = vrot.slane %v10242, 4
      %v10244 = vmax.f32 %v10242, %v10243
      %v10245 = vrot.slane %v10244, 2
      %v10246 = vmax.f32 %v10244, %v10245
      %v10247 = vrot.slane %v10246, 1
      %v10248 = vmax.f32 %v10246, %v10247
      %v10249 = vsel %vm9191, %v8668, -inf
      %v10250 = vrot.slane %v10249, 4
      %v10251 = vmax.f32 %v10249, %v10250
      %v10252 = vrot.slane %v10251, 2
      %v10253 = vmax.f32 %v10251, %v10252
      %v10254 = vrot.slane %v10253, 1
      %v10255 = vmax.f32 %v10253, %v10254
      %v10256 = vsel %vm9191, %v8673, -inf
      %v10257 = vrot.slane %v10256, 4
      %v10258 = vmax.f32 %v10256, %v10257
      %v10259 = vrot.slane %v10258, 2
      %v10260 = vmax.f32 %v10258, %v10259
      %v10261 = vrot.slane %v10260, 1
      %v10262 = vmax.f32 %v10260, %v10261
      %v10263 = vsel %vm9191, %v8678, -inf
      %v10264 = vrot.slane %v10263, 4
      %v10265 = vmax.f32 %v10263, %v10264
      %v10266 = vrot.slane %v10265, 2
      %v10267 = vmax.f32 %v10265, %v10266
      %v10268 = vrot.slane %v10267, 1
      %v10269 = vmax.f32 %v10267, %v10268
      %v10270 = vsel %vm9191, %v8683, -inf
      %v10271 = vrot.slane %v10270, 4
      %v10272 = vmax.f32 %v10270, %v10271
      %v10273 = vrot.slane %v10272, 2
      %v10274 = vmax.f32 %v10272, %v10273
      %v10275 = vrot.slane %v10274, 1
      %v10276 = vmax.f32 %v10274, %v10275
      %v10277 = vsel %vm9191, %v8688, -inf
      %v10278 = vrot.slane %v10277, 4
      %v10279 = vmax.f32 %v10277, %v10278
      %v10280 = vrot.slane %v10279, 2
      %v10281 = vmax.f32 %v10279, %v10280
      %v10282 = vrot.slane %v10281, 1
      %v10283 = vmax.f32 %v10281, %v10282
      %v10284 = vsel %vm9191, %v8693, -inf
      %v10285 = vrot.slane %v10284, 4
      %v10286 = vmax.f32 %v10284, %v10285
      %v10287 = vrot.slane %v10286, 2
      %v10288 = vmax.f32 %v10286, %v10287
      %v10289 = vrot.slane %v10288, 1
      %v10290 = vmax.f32 %v10288, %v10289
      %v10291 = vsel %vm9191, %v8698, -inf
      %v10292 = vrot.slane %v10291, 4
      %v10293 = vmax.f32 %v10291, %v10292
      %v10294 = vrot.slane %v10293, 2
      %v10295 = vmax.f32 %v10293, %v10294
      %v10296 = vrot.slane %v10295, 1
      %v10297 = vmax.f32 %v10295, %v10296
      %v10298 = vsel %vm9191, %v8703, -inf
      %v10299 = vrot.slane %v10298, 4
      %v10300 = vmax.f32 %v10298, %v10299
      %v10301 = vrot.slane %v10300, 2
      %v10302 = vmax.f32 %v10300, %v10301
      %v10303 = vrot.slane %v10302, 1
      %v10304 = vmax.f32 %v10302, %v10303
      %v10305 = vsel %vm9191, %v8708, -inf
      %v10306 = vrot.slane %v10305, 4
      %v10307 = vmax.f32 %v10305, %v10306
      %v10308 = vrot.slane %v10307, 2
      %v10309 = vmax.f32 %v10307, %v10308
      %v10310 = vrot.slane %v10309, 1
      %v10311 = vmax.f32 %v10309, %v10310
      %v10312 = vsel %vm9191, %v8713, -inf
      %v10313 = vrot.slane %v10312, 4
      %v10314 = vmax.f32 %v10312, %v10313
      %v10315 = vrot.slane %v10314, 2
      %v10316 = vmax.f32 %v10314, %v10315
      %v10317 = vrot.slane %v10316, 1
      %v10318 = vmax.f32 %v10316, %v10317
      %v10319 = vsel %vm9191, %v8718, -inf
      %v10320 = vrot.slane %v10319, 4
      %v10321 = vmax.f32 %v10319, %v10320
      %v10322 = vrot.slane %v10321, 2
      %v10323 = vmax.f32 %v10321, %v10322
      %v10324 = vrot.slane %v10323, 1
      %v10325 = vmax.f32 %v10323, %v10324
      %v10326 = vsel %vm9191, %v8723, -inf
      %v10327 = vrot.slane %v10326, 4
      %v10328 = vmax.f32 %v10326, %v10327
      %v10329 = vrot.slane %v10328, 2
      %v10330 = vmax.f32 %v10328, %v10329
      %v10331 = vrot.slane %v10330, 1
      %v10332 = vmax.f32 %v10330, %v10331
      %v10333 = vsel %vm9191, %v8728, -inf
      %v10334 = vrot.slane %v10333, 4
      %v10335 = vmax.f32 %v10333, %v10334
      %v10336 = vrot.slane %v10335, 2
      %v10337 = vmax.f32 %v10335, %v10336
      %v10338 = vrot.slane %v10337, 1
      %v10339 = vmax.f32 %v10337, %v10338
      %v10340 = vsel %vm9191, %v8733, -inf
      %v10341 = vrot.slane %v10340, 4
      %v10342 = vmax.f32 %v10340, %v10341
      %v10343 = vrot.slane %v10342, 2
      %v10344 = vmax.f32 %v10342, %v10343
      %v10345 = vrot.slane %v10344, 1
      %v10346 = vmax.f32 %v10344, %v10345
      %v10347 = vsel %vm9191, %v8738, -inf
      %v10348 = vrot.slane %v10347, 4
      %v10349 = vmax.f32 %v10347, %v10348
      %v10350 = vrot.slane %v10349, 2
      %v10351 = vmax.f32 %v10349, %v10350
      %v10352 = vrot.slane %v10351, 1
      %v10353 = vmax.f32 %v10351, %v10352
      %v10354 = vsel %vm9191, %v8743, -inf
      %v10355 = vrot.slane %v10354, 4
      %v10356 = vmax.f32 %v10354, %v10355
      %v10357 = vrot.slane %v10356, 2
      %v10358 = vmax.f32 %v10356, %v10357
      %v10359 = vrot.slane %v10358, 1
      %v10360 = vmax.f32 %v10358, %v10359
      %v10361 = vsel %vm9191, %v8748, -inf
      %v10362 = vrot.slane %v10361, 4
      %v10363 = vmax.f32 %v10361, %v10362
      %v10364 = vrot.slane %v10363, 2
      %v10365 = vmax.f32 %v10363, %v10364
      %v10366 = vrot.slane %v10365, 1
      %v10367 = vmax.f32 %v10365, %v10366
      %v10368 = vsel %vm9191, %v8753, -inf
      %v10369 = vrot.slane %v10368, 4
      %v10370 = vmax.f32 %v10368, %v10369
      %v10371 = vrot.slane %v10370, 2
      %v10372 = vmax.f32 %v10370, %v10371
      %v10373 = vrot.slane %v10372, 1
      %v10374 = vmax.f32 %v10372, %v10373
      %v10375 = vsel %vm9191, %v8758, -inf
      %v10376 = vrot.slane %v10375, 4
      %v10377 = vmax.f32 %v10375, %v10376
      %v10378 = vrot.slane %v10377, 2
      %v10379 = vmax.f32 %v10377, %v10378
      %v10380 = vrot.slane %v10379, 1
      %v10381 = vmax.f32 %v10379, %v10380
      %v10382 = vsel %vm9191, %v8763, -inf
      %v10383 = vrot.slane %v10382, 4
      %v10384 = vmax.f32 %v10382, %v10383
      %v10385 = vrot.slane %v10384, 2
      %v10386 = vmax.f32 %v10384, %v10385
      %v10387 = vrot.slane %v10386, 1
      %v10388 = vmax.f32 %v10386, %v10387
      %v10389 = vsel %vm9191, %v8768, -inf
      %v10390 = vrot.slane %v10389, 4
      %v10391 = vmax.f32 %v10389, %v10390
      %v10392 = vrot.slane %v10391, 2
      %v10393 = vmax.f32 %v10391, %v10392
      %v10394 = vrot.slane %v10393, 1
      %v10395 = vmax.f32 %v10393, %v10394
      %v10396 = vsel %vm9191, %v8773, -inf
      %v10397 = vrot.slane %v10396, 4
      %v10398 = vmax.f32 %v10396, %v10397
      %v10399 = vrot.slane %v10398, 2
      %v10400 = vmax.f32 %v10398, %v10399
      %v10401 = vrot.slane %v10400, 1
      %v10402 = vmax.f32 %v10400, %v10401
      %v10403 = vsel %vm9191, %v8778, -inf
      %v10404 = vrot.slane %v10403, 4
      %v10405 = vmax.f32 %v10403, %v10404
      %v10406 = vrot.slane %v10405, 2
      %v10407 = vmax.f32 %v10405, %v10406
      %v10408 = vrot.slane %v10407, 1
      %v10409 = vmax.f32 %v10407, %v10408
      %v10410 = vsel %vm9191, %v8783, -inf
      %v10411 = vrot.slane %v10410, 4
      %v10412 = vmax.f32 %v10410, %v10411
      %v10413 = vrot.slane %v10412, 2
      %v10414 = vmax.f32 %v10412, %v10413
      %v10415 = vrot.slane %v10414, 1
      %v10416 = vmax.f32 %v10414, %v10415
      %v10417 = vsel %vm9191, %v8788, -inf
      %v10418 = vrot.slane %v10417, 4
      %v10419 = vmax.f32 %v10417, %v10418
      %v10420 = vrot.slane %v10419, 2
      %v10421 = vmax.f32 %v10419, %v10420
      %v10422 = vrot.slane %v10421, 1
      %v10423 = vmax.f32 %v10421, %v10422
      %v10424 = vsel %vm9191, %v8793, -inf
      %v10425 = vrot.slane %v10424, 4
      %v10426 = vmax.f32 %v10424, %v10425
      %v10427 = vrot.slane %v10426, 2
      %v10428 = vmax.f32 %v10426, %v10427
      %v10429 = vrot.slane %v10428, 1
      %v10430 = vmax.f32 %v10428, %v10429
      %v10431 = vsel %vm9191, %v8798, -inf
      %v10432 = vrot.slane %v10431, 4
      %v10433 = vmax.f32 %v10431, %v10432
      %v10434 = vrot.slane %v10433, 2
      %v10435 = vmax.f32 %v10433, %v10434
      %v10436 = vrot.slane %v10435, 1
      %v10437 = vmax.f32 %v10435, %v10436
      %v10438 = vsel %vm9191, %v8803, -inf
      %v10439 = vrot.slane %v10438, 4
      %v10440 = vmax.f32 %v10438, %v10439
      %v10441 = vrot.slane %v10440, 2
      %v10442 = vmax.f32 %v10440, %v10441
      %v10443 = vrot.slane %v10442, 1
      %v10444 = vmax.f32 %v10442, %v10443
      %v10445 = vsel %vm9191, %v8808, -inf
      %v10446 = vrot.slane %v10445, 4
      %v10447 = vmax.f32 %v10445, %v10446
      %v10448 = vrot.slane %v10447, 2
      %v10449 = vmax.f32 %v10447, %v10448
      %v10450 = vrot.slane %v10449, 1
      %v10451 = vmax.f32 %v10449, %v10450
      %v10452 = vsel %vm9191, %v8813, -inf
      %v10453 = vrot.slane %v10452, 4
      %v10454 = vmax.f32 %v10452, %v10453
      %v10455 = vrot.slane %v10454, 2
      %v10456 = vmax.f32 %v10454, %v10455
      %v10457 = vrot.slane %v10456, 1
      %v10458 = vmax.f32 %v10456, %v10457
      %v10459 = vsel %vm9191, %v8818, -inf
      %v10460 = vrot.slane %v10459, 4
      %v10461 = vmax.f32 %v10459, %v10460
      %v10462 = vrot.slane %v10461, 2
      %v10463 = vmax.f32 %v10461, %v10462
      %v10464 = vrot.slane %v10463, 1
      %v10465 = vmax.f32 %v10463, %v10464
      %v10466 = vsel %vm9191, %v8823, -inf
      %v10467 = vrot.slane %v10466, 4
      %v10468 = vmax.f32 %v10466, %v10467
      %v10469 = vrot.slane %v10468, 2
      %v10470 = vmax.f32 %v10468, %v10469
      %v10471 = vrot.slane %v10470, 1
      %v10472 = vmax.f32 %v10470, %v10471
      %v10473 = vsel %vm9191, %v8828, -inf
      %v10474 = vrot.slane %v10473, 4
      %v10475 = vmax.f32 %v10473, %v10474
      %v10476 = vrot.slane %v10475, 2
      %v10477 = vmax.f32 %v10475, %v10476
      %v10478 = vrot.slane %v10477, 1
      %v10479 = vmax.f32 %v10477, %v10478
      %v10480 = vsel %vm9191, %v8833, -inf
      %v10481 = vrot.slane %v10480, 4
      %v10482 = vmax.f32 %v10480, %v10481
      %v10483 = vrot.slane %v10482, 2
      %v10484 = vmax.f32 %v10482, %v10483
      %v10485 = vrot.slane %v10484, 1
      %v10486 = vmax.f32 %v10484, %v10485
      %v10487 = vsel %vm9191, %v8838, -inf
      %v10488 = vrot.slane %v10487, 4
      %v10489 = vmax.f32 %v10487, %v10488
      %v10490 = vrot.slane %v10489, 2
      %v10491 = vmax.f32 %v10489, %v10490
      %v10492 = vrot.slane %v10491, 1
      %v10493 = vmax.f32 %v10491, %v10492
      %v10494 = vsel %vm9191, %v8843, -inf
      %v10495 = vrot.slane %v10494, 4
      %v10496 = vmax.f32 %v10494, %v10495
      %v10497 = vrot.slane %v10496, 2
      %v10498 = vmax.f32 %v10496, %v10497
      %v10499 = vrot.slane %v10498, 1
      %v10500 = vmax.f32 %v10498, %v10499
      %v10501 = vsel %vm9191, %v8848, -inf
      %v10502 = vrot.slane %v10501, 4
      %v10503 = vmax.f32 %v10501, %v10502
      %v10504 = vrot.slane %v10503, 2
      %v10505 = vmax.f32 %v10503, %v10504
      %v10506 = vrot.slane %v10505, 1
      %v10507 = vmax.f32 %v10505, %v10506
      %v10508 = vsel %vm9191, %v8853, -inf
      %v10509 = vrot.slane %v10508, 4
      %v10510 = vmax.f32 %v10508, %v10509
      %v10511 = vrot.slane %v10510, 2
      %v10512 = vmax.f32 %v10510, %v10511
      %v10513 = vrot.slane %v10512, 1
      %v10514 = vmax.f32 %v10512, %v10513
      %v10515 = vsel %vm9191, %v8858, -inf
      %v10516 = vrot.slane %v10515, 4
      %v10517 = vmax.f32 %v10515, %v10516
      %v10518 = vrot.slane %v10517, 2
      %v10519 = vmax.f32 %v10517, %v10518
      %v10520 = vrot.slane %v10519, 1
      %v10521 = vmax.f32 %v10519, %v10520
      %v10522 = vsel %vm9191, %v8863, -inf
      %v10523 = vrot.slane %v10522, 4
      %v10524 = vmax.f32 %v10522, %v10523
      %v10525 = vrot.slane %v10524, 2
      %v10526 = vmax.f32 %v10524, %v10525
      %v10527 = vrot.slane %v10526, 1
      %v10528 = vmax.f32 %v10526, %v10527
      %v10529 = vsel %vm9191, %v8868, -inf
      %v10530 = vrot.slane %v10529, 4
      %v10531 = vmax.f32 %v10529, %v10530
      %v10532 = vrot.slane %v10531, 2
      %v10533 = vmax.f32 %v10531, %v10532
      %v10534 = vrot.slane %v10533, 1
      %v10535 = vmax.f32 %v10533, %v10534
      %v10536 = vsel %vm9191, %v8873, -inf
      %v10537 = vrot.slane %v10536, 4
      %v10538 = vmax.f32 %v10536, %v10537
      %v10539 = vrot.slane %v10538, 2
      %v10540 = vmax.f32 %v10538, %v10539
      %v10541 = vrot.slane %v10540, 1
      %v10542 = vmax.f32 %v10540, %v10541
      %v10543 = vsel %vm9191, %v8878, -inf
      %v10544 = vrot.slane %v10543, 4
      %v10545 = vmax.f32 %v10543, %v10544
      %v10546 = vrot.slane %v10545, 2
      %v10547 = vmax.f32 %v10545, %v10546
      %v10548 = vrot.slane %v10547, 1
      %v10549 = vmax.f32 %v10547, %v10548
      %v10550 = vsel %vm9191, %v8883, -inf
      %v10551 = vrot.slane %v10550, 4
      %v10552 = vmax.f32 %v10550, %v10551
      %v10553 = vrot.slane %v10552, 2
      %v10554 = vmax.f32 %v10552, %v10553
      %v10555 = vrot.slane %v10554, 1
      %v10556 = vmax.f32 %v10554, %v10555
      %v10557 = vsel %vm9191, %v8888, -inf
      %v10558 = vrot.slane %v10557, 4
      %v10559 = vmax.f32 %v10557, %v10558
      %v10560 = vrot.slane %v10559, 2
      %v10561 = vmax.f32 %v10559, %v10560
      %v10562 = vrot.slane %v10561, 1
      %v10563 = vmax.f32 %v10561, %v10562
      %v10564 = vsel %vm9191, %v8893, -inf
      %v10565 = vrot.slane %v10564, 4
      %v10566 = vmax.f32 %v10564, %v10565
      %v10567 = vrot.slane %v10566, 2
      %v10568 = vmax.f32 %v10566, %v10567
      %v10569 = vrot.slane %v10568, 1
      %v10570 = vmax.f32 %v10568, %v10569
      %v10571 = vsel %vm9191, %v8898, -inf
      %v10572 = vrot.slane %v10571, 4
      %v10573 = vmax.f32 %v10571, %v10572
      %v10574 = vrot.slane %v10573, 2
      %v10575 = vmax.f32 %v10573, %v10574
      %v10576 = vrot.slane %v10575, 1
      %v10577 = vmax.f32 %v10575, %v10576
      %v10578 = vsel %vm9191, %v8903, -inf
      %v10579 = vrot.slane %v10578, 4
      %v10580 = vmax.f32 %v10578, %v10579
      %v10581 = vrot.slane %v10580, 2
      %v10582 = vmax.f32 %v10580, %v10581
      %v10583 = vrot.slane %v10582, 1
      %v10584 = vmax.f32 %v10582, %v10583
      %v10585 = vsel %vm9191, %v8908, -inf
      %v10586 = vrot.slane %v10585, 4
      %v10587 = vmax.f32 %v10585, %v10586
      %v10588 = vrot.slane %v10587, 2
      %v10589 = vmax.f32 %v10587, %v10588
      %v10590 = vrot.slane %v10589, 1
      %v10591 = vmax.f32 %v10589, %v10590
      %v10592 = vsel %vm9191, %v8913, -inf
      %v10593 = vrot.slane %v10592, 4
      %v10594 = vmax.f32 %v10592, %v10593
      %v10595 = vrot.slane %v10594, 2
      %v10596 = vmax.f32 %v10594, %v10595
      %v10597 = vrot.slane %v10596, 1
      %v10598 = vmax.f32 %v10596, %v10597
      %v10599 = vsel %vm9191, %v8918, -inf
      %v10600 = vrot.slane %v10599, 4
      %v10601 = vmax.f32 %v10599, %v10600
      %v10602 = vrot.slane %v10601, 2
      %v10603 = vmax.f32 %v10601, %v10602
      %v10604 = vrot.slane %v10603, 1
      %v10605 = vmax.f32 %v10603, %v10604
      %v10606 = vsel %vm9191, %v8923, -inf
      %v10607 = vrot.slane %v10606, 4
      %v10608 = vmax.f32 %v10606, %v10607
      %v10609 = vrot.slane %v10608, 2
      %v10610 = vmax.f32 %v10608, %v10609
      %v10611 = vrot.slane %v10610, 1
      %v10612 = vmax.f32 %v10610, %v10611
      %v10613 = vsel %vm9191, %v8928, -inf
      %v10614 = vrot.slane %v10613, 4
      %v10615 = vmax.f32 %v10613, %v10614
      %v10616 = vrot.slane %v10615, 2
      %v10617 = vmax.f32 %v10615, %v10616
      %v10618 = vrot.slane %v10617, 1
      %v10619 = vmax.f32 %v10617, %v10618
      %v10620 = vsel %vm9191, %v8933, -inf
      %v10621 = vrot.slane %v10620, 4
      %v10622 = vmax.f32 %v10620, %v10621
      %v10623 = vrot.slane %v10622, 2
      %v10624 = vmax.f32 %v10622, %v10623
      %v10625 = vrot.slane %v10624, 1
      %v10626 = vmax.f32 %v10624, %v10625
      %v10627 = vsel %vm9191, %v8938, -inf
      %v10628 = vrot.slane %v10627, 4
      %v10629 = vmax.f32 %v10627, %v10628
      %v10630 = vrot.slane %v10629, 2
      %v10631 = vmax.f32 %v10629, %v10630
      %v10632 = vrot.slane %v10631, 1
      %v10633 = vmax.f32 %v10631, %v10632
      %v10634 = vsel %vm9191, %v8943, -inf
      %v10635 = vrot.slane %v10634, 4
      %v10636 = vmax.f32 %v10634, %v10635
      %v10637 = vrot.slane %v10636, 2
      %v10638 = vmax.f32 %v10636, %v10637
      %v10639 = vrot.slane %v10638, 1
      %v10640 = vmax.f32 %v10638, %v10639
      %v10641 = vsel %vm9191, %v8948, -inf
      %v10642 = vrot.slane %v10641, 4
      %v10643 = vmax.f32 %v10641, %v10642
      %v10644 = vrot.slane %v10643, 2
      %v10645 = vmax.f32 %v10643, %v10644
      %v10646 = vrot.slane %v10645, 1
      %v10647 = vmax.f32 %v10645, %v10646
      %v10648 = vsel %vm9191, %v8953, -inf
      %v10649 = vrot.slane %v10648, 4
      %v10650 = vmax.f32 %v10648, %v10649
      %v10651 = vrot.slane %v10650, 2
      %v10652 = vmax.f32 %v10650, %v10651
      %v10653 = vrot.slane %v10652, 1
      %v10654 = vmax.f32 %v10652, %v10653
      %v10655 = vsel %vm9191, %v8958, -inf
      %v10656 = vrot.slane %v10655, 4
      %v10657 = vmax.f32 %v10655, %v10656
      %v10658 = vrot.slane %v10657, 2
      %v10659 = vmax.f32 %v10657, %v10658
      %v10660 = vrot.slane %v10659, 1
      %v10661 = vmax.f32 %v10659, %v10660
      %v10662 = vsel %vm9191, %v8963, -inf
      %v10663 = vrot.slane %v10662, 4
      %v10664 = vmax.f32 %v10662, %v10663
      %v10665 = vrot.slane %v10664, 2
      %v10666 = vmax.f32 %v10664, %v10665
      %v10667 = vrot.slane %v10666, 1
      %v10668 = vmax.f32 %v10666, %v10667
      %v10669 = vsel %vm9191, %v8968, -inf
      %v10670 = vrot.slane %v10669, 4
      %v10671 = vmax.f32 %v10669, %v10670
      %v10672 = vrot.slane %v10671, 2
      %v10673 = vmax.f32 %v10671, %v10672
      %v10674 = vrot.slane %v10673, 1
      %v10675 = vmax.f32 %v10673, %v10674
      %v10676 = vsel %vm9191, %v8973, -inf
      %v10677 = vrot.slane %v10676, 4
      %v10678 = vmax.f32 %v10676, %v10677
      %v10679 = vrot.slane %v10678, 2
      %v10680 = vmax.f32 %v10678, %v10679
      %v10681 = vrot.slane %v10680, 1
      %v10682 = vmax.f32 %v10680, %v10681
      %v10683 = vsel %vm9191, %v8978, -inf
      %v10684 = vrot.slane %v10683, 4
      %v10685 = vmax.f32 %v10683, %v10684
      %v10686 = vrot.slane %v10685, 2
      %v10687 = vmax.f32 %v10685, %v10686
      %v10688 = vrot.slane %v10687, 1
      %v10689 = vmax.f32 %v10687, %v10688
      %v10690 = vsel %vm9191, %v8983, -inf
      %v10691 = vrot.slane %v10690, 4
      %v10692 = vmax.f32 %v10690, %v10691
      %v10693 = vrot.slane %v10692, 2
      %v10694 = vmax.f32 %v10692, %v10693
      %v10695 = vrot.slane %v10694, 1
      %v10696 = vmax.f32 %v10694, %v10695
      %v10697 = vsel %vm9191, %v8988, -inf
      %v10698 = vrot.slane %v10697, 4
      %v10699 = vmax.f32 %v10697, %v10698
      %v10700 = vrot.slane %v10699, 2
      %v10701 = vmax.f32 %v10699, %v10700
      %v10702 = vrot.slane %v10701, 1
      %v10703 = vmax.f32 %v10701, %v10702
      %v10704 = vsel %vm9191, %v8993, -inf
      %v10705 = vrot.slane %v10704, 4
      %v10706 = vmax.f32 %v10704, %v10705
      %v10707 = vrot.slane %v10706, 2
      %v10708 = vmax.f32 %v10706, %v10707
      %v10709 = vrot.slane %v10708, 1
      %v10710 = vmax.f32 %v10708, %v10709
      %v10711 = vsel %vm9191, %v8998, -inf
      %v10712 = vrot.slane %v10711, 4
      %v10713 = vmax.f32 %v10711, %v10712
      %v10714 = vrot.slane %v10713, 2
      %v10715 = vmax.f32 %v10713, %v10714
      %v10716 = vrot.slane %v10715, 1
      %v10717 = vmax.f32 %v10715, %v10716
      %v10718 = vsel %vm9191, %v9003, -inf
      %v10719 = vrot.slane %v10718, 4
      %v10720 = vmax.f32 %v10718, %v10719
      %v10721 = vrot.slane %v10720, 2
      %v10722 = vmax.f32 %v10720, %v10721
      %v10723 = vrot.slane %v10722, 1
      %v10724 = vmax.f32 %v10722, %v10723
      %v10725 = vsel %vm9191, %v9008, -inf
      %v10726 = vrot.slane %v10725, 4
      %v10727 = vmax.f32 %v10725, %v10726
      %v10728 = vrot.slane %v10727, 2
      %v10729 = vmax.f32 %v10727, %v10728
      %v10730 = vrot.slane %v10729, 1
      %v10731 = vmax.f32 %v10729, %v10730
      %v10732 = vsel %vm9191, %v9013, -inf
      %v10733 = vrot.slane %v10732, 4
      %v10734 = vmax.f32 %v10732, %v10733
      %v10735 = vrot.slane %v10734, 2
      %v10736 = vmax.f32 %v10734, %v10735
      %v10737 = vrot.slane %v10736, 1
      %v10738 = vmax.f32 %v10736, %v10737
      %v10739 = vsel %vm9191, %v9018, -inf
      %v10740 = vrot.slane %v10739, 4
      %v10741 = vmax.f32 %v10739, %v10740
      %v10742 = vrot.slane %v10741, 2
      %v10743 = vmax.f32 %v10741, %v10742
      %v10744 = vrot.slane %v10743, 1
      %v10745 = vmax.f32 %v10743, %v10744
      %v10746 = vsel %vm9191, %v9023, -inf
      %v10747 = vrot.slane %v10746, 4
      %v10748 = vmax.f32 %v10746, %v10747
      %v10749 = vrot.slane %v10748, 2
      %v10750 = vmax.f32 %v10748, %v10749
      %v10751 = vrot.slane %v10750, 1
      %v10752 = vmax.f32 %v10750, %v10751
      %v10753 = vsel %vm9191, %v9028, -inf
      %v10754 = vrot.slane %v10753, 4
      %v10755 = vmax.f32 %v10753, %v10754
      %v10756 = vrot.slane %v10755, 2
      %v10757 = vmax.f32 %v10755, %v10756
      %v10758 = vrot.slane %v10757, 1
      %v10759 = vmax.f32 %v10757, %v10758
      %v10760 = vsel %vm9191, %v9033, -inf
      %v10761 = vrot.slane %v10760, 4
      %v10762 = vmax.f32 %v10760, %v10761
      %v10763 = vrot.slane %v10762, 2
      %v10764 = vmax.f32 %v10762, %v10763
      %v10765 = vrot.slane %v10764, 1
      %v10766 = vmax.f32 %v10764, %v10765
      %v10767 = vsel %vm9191, %v9038, -inf
      %v10768 = vrot.slane %v10767, 4
      %v10769 = vmax.f32 %v10767, %v10768
      %v10770 = vrot.slane %v10769, 2
      %v10771 = vmax.f32 %v10769, %v10770
      %v10772 = vrot.slane %v10771, 1
      %v10773 = vmax.f32 %v10771, %v10772
      %v10774 = vsel %vm9191, %v9043, -inf
      %v10775 = vrot.slane %v10774, 4
      %v10776 = vmax.f32 %v10774, %v10775
      %v10777 = vrot.slane %v10776, 2
      %v10778 = vmax.f32 %v10776, %v10777
      %v10779 = vrot.slane %v10778, 1
      %v10780 = vmax.f32 %v10778, %v10779
      %v10781 = vsel %vm9191, %v9048, -inf
      %v10782 = vrot.slane %v10781, 4
      %v10783 = vmax.f32 %v10781, %v10782
      %v10784 = vrot.slane %v10783, 2
      %v10785 = vmax.f32 %v10783, %v10784
      %v10786 = vrot.slane %v10785, 1
      %v10787 = vmax.f32 %v10785, %v10786
      %v10788 = vsel %vm9191, %v9053, -inf
      %v10789 = vrot.slane %v10788, 4
      %v10790 = vmax.f32 %v10788, %v10789
      %v10791 = vrot.slane %v10790, 2
      %v10792 = vmax.f32 %v10790, %v10791
      %v10793 = vrot.slane %v10792, 1
      %v10794 = vmax.f32 %v10792, %v10793
      %v10795 = vsel %vm9191, %v9058, -inf
      %v10796 = vrot.slane %v10795, 4
      %v10797 = vmax.f32 %v10795, %v10796
      %v10798 = vrot.slane %v10797, 2
      %v10799 = vmax.f32 %v10797, %v10798
      %v10800 = vrot.slane %v10799, 1
      %v10801 = vmax.f32 %v10799, %v10800
      %v10802 = vsel %vm9191, %v9063, -inf
      %v10803 = vrot.slane %v10802, 4
      %v10804 = vmax.f32 %v10802, %v10803
      %v10805 = vrot.slane %v10804, 2
      %v10806 = vmax.f32 %v10804, %v10805
      %v10807 = vrot.slane %v10806, 1
      %v10808 = vmax.f32 %v10806, %v10807
      %v10809 = vsel %vm9191, %v9068, -inf
      %v10810 = vrot.slane %v10809, 4
      %v10811 = vmax.f32 %v10809, %v10810
      %v10812 = vrot.slane %v10811, 2
      %v10813 = vmax.f32 %v10811, %v10812
      %v10814 = vrot.slane %v10813, 1
      %v10815 = vmax.f32 %v10813, %v10814
      %v10816 = vsel %vm9191, %v9073, -inf
      %v10817 = vrot.slane %v10816, 4
      %v10818 = vmax.f32 %v10816, %v10817
      %v10819 = vrot.slane %v10818, 2
      %v10820 = vmax.f32 %v10818, %v10819
      %v10821 = vrot.slane %v10820, 1
      %v10822 = vmax.f32 %v10820, %v10821
      %v10823 = vsel %vm9191, %v9078, -inf
      %v10824 = vrot.slane %v10823, 4
      %v10825 = vmax.f32 %v10823, %v10824
      %v10826 = vrot.slane %v10825, 2
      %v10827 = vmax.f32 %v10825, %v10826
      %v10828 = vrot.slane %v10827, 1
      %v10829 = vmax.f32 %v10827, %v10828
      %v10830 = vsel %vm9191, %v9083, -inf
      %v10831 = vrot.slane %v10830, 4
      %v10832 = vmax.f32 %v10830, %v10831
      %v10833 = vrot.slane %v10832, 2
      %v10834 = vmax.f32 %v10832, %v10833
      %v10835 = vrot.slane %v10834, 1
      %v10836 = vmax.f32 %v10834, %v10835
      %v10837 = vsel %vm9191, %v9088, -inf
      %v10838 = vrot.slane %v10837, 4
      %v10839 = vmax.f32 %v10837, %v10838
      %v10840 = vrot.slane %v10839, 2
      %v10841 = vmax.f32 %v10839, %v10840
      %v10842 = vrot.slane %v10841, 1
      %v10843 = vmax.f32 %v10841, %v10842
      %v10844 = vsel %vm9191, %v9093, -inf
      %v10845 = vrot.slane %v10844, 4
      %v10846 = vmax.f32 %v10844, %v10845
      %v10847 = vrot.slane %v10846, 2
      %v10848 = vmax.f32 %v10846, %v10847
      %v10849 = vrot.slane %v10848, 1
      %v10850 = vmax.f32 %v10848, %v10849
      %v10851 = vsel %vm9191, %v9098, -inf
      %v10852 = vrot.slane %v10851, 4
      %v10853 = vmax.f32 %v10851, %v10852
      %v10854 = vrot.slane %v10853, 2
      %v10855 = vmax.f32 %v10853, %v10854
      %v10856 = vrot.slane %v10855, 1
      %v10857 = vmax.f32 %v10855, %v10856
      %v10858 = vsel %vm9191, %v9103, -inf
      %v10859 = vrot.slane %v10858, 4
      %v10860 = vmax.f32 %v10858, %v10859
      %v10861 = vrot.slane %v10860, 2
      %v10862 = vmax.f32 %v10860, %v10861
      %v10863 = vrot.slane %v10862, 1
      %v10864 = vmax.f32 %v10862, %v10863
      %v10865 = vsel %vm9191, %v9108, -inf
      %v10866 = vrot.slane %v10865, 4
      %v10867 = vmax.f32 %v10865, %v10866
      %v10868 = vrot.slane %v10867, 2
      %v10869 = vmax.f32 %v10867, %v10868
      %v10870 = vrot.slane %v10869, 1
      %v10871 = vmax.f32 %v10869, %v10870
      %v10872 = vsel %vm9191, %v9113, -inf
      %v10873 = vrot.slane %v10872, 4
      %v10874 = vmax.f32 %v10872, %v10873
      %v10875 = vrot.slane %v10874, 2
      %v10876 = vmax.f32 %v10874, %v10875
      %v10877 = vrot.slane %v10876, 1
      %v10878 = vmax.f32 %v10876, %v10877
      %v10879 = vsel %vm9191, %v9118, -inf
      %v10880 = vrot.slane %v10879, 4
      %v10881 = vmax.f32 %v10879, %v10880
      %v10882 = vrot.slane %v10881, 2
      %v10883 = vmax.f32 %v10881, %v10882
      %v10884 = vrot.slane %v10883, 1
      %v10885 = vmax.f32 %v10883, %v10884
      %v10886 = vsel %vm9191, %v9123, -inf
      %v10887 = vrot.slane %v10886, 4
      %v10888 = vmax.f32 %v10886, %v10887
      %v10889 = vrot.slane %v10888, 2
      %v10890 = vmax.f32 %v10888, %v10889
      %v10891 = vrot.slane %v10890, 1
      %v10892 = vmax.f32 %v10890, %v10891
      %v10893 = vsel %vm9191, %v9128, -inf
      %v10894 = vrot.slane %v10893, 4
      %v10895 = vmax.f32 %v10893, %v10894
      %v10896 = vrot.slane %v10895, 2
      %v10897 = vmax.f32 %v10895, %v10896
      %v10898 = vrot.slane %v10897, 1
      %v10899 = vmax.f32 %v10897, %v10898
      %v10900 = vsel %vm9191, %v9133, -inf
      %v10901 = vrot.slane %v10900, 4
      %v10902 = vmax.f32 %v10900, %v10901
      %v10903 = vrot.slane %v10902, 2
      %v10904 = vmax.f32 %v10902, %v10903
      %v10905 = vrot.slane %v10904, 1
      %v10906 = vmax.f32 %v10904, %v10905
      %v10907 = vsel %vm9191, %v9138, -inf
      %v10908 = vrot.slane %v10907, 4
      %v10909 = vmax.f32 %v10907, %v10908
      %v10910 = vrot.slane %v10909, 2
      %v10911 = vmax.f32 %v10909, %v10910
      %v10912 = vrot.slane %v10911, 1
      %v10913 = vmax.f32 %v10911, %v10912
      %v10914 = vsel %vm9191, %v9143, -inf
      %v10915 = vrot.slane %v10914, 4
      %v10916 = vmax.f32 %v10914, %v10915
      %v10917 = vrot.slane %v10916, 2
      %v10918 = vmax.f32 %v10916, %v10917
      %v10919 = vrot.slane %v10918, 1
      %v10920 = vmax.f32 %v10918, %v10919
      %v10921 = vsel %vm9191, %v9148, -inf
      %v10922 = vrot.slane %v10921, 4
      %v10923 = vmax.f32 %v10921, %v10922
      %v10924 = vrot.slane %v10923, 2
      %v10925 = vmax.f32 %v10923, %v10924
      %v10926 = vrot.slane %v10925, 1
      %v10927 = vmax.f32 %v10925, %v10926
      %v10928 = vsel %vm9191, %v9153, -inf
      %v10929 = vrot.slane %v10928, 4
      %v10930 = vmax.f32 %v10928, %v10929
      %v10931 = vrot.slane %v10930, 2
      %v10932 = vmax.f32 %v10930, %v10931
      %v10933 = vrot.slane %v10932, 1
      %v10934 = vmax.f32 %v10932, %v10933
      %v10935 = vsel %vm9191, %v9158, -inf
      %v10936 = vrot.slane %v10935, 4
      %v10937 = vmax.f32 %v10935, %v10936
      %v10938 = vrot.slane %v10937, 2
      %v10939 = vmax.f32 %v10937, %v10938
      %v10940 = vrot.slane %v10939, 1
      %v10941 = vmax.f32 %v10939, %v10940
      %v10942 = vsel %vm9191, %v9163, -inf
      %v10943 = vrot.slane %v10942, 4
      %v10944 = vmax.f32 %v10942, %v10943
      %v10945 = vrot.slane %v10944, 2
      %v10946 = vmax.f32 %v10944, %v10945
      %v10947 = vrot.slane %v10946, 1
      %v10948 = vmax.f32 %v10946, %v10947
      %v10949 = vsel %vm9191, %v9168, -inf
      %v10950 = vrot.slane %v10949, 4
      %v10951 = vmax.f32 %v10949, %v10950
      %v10952 = vrot.slane %v10951, 2
      %v10953 = vmax.f32 %v10951, %v10952
      %v10954 = vrot.slane %v10953, 1
      %v10955 = vmax.f32 %v10953, %v10954
      %v10956 = vsel %vm9191, %v9173, -inf
      %v10957 = vrot.slane %v10956, 4
      %v10958 = vmax.f32 %v10956, %v10957
      %v10959 = vrot.slane %v10958, 2
      %v10960 = vmax.f32 %v10958, %v10959
      %v10961 = vrot.slane %v10960, 1
      %v10962 = vmax.f32 %v10960, %v10961
      %v10963 = vsel %vm9191, %v9178, -inf
      %v10964 = vrot.slane %v10963, 4
      %v10965 = vmax.f32 %v10963, %v10964
      %v10966 = vrot.slane %v10965, 2
      %v10967 = vmax.f32 %v10965, %v10966
      %v10968 = vrot.slane %v10967, 1
      %v10969 = vmax.f32 %v10967, %v10968
      %v10970 = vsel %vm9191, %v9183, -inf
      %v10971 = vrot.slane %v10970, 4
      %v10972 = vmax.f32 %v10970, %v10971
      %v10973 = vrot.slane %v10972, 2
      %v10974 = vmax.f32 %v10972, %v10973
      %v10975 = vrot.slane %v10974, 1
      %v10976 = vmax.f32 %v10974, %v10975
      %v10977 = vsel %vm9191, %v9188, -inf
      %v10978 = vrot.slane %v10977, 4
      %v10979 = vmax.f32 %v10977, %v10978
      %v10980 = vrot.slane %v10979, 2
      %v10981 = vmax.f32 %v10979, %v10980
      %v10982 = vrot.slane %v10981, 1
      %v10983 = vmax.f32 %v10981, %v10982
      %v10984 = vld [vmem:[%s5] sm:$0xff]
      %v10985 = vld [vmem:[%s5 + $0x8] sm:$0xff]
      %v10986 = vld [vmem:[%s5 + $0x10] sm:$0xff]
      %v10987 = vld [vmem:[%s5 + $0x18] sm:$0xff]
      %vm11244 = vcmask 1041409
      %v11245 = vsel %vm11244, %v5295, %v5288
      %vm11246 = vcmask 1042434
      %v11247 = vsel %vm11246, %v5302, %v11245
      %vm11248 = vcmask 1043459
      %v11249 = vsel %vm11248, %v5309, %v11247
      %vm11250 = vcmask 1044484
      %v11251 = vsel %vm11250, %v5316, %v11249
      %vm11252 = vcmask 1045509
      %v11253 = vsel %vm11252, %v5323, %v11251
      %vm11254 = vcmask 1046534
      %v11255 = vsel %vm11254, %v5330, %v11253
      %vm11256 = vcmask 1047559
      %v11257 = vsel %vm11256, %v5337, %v11255
      %v11258 = vsel %vm11244, %v5351, %v5344
      %v11259 = vsel %vm11246, %v5358, %v11258
      %v11260 = vsel %vm11248, %v5365, %v11259
      %v11261 = vsel %vm11250, %v5372, %v11260
      %v11262 = vsel %vm11252, %v5379, %v11261
      %v11263 = vsel %vm11254, %v5386, %v11262
      %v11264 = vsel %vm11256, %v5393, %v11263
      %v11265 = vsel %vm11244, %v5407, %v5400
      %v11266 = vsel %vm11246, %v5414, %v11265
      %v11267 = vsel %vm11248, %v5421, %v11266
      %v11268 = vsel %vm11250, %v5428, %v11267
      %v11269 = vsel %vm11252, %v5435, %v11268
      %v11270 = vsel %vm11254, %v5442, %v11269
      %v11271 = vsel %vm11256, %v5449, %v11270
      %v11272 = vsel %vm11244, %v5463, %v5456
      %v11273 = vsel %vm11246, %v5470, %v11272
      %v11274 = vsel %vm11248, %v5477, %v11273
      %v11275 = vsel %vm11250, %v5484, %v11274
      %v11276 = vsel %vm11252, %v5491, %v11275
      %v11277 = vsel %vm11254, %v5498, %v11276
      %v11278 = vsel %vm11256, %v5505, %v11277
      %v11279 = vsel %vm11244, %v5519, %v5512
      %v11280 = vsel %vm11246, %v5526, %v11279
      %v11281 = vsel %vm11248, %v5533, %v11280
      %v11282 = vsel %vm11250, %v5540, %v11281
      %v11283 = vsel %vm11252, %v5547, %v11282
      %v11284 = vsel %vm11254, %v5554, %v11283
      %v11285 = vsel %vm11256, %v5561, %v11284
      %v11286 = vsel %vm11244, %v5575, %v5568
      %v11287 = vsel %vm11246, %v5582, %v11286
      %v11288 = vsel %vm11248, %v5589, %v11287
      %v11289 = vsel %vm11250, %v5596, %v11288
      %v11290 = vsel %vm11252, %v5603, %v11289
      %v11291 = vsel %vm11254, %v5610, %v11290
      %v11292 = vsel %vm11256, %v5617, %v11291
      %v11293 = vsel %vm11244, %v5631, %v5624
      %v11294 = vsel %vm11246, %v5638, %v11293
      %v11295 = vsel %vm11248, %v5645, %v11294
      %v11296 = vsel %vm11250, %v5652, %v11295
      %v11297 = vsel %vm11252, %v5659, %v11296
      %v11298 = vsel %vm11254, %v5666, %v11297
      %v11299 = vsel %vm11256, %v5673, %v11298
      %v11300 = vsel %vm11244, %v5687, %v5680
      %v11301 = vsel %vm11246, %v5694, %v11300
      %v11302 = vsel %vm11248, %v5701, %v11301
      %v11303 = vsel %vm11250, %v5708, %v11302
      %v11304 = vsel %vm11252, %v5715, %v11303
      %v11305 = vsel %vm11254, %v5722, %v11304
      %v11306 = vsel %vm11256, %v5729, %v11305
      %v11307 = vsel %vm11244, %v5743, %v5736
      %v11308 = vsel %vm11246, %v5750, %v11307
      %v11309 = vsel %vm11248, %v5757, %v11308
      %v11310 = vsel %vm11250, %v5764, %v11309
      %v11311 = vsel %vm11252, %v5771, %v11310
      %v11312 = vsel %vm11254, %v5778, %v11311
      %v11313 = vsel %vm11256, %v5785, %v11312
      %v11314 = vsel %vm11244, %v5799, %v5792
      %v11315 = vsel %vm11246, %v5806, %v11314
      %v11316 = vsel %vm11248, %v5813, %v11315
      %v11317 = vsel %vm11250, %v5820, %v11316
      %v11318 = vsel %vm11252, %v5827, %v11317
      %v11319 = vsel %vm11254, %v5834, %v11318
      %v11320 = vsel %vm11256, %v5841, %v11319
      %v11321 = vsel %vm11244, %v5855, %v5848
      %v11322 = vsel %vm11246, %v5862, %v11321
      %v11323 = vsel %vm11248, %v5869, %v11322
      %v11324 = vsel %vm11250, %v5876, %v11323
      %v11325 = vsel %vm11252, %v5883, %v11324
      %v11326 = vsel %vm11254, %v5890, %v11325
      %v11327 = vsel %vm11256, %v5897, %v11326
      %v11328 = vsel %vm11244, %v5911, %v5904
      %v11329 = vsel %vm11246, %v5918, %v11328
      %v11330 = vsel %vm11248, %v5925, %v11329
      %v11331 = vsel %vm11250, %v5932, %v11330
      %v11332 = vsel %vm11252, %v5939, %v11331
      %v11333 = vsel %vm11254, %v5946, %v11332
      %v11334 = vsel %vm11256, %v5953, %v11333
      %v11335 = vsel %vm11244, %v5967, %v5960
      %v11336 = vsel %vm11246, %v5974, %v11335
      %v11337 = vsel %vm11248, %v5981, %v11336
      %v11338 = vsel %vm11250, %v5988, %v11337
      %v11339 = vsel %vm11252, %v5995, %v11338
      %v11340 = vsel %vm11254, %v6002, %v11339
      %v11341 = vsel %vm11256, %v6009, %v11340
      %v11342 = vsel %vm11244, %v6023, %v6016
      %v11343 = vsel %vm11246, %v6030, %v11342
      %v11344 = vsel %vm11248, %v6037, %v11343
      %v11345 = vsel %vm11250, %v6044, %v11344
      %v11346 = vsel %vm11252, %v6051, %v11345
      %v11347 = vsel %vm11254, %v6058, %v11346
      %v11348 = vsel %vm11256, %v6065, %v11347
      %v11349 = vsel %vm11244, %v6079, %v6072
      %v11350 = vsel %vm11246, %v6086, %v11349
      %v11351 = vsel %vm11248, %v6093, %v11350
      %v11352 = vsel %vm11250, %v6100, %v11351
      %v11353 = vsel %vm11252, %v6107, %v11352
      %v11354 = vsel %vm11254, %v6114, %v11353
      %v11355 = vsel %vm11256, %v6121, %v11354
      %v11356 = vsel %vm11244, %v6135, %v6128
      %v11357 = vsel %vm11246, %v6142, %v11356
      %v11358 = vsel %vm11248, %v6149, %v11357
      %v11359 = vsel %vm11250, %v6156, %v11358
      %v11360 = vsel %vm11252, %v6163, %v11359
      %v11361 = vsel %vm11254, %v6170, %v11360
      %v11362 = vsel %vm11256, %v6177, %v11361
      %v11363 = vsel %vm11244, %v6191, %v6184
      %v11364 = vsel %vm11246, %v6198, %v11363
      %v11365 = vsel %vm11248, %v6205, %v11364
      %v11366 = vsel %vm11250, %v6212, %v11365
      %v11367 = vsel %vm11252, %v6219, %v11366
      %v11368 = vsel %vm11254, %v6226, %v11367
      %v11369 = vsel %vm11256, %v6233, %v11368
      %v11370 = vsel %vm11244, %v6247, %v6240
      %v11371 = vsel %vm11246, %v6254, %v11370
      %v11372 = vsel %vm11248, %v6261, %v11371
      %v11373 = vsel %vm11250, %v6268, %v11372
      %v11374 = vsel %vm11252, %v6275, %v11373
      %v11375 = vsel %vm11254, %v6282, %v11374
      %v11376 = vsel %vm11256, %v6289, %v11375
      %v11377 = vsel %vm11244, %v6303, %v6296
      %v11378 = vsel %vm11246, %v6310, %v11377
      %v11379 = vsel %vm11248, %v6317, %v11378
      %v11380 = vsel %vm11250, %v6324, %v11379
      %v11381 = vsel %vm11252, %v6331, %v11380
      %v11382 = vsel %vm11254, %v6338, %v11381
      %v11383 = vsel %vm11256, %v6345, %v11382
      %v11384 = vsel %vm11244, %v6359, %v6352
      %v11385 = vsel %vm11246, %v6366, %v11384
      %v11386 = vsel %vm11248, %v6373, %v11385
      %v11387 = vsel %vm11250, %v6380, %v11386
      %v11388 = vsel %vm11252, %v6387, %v11387
      %v11389 = vsel %vm11254, %v6394, %v11388
      %v11390 = vsel %vm11256, %v6401, %v11389
      %v11391 = vsel %vm11244, %v6415, %v6408
      %v11392 = vsel %vm11246, %v6422, %v11391
      %v11393 = vsel %vm11248, %v6429, %v11392
      %v11394 = vsel %vm11250, %v6436, %v11393
      %v11395 = vsel %vm11252, %v6443, %v11394
      %v11396 = vsel %vm11254, %v6450, %v11395
      %v11397 = vsel %vm11256, %v6457, %v11396
      %v11398 = vsel %vm11244, %v6471, %v6464
      %v11399 = vsel %vm11246, %v6478, %v11398
      %v11400 = vsel %vm11248, %v6485, %v11399
      %v11401 = vsel %vm11250, %v6492, %v11400
      %v11402 = vsel %vm11252, %v6499, %v11401
      %v11403 = vsel %vm11254, %v6506, %v11402
      %v11404 = vsel %vm11256, %v6513, %v11403
      %v11405 = vsel %vm11244, %v6527, %v6520
      %v11406 = vsel %vm11246, %v6534, %v11405
      %v11407 = vsel %vm11248, %v6541, %v11406
      %v11408 = vsel %vm11250, %v6548, %v11407
      %v11409 = vsel %vm11252, %v6555, %v11408
      %v11410 = vsel %vm11254, %v6562, %v11409
      %v11411 = vsel %vm11256, %v6569, %v11410
      %v11412 = vsel %vm11244, %v6583, %v6576
      %v11413 = vsel %vm11246, %v6590, %v11412
      %v11414 = vsel %vm11248, %v6597, %v11413
      %v11415 = vsel %vm11250, %v6604, %v11414
      %v11416 = vsel %vm11252, %v6611, %v11415
      %v11417 = vsel %vm11254, %v6618, %v11416
      %v11418 = vsel %vm11256, %v6625, %v11417
      %v11419 = vsel %vm11244, %v6639, %v6632
      %v11420 = vsel %vm11246, %v6646, %v11419
      %v11421 = vsel %vm11248, %v6653, %v11420
      %v11422 = vsel %vm11250, %v6660, %v11421
      %v11423 = vsel %vm11252, %v6667, %v11422
      %v11424 = vsel %vm11254, %v6674, %v11423
      %v11425 = vsel %vm11256, %v6681, %v11424
      %v11426 = vsel %vm11244, %v6695, %v6688
      %v11427 = vsel %vm11246, %v6702, %v11426
      %v11428 = vsel %vm11248, %v6709, %v11427
      %v11429 = vsel %vm11250, %v6716, %v11428
      %v11430 = vsel %vm11252, %v6723, %v11429
      %v11431 = vsel %vm11254, %v6730, %v11430
      %v11432 = vsel %vm11256, %v6737, %v11431
      %v11433 = vsel %vm11244, %v6751, %v6744
      %v11434 = vsel %vm11246, %v6758, %v11433
      %v11435 = vsel %vm11248, %v6765, %v11434
      %v11436 = vsel %vm11250, %v6772, %v11435
      %v11437 = vsel %vm11252, %v6779, %v11436
      %v11438 = vsel %vm11254, %v6786, %v11437
      %v11439 = vsel %vm11256, %v6793, %v11438
      %v11440 = vsel %vm11244, %v6807, %v6800
      %v11441 = vsel %vm11246, %v6814, %v11440
      %v11442 = vsel %vm11248, %v6821, %v11441
      %v11443 = vsel %vm11250, %v6828, %v11442
      %v11444 = vsel %vm11252, %v6835, %v11443
      %v11445 = vsel %vm11254, %v6842, %v11444
      %v11446 = vsel %vm11256, %v6849, %v11445
      %v11447 = vsel %vm11244, %v6863, %v6856
      %v11448 = vsel %vm11246, %v6870, %v11447
      %v11449 = vsel %vm11248, %v6877, %v11448
      %v11450 = vsel %vm11250, %v6884, %v11449
      %v11451 = vsel %vm11252, %v6891, %v11450
      %v11452 = vsel %vm11254, %v6898, %v11451
      %v11453 = vsel %vm11256, %v6905, %v11452
      %v11454 = vsel %vm11244, %v6919, %v6912
      %v11455 = vsel %vm11246, %v6926, %v11454
      %v11456 = vsel %vm11248, %v6933, %v11455
      %v11457 = vsel %vm11250, %v6940, %v11456
      %v11458 = vsel %vm11252, %v6947, %v11457
      %v11459 = vsel %vm11254, %v6954, %v11458
      %v11460 = vsel %vm11256, %v6961, %v11459
      %v11461 = vsel %vm11244, %v6975, %v6968
      %v11462 = vsel %vm11246, %v6982, %v11461
      %v11463 = vsel %vm11248, %v6989, %v11462
      %v11464 = vsel %vm11250, %v6996, %v11463
      %v11465 = vsel %vm11252, %v7003, %v11464
      %v11466 = vsel %vm11254, %v7010, %v11465
      %v11467 = vsel %vm11256, %v7017, %v11466
      %v11468 = vsel %vm11244, %v7031, %v7024
      %v11469 = vsel %vm11246, %v7038, %v11468
      %v11470 = vsel %vm11248, %v7045, %v11469
      %v11471 = vsel %vm11250, %v7052, %v11470
      %v11472 = vsel %vm11252, %v7059, %v11471
      %v11473 = vsel %vm11254, %v7066, %v11472
      %v11474 = vsel %vm11256, %v7073, %v11473
      %v11475 = vsel %vm5281, %v11257, 0
      %v11477 = vsel %vm5281, %v11264, 0
      %v11479 = vsel %vm5281, %v11271, 0
      %v11481 = vsel %vm5281, %v11278, 0
      %v11483 = vsel %vm5281, %v11285, 0
      %v11485 = vsel %vm5281, %v11292, 0
      %v11487 = vsel %vm5281, %v11299, 0
      %v11489 = vsel %vm5281, %v11306, 0
      %v11491 = vsel %vm5281, %v11313, 0
      %v11493 = vsel %vm5281, %v11320, 0
      %v11495 = vsel %vm5281, %v11327, 0
      %v11497 = vsel %vm5281, %v11334, 0
      %v11499 = vsel %vm5281, %v11341, 0
      %v11501 = vsel %vm5281, %v11348, 0
      %v11503 = vsel %vm5281, %v11355, 0
      %v11505 = vsel %vm5281, %v11362, 0
      %v11507 = vsel %vm5281, %v11369, 0
      %v11509 = vsel %vm5281, %v11376, 0
      %v11511 = vsel %vm5281, %v11383, 0
      %v11513 = vsel %vm5281, %v11390, 0
      %v11515 = vsel %vm5281, %v11397, 0
      %v11517 = vsel %vm5281, %v11404, 0
      %v11519 = vsel %vm5281, %v11411, 0
      %v11521 = vsel %vm5281, %v11418, 0
      %v11523 = vsel %vm5281, %v11425, 0
      %v11525 = vsel %vm5281, %v11432, 0
      %v11527 = vsel %vm5281, %v11439, 0
      %v11529 = vsel %vm5281, %v11446, 0
      %v11531 = vsel %vm5281, %v11453, 0
      %v11533 = vsel %vm5281, %v11460, 0
      %v11535 = vsel %vm5281, %v11467, 0
      %v11537 = vsel %vm5281, %v11474, 0
      %11539 = vmatprep.subr.mxu0 0.0
      %11540 = vmatpush1.msra.mxu0 %v10984
      %11541 = vmatprep.subr.mxu0 0.0
      %11542 = vmatpush1.msra.mxu0 %v10985
      %11543 = vmatprep.subr.mxu0 0.0
      %11544 = vmatpush1.msra.mxu0 %v10986
      %11545 = vmatprep.subr.mxu0 0.0
      %11546 = vmatpush1.msra.mxu0 %v10987
      %11547 = vmatprep.subr.mxu0 0.0
      %11548 = vmatpush1.msra.mxu0 0.0
      %11549 = vmatprep.subr.mxu0 0.0
      %11550 = vmatpush1.msra.mxu0 0.0
      %11551 = vmatprep.subr.mxu0 0.0
      %11552 = vmatpush1.msra.mxu0 0.0
      %11553 = vmatprep.subr.mxu0 0.0
      %11554 = vmatpush1.msra.mxu0 0.0
      %11555 = vmatprep.subr.mxu0 0.0
      %11556 = vmatpush1.msra.mxu0 0.0
      %11557 = vmatprep.subr.mxu0 0.0
      %11558 = vmatpush1.msra.mxu0 0.0
      %11559 = vmatprep.subr.mxu0 0.0
      %11560 = vmatpush1.msra.mxu0 0.0
      %11561 = vmatprep.subr.mxu0 0.0
      %11562 = vmatpush1.msra.mxu0 0.0
      %11563 = vmatprep.subr.mxu0 0.0
      %11564 = vmatpush1.msra.mxu0 0.0
      %11565 = vmatprep.subr.mxu0 0.0
      %11566 = vmatpush1.msra.mxu0 0.0
      %11567 = vmatprep.subr.mxu0 0.0
      %11568 = vmatpush1.msra.mxu0 0.0
      %11569 = vmatprep.subr.mxu0 0.0
      %11570 = vmatpush1.msra.mxu0 0.0
      %11571 = vmatprep.subr.mxu0 0.0
      %11572 = vmatpush1.msra.mxu0 0.0
      %11573 = vmatprep.subr.mxu0 0.0
      %11574 = vmatpush1.msra.mxu0 0.0
      %11575 = vmatprep.subr.mxu0 0.0
      %11576 = vmatpush1.msra.mxu0 0.0
      %11577 = vmatprep.subr.mxu0 0.0
      %11578 = vmatpush1.msra.mxu0 0.0
      %11579 = vmatprep.subr.mxu0 0.0
      %11580 = vmatpush1.msra.mxu0 0.0
      %11581 = vmatprep.subr.mxu0 0.0
      %11582 = vmatpush1.msra.mxu0 0.0
      %11583 = vmatprep.subr.mxu0 0.0
      %11584 = vmatpush1.msra.mxu0 0.0
      %11585 = vmatprep.subr.mxu0 0.0
      %11586 = vmatpush1.msra.mxu0 0.0
      %11587 = vmatprep.subr.mxu0 0.0
      %11588 = vmatpush1.msra.mxu0 0.0
      %11589 = vmatprep.subr.mxu0 0.0
      %11590 = vmatpush1.msra.mxu0 0.0
      %11591 = vmatprep.subr.mxu0 0.0
      %11592 = vmatpush1.msra.mxu0 0.0
      %11593 = vmatprep.subr.mxu0 0.0
      %11594 = vmatpush1.msra.mxu0 0.0
      %11595 = vmatprep.subr.mxu0 0.0
      %11596 = vmatpush1.msra.mxu0 0.0
      %11597 = vmatprep.subr.mxu0 0.0
      %11598 = vmatpush1.msra.mxu0 0.0
      %11599 = vmatprep.subr.mxu0 0.0
      %11600 = vmatpush1.msra.mxu0 0.0
      %11601 = vmatprep.subr.mxu0 0.0
      %11602 = vmatpush1.msra.mxu0 0.0
      %11603 = vmatprep.mubr.f32.mxu0 0.0
      %11604 = vmatmul.mubr.f32.gmra.mrb[0].mxu0 %v11475
      %v11605 = vpop.f32.mrb[0].mxu0
      %v11606 = vadd.f32 0.0, %v11605
      %v11607 = vpop.f32.mrb[0].mxu0
      %11608 = vmatprep.mubr.f32.mxu0 0.0
      %11609 = vmatmul.mubr.f32.gmra.mrb[0].mxu0 %v11477
      %v11610 = vpop.f32.mrb[0].mxu0
      %v11611 = vadd.f32 0.0, %v11610
      %v11612 = vpop.f32.mrb[0].mxu0
      %11613 = vmatprep.mubr.f32.mxu0 0.0
      %11614 = vmatmul.mubr.f32.gmra.mrb[0].mxu0 %v11479
      %v11615 = vpop.f32.mrb[0].mxu0
      %v11616 = vadd.f32 0.0, %v11615
      %v11617 = vpop.f32.mrb[0].mxu0
      %11618 = vmatprep.mubr.f32.mxu0 0.0
      %11619 = vmatmul.mubr.f32.gmra.mrb[0].mxu0 %v11481
      %v11620 = vpop.f32.mrb[0].mxu0
      %v11621 = vadd.f32 0.0, %v11620
      %v11622 = vpop.f32.mrb[0].mxu0
      %11623 = vmatprep.mubr.f32.mxu0 0.0
      %11624 = vmatmul.mubr.f32.gmra.mrb[0].mxu0 %v11483
      %v11625 = vpop.f32.mrb[0].mxu0
      %v11626 = vadd.f32 0.0, %v11625
      %v11627 = vpop.f32.mrb[0].mxu0
      %11628 = vmatprep.mubr.f32.mxu0 0.0
      %11629 = vmatmul.mubr.f32.gmra.mrb[0].mxu0 %v11485
      %v11630 = vpop.f32.mrb[0].mxu0
      %v11631 = vadd.f32 0.0, %v11630
      %v11632 = vpop.f32.mrb[0].mxu0
      %11633 = vmatprep.mubr.f32.mxu0 0.0
      %11634 = vmatmul.mubr.f32.gmra.mrb[0].mxu0 %v11487
      %v11635 = vpop.f32.mrb[0].mxu0
      %v11636 = vadd.f32 0.0, %v11635
      %v11637 = vpop.f32.mrb[0].mxu0
      %11638 = vmatprep.mubr.f32.mxu0 0.0
      %11639 = vmatmul.mubr.f32.gmra.mrb[0].mxu0 %v11489
      %v11640 = vpop.f32.mrb[0].mxu0
      %v11641 = vadd.f32 0.0, %v11640
      %v11642 = vpop.f32.mrb[0].mxu0
      %11643 = vmatprep.mubr.f32.mxu0 0.0
      %11644 = vmatmul.mubr.f32.gmra.mrb[0].mxu0 %v11491
      %v11645 = vpop.f32.mrb[0].mxu0
      %v11646 = vadd.f32 0.0, %v11645
      %v11647 = vpop.f32.mrb[0].mxu0
      %11648 = vmatprep.mubr.f32.mxu0 0.0
      %11649 = vmatmul.mubr.f32.gmra.mrb[0].mxu0 %v11493
      %v11650 = vpop.f32.mrb[0].mxu0
      %v11651 = vadd.f32 0.0, %v11650
      %v11652 = vpop.f32.mrb[0].mxu0
      %11653 = vmatprep.mubr.f32.mxu0 0.0
      %11654 = vmatmul.mubr.f32.gmra.mrb[0].mxu0 %v11495
      %v11655 = vpop.f32.mrb[0].mxu0
      %v11656 = vadd.f32 0.0, %v11655
      %v11657 = vpop.f32.mrb[0].mxu0
      %11658 = vmatprep.mubr.f32.mxu0 0.0
      %11659 = vmatmul.mubr.f32.gmra.mrb[0].mxu0 %v11497
      %v11660 = vpop.f32.mrb[0].mxu0
      %v11661 = vadd.f32 0.0, %v11660
      %v11662 = vpop.f32.mrb[0].mxu0
      %11663 = vmatprep.mubr.f32.mxu0 0.0
      %11664 = vmatmul.mubr.f32.gmra.mrb[0].mxu0 %v11499
      %v11665 = vpop.f32.mrb[0].mxu0
      %v11666 = vadd.f32 0.0, %v11665
      %v11667 = vpop.f32.mrb[0].mxu0
      %11668 = vmatprep.mubr.f32.mxu0 0.0
      %11669 = vmatmul.mubr.f32.gmra.mrb[0].mxu0 %v11501
      %v11670 = vpop.f32.mrb[0].mxu0
      %v11671 = vadd.f32 0.0, %v11670
      %v11672 = vpop.f32.mrb[0].mxu0
      %11673 = vmatprep.mubr.f32.mxu0 0.0
      %11674 = vmatmul.mubr.f32.gmra.mrb[0].mxu0 %v11503
      %v11675 = vpop.f32.mrb[0].mxu0
      %v11676 = vadd.f32 0.0, %v11675
      %v11677 = vpop.f32.mrb[0].mxu0
      %11678 = vmatprep.mubr.f32.mxu0 0.0
      %11679 = vmatmul.mubr.f32.gmra.mrb[0].mxu0 %v11505
      %v11680 = vpop.f32.mrb[0].mxu0
      %v11681 = vadd.f32 0.0, %v11680
      %v11682 = vpop.f32.mrb[0].mxu0
      %11683 = vmatprep.mubr.f32.mxu0 0.0
      %11684 = vmatmul.mubr.f32.gmra.mrb[0].mxu0 %v11507
      %v11685 = vpop.f32.mrb[0].mxu0
      %v11686 = vadd.f32 0.0, %v11685
      %v11687 = vpop.f32.mrb[0].mxu0
      %11688 = vmatprep.mubr.f32.mxu0 0.0
      %11689 = vmatmul.mubr.f32.gmra.mrb[0].mxu0 %v11509
      %v11690 = vpop.f32.mrb[0].mxu0
      %v11691 = vadd.f32 0.0, %v11690
      %v11692 = vpop.f32.mrb[0].mxu0
      %11693 = vmatprep.mubr.f32.mxu0 0.0
      %11694 = vmatmul.mubr.f32.gmra.mrb[0].mxu0 %v11511
      %v11695 = vpop.f32.mrb[0].mxu0
      %v11696 = vadd.f32 0.0, %v11695
      %v11697 = vpop.f32.mrb[0].mxu0
      %11698 = vmatprep.mubr.f32.mxu0 0.0
      %11699 = vmatmul.mubr.f32.gmra.mrb[0].mxu0 %v11513
      %v11700 = vpop.f32.mrb[0].mxu0
      %v11701 = vadd.f32 0.0, %v11700
      %v11702 = vpop.f32.mrb[0].mxu0
      %11703 = vmatprep.mubr.f32.mxu0 0.0
      %11704 = vmatmul.mubr.f32.gmra.mrb[0].mxu0 %v11515
      %v11705 = vpop.f32.mrb[0].mxu0
      %v11706 = vadd.f32 0.0, %v11705
      %v11707 = vpop.f32.mrb[0].mxu0
      %11708 = vmatprep.mubr.f32.mxu0 0.0
      %11709 = vmatmul.mubr.f32.gmra.mrb[0].mxu0 %v11517
      %v11710 = vpop.f32.mrb[0].mxu0
      %v11711 = vadd.f32 0.0, %v11710
      %v11712 = vpop.f32.mrb[0].mxu0
      %11713 = vmatprep.mubr.f32.mxu0 0.0
      %11714 = vmatmul.mubr.f32.gmra.mrb[0].mxu0 %v11519
      %v11715 = vpop.f32.mrb[0].mxu0
      %v11716 = vadd.f32 0.0, %v11715
      %v11717 = vpop.f32.mrb[0].mxu0
      %11718 = vmatprep.mubr.f32.mxu0 0.0
      %11719 = vmatmul.mubr.f32.gmra.mrb[0].mxu0 %v11521
      %v11720 = vpop.f32.mrb[0].mxu0
      %v11721 = vadd.f32 0.0, %v11720
      %v11722 = vpop.f32.mrb[0].mxu0
      %11723 = vmatprep.mubr.f32.mxu0 0.0
      %11724 = vmatmul.mubr.f32.gmra.mrb[0].mxu0 %v11523
      %v11725 = vpop.f32.mrb[0].mxu0
      %v11726 = vadd.f32 0.0, %v11725
      %v11727 = vpop.f32.mrb[0].mxu0
      %11728 = vmatprep.mubr.f32.mxu0 0.0
      %11729 = vmatmul.mubr.f32.gmra.mrb[0].mxu0 %v11525
      %v11730 = vpop.f32.mrb[0].mxu0
      %v11731 = vadd.f32 0.0, %v11730
      %v11732 = vpop.f32.mrb[0].mxu0
      %11733 = vmatprep.mubr.f32.mxu0 0.0
      %11734 = vmatmul.mubr.f32.gmra.mrb[0].mxu0 %v11527
      %v11735 = vpop.f32.mrb[0].mxu0
      %v11736 = vadd.f32 0.0, %v11735
      %v11737 = vpop.f32.mrb[0].mxu0
      %11738 = vmatprep.mubr.f32.mxu0 0.0
      %11739 = vmatmul.mubr.f32.gmra.mrb[0].mxu0 %v11529
      %v11740 = vpop.f32.mrb[0].mxu0
      %v11741 = vadd.f32 0.0, %v11740
      %v11742 = vpop.f32.mrb[0].mxu0
      %11743 = vmatprep.mubr.f32.mxu0 0.0
      %11744 = vmatmul.mubr.f32.gmra.mrb[0].mxu0 %v11531
      %v11745 = vpop.f32.mrb[0].mxu0
      %v11746 = vadd.f32 0.0, %v11745
      %v11747 = vpop.f32.mrb[0].mxu0
      %11748 = vmatprep.mubr.f32.mxu0 0.0
      %11749 = vmatmul.mubr.f32.gmra.mrb[0].mxu0 %v11533
      %v11750 = vpop.f32.mrb[0].mxu0
      %v11751 = vadd.f32 0.0, %v11750
      %v11752 = vpop.f32.mrb[0].mxu0
      %11753 = vmatprep.mubr.f32.mxu0 0.0
      %11754 = vmatmul.mubr.f32.gmra.mrb[0].mxu0 %v11535
      %v11755 = vpop.f32.mrb[0].mxu0
      %v11756 = vadd.f32 0.0, %v11755
      %v11757 = vpop.f32.mrb[0].mxu0
      %11758 = vmatprep.mubr.f32.mxu0 0.0
      %11759 = vmatmul.mubr.f32.gmra.mrb[0].mxu0 %v11537
      %v11760 = vpop.f32.mrb[0].mxu0
      %v11761 = vadd.f32 0.0, %v11760
      %v11762 = vpop.f32.mrb[0].mxu0
      %11763 = vdwg.mxu0
      %v11796 = vrot.slane %v11606, 1
      %v11797 = vrot.slane %v11606, 2
      %v11798 = vrot.slane %v11606, 3
      %v11799 = vrot.slane %v11606, 4
      %v11800 = vrot.slane %v11606, 5
      %v11801 = vrot.slane %v11606, 6
      %v11802 = vrot.slane %v11606, 7
      %v11803 = vrot.slane %v11611, 1
      %v11804 = vrot.slane %v11611, 2
      %v11805 = vrot.slane %v11611, 3
      %v11806 = vrot.slane %v11611, 4
      %v11807 = vrot.slane %v11611, 5
      %v11808 = vrot.slane %v11611, 6
      %v11809 = vrot.slane %v11611, 7
      %v11810 = vrot.slane %v11616, 1
      %v11811 = vrot.slane %v11616, 2
      %v11812 = vrot.slane %v11616, 3
      %v11813 = vrot.slane %v11616, 4
      %v11814 = vrot.slane %v11616, 5
      %v11815 = vrot.slane %v11616, 6
      %v11816 = vrot.slane %v11616, 7
      %v11817 = vrot.slane %v11621, 1
      %v11818 = vrot.slane %v11621, 2
      %v11819 = vrot.slane %v11621, 3
      %v11820 = vrot.slane %v11621, 4
      %v11821 = vrot.slane %v11621, 5
      %v11822 = vrot.slane %v11621, 6
      %v11823 = vrot.slane %v11621, 7
      %v11824 = vrot.slane %v11626, 1
      %v11825 = vrot.slane %v11626, 2
      %v11826 = vrot.slane %v11626, 3
      %v11827 = vrot.slane %v11626, 4
      %v11828 = vrot.slane %v11626, 5
      %v11829 = vrot.slane %v11626, 6
      %v11830 = vrot.slane %v11626, 7
      %v11831 = vrot.slane %v11631, 1
      %v11832 = vrot.slane %v11631, 2
      %v11833 = vrot.slane %v11631, 3
      %v11834 = vrot.slane %v11631, 4
      %v11835 = vrot.slane %v11631, 5
      %v11836 = vrot.slane %v11631, 6
      %v11837 = vrot.slane %v11631, 7
      %v11838 = vrot.slane %v11636, 1
      %v11839 = vrot.slane %v11636, 2
      %v11840 = vrot.slane %v11636, 3
      %v11841 = vrot.slane %v11636, 4
      %v11842 = vrot.slane %v11636, 5
      %v11843 = vrot.slane %v11636, 6
      %v11844 = vrot.slane %v11636, 7
      %v11845 = vrot.slane %v11641, 1
      %v11846 = vrot.slane %v11641, 2
      %v11847 = vrot.slane %v11641, 3
      %v11848 = vrot.slane %v11641, 4
      %v11849 = vrot.slane %v11641, 5
      %v11850 = vrot.slane %v11641, 6
      %v11851 = vrot.slane %v11641, 7
      %v11852 = vrot.slane %v11646, 1
      %v11853 = vrot.slane %v11646, 2
      %v11854 = vrot.slane %v11646, 3
      %v11855 = vrot.slane %v11646, 4
      %v11856 = vrot.slane %v11646, 5
      %v11857 = vrot.slane %v11646, 6
      %v11858 = vrot.slane %v11646, 7
      %v11859 = vrot.slane %v11651, 1
      %v11860 = vrot.slane %v11651, 2
      %v11861 = vrot.slane %v11651, 3
      %v11862 = vrot.slane %v11651, 4
      %v11863 = vrot.slane %v11651, 5
      %v11864 = vrot.slane %v11651, 6
      %v11865 = vrot.slane %v11651, 7
      %v11866 = vrot.slane %v11656, 1
      %v11867 = vrot.slane %v11656, 2
      %v11868 = vrot.slane %v11656, 3
      %v11869 = vrot.slane %v11656, 4
      %v11870 = vrot.slane %v11656, 5
      %v11871 = vrot.slane %v11656, 6
      %v11872 = vrot.slane %v11656, 7
      %v11873 = vrot.slane %v11661, 1
      %v11874 = vrot.slane %v11661, 2
      %v11875 = vrot.slane %v11661, 3
      %v11876 = vrot.slane %v11661, 4
      %v11877 = vrot.slane %v11661, 5
      %v11878 = vrot.slane %v11661, 6
      %v11879 = vrot.slane %v11661, 7
      %v11880 = vrot.slane %v11666, 1
      %v11881 = vrot.slane %v11666, 2
      %v11882 = vrot.slane %v11666, 3
      %v11883 = vrot.slane %v11666, 4
      %v11884 = vrot.slane %v11666, 5
      %v11885 = vrot.slane %v11666, 6
      %v11886 = vrot.slane %v11666, 7
      %v11887 = vrot.slane %v11671, 1
      %v11888 = vrot.slane %v11671, 2
      %v11889 = vrot.slane %v11671, 3
      %v11890 = vrot.slane %v11671, 4
      %v11891 = vrot.slane %v11671, 5
      %v11892 = vrot.slane %v11671, 6
      %v11893 = vrot.slane %v11671, 7
      %v11894 = vrot.slane %v11676, 1
      %v11895 = vrot.slane %v11676, 2
      %v11896 = vrot.slane %v11676, 3
      %v11897 = vrot.slane %v11676, 4
      %v11898 = vrot.slane %v11676, 5
      %v11899 = vrot.slane %v11676, 6
      %v11900 = vrot.slane %v11676, 7
      %v11901 = vrot.slane %v11681, 1
      %v11902 = vrot.slane %v11681, 2
      %v11903 = vrot.slane %v11681, 3
      %v11904 = vrot.slane %v11681, 4
      %v11905 = vrot.slane %v11681, 5
      %v11906 = vrot.slane %v11681, 6
      %v11907 = vrot.slane %v11681, 7
      %v11908 = vrot.slane %v11686, 1
      %v11909 = vrot.slane %v11686, 2
      %v11910 = vrot.slane %v11686, 3
      %v11911 = vrot.slane %v11686, 4
      %v11912 = vrot.slane %v11686, 5
      %v11913 = vrot.slane %v11686, 6
      %v11914 = vrot.slane %v11686, 7
      %v11915 = vrot.slane %v11691, 1
      %v11916 = vrot.slane %v11691, 2
      %v11917 = vrot.slane %v11691, 3
      %v11918 = vrot.slane %v11691, 4
      %v11919 = vrot.slane %v11691, 5
      %v11920 = vrot.slane %v11691, 6
      %v11921 = vrot.slane %v11691, 7
      %v11922 = vrot.slane %v11696, 1
      %v11923 = vrot.slane %v11696, 2
      %v11924 = vrot.slane %v11696, 3
      %v11925 = vrot.slane %v11696, 4
      %v11926 = vrot.slane %v11696, 5
      %v11927 = vrot.slane %v11696, 6
      %v11928 = vrot.slane %v11696, 7
      %v11929 = vrot.slane %v11701, 1
      %v11930 = vrot.slane %v11701, 2
      %v11931 = vrot.slane %v11701, 3
      %v11932 = vrot.slane %v11701, 4
      %v11933 = vrot.slane %v11701, 5
      %v11934 = vrot.slane %v11701, 6
      %v11935 = vrot.slane %v11701, 7
      %v11936 = vrot.slane %v11706, 1
      %v11937 = vrot.slane %v11706, 2
      %v11938 = vrot.slane %v11706, 3
      %v11939 = vrot.slane %v11706, 4
      %v11940 = vrot.slane %v11706, 5
      %v11941 = vrot.slane %v11706, 6
      %v11942 = vrot.slane %v11706, 7
      %v11943 = vrot.slane %v11711, 1
      %v11944 = vrot.slane %v11711, 2
      %v11945 = vrot.slane %v11711, 3
      %v11946 = vrot.slane %v11711, 4
      %v11947 = vrot.slane %v11711, 5
      %v11948 = vrot.slane %v11711, 6
      %v11949 = vrot.slane %v11711, 7
      %v11950 = vrot.slane %v11716, 1
      %v11951 = vrot.slane %v11716, 2
      %v11952 = vrot.slane %v11716, 3
      %v11953 = vrot.slane %v11716, 4
      %v11954 = vrot.slane %v11716, 5
      %v11955 = vrot.slane %v11716, 6
      %v11956 = vrot.slane %v11716, 7
      %v11957 = vrot.slane %v11721, 1
      %v11958 = vrot.slane %v11721, 2
      %v11959 = vrot.slane %v11721, 3
      %v11960 = vrot.slane %v11721, 4
      %v11961 = vrot.slane %v11721, 5
      %v11962 = vrot.slane %v11721, 6
      %v11963 = vrot.slane %v11721, 7
      %v11964 = vrot.slane %v11726, 1
      %v11965 = vrot.slane %v11726, 2
      %v11966 = vrot.slane %v11726, 3
      %v11967 = vrot.slane %v11726, 4
      %v11968 = vrot.slane %v11726, 5
      %v11969 = vrot.slane %v11726, 6
      %v11970 = vrot.slane %v11726, 7
      %v11971 = vrot.slane %v11731, 1
      %v11972 = vrot.slane %v11731, 2
      %v11973 = vrot.slane %v11731, 3
      %v11974 = vrot.slane %v11731, 4
      %v11975 = vrot.slane %v11731, 5
      %v11976 = vrot.slane %v11731, 6
      %v11977 = vrot.slane %v11731, 7
      %v11978 = vrot.slane %v11736, 1
      %v11979 = vrot.slane %v11736, 2
      %v11980 = vrot.slane %v11736, 3
      %v11981 = vrot.slane %v11736, 4
      %v11982 = vrot.slane %v11736, 5
      %v11983 = vrot.slane %v11736, 6
      %v11984 = vrot.slane %v11736, 7
      %v11985 = vrot.slane %v11741, 1
      %v11986 = vrot.slane %v11741, 2
      %v11987 = vrot.slane %v11741, 3
      %v11988 = vrot.slane %v11741, 4
      %v11989 = vrot.slane %v11741, 5
      %v11990 = vrot.slane %v11741, 6
      %v11991 = vrot.slane %v11741, 7
      %v11992 = vrot.slane %v11746, 1
      %v11993 = vrot.slane %v11746, 2
      %v11994 = vrot.slane %v11746, 3
      %v11995 = vrot.slane %v11746, 4
      %v11996 = vrot.slane %v11746, 5
      %v11997 = vrot.slane %v11746, 6
      %v11998 = vrot.slane %v11746, 7
      %v11999 = vrot.slane %v11751, 1
      %v12000 = vrot.slane %v11751, 2
      %v12001 = vrot.slane %v11751, 3
      %v12002 = vrot.slane %v11751, 4
      %v12003 = vrot.slane %v11751, 5
      %v12004 = vrot.slane %v11751, 6
      %v12005 = vrot.slane %v11751, 7
      %v12006 = vrot.slane %v11756, 1
      %v12007 = vrot.slane %v11756, 2
      %v12008 = vrot.slane %v11756, 3
      %v12009 = vrot.slane %v11756, 4
      %v12010 = vrot.slane %v11756, 5
      %v12011 = vrot.slane %v11756, 6
      %v12012 = vrot.slane %v11756, 7
      %v12013 = vrot.slane %v11761, 1
      %v12014 = vrot.slane %v11761, 2
      %v12015 = vrot.slane %v11761, 3
      %v12016 = vrot.slane %v11761, 4
      %v12017 = vrot.slane %v11761, 5
      %v12018 = vrot.slane %v11761, 6
      %v12019 = vrot.slane %v11761, 7
      %v12276 = vadd.f32 %v9198, %v11606
      %v12277 = vadd.f32 %v9205, %v11796
      %v12278 = vadd.f32 %v9212, %v11797
      %v12279 = vadd.f32 %v9219, %v11798
      %v12280 = vadd.f32 %v9226, %v11799
      %v12281 = vadd.f32 %v9233, %v11800
      %v12282 = vadd.f32 %v9240, %v11801
      %v12283 = vadd.f32 %v9247, %v11802
      %v12284 = vadd.f32 %v9254, %v11611
      %v12285 = vadd.f32 %v9261, %v11803
      %v12286 = vadd.f32 %v9268, %v11804
      %v12287 = vadd.f32 %v9275, %v11805
      %v12288 = vadd.f32 %v9282, %v11806
      %v12289 = vadd.f32 %v9289, %v11807
      %v12290 = vadd.f32 %v9296, %v11808
      %v12291 = vadd.f32 %v9303, %v11809
      %v12292 = vadd.f32 %v9310, %v11616
      %v12293 = vadd.f32 %v9317, %v11810
      %v12294 = vadd.f32 %v9324, %v11811
      %v12295 = vadd.f32 %v9331, %v11812
      %v12296 = vadd.f32 %v9338, %v11813
      %v12297 = vadd.f32 %v9345, %v11814
      %v12298 = vadd.f32 %v9352, %v11815
      %v12299 = vadd.f32 %v9359, %v11816
      %v12300 = vadd.f32 %v9366, %v11621
      %v12301 = vadd.f32 %v9373, %v11817
      %v12302 = vadd.f32 %v9380, %v11818
      %v12303 = vadd.f32 %v9387, %v11819
      %v12304 = vadd.f32 %v9394, %v11820
      %v12305 = vadd.f32 %v9401, %v11821
      %v12306 = vadd.f32 %v9408, %v11822
      %v12307 = vadd.f32 %v9415, %v11823
      %v12308 = vadd.f32 %v9422, %v11626
      %v12309 = vadd.f32 %v9429, %v11824
      %v12310 = vadd.f32 %v9436, %v11825
      %v12311 = vadd.f32 %v9443, %v11826
      %v12312 = vadd.f32 %v9450, %v11827
      %v12313 = vadd.f32 %v9457, %v11828
      %v12314 = vadd.f32 %v9464, %v11829
      %v12315 = vadd.f32 %v9471, %v11830
      %v12316 = vadd.f32 %v9478, %v11631
      %v12317 = vadd.f32 %v9485, %v11831
      %v12318 = vadd.f32 %v9492, %v11832
      %v12319 = vadd.f32 %v9499, %v11833
      %v12320 = vadd.f32 %v9506, %v11834
      %v12321 = vadd.f32 %v9513, %v11835
      %v12322 = vadd.f32 %v9520, %v11836
      %v12323 = vadd.f32 %v9527, %v11837
      %v12324 = vadd.f32 %v9534, %v11636
      %v12325 = vadd.f32 %v9541, %v11838
      %v12326 = vadd.f32 %v9548, %v11839
      %v12327 = vadd.f32 %v9555, %v11840
      %v12328 = vadd.f32 %v9562, %v11841
      %v12329 = vadd.f32 %v9569, %v11842
      %v12330 = vadd.f32 %v9576, %v11843
      %v12331 = vadd.f32 %v9583, %v11844
      %v12332 = vadd.f32 %v9590, %v11641
      %v12333 = vadd.f32 %v9597, %v11845
      %v12334 = vadd.f32 %v9604, %v11846
      %v12335 = vadd.f32 %v9611, %v11847
      %v12336 = vadd.f32 %v9618, %v11848
      %v12337 = vadd.f32 %v9625, %v11849
      %v12338 = vadd.f32 %v9632, %v11850
      %v12339 = vadd.f32 %v9639, %v11851
      %v12340 = vadd.f32 %v9646, %v11646
      %v12341 = vadd.f32 %v9653, %v11852
      %v12342 = vadd.f32 %v9660, %v11853
      %v12343 = vadd.f32 %v9667, %v11854
      %v12344 = vadd.f32 %v9674, %v11855
      %v12345 = vadd.f32 %v9681, %v11856
      %v12346 = vadd.f32 %v9688, %v11857
      %v12347 = vadd.f32 %v9695, %v11858
      %v12348 = vadd.f32 %v9702, %v11651
      %v12349 = vadd.f32 %v9709, %v11859
      %v12350 = vadd.f32 %v9716, %v11860
      %v12351 = vadd.f32 %v9723, %v11861
      %v12352 = vadd.f32 %v9730, %v11862
      %v12353 = vadd.f32 %v9737, %v11863
      %v12354 = vadd.f32 %v9744, %v11864
      %v12355 = vadd.f32 %v9751, %v11865
      %v12356 = vadd.f32 %v9758, %v11656
      %v12357 = vadd.f32 %v9765, %v11866
      %v12358 = vadd.f32 %v9772, %v11867
      %v12359 = vadd.f32 %v9779, %v11868
      %v12360 = vadd.f32 %v9786, %v11869
      %v12361 = vadd.f32 %v9793, %v11870
      %v12362 = vadd.f32 %v9800, %v11871
      %v12363 = vadd.f32 %v9807, %v11872
      %v12364 = vadd.f32 %v9814, %v11661
      %v12365 = vadd.f32 %v9821, %v11873
      %v12366 = vadd.f32 %v9828, %v11874
      %v12367 = vadd.f32 %v9835, %v11875
      %v12368 = vadd.f32 %v9842, %v11876
      %v12369 = vadd.f32 %v9849, %v11877
      %v12370 = vadd.f32 %v9856, %v11878
      %v12371 = vadd.f32 %v9863, %v11879
      %v12372 = vadd.f32 %v9870, %v11666
      %v12373 = vadd.f32 %v9877, %v11880
      %v12374 = vadd.f32 %v9884, %v11881
      %v12375 = vadd.f32 %v9891, %v11882
      %v12376 = vadd.f32 %v9898, %v11883
      %v12377 = vadd.f32 %v9905, %v11884
      %v12378 = vadd.f32 %v9912, %v11885
      %v12379 = vadd.f32 %v9919, %v11886
      %v12380 = vadd.f32 %v9926, %v11671
      %v12381 = vadd.f32 %v9933, %v11887
      %v12382 = vadd.f32 %v9940, %v11888
      %v12383 = vadd.f32 %v9947, %v11889
      %v12384 = vadd.f32 %v9954, %v11890
      %v12385 = vadd.f32 %v9961, %v11891
      %v12386 = vadd.f32 %v9968, %v11892
      %v12387 = vadd.f32 %v9975, %v11893
      %v12388 = vadd.f32 %v9982, %v11676
      %v12389 = vadd.f32 %v9989, %v11894
      %v12390 = vadd.f32 %v9996, %v11895
      %v12391 = vadd.f32 %v10003, %v11896
      %v12392 = vadd.f32 %v10010, %v11897
      %v12393 = vadd.f32 %v10017, %v11898
      %v12394 = vadd.f32 %v10024, %v11899
      %v12395 = vadd.f32 %v10031, %v11900
      %v12396 = vadd.f32 %v10038, %v11681
      %v12397 = vadd.f32 %v10045, %v11901
      %v12398 = vadd.f32 %v10052, %v11902
      %v12399 = vadd.f32 %v10059, %v11903
      %v12400 = vadd.f32 %v10066, %v11904
      %v12401 = vadd.f32 %v10073, %v11905
      %v12402 = vadd.f32 %v10080, %v11906
      %v12403 = vadd.f32 %v10087, %v11907
      %v12404 = vadd.f32 %v10094, %v11686
      %v12405 = vadd.f32 %v10101, %v11908
      %v12406 = vadd.f32 %v10108, %v11909
      %v12407 = vadd.f32 %v10115, %v11910
      %v12408 = vadd.f32 %v10122, %v11911
      %v12409 = vadd.f32 %v10129, %v11912
      %v12410 = vadd.f32 %v10136, %v11913
      %v12411 = vadd.f32 %v10143, %v11914
      %v12412 = vadd.f32 %v10150, %v11691
      %v12413 = vadd.f32 %v10157, %v11915
      %v12414 = vadd.f32 %v10164, %v11916
      %v12415 = vadd.f32 %v10171, %v11917
      %v12416 = vadd.f32 %v10178, %v11918
      %v12417 = vadd.f32 %v10185, %v11919
      %v12418 = vadd.f32 %v10192, %v11920
      %v12419 = vadd.f32 %v10199, %v11921
      %v12420 = vadd.f32 %v10206, %v11696
      %v12421 = vadd.f32 %v10213, %v11922
      %v12422 = vadd.f32 %v10220, %v11923
      %v12423 = vadd.f32 %v10227, %v11924
      %v12424 = vadd.f32 %v10234, %v11925
      %v12425 = vadd.f32 %v10241, %v11926
      %v12426 = vadd.f32 %v10248, %v11927
      %v12427 = vadd.f32 %v10255, %v11928
      %v12428 = vadd.f32 %v10262, %v11701
      %v12429 = vadd.f32 %v10269, %v11929
      %v12430 = vadd.f32 %v10276, %v11930
      %v12431 = vadd.f32 %v10283, %v11931
      %v12432 = vadd.f32 %v10290, %v11932
      %v12433 = vadd.f32 %v10297, %v11933
      %v12434 = vadd.f32 %v10304, %v11934
      %v12435 = vadd.f32 %v10311, %v11935
      %v12436 = vadd.f32 %v10318, %v11706
      %v12437 = vadd.f32 %v10325, %v11936
      %v12438 = vadd.f32 %v10332, %v11937
      %v12439 = vadd.f32 %v10339, %v11938
      %v12440 = vadd.f32 %v10346, %v11939
      %v12441 = vadd.f32 %v10353, %v11940
      %v12442 = vadd.f32 %v10360, %v11941
      %v12443 = vadd.f32 %v10367, %v11942
      %v12444 = vadd.f32 %v10374, %v11711
      %v12445 = vadd.f32 %v10381, %v11943
      %v12446 = vadd.f32 %v10388, %v11944
      %v12447 = vadd.f32 %v10395, %v11945
      %v12448 = vadd.f32 %v10402, %v11946
      %v12449 = vadd.f32 %v10409, %v11947
      %v12450 = vadd.f32 %v10416, %v11948
      %v12451 = vadd.f32 %v10423, %v11949
      %v12452 = vadd.f32 %v10430, %v11716
      %v12453 = vadd.f32 %v10437, %v11950
      %v12454 = vadd.f32 %v10444, %v11951
      %v12455 = vadd.f32 %v10451, %v11952
      %v12456 = vadd.f32 %v10458, %v11953
      %v12457 = vadd.f32 %v10465, %v11954
      %v12458 = vadd.f32 %v10472, %v11955
      %v12459 = vadd.f32 %v10479, %v11956
      %v12460 = vadd.f32 %v10486, %v11721
      %v12461 = vadd.f32 %v10493, %v11957
      %v12462 = vadd.f32 %v10500, %v11958
      %v12463 = vadd.f32 %v10507, %v11959
      %v12464 = vadd.f32 %v10514, %v11960
      %v12465 = vadd.f32 %v10521, %v11961
      %v12466 = vadd.f32 %v10528, %v11962
      %v12467 = vadd.f32 %v10535, %v11963
      %v12468 = vadd.f32 %v10542, %v11726
      %v12469 = vadd.f32 %v10549, %v11964
      %v12470 = vadd.f32 %v10556, %v11965
      %v12471 = vadd.f32 %v10563, %v11966
      %v12472 = vadd.f32 %v10570, %v11967
      %v12473 = vadd.f32 %v10577, %v11968
      %v12474 = vadd.f32 %v10584, %v11969
      %v12475 = vadd.f32 %v10591, %v11970
      %v12476 = vadd.f32 %v10598, %v11731
      %v12477 = vadd.f32 %v10605, %v11971
      %v12478 = vadd.f32 %v10612, %v11972
      %v12479 = vadd.f32 %v10619, %v11973
      %v12480 = vadd.f32 %v10626, %v11974
      %v12481 = vadd.f32 %v10633, %v11975
      %v12482 = vadd.f32 %v10640, %v11976
      %v12483 = vadd.f32 %v10647, %v11977
      %v12484 = vadd.f32 %v10654, %v11736
      %v12485 = vadd.f32 %v10661, %v11978
      %v12486 = vadd.f32 %v10668, %v11979
      %v12487 = vadd.f32 %v10675, %v11980
      %v12488 = vadd.f32 %v10682, %v11981
      %v12489 = vadd.f32 %v10689, %v11982
      %v12490 = vadd.f32 %v10696, %v11983
      %v12491 = vadd.f32 %v10703, %v11984
      %v12492 = vadd.f32 %v10710, %v11741
      %v12493 = vadd.f32 %v10717, %v11985
      %v12494 = vadd.f32 %v10724, %v11986
      %v12495 = vadd.f32 %v10731, %v11987
      %v12496 = vadd.f32 %v10738, %v11988
      %v12497 = vadd.f32 %v10745, %v11989
      %v12498 = vadd.f32 %v10752, %v11990
      %v12499 = vadd.f32 %v10759, %v11991
      %v12500 = vadd.f32 %v10766, %v11746
      %v12501 = vadd.f32 %v10773, %v11992
      %v12502 = vadd.f32 %v10780, %v11993
      %v12503 = vadd.f32 %v10787, %v11994
      %v12504 = vadd.f32 %v10794, %v11995
      %v12505 = vadd.f32 %v10801, %v11996
      %v12506 = vadd.f32 %v10808, %v11997
      %v12507 = vadd.f32 %v10815, %v11998
      %v12508 = vadd.f32 %v10822, %v11751
      %v12509 = vadd.f32 %v10829, %v11999
      %v12510 = vadd.f32 %v10836, %v12000
      %v12511 = vadd.f32 %v10843, %v12001
      %v12512 = vadd.f32 %v10850, %v12002
      %v12513 = vadd.f32 %v10857, %v12003
      %v12514 = vadd.f32 %v10864, %v12004
      %v12515 = vadd.f32 %v10871, %v12005
      %v12516 = vadd.f32 %v10878, %v11756
      %v12517 = vadd.f32 %v10885, %v12006
      %v12518 = vadd.f32 %v10892, %v12007
      %v12519 = vadd.f32 %v10899, %v12008
      %v12520 = vadd.f32 %v10906, %v12009
      %v12521 = vadd.f32 %v10913, %v12010
      %v12522 = vadd.f32 %v10920, %v12011
      %v12523 = vadd.f32 %v10927, %v12012
      %v12524 = vadd.f32 %v10934, %v11761
      %v12525 = vadd.f32 %v10941, %v12013
      %v12526 = vadd.f32 %v10948, %v12014
      %v12527 = vadd.f32 %v10955, %v12015
      %v12528 = vadd.f32 %v10962, %v12016
      %v12529 = vadd.f32 %v10969, %v12017
      %v12530 = vadd.f32 %v10976, %v12018
      %v12531 = vadd.f32 %v10983, %v12019
      %v12532 = vld [vmem:[%s6] sm:$0x1]
      %v12534 = vlaneseq
      %v12535 = vshrl.u32 %v12534, 7
      %v12536 = vsub.s32 0, %v12535
      %v12537 = vrot.slane %v12532, %v12536
      %v12539 = vadd.f32 %v12276, %v12537
      %v12540 = vadd.f32 %v12277, %v12537
      %v12541 = vadd.f32 %v12278, %v12537
      %v12542 = vadd.f32 %v12279, %v12537
      %v12543 = vadd.f32 %v12280, %v12537
      %v12544 = vadd.f32 %v12281, %v12537
      %v12545 = vadd.f32 %v12282, %v12537
      %v12546 = vadd.f32 %v12283, %v12537
      %v12547 = vadd.f32 %v12284, %v12537
      %v12548 = vadd.f32 %v12285, %v12537
      %v12549 = vadd.f32 %v12286, %v12537
      %v12550 = vadd.f32 %v12287, %v12537
      %v12551 = vadd.f32 %v12288, %v12537
      %v12552 = vadd.f32 %v12289, %v12537
      %v12553 = vadd.f32 %v12290, %v12537
      %v12554 = vadd.f32 %v12291, %v12537
      %v12555 = vadd.f32 %v12292, %v12537
      %v12556 = vadd.f32 %v12293, %v12537
      %v12557 = vadd.f32 %v12294, %v12537
      %v12558 = vadd.f32 %v12295, %v12537
      %v12559 = vadd.f32 %v12296, %v12537
      %v12560 = vadd.f32 %v12297, %v12537
      %v12561 = vadd.f32 %v12298, %v12537
      %v12562 = vadd.f32 %v12299, %v12537
      %v12563 = vadd.f32 %v12300, %v12537
      %v12564 = vadd.f32 %v12301, %v12537
      %v12565 = vadd.f32 %v12302, %v12537
      %v12566 = vadd.f32 %v12303, %v12537
      %v12567 = vadd.f32 %v12304, %v12537
      %v12568 = vadd.f32 %v12305, %v12537
      %v12569 = vadd.f32 %v12306, %v12537
      %v12570 = vadd.f32 %v12307, %v12537
      %v12571 = vadd.f32 %v12308, %v12537
      %v12572 = vadd.f32 %v12309, %v12537
      %v12573 = vadd.f32 %v12310, %v12537
      %v12574 = vadd.f32 %v12311, %v12537
      %v12575 = vadd.f32 %v12312, %v12537
      %v12576 = vadd.f32 %v12313, %v12537
      %v12577 = vadd.f32 %v12314, %v12537
      %v12578 = vadd.f32 %v12315, %v12537
      %v12579 = vadd.f32 %v12316, %v12537
      %v12580 = vadd.f32 %v12317, %v12537
      %v12581 = vadd.f32 %v12318, %v12537
      %v12582 = vadd.f32 %v12319, %v12537
      %v12583 = vadd.f32 %v12320, %v12537
      %v12584 = vadd.f32 %v12321, %v12537
      %v12585 = vadd.f32 %v12322, %v12537
      %v12586 = vadd.f32 %v12323, %v12537
      %v12587 = vadd.f32 %v12324, %v12537
      %v12588 = vadd.f32 %v12325, %v12537
      %v12589 = vadd.f32 %v12326, %v12537
      %v12590 = vadd.f32 %v12327, %v12537
      %v12591 = vadd.f32 %v12328, %v12537
      %v12592 = vadd.f32 %v12329, %v12537
      %v12593 = vadd.f32 %v12330, %v12537
      %v12594 = vadd.f32 %v12331, %v12537
      %v12595 = vadd.f32 %v12332, %v12537
      %v12596 = vadd.f32 %v12333, %v12537
      %v12597 = vadd.f32 %v12334, %v12537
      %v12598 = vadd.f32 %v12335, %v12537
      %v12599 = vadd.f32 %v12336, %v12537
      %v12600 = vadd.f32 %v12337, %v12537
      %v12601 = vadd.f32 %v12338, %v12537
      %v12602 = vadd.f32 %v12339, %v12537
      %v12603 = vadd.f32 %v12340, %v12537
      %v12604 = vadd.f32 %v12341, %v12537
      %v12605 = vadd.f32 %v12342, %v12537
      %v12606 = vadd.f32 %v12343, %v12537
      %v12607 = vadd.f32 %v12344, %v12537
      %v12608 = vadd.f32 %v12345, %v12537
      %v12609 = vadd.f32 %v12346, %v12537
      %v12610 = vadd.f32 %v12347, %v12537
      %v12611 = vadd.f32 %v12348, %v12537
      %v12612 = vadd.f32 %v12349, %v12537
      %v12613 = vadd.f32 %v12350, %v12537
      %v12614 = vadd.f32 %v12351, %v12537
      %v12615 = vadd.f32 %v12352, %v12537
      %v12616 = vadd.f32 %v12353, %v12537
      %v12617 = vadd.f32 %v12354, %v12537
      %v12618 = vadd.f32 %v12355, %v12537
      %v12619 = vadd.f32 %v12356, %v12537
      %v12620 = vadd.f32 %v12357, %v12537
      %v12621 = vadd.f32 %v12358, %v12537
      %v12622 = vadd.f32 %v12359, %v12537
      %v12623 = vadd.f32 %v12360, %v12537
      %v12624 = vadd.f32 %v12361, %v12537
      %v12625 = vadd.f32 %v12362, %v12537
      %v12626 = vadd.f32 %v12363, %v12537
      %v12627 = vadd.f32 %v12364, %v12537
      %v12628 = vadd.f32 %v12365, %v12537
      %v12629 = vadd.f32 %v12366, %v12537
      %v12630 = vadd.f32 %v12367, %v12537
      %v12631 = vadd.f32 %v12368, %v12537
      %v12632 = vadd.f32 %v12369, %v12537
      %v12633 = vadd.f32 %v12370, %v12537
      %v12634 = vadd.f32 %v12371, %v12537
      %v12635 = vadd.f32 %v12372, %v12537
      %v12636 = vadd.f32 %v12373, %v12537
      %v12637 = vadd.f32 %v12374, %v12537
      %v12638 = vadd.f32 %v12375, %v12537
      %v12639 = vadd.f32 %v12376, %v12537
      %v12640 = vadd.f32 %v12377, %v12537
      %v12641 = vadd.f32 %v12378, %v12537
      %v12642 = vadd.f32 %v12379, %v12537
      %v12643 = vadd.f32 %v12380, %v12537
      %v12644 = vadd.f32 %v12381, %v12537
      %v12645 = vadd.f32 %v12382, %v12537
      %v12646 = vadd.f32 %v12383, %v12537
      %v12647 = vadd.f32 %v12384, %v12537
      %v12648 = vadd.f32 %v12385, %v12537
      %v12649 = vadd.f32 %v12386, %v12537
      %v12650 = vadd.f32 %v12387, %v12537
      %v12651 = vadd.f32 %v12388, %v12537
      %v12652 = vadd.f32 %v12389, %v12537
      %v12653 = vadd.f32 %v12390, %v12537
      %v12654 = vadd.f32 %v12391, %v12537
      %v12655 = vadd.f32 %v12392, %v12537
      %v12656 = vadd.f32 %v12393, %v12537
      %v12657 = vadd.f32 %v12394, %v12537
      %v12658 = vadd.f32 %v12395, %v12537
      %v12659 = vadd.f32 %v12396, %v12537
      %v12660 = vadd.f32 %v12397, %v12537
      %v12661 = vadd.f32 %v12398, %v12537
      %v12662 = vadd.f32 %v12399, %v12537
      %v12663 = vadd.f32 %v12400, %v12537
      %v12664 = vadd.f32 %v12401, %v12537
      %v12665 = vadd.f32 %v12402, %v12537
      %v12666 = vadd.f32 %v12403, %v12537
      %v12667 = vadd.f32 %v12404, %v12537
      %v12668 = vadd.f32 %v12405, %v12537
      %v12669 = vadd.f32 %v12406, %v12537
      %v12670 = vadd.f32 %v12407, %v12537
      %v12671 = vadd.f32 %v12408, %v12537
      %v12672 = vadd.f32 %v12409, %v12537
      %v12673 = vadd.f32 %v12410, %v12537
      %v12674 = vadd.f32 %v12411, %v12537
      %v12675 = vadd.f32 %v12412, %v12537
      %v12676 = vadd.f32 %v12413, %v12537
      %v12677 = vadd.f32 %v12414, %v12537
      %v12678 = vadd.f32 %v12415, %v12537
      %v12679 = vadd.f32 %v12416, %v12537
      %v12680 = vadd.f32 %v12417, %v12537
      %v12681 = vadd.f32 %v12418, %v12537
      %v12682 = vadd.f32 %v12419, %v12537
      %v12683 = vadd.f32 %v12420, %v12537
      %v12684 = vadd.f32 %v12421, %v12537
      %v12685 = vadd.f32 %v12422, %v12537
      %v12686 = vadd.f32 %v12423, %v12537
      %v12687 = vadd.f32 %v12424, %v12537
      %v12688 = vadd.f32 %v12425, %v12537
      %v12689 = vadd.f32 %v12426, %v12537
      %v12690 = vadd.f32 %v12427, %v12537
      %v12691 = vadd.f32 %v12428, %v12537
      %v12692 = vadd.f32 %v12429, %v12537
      %v12693 = vadd.f32 %v12430, %v12537
      %v12694 = vadd.f32 %v12431, %v12537
      %v12695 = vadd.f32 %v12432, %v12537
      %v12696 = vadd.f32 %v12433, %v12537
      %v12697 = vadd.f32 %v12434, %v12537
      %v12698 = vadd.f32 %v12435, %v12537
      %v12699 = vadd.f32 %v12436, %v12537
      %v12700 = vadd.f32 %v12437, %v12537
      %v12701 = vadd.f32 %v12438, %v12537
      %v12702 = vadd.f32 %v12439, %v12537
      %v12703 = vadd.f32 %v12440, %v12537
      %v12704 = vadd.f32 %v12441, %v12537
      %v12705 = vadd.f32 %v12442, %v12537
      %v12706 = vadd.f32 %v12443, %v12537
      %v12707 = vadd.f32 %v12444, %v12537
      %v12708 = vadd.f32 %v12445, %v12537
      %v12709 = vadd.f32 %v12446, %v12537
      %v12710 = vadd.f32 %v12447, %v12537
      %v12711 = vadd.f32 %v12448, %v12537
      %v12712 = vadd.f32 %v12449, %v12537
      %v12713 = vadd.f32 %v12450, %v12537
      %v12714 = vadd.f32 %v12451, %v12537
      %v12715 = vadd.f32 %v12452, %v12537
      %v12716 = vadd.f32 %v12453, %v12537
      %v12717 = vadd.f32 %v12454, %v12537
      %v12718 = vadd.f32 %v12455, %v12537
      %v12719 = vadd.f32 %v12456, %v12537
      %v12720 = vadd.f32 %v12457, %v12537
      %v12721 = vadd.f32 %v12458, %v12537
      %v12722 = vadd.f32 %v12459, %v12537
      %v12723 = vadd.f32 %v12460, %v12537
      %v12724 = vadd.f32 %v12461, %v12537
      %v12725 = vadd.f32 %v12462, %v12537
      %v12726 = vadd.f32 %v12463, %v12537
      %v12727 = vadd.f32 %v12464, %v12537
      %v12728 = vadd.f32 %v12465, %v12537
      %v12729 = vadd.f32 %v12466, %v12537
      %v12730 = vadd.f32 %v12467, %v12537
      %v12731 = vadd.f32 %v12468, %v12537
      %v12732 = vadd.f32 %v12469, %v12537
      %v12733 = vadd.f32 %v12470, %v12537
      %v12734 = vadd.f32 %v12471, %v12537
      %v12735 = vadd.f32 %v12472, %v12537
      %v12736 = vadd.f32 %v12473, %v12537
      %v12737 = vadd.f32 %v12474, %v12537
      %v12738 = vadd.f32 %v12475, %v12537
      %v12739 = vadd.f32 %v12476, %v12537
      %v12740 = vadd.f32 %v12477, %v12537
      %v12741 = vadd.f32 %v12478, %v12537
      %v12742 = vadd.f32 %v12479, %v12537
      %v12743 = vadd.f32 %v12480, %v12537
      %v12744 = vadd.f32 %v12481, %v12537
      %v12745 = vadd.f32 %v12482, %v12537
      %v12746 = vadd.f32 %v12483, %v12537
      %v12747 = vadd.f32 %v12484, %v12537
      %v12748 = vadd.f32 %v12485, %v12537
      %v12749 = vadd.f32 %v12486, %v12537
      %v12750 = vadd.f32 %v12487, %v12537
      %v12751 = vadd.f32 %v12488, %v12537
      %v12752 = vadd.f32 %v12489, %v12537
      %v12753 = vadd.f32 %v12490, %v12537
      %v12754 = vadd.f32 %v12491, %v12537
      %v12755 = vadd.f32 %v12492, %v12537
      %v12756 = vadd.f32 %v12493, %v12537
      %v12757 = vadd.f32 %v12494, %v12537
      %v12758 = vadd.f32 %v12495, %v12537
      %v12759 = vadd.f32 %v12496, %v12537
      %v12760 = vadd.f32 %v12497, %v12537
      %v12761 = vadd.f32 %v12498, %v12537
      %v12762 = vadd.f32 %v12499, %v12537
      %v12763 = vadd.f32 %v12500, %v12537
      %v12764 = vadd.f32 %v12501, %v12537
      %v12765 = vadd.f32 %v12502, %v12537
      %v12766 = vadd.f32 %v12503, %v12537
      %v12767 = vadd.f32 %v12504, %v12537
      %v12768 = vadd.f32 %v12505, %v12537
      %v12769 = vadd.f32 %v12506, %v12537
      %v12770 = vadd.f32 %v12507, %v12537
      %v12771 = vadd.f32 %v12508, %v12537
      %v12772 = vadd.f32 %v12509, %v12537
      %v12773 = vadd.f32 %v12510, %v12537
      %v12774 = vadd.f32 %v12511, %v12537
      %v12775 = vadd.f32 %v12512, %v12537
      %v12776 = vadd.f32 %v12513, %v12537
      %v12777 = vadd.f32 %v12514, %v12537
      %v12778 = vadd.f32 %v12515, %v12537
      %v12779 = vadd.f32 %v12516, %v12537
      %v12780 = vadd.f32 %v12517, %v12537
      %v12781 = vadd.f32 %v12518, %v12537
      %v12782 = vadd.f32 %v12519, %v12537
      %v12783 = vadd.f32 %v12520, %v12537
      %v12784 = vadd.f32 %v12521, %v12537
      %v12785 = vadd.f32 %v12522, %v12537
      %v12786 = vadd.f32 %v12523, %v12537
      %v12787 = vadd.f32 %v12524, %v12537
      %v12788 = vadd.f32 %v12525, %v12537
      %v12789 = vadd.f32 %v12526, %v12537
      %v12790 = vadd.f32 %v12527, %v12537
      %v12791 = vadd.f32 %v12528, %v12537
      %v12792 = vadd.f32 %v12529, %v12537
      %v12793 = vadd.f32 %v12530, %v12537
      %v12794 = vadd.f32 %v12531, %v12537
      %v12795 = vmax.f32 %v12539, 0.0
      %v12796 = vmax.f32 %v12540, 0.0
      %v12797 = vmax.f32 %v12541, 0.0
      %v12798 = vmax.f32 %v12542, 0.0
      %v12799 = vmax.f32 %v12543, 0.0
      %v12800 = vmax.f32 %v12544, 0.0
      %v12801 = vmax.f32 %v12545, 0.0
      %v12802 = vmax.f32 %v12546, 0.0
      %v12803 = vmax.f32 %v12547, 0.0
      %v12804 = vmax.f32 %v12548, 0.0
      %v12805 = vmax.f32 %v12549, 0.0
      %v12806 = vmax.f32 %v12550, 0.0
      %v12807 = vmax.f32 %v12551, 0.0
      %v12808 = vmax.f32 %v12552, 0.0
      %v12809 = vmax.f32 %v12553, 0.0
      %v12810 = vmax.f32 %v12554, 0.0
      %v12811 = vmax.f32 %v12555, 0.0
      %v12812 = vmax.f32 %v12556, 0.0
      %v12813 = vmax.f32 %v12557, 0.0
      %v12814 = vmax.f32 %v12558, 0.0
      %v12815 = vmax.f32 %v12559, 0.0
      %v12816 = vmax.f32 %v12560, 0.0
      %v12817 = vmax.f32 %v12561, 0.0
      %v12818 = vmax.f32 %v12562, 0.0
      %v12819 = vmax.f32 %v12563, 0.0
      %v12820 = vmax.f32 %v12564, 0.0
      %v12821 = vmax.f32 %v12565, 0.0
      %v12822 = vmax.f32 %v12566, 0.0
      %v12823 = vmax.f32 %v12567, 0.0
      %v12824 = vmax.f32 %v12568, 0.0
      %v12825 = vmax.f32 %v12569, 0.0
      %v12826 = vmax.f32 %v12570, 0.0
      %v12827 = vmax.f32 %v12571, 0.0
      %v12828 = vmax.f32 %v12572, 0.0
      %v12829 = vmax.f32 %v12573, 0.0
      %v12830 = vmax.f32 %v12574, 0.0
      %v12831 = vmax.f32 %v12575, 0.0
      %v12832 = vmax.f32 %v12576, 0.0
      %v12833 = vmax.f32 %v12577, 0.0
      %v12834 = vmax.f32 %v12578, 0.0
      %v12835 = vmax.f32 %v12579, 0.0
      %v12836 = vmax.f32 %v12580, 0.0
      %v12837 = vmax.f32 %v12581, 0.0
      %v12838 = vmax.f32 %v12582, 0.0
      %v12839 = vmax.f32 %v12583, 0.0
      %v12840 = vmax.f32 %v12584, 0.0
      %v12841 = vmax.f32 %v12585, 0.0
      %v12842 = vmax.f32 %v12586, 0.0
      %v12843 = vmax.f32 %v12587, 0.0
      %v12844 = vmax.f32 %v12588, 0.0
      %v12845 = vmax.f32 %v12589, 0.0
      %v12846 = vmax.f32 %v12590, 0.0
      %v12847 = vmax.f32 %v12591, 0.0
      %v12848 = vmax.f32 %v12592, 0.0
      %v12849 = vmax.f32 %v12593, 0.0
      %v12850 = vmax.f32 %v12594, 0.0
      %v12851 = vmax.f32 %v12595, 0.0
      %v12852 = vmax.f32 %v12596, 0.0
      %v12853 = vmax.f32 %v12597, 0.0
      %v12854 = vmax.f32 %v12598, 0.0
      %v12855 = vmax.f32 %v12599, 0.0
      %v12856 = vmax.f32 %v12600, 0.0
      %v12857 = vmax.f32 %v12601, 0.0
      %v12858 = vmax.f32 %v12602, 0.0
      %v12859 = vmax.f32 %v12603, 0.0
      %v12860 = vmax.f32 %v12604, 0.0
      %v12861 = vmax.f32 %v12605, 0.0
      %v12862 = vmax.f32 %v12606, 0.0
      %v12863 = vmax.f32 %v12607, 0.0
      %v12864 = vmax.f32 %v12608, 0.0
      %v12865 = vmax.f32 %v12609, 0.0
      %v12866 = vmax.f32 %v12610, 0.0
      %v12867 = vmax.f32 %v12611, 0.0
      %v12868 = vmax.f32 %v12612, 0.0
      %v12869 = vmax.f32 %v12613, 0.0
      %v12870 = vmax.f32 %v12614, 0.0
      %v12871 = vmax.f32 %v12615, 0.0
      %v12872 = vmax.f32 %v12616, 0.0
      %v12873 = vmax.f32 %v12617, 0.0
      %v12874 = vmax.f32 %v12618, 0.0
      %v12875 = vmax.f32 %v12619, 0.0
      %v12876 = vmax.f32 %v12620, 0.0
      %v12877 = vmax.f32 %v12621, 0.0
      %v12878 = vmax.f32 %v12622, 0.0
      %v12879 = vmax.f32 %v12623, 0.0
      %v12880 = vmax.f32 %v12624, 0.0
      %v12881 = vmax.f32 %v12625, 0.0
      %v12882 = vmax.f32 %v12626, 0.0
      %v12883 = vmax.f32 %v12627, 0.0
      %v12884 = vmax.f32 %v12628, 0.0
      %v12885 = vmax.f32 %v12629, 0.0
      %v12886 = vmax.f32 %v12630, 0.0
      %v12887 = vmax.f32 %v12631, 0.0
      %v12888 = vmax.f32 %v12632, 0.0
      %v12889 = vmax.f32 %v12633, 0.0
      %v12890 = vmax.f32 %v12634, 0.0
      %v12891 = vmax.f32 %v12635, 0.0
      %v12892 = vmax.f32 %v12636, 0.0
      %v12893 = vmax.f32 %v12637, 0.0
      %v12894 = vmax.f32 %v12638, 0.0
      %v12895 = vmax.f32 %v12639, 0.0
      %v12896 = vmax.f32 %v12640, 0.0
      %v12897 = vmax.f32 %v12641, 0.0
      %v12898 = vmax.f32 %v12642, 0.0
      %v12899 = vmax.f32 %v12643, 0.0
      %v12900 = vmax.f32 %v12644, 0.0
      %v12901 = vmax.f32 %v12645, 0.0
      %v12902 = vmax.f32 %v12646, 0.0
      %v12903 = vmax.f32 %v12647, 0.0
      %v12904 = vmax.f32 %v12648, 0.0
      %v12905 = vmax.f32 %v12649, 0.0
      %v12906 = vmax.f32 %v12650, 0.0
      %v12907 = vmax.f32 %v12651, 0.0
      %v12908 = vmax.f32 %v12652, 0.0
      %v12909 = vmax.f32 %v12653, 0.0
      %v12910 = vmax.f32 %v12654, 0.0
      %v12911 = vmax.f32 %v12655, 0.0
      %v12912 = vmax.f32 %v12656, 0.0
      %v12913 = vmax.f32 %v12657, 0.0
      %v12914 = vmax.f32 %v12658, 0.0
      %v12915 = vmax.f32 %v12659, 0.0
      %v12916 = vmax.f32 %v12660, 0.0
      %v12917 = vmax.f32 %v12661, 0.0
      %v12918 = vmax.f32 %v12662, 0.0
      %v12919 = vmax.f32 %v12663, 0.0
      %v12920 = vmax.f32 %v12664, 0.0
      %v12921 = vmax.f32 %v12665, 0.0
      %v12922 = vmax.f32 %v12666, 0.0
      %v12923 = vmax.f32 %v12667, 0.0
      %v12924 = vmax.f32 %v12668, 0.0
      %v12925 = vmax.f32 %v12669, 0.0
      %v12926 = vmax.f32 %v12670, 0.0
      %v12927 = vmax.f32 %v12671, 0.0
      %v12928 = vmax.f32 %v12672, 0.0
      %v12929 = vmax.f32 %v12673, 0.0
      %v12930 = vmax.f32 %v12674, 0.0
      %v12931 = vmax.f32 %v12675, 0.0
      %v12932 = vmax.f32 %v12676, 0.0
      %v12933 = vmax.f32 %v12677, 0.0
      %v12934 = vmax.f32 %v12678, 0.0
      %v12935 = vmax.f32 %v12679, 0.0
      %v12936 = vmax.f32 %v12680, 0.0
      %v12937 = vmax.f32 %v12681, 0.0
      %v12938 = vmax.f32 %v12682, 0.0
      %v12939 = vmax.f32 %v12683, 0.0
      %v12940 = vmax.f32 %v12684, 0.0
      %v12941 = vmax.f32 %v12685, 0.0
      %v12942 = vmax.f32 %v12686, 0.0
      %v12943 = vmax.f32 %v12687, 0.0
      %v12944 = vmax.f32 %v12688, 0.0
      %v12945 = vmax.f32 %v12689, 0.0
      %v12946 = vmax.f32 %v12690, 0.0
      %v12947 = vmax.f32 %v12691, 0.0
      %v12948 = vmax.f32 %v12692, 0.0
      %v12949 = vmax.f32 %v12693, 0.0
      %v12950 = vmax.f32 %v12694, 0.0
      %v12951 = vmax.f32 %v12695, 0.0
      %v12952 = vmax.f32 %v12696, 0.0
      %v12953 = vmax.f32 %v12697, 0.0
      %v12954 = vmax.f32 %v12698, 0.0
      %v12955 = vmax.f32 %v12699, 0.0
      %v12956 = vmax.f32 %v12700, 0.0
      %v12957 = vmax.f32 %v12701, 0.0
      %v12958 = vmax.f32 %v12702, 0.0
      %v12959 = vmax.f32 %v12703, 0.0
      %v12960 = vmax.f32 %v12704, 0.0
      %v12961 = vmax.f32 %v12705, 0.0
      %v12962 = vmax.f32 %v12706, 0.0
      %v12963 = vmax.f32 %v12707, 0.0
      %v12964 = vmax.f32 %v12708, 0.0
      %v12965 = vmax.f32 %v12709, 0.0
      %v12966 = vmax.f32 %v12710, 0.0
      %v12967 = vmax.f32 %v12711, 0.0
      %v12968 = vmax.f32 %v12712, 0.0
      %v12969 = vmax.f32 %v12713, 0.0
      %v12970 = vmax.f32 %v12714, 0.0
      %v12971 = vmax.f32 %v12715, 0.0
      %v12972 = vmax.f32 %v12716, 0.0
      %v12973 = vmax.f32 %v12717, 0.0
      %v12974 = vmax.f32 %v12718, 0.0
      %v12975 = vmax.f32 %v12719, 0.0
      %v12976 = vmax.f32 %v12720, 0.0
      %v12977 = vmax.f32 %v12721, 0.0
      %v12978 = vmax.f32 %v12722, 0.0
      %v12979 = vmax.f32 %v12723, 0.0
      %v12980 = vmax.f32 %v12724, 0.0
      %v12981 = vmax.f32 %v12725, 0.0
      %v12982 = vmax.f32 %v12726, 0.0
      %v12983 = vmax.f32 %v12727, 0.0
      %v12984 = vmax.f32 %v12728, 0.0
      %v12985 = vmax.f32 %v12729, 0.0
      %v12986 = vmax.f32 %v12730, 0.0
      %v12987 = vmax.f32 %v12731, 0.0
      %v12988 = vmax.f32 %v12732, 0.0
      %v12989 = vmax.f32 %v12733, 0.0
      %v12990 = vmax.f32 %v12734, 0.0
      %v12991 = vmax.f32 %v12735, 0.0
      %v12992 = vmax.f32 %v12736, 0.0
      %v12993 = vmax.f32 %v12737, 0.0
      %v12994 = vmax.f32 %v12738, 0.0
      %v12995 = vmax.f32 %v12739, 0.0
      %v12996 = vmax.f32 %v12740, 0.0
      %v12997 = vmax.f32 %v12741, 0.0
      %v12998 = vmax.f32 %v12742, 0.0
      %v12999 = vmax.f32 %v12743, 0.0
      %v13000 = vmax.f32 %v12744, 0.0
      %v13001 = vmax.f32 %v12745, 0.0
      %v13002 = vmax.f32 %v12746, 0.0
      %v13003 = vmax.f32 %v12747, 0.0
      %v13004 = vmax.f32 %v12748, 0.0
      %v13005 = vmax.f32 %v12749, 0.0
      %v13006 = vmax.f32 %v12750, 0.0
      %v13007 = vmax.f32 %v12751, 0.0
      %v13008 = vmax.f32 %v12752, 0.0
      %v13009 = vmax.f32 %v12753, 0.0
      %v13010 = vmax.f32 %v12754, 0.0
      %v13011 = vmax.f32 %v12755, 0.0
      %v13012 = vmax.f32 %v12756, 0.0
      %v13013 = vmax.f32 %v12757, 0.0
      %v13014 = vmax.f32 %v12758, 0.0
      %v13015 = vmax.f32 %v12759, 0.0
      %v13016 = vmax.f32 %v12760, 0.0
      %v13017 = vmax.f32 %v12761, 0.0
      %v13018 = vmax.f32 %v12762, 0.0
      %v13019 = vmax.f32 %v12763, 0.0
      %v13020 = vmax.f32 %v12764, 0.0
      %v13021 = vmax.f32 %v12765, 0.0
      %v13022 = vmax.f32 %v12766, 0.0
      %v13023 = vmax.f32 %v12767, 0.0
      %v13024 = vmax.f32 %v12768, 0.0
      %v13025 = vmax.f32 %v12769, 0.0
      %v13026 = vmax.f32 %v12770, 0.0
      %v13027 = vmax.f32 %v12771, 0.0
      %v13028 = vmax.f32 %v12772, 0.0
      %v13029 = vmax.f32 %v12773, 0.0
      %v13030 = vmax.f32 %v12774, 0.0
      %v13031 = vmax.f32 %v12775, 0.0
      %v13032 = vmax.f32 %v12776, 0.0
      %v13033 = vmax.f32 %v12777, 0.0
      %v13034 = vmax.f32 %v12778, 0.0
      %v13035 = vmax.f32 %v12779, 0.0
      %v13036 = vmax.f32 %v12780, 0.0
      %v13037 = vmax.f32 %v12781, 0.0
      %v13038 = vmax.f32 %v12782, 0.0
      %v13039 = vmax.f32 %v12783, 0.0
      %v13040 = vmax.f32 %v12784, 0.0
      %v13041 = vmax.f32 %v12785, 0.0
      %v13042 = vmax.f32 %v12786, 0.0
      %v13043 = vmax.f32 %v12787, 0.0
      %v13044 = vmax.f32 %v12788, 0.0
      %v13045 = vmax.f32 %v12789, 0.0
      %v13046 = vmax.f32 %v12790, 0.0
      %v13047 = vmax.f32 %v12791, 0.0
      %v13048 = vmax.f32 %v12792, 0.0
      %v13049 = vmax.f32 %v12793, 0.0
      %v13050 = vmax.f32 %v12794, 0.0
      %v13307 = vrot.slane %v12796, 7
      %v13308 = vsel %vm11244, %v13307, %v12795
      %v13309 = vrot.slane %v12797, 6
      %v13310 = vsel %vm11246, %v13309, %v13308
      %v13311 = vrot.slane %v12798, 5
      %v13312 = vsel %vm11248, %v13311, %v13310
      %v13313 = vrot.slane %v12799, 4
      %v13314 = vsel %vm11250, %v13313, %v13312
      %v13315 = vrot.slane %v12800, 3
      %v13316 = vsel %vm11252, %v13315, %v13314
      %v13317 = vrot.slane %v12801, 2
      %v13318 = vsel %vm11254, %v13317, %v13316
      %v13319 = vrot.slane %v12802, 1
      %v13320 = vsel %vm11256, %v13319, %v13318
      %v13321 = vrot.slane %v12804, 7
      %v13322 = vsel %vm11244, %v13321, %v12803
      %v13323 = vrot.slane %v12805, 6
      %v13324 = vsel %vm11246, %v13323, %v13322
      %v13325 = vrot.slane %v12806, 5
      %v13326 = vsel %vm11248, %v13325, %v13324
      %v13327 = vrot.slane %v12807, 4
      %v13328 = vsel %vm11250, %v13327, %v13326
      %v13329 = vrot.slane %v12808, 3
      %v13330 = vsel %vm11252, %v13329, %v13328
      %v13331 = vrot.slane %v12809, 2
      %v13332 = vsel %vm11254, %v13331, %v13330
      %v13333 = vrot.slane %v12810, 1
      %v13334 = vsel %vm11256, %v13333, %v13332
      %v13335 = vrot.slane %v12812, 7
      %v13336 = vsel %vm11244, %v13335, %v12811
      %v13337 = vrot.slane %v12813, 6
      %v13338 = vsel %vm11246, %v13337, %v13336
      %v13339 = vrot.slane %v12814, 5
      %v13340 = vsel %vm11248, %v13339, %v13338
      %v13341 = vrot.slane %v12815, 4
      %v13342 = vsel %vm11250, %v13341, %v13340
      %v13343 = vrot.slane %v12816, 3
      %v13344 = vsel %vm11252, %v13343, %v13342
      %v13345 = vrot.slane %v12817, 2
      %v13346 = vsel %vm11254, %v13345, %v13344
      %v13347 = vrot.slane %v12818, 1
      %v13348 = vsel %vm11256, %v13347, %v13346
      %v13349 = vrot.slane %v12820, 7
      %v13350 = vsel %vm11244, %v13349, %v12819
      %v13351 = vrot.slane %v12821, 6
      %v13352 = vsel %vm11246, %v13351, %v13350
      %v13353 = vrot.slane %v12822, 5
      %v13354 = vsel %vm11248, %v13353, %v13352
      %v13355 = vrot.slane %v12823, 4
      %v13356 = vsel %vm11250, %v13355, %v13354
      %v13357 = vrot.slane %v12824, 3
      %v13358 = vsel %vm11252, %v13357, %v13356
      %v13359 = vrot.slane %v12825, 2
      %v13360 = vsel %vm11254, %v13359, %v13358
      %v13361 = vrot.slane %v12826, 1
      %v13362 = vsel %vm11256, %v13361, %v13360
      %v13363 = vrot.slane %v12828, 7
      %v13364 = vsel %vm11244, %v13363, %v12827
      %v13365 = vrot.slane %v12829, 6
      %v13366 = vsel %vm11246, %v13365, %v13364
      %v13367 = vrot.slane %v12830, 5
      %v13368 = vsel %vm11248, %v13367, %v13366
      %v13369 = vrot.slane %v12831, 4
      %v13370 = vsel %vm11250, %v13369, %v13368
      %v13371 = vrot.slane %v12832, 3
      %v13372 = vsel %vm11252, %v13371, %v13370
      %v13373 = vrot.slane %v12833, 2
      %v13374 = vsel %vm11254, %v13373, %v13372
      %v13375 = vrot.slane %v12834, 1
      %v13376 = vsel %vm11256, %v13375, %v13374
      %v13377 = vrot.slane %v12836, 7
      %v13378 = vsel %vm11244, %v13377, %v12835
      %v13379 = vrot.slane %v12837, 6
      %v13380 = vsel %vm11246, %v13379, %v13378
      %v13381 = vrot.slane %v12838, 5
      %v13382 = vsel %vm11248, %v13381, %v13380
      %v13383 = vrot.slane %v12839, 4
      %v13384 = vsel %vm11250, %v13383, %v13382
      %v13385 = vrot.slane %v12840, 3
      %v13386 = vsel %vm11252, %v13385, %v13384
      %v13387 = vrot.slane %v12841, 2
      %v13388 = vsel %vm11254, %v13387, %v13386
      %v13389 = vrot.slane %v12842, 1
      %v13390 = vsel %vm11256, %v13389, %v13388
      %v13391 = vrot.slane %v12844, 7
      %v13392 = vsel %vm11244, %v13391, %v12843
      %v13393 = vrot.slane %v12845, 6
      %v13394 = vsel %vm11246, %v13393, %v13392
      %v13395 = vrot.slane %v12846, 5
      %v13396 = vsel %vm11248, %v13395, %v13394
      %v13397 = vrot.slane %v12847, 4
      %v13398 = vsel %vm11250, %v13397, %v13396
      %v13399 = vrot.slane %v12848, 3
      %v13400 = vsel %vm11252, %v13399, %v13398
      %v13401 = vrot.slane %v12849, 2
      %v13402 = vsel %vm11254, %v13401, %v13400
      %v13403 = vrot.slane %v12850, 1
      %v13404 = vsel %vm11256, %v13403, %v13402
      %v13405 = vrot.slane %v12852, 7
      %v13406 = vsel %vm11244, %v13405, %v12851
      %v13407 = vrot.slane %v12853, 6
      %v13408 = vsel %vm11246, %v13407, %v13406
      %v13409 = vrot.slane %v12854, 5
      %v13410 = vsel %vm11248, %v13409, %v13408
      %v13411 = vrot.slane %v12855, 4
      %v13412 = vsel %vm11250, %v13411, %v13410
      %v13413 = vrot.slane %v12856, 3
      %v13414 = vsel %vm11252, %v13413, %v13412
      %v13415 = vrot.slane %v12857, 2
      %v13416 = vsel %vm11254, %v13415, %v13414
      %v13417 = vrot.slane %v12858, 1
      %v13418 = vsel %vm11256, %v13417, %v13416
      %v13419 = vrot.slane %v12860, 7
      %v13420 = vsel %vm11244, %v13419, %v12859
      %v13421 = vrot.slane %v12861, 6
      %v13422 = vsel %vm11246, %v13421, %v13420
      %v13423 = vrot.slane %v12862, 5
      %v13424 = vsel %vm11248, %v13423, %v13422
      %v13425 = vrot.slane %v12863, 4
      %v13426 = vsel %vm11250, %v13425, %v13424
      %v13427 = vrot.slane %v12864, 3
      %v13428 = vsel %vm11252, %v13427, %v13426
      %v13429 = vrot.slane %v12865, 2
      %v13430 = vsel %vm11254, %v13429, %v13428
      %v13431 = vrot.slane %v12866, 1
      %v13432 = vsel %vm11256, %v13431, %v13430
      %v13433 = vrot.slane %v12868, 7
      %v13434 = vsel %vm11244, %v13433, %v12867
      %v13435 = vrot.slane %v12869, 6
      %v13436 = vsel %vm11246, %v13435, %v13434
      %v13437 = vrot.slane %v12870, 5
      %v13438 = vsel %vm11248, %v13437, %v13436
      %v13439 = vrot.slane %v12871, 4
      %v13440 = vsel %vm11250, %v13439, %v13438
      %v13441 = vrot.slane %v12872, 3
      %v13442 = vsel %vm11252, %v13441, %v13440
      %v13443 = vrot.slane %v12873, 2
      %v13444 = vsel %vm11254, %v13443, %v13442
      %v13445 = vrot.slane %v12874, 1
      %v13446 = vsel %vm11256, %v13445, %v13444
      %v13447 = vrot.slane %v12876, 7
      %v13448 = vsel %vm11244, %v13447, %v12875
      %v13449 = vrot.slane %v12877, 6
      %v13450 = vsel %vm11246, %v13449, %v13448
      %v13451 = vrot.slane %v12878, 5
      %v13452 = vsel %vm11248, %v13451, %v13450
      %v13453 = vrot.slane %v12879, 4
      %v13454 = vsel %vm11250, %v13453, %v13452
      %v13455 = vrot.slane %v12880, 3
      %v13456 = vsel %vm11252, %v13455, %v13454
      %v13457 = vrot.slane %v12881, 2
      %v13458 = vsel %vm11254, %v13457, %v13456
      %v13459 = vrot.slane %v12882, 1
      %v13460 = vsel %vm11256, %v13459, %v13458
      %v13461 = vrot.slane %v12884, 7
      %v13462 = vsel %vm11244, %v13461, %v12883
      %v13463 = vrot.slane %v12885, 6
      %v13464 = vsel %vm11246, %v13463, %v13462
      %v13465 = vrot.slane %v12886, 5
      %v13466 = vsel %vm11248, %v13465, %v13464
      %v13467 = vrot.slane %v12887, 4
      %v13468 = vsel %vm11250, %v13467, %v13466
      %v13469 = vrot.slane %v12888, 3
      %v13470 = vsel %vm11252, %v13469, %v13468
      %v13471 = vrot.slane %v12889, 2
      %v13472 = vsel %vm11254, %v13471, %v13470
      %v13473 = vrot.slane %v12890, 1
      %v13474 = vsel %vm11256, %v13473, %v13472
      %v13475 = vrot.slane %v12892, 7
      %v13476 = vsel %vm11244, %v13475, %v12891
      %v13477 = vrot.slane %v12893, 6
      %v13478 = vsel %vm11246, %v13477, %v13476
      %v13479 = vrot.slane %v12894, 5
      %v13480 = vsel %vm11248, %v13479, %v13478
      %v13481 = vrot.slane %v12895, 4
      %v13482 = vsel %vm11250, %v13481, %v13480
      %v13483 = vrot.slane %v12896, 3
      %v13484 = vsel %vm11252, %v13483, %v13482
      %v13485 = vrot.slane %v12897, 2
      %v13486 = vsel %vm11254, %v13485, %v13484
      %v13487 = vrot.slane %v12898, 1
      %v13488 = vsel %vm11256, %v13487, %v13486
      %v13489 = vrot.slane %v12900, 7
      %v13490 = vsel %vm11244, %v13489, %v12899
      %v13491 = vrot.slane %v12901, 6
      %v13492 = vsel %vm11246, %v13491, %v13490
      %v13493 = vrot.slane %v12902, 5
      %v13494 = vsel %vm11248, %v13493, %v13492
      %v13495 = vrot.slane %v12903, 4
      %v13496 = vsel %vm11250, %v13495, %v13494
      %v13497 = vrot.slane %v12904, 3
      %v13498 = vsel %vm11252, %v13497, %v13496
      %v13499 = vrot.slane %v12905, 2
      %v13500 = vsel %vm11254, %v13499, %v13498
      %v13501 = vrot.slane %v12906, 1
      %v13502 = vsel %vm11256, %v13501, %v13500
      %v13503 = vrot.slane %v12908, 7
      %v13504 = vsel %vm11244, %v13503, %v12907
      %v13505 = vrot.slane %v12909, 6
      %v13506 = vsel %vm11246, %v13505, %v13504
      %v13507 = vrot.slane %v12910, 5
      %v13508 = vsel %vm11248, %v13507, %v13506
      %v13509 = vrot.slane %v12911, 4
      %v13510 = vsel %vm11250, %v13509, %v13508
      %v13511 = vrot.slane %v12912, 3
      %v13512 = vsel %vm11252, %v13511, %v13510
      %v13513 = vrot.slane %v12913, 2
      %v13514 = vsel %vm11254, %v13513, %v13512
      %v13515 = vrot.slane %v12914, 1
      %v13516 = vsel %vm11256, %v13515, %v13514
      %v13517 = vrot.slane %v12916, 7
      %v13518 = vsel %vm11244, %v13517, %v12915
      %v13519 = vrot.slane %v12917, 6
      %v13520 = vsel %vm11246, %v13519, %v13518
      %v13521 = vrot.slane %v12918, 5
      %v13522 = vsel %vm11248, %v13521, %v13520
      %v13523 = vrot.slane %v12919, 4
      %v13524 = vsel %vm11250, %v13523, %v13522
      %v13525 = vrot.slane %v12920, 3
      %v13526 = vsel %vm11252, %v13525, %v13524
      %v13527 = vrot.slane %v12921, 2
      %v13528 = vsel %vm11254, %v13527, %v13526
      %v13529 = vrot.slane %v12922, 1
      %v13530 = vsel %vm11256, %v13529, %v13528
      %v13531 = vrot.slane %v12924, 7
      %v13532 = vsel %vm11244, %v13531, %v12923
      %v13533 = vrot.slane %v12925, 6
      %v13534 = vsel %vm11246, %v13533, %v13532
      %v13535 = vrot.slane %v12926, 5
      %v13536 = vsel %vm11248, %v13535, %v13534
      %v13537 = vrot.slane %v12927, 4
      %v13538 = vsel %vm11250, %v13537, %v13536
      %v13539 = vrot.slane %v12928, 3
      %v13540 = vsel %vm11252, %v13539, %v13538
      %v13541 = vrot.slane %v12929, 2
      %v13542 = vsel %vm11254, %v13541, %v13540
      %v13543 = vrot.slane %v12930, 1
      %v13544 = vsel %vm11256, %v13543, %v13542
      %v13545 = vrot.slane %v12932, 7
      %v13546 = vsel %vm11244, %v13545, %v12931
      %v13547 = vrot.slane %v12933, 6
      %v13548 = vsel %vm11246, %v13547, %v13546
      %v13549 = vrot.slane %v12934, 5
      %v13550 = vsel %vm11248, %v13549, %v13548
      %v13551 = vrot.slane %v12935, 4
      %v13552 = vsel %vm11250, %v13551, %v13550
      %v13553 = vrot.slane %v12936, 3
      %v13554 = vsel %vm11252, %v13553, %v13552
      %v13555 = vrot.slane %v12937, 2
      %v13556 = vsel %vm11254, %v13555, %v13554
      %v13557 = vrot.slane %v12938, 1
      %v13558 = vsel %vm11256, %v13557, %v13556
      %v13559 = vrot.slane %v12940, 7
      %v13560 = vsel %vm11244, %v13559, %v12939
      %v13561 = vrot.slane %v12941, 6
      %v13562 = vsel %vm11246, %v13561, %v13560
      %v13563 = vrot.slane %v12942, 5
      %v13564 = vsel %vm11248, %v13563, %v13562
      %v13565 = vrot.slane %v12943, 4
      %v13566 = vsel %vm11250, %v13565, %v13564
      %v13567 = vrot.slane %v12944, 3
      %v13568 = vsel %vm11252, %v13567, %v13566
      %v13569 = vrot.slane %v12945, 2
      %v13570 = vsel %vm11254, %v13569, %v13568
      %v13571 = vrot.slane %v12946, 1
      %v13572 = vsel %vm11256, %v13571, %v13570
      %v13573 = vrot.slane %v12948, 7
      %v13574 = vsel %vm11244, %v13573, %v12947
      %v13575 = vrot.slane %v12949, 6
      %v13576 = vsel %vm11246, %v13575, %v13574
      %v13577 = vrot.slane %v12950, 5
      %v13578 = vsel %vm11248, %v13577, %v13576
      %v13579 = vrot.slane %v12951, 4
      %v13580 = vsel %vm11250, %v13579, %v13578
      %v13581 = vrot.slane %v12952, 3
      %v13582 = vsel %vm11252, %v13581, %v13580
      %v13583 = vrot.slane %v12953, 2
      %v13584 = vsel %vm11254, %v13583, %v13582
      %v13585 = vrot.slane %v12954, 1
      %v13586 = vsel %vm11256, %v13585, %v13584
      %v13587 = vrot.slane %v12956, 7
      %v13588 = vsel %vm11244, %v13587, %v12955
      %v13589 = vrot.slane %v12957, 6
      %v13590 = vsel %vm11246, %v13589, %v13588
      %v13591 = vrot.slane %v12958, 5
      %v13592 = vsel %vm11248, %v13591, %v13590
      %v13593 = vrot.slane %v12959, 4
      %v13594 = vsel %vm11250, %v13593, %v13592
      %v13595 = vrot.slane %v12960, 3
      %v13596 = vsel %vm11252, %v13595, %v13594
      %v13597 = vrot.slane %v12961, 2
      %v13598 = vsel %vm11254, %v13597, %v13596
      %v13599 = vrot.slane %v12962, 1
      %v13600 = vsel %vm11256, %v13599, %v13598
      %v13601 = vrot.slane %v12964, 7
      %v13602 = vsel %vm11244, %v13601, %v12963
      %v13603 = vrot.slane %v12965, 6
      %v13604 = vsel %vm11246, %v13603, %v13602
      %v13605 = vrot.slane %v12966, 5
      %v13606 = vsel %vm11248, %v13605, %v13604
      %v13607 = vrot.slane %v12967, 4
      %v13608 = vsel %vm11250, %v13607, %v13606
      %v13609 = vrot.slane %v12968, 3
      %v13610 = vsel %vm11252, %v13609, %v13608
      %v13611 = vrot.slane %v12969, 2
      %v13612 = vsel %vm11254, %v13611, %v13610
      %v13613 = vrot.slane %v12970, 1
      %v13614 = vsel %vm11256, %v13613, %v13612
      %v13615 = vrot.slane %v12972, 7
      %v13616 = vsel %vm11244, %v13615, %v12971
      %v13617 = vrot.slane %v12973, 6
      %v13618 = vsel %vm11246, %v13617, %v13616
      %v13619 = vrot.slane %v12974, 5
      %v13620 = vsel %vm11248, %v13619, %v13618
      %v13621 = vrot.slane %v12975, 4
      %v13622 = vsel %vm11250, %v13621, %v13620
      %v13623 = vrot.slane %v12976, 3
      %v13624 = vsel %vm11252, %v13623, %v13622
      %v13625 = vrot.slane %v12977, 2
      %v13626 = vsel %vm11254, %v13625, %v13624
      %v13627 = vrot.slane %v12978, 1
      %v13628 = vsel %vm11256, %v13627, %v13626
      %v13629 = vrot.slane %v12980, 7
      %v13630 = vsel %vm11244, %v13629, %v12979
      %v13631 = vrot.slane %v12981, 6
      %v13632 = vsel %vm11246, %v13631, %v13630
      %v13633 = vrot.slane %v12982, 5
      %v13634 = vsel %vm11248, %v13633, %v13632
      %v13635 = vrot.slane %v12983, 4
      %v13636 = vsel %vm11250, %v13635, %v13634
      %v13637 = vrot.slane %v12984, 3
      %v13638 = vsel %vm11252, %v13637, %v13636
      %v13639 = vrot.slane %v12985, 2
      %v13640 = vsel %vm11254, %v13639, %v13638
      %v13641 = vrot.slane %v12986, 1
      %v13642 = vsel %vm11256, %v13641, %v13640
      %v13643 = vrot.slane %v12988, 7
      %v13644 = vsel %vm11244, %v13643, %v12987
      %v13645 = vrot.slane %v12989, 6
      %v13646 = vsel %vm11246, %v13645, %v13644
      %v13647 = vrot.slane %v12990, 5
      %v13648 = vsel %vm11248, %v13647, %v13646
      %v13649 = vrot.slane %v12991, 4
      %v13650 = vsel %vm11250, %v13649, %v13648
      %v13651 = vrot.slane %v12992, 3
      %v13652 = vsel %vm11252, %v13651, %v13650
      %v13653 = vrot.slane %v12993, 2
      %v13654 = vsel %vm11254, %v13653, %v13652
      %v13655 = vrot.slane %v12994, 1
      %v13656 = vsel %vm11256, %v13655, %v13654
      %v13657 = vrot.slane %v12996, 7
      %v13658 = vsel %vm11244, %v13657, %v12995
      %v13659 = vrot.slane %v12997, 6
      %v13660 = vsel %vm11246, %v13659, %v13658
      %v13661 = vrot.slane %v12998, 5
      %v13662 = vsel %vm11248, %v13661, %v13660
      %v13663 = vrot.slane %v12999, 4
      %v13664 = vsel %vm11250, %v13663, %v13662
      %v13665 = vrot.slane %v13000, 3
      %v13666 = vsel %vm11252, %v13665, %v13664
      %v13667 = vrot.slane %v13001, 2
      %v13668 = vsel %vm11254, %v13667, %v13666
      %v13669 = vrot.slane %v13002, 1
      %v13670 = vsel %vm11256, %v13669, %v13668
      %v13671 = vrot.slane %v13004, 7
      %v13672 = vsel %vm11244, %v13671, %v13003
      %v13673 = vrot.slane %v13005, 6
      %v13674 = vsel %vm11246, %v13673, %v13672
      %v13675 = vrot.slane %v13006, 5
      %v13676 = vsel %vm11248, %v13675, %v13674
      %v13677 = vrot.slane %v13007, 4
      %v13678 = vsel %vm11250, %v13677, %v13676
      %v13679 = vrot.slane %v13008, 3
      %v13680 = vsel %vm11252, %v13679, %v13678
      %v13681 = vrot.slane %v13009, 2
      %v13682 = vsel %vm11254, %v13681, %v13680
      %v13683 = vrot.slane %v13010, 1
      %v13684 = vsel %vm11256, %v13683, %v13682
      %v13685 = vrot.slane %v13012, 7
      %v13686 = vsel %vm11244, %v13685, %v13011
      %v13687 = vrot.slane %v13013, 6
      %v13688 = vsel %vm11246, %v13687, %v13686
      %v13689 = vrot.slane %v13014, 5
      %v13690 = vsel %vm11248, %v13689, %v13688
      %v13691 = vrot.slane %v13015, 4
      %v13692 = vsel %vm11250, %v13691, %v13690
      %v13693 = vrot.slane %v13016, 3
      %v13694 = vsel %vm11252, %v13693, %v13692
      %v13695 = vrot.slane %v13017, 2
      %v13696 = vsel %vm11254, %v13695, %v13694
      %v13697 = vrot.slane %v13018, 1
      %v13698 = vsel %vm11256, %v13697, %v13696
      %v13699 = vrot.slane %v13020, 7
      %v13700 = vsel %vm11244, %v13699, %v13019
      %v13701 = vrot.slane %v13021, 6
      %v13702 = vsel %vm11246, %v13701, %v13700
      %v13703 = vrot.slane %v13022, 5
      %v13704 = vsel %vm11248, %v13703, %v13702
      %v13705 = vrot.slane %v13023, 4
      %v13706 = vsel %vm11250, %v13705, %v13704
      %v13707 = vrot.slane %v13024, 3
      %v13708 = vsel %vm11252, %v13707, %v13706
      %v13709 = vrot.slane %v13025, 2
      %v13710 = vsel %vm11254, %v13709, %v13708
      %v13711 = vrot.slane %v13026, 1
      %v13712 = vsel %vm11256, %v13711, %v13710
      %v13713 = vrot.slane %v13028, 7
      %v13714 = vsel %vm11244, %v13713, %v13027
      %v13715 = vrot.slane %v13029, 6
      %v13716 = vsel %vm11246, %v13715, %v13714
      %v13717 = vrot.slane %v13030, 5
      %v13718 = vsel %vm11248, %v13717, %v13716
      %v13719 = vrot.slane %v13031, 4
      %v13720 = vsel %vm11250, %v13719, %v13718
      %v13721 = vrot.slane %v13032, 3
      %v13722 = vsel %vm11252, %v13721, %v13720
      %v13723 = vrot.slane %v13033, 2
      %v13724 = vsel %vm11254, %v13723, %v13722
      %v13725 = vrot.slane %v13034, 1
      %v13726 = vsel %vm11256, %v13725, %v13724
      %v13727 = vrot.slane %v13036, 7
      %v13728 = vsel %vm11244, %v13727, %v13035
      %v13729 = vrot.slane %v13037, 6
      %v13730 = vsel %vm11246, %v13729, %v13728
      %v13731 = vrot.slane %v13038, 5
      %v13732 = vsel %vm11248, %v13731, %v13730
      %v13733 = vrot.slane %v13039, 4
      %v13734 = vsel %vm11250, %v13733, %v13732
      %v13735 = vrot.slane %v13040, 3
      %v13736 = vsel %vm11252, %v13735, %v13734
      %v13737 = vrot.slane %v13041, 2
      %v13738 = vsel %vm11254, %v13737, %v13736
      %v13739 = vrot.slane %v13042, 1
      %v13740 = vsel %vm11256, %v13739, %v13738
      %v13741 = vrot.slane %v13044, 7
      %v13742 = vsel %vm11244, %v13741, %v13043
      %v13743 = vrot.slane %v13045, 6
      %v13744 = vsel %vm11246, %v13743, %v13742
      %v13745 = vrot.slane %v13046, 5
      %v13746 = vsel %vm11248, %v13745, %v13744
      %v13747 = vrot.slane %v13047, 4
      %v13748 = vsel %vm11250, %v13747, %v13746
      %v13749 = vrot.slane %v13048, 3
      %v13750 = vsel %vm11252, %v13749, %v13748
      %v13751 = vrot.slane %v13049, 2
      %v13752 = vsel %vm11254, %v13751, %v13750
      %v13753 = vrot.slane %v13050, 1
      %v13754 = vsel %vm11256, %v13753, %v13752
      %13787 = vst.msk [vmem:[%s302] sm:$0xff] %vm9191, %v13320
      %13788 = vst.msk [vmem:[%s302 + $0x8] sm:$0xff] %vm9191, %v13334
      %13789 = vst.msk [vmem:[%s302 + $0x10] sm:$0xff] %vm9191, %v13348
      %13790 = vst.msk [vmem:[%s302 + $0x18] sm:$0xff] %vm9191, %v13362
      %13791 = vst.msk [vmem:[%s302 + $0x20] sm:$0xff] %vm9191, %v13376
      %13792 = vst.msk [vmem:[%s302 + $0x28] sm:$0xff] %vm9191, %v13390
      %13793 = vst.msk [vmem:[%s302 + $0x30] sm:$0xff] %vm9191, %v13404
      %13794 = vst.msk [vmem:[%s302 + $0x38] sm:$0xff] %vm9191, %v13418
      %13795 = vst.msk [vmem:[%s302 + $0x40] sm:$0xff] %vm9191, %v13432
      %13796 = vst.msk [vmem:[%s302 + $0x48] sm:$0xff] %vm9191, %v13446
      %13797 = vst.msk [vmem:[%s302 + $0x50] sm:$0xff] %vm9191, %v13460
      %13798 = vst.msk [vmem:[%s302 + $0x58] sm:$0xff] %vm9191, %v13474
      %13799 = vst.msk [vmem:[%s302 + $0x60] sm:$0xff] %vm9191, %v13488
      %13800 = vst.msk [vmem:[%s302 + $0x68] sm:$0xff] %vm9191, %v13502
      %13801 = vst.msk [vmem:[%s302 + $0x70] sm:$0xff] %vm9191, %v13516
      %13802 = vst.msk [vmem:[%s302 + $0x78] sm:$0xff] %vm9191, %v13530
      %13803 = vst.msk [vmem:[%s302 + $0x80] sm:$0xff] %vm9191, %v13544
      %13804 = vst.msk [vmem:[%s302 + $0x88] sm:$0xff] %vm9191, %v13558
      %13805 = vst.msk [vmem:[%s302 + $0x90] sm:$0xff] %vm9191, %v13572
      %13806 = vst.msk [vmem:[%s302 + $0x98] sm:$0xff] %vm9191, %v13586
      %13807 = vst.msk [vmem:[%s302 + $0xa0] sm:$0xff] %vm9191, %v13600
      %13808 = vst.msk [vmem:[%s302 + $0xa8] sm:$0xff] %vm9191, %v13614
      %13809 = vst.msk [vmem:[%s302 + $0xb0] sm:$0xff] %vm9191, %v13628
      %13810 = vst.msk [vmem:[%s302 + $0xb8] sm:$0xff] %vm9191, %v13642
      %13811 = vst.msk [vmem:[%s302 + $0xc0] sm:$0xff] %vm9191, %v13656
      %13812 = vst.msk [vmem:[%s302 + $0xc8] sm:$0xff] %vm9191, %v13670
      %13813 = vst.msk [vmem:[%s302 + $0xd0] sm:$0xff] %vm9191, %v13684
      %13814 = vst.msk [vmem:[%s302 + $0xd8] sm:$0xff] %vm9191, %v13698
      %13815 = vst.msk [vmem:[%s302 + $0xe0] sm:$0xff] %vm9191, %v13712
      %13816 = vst.msk [vmem:[%s302 + $0xe8] sm:$0xff] %vm9191, %v13726
      %13817 = vst.msk [vmem:[%s302 + $0xf0] sm:$0xff] %vm9191, %v13740
      %13818 = vst.msk [vmem:[%s302 + $0xf8] sm:$0xff] %vm9191, %v13754
      %s13819 = smul.u32 32, %s18
      %p13820 = scmp.lt.s32.totalorder %s13819, 63
      %s13821 = scalar_select %p13820, %s13819, 63
      %s13822 = smul.addr %s13821, 8
      %s13823 = scalar_lea.vmem %s7, %s13822
      // Predicated region
      $region49: #{tpu_custom_call.1} parent=47 // pred_check
        %p13824 = pneg %p193
      $region50: #{tpu_custom_call.1} parent=47 // pred_check_branch
        %13826 = sbr.rel (%p13824) target = $region52
      $region51: #{tpu_custom_call.1} parent=47 // pred_region
        %s13827 = smul.u32 32, %s18
      $region52: #{tpu_custom_call.1} parent=47 // pred_fallthru
        _
    $region48: #{tpu_custom_call.1} parent=5 // pred_fallthru
      _
    %p13828 = scmp.le.s32.totalorder 2, %s13
    // Predicated region
    $region53: #{tpu_custom_call.1} parent=5 // pred_check
      %p13829 = pneg %p13828
    $region54: #{tpu_custom_call.1} parent=5 // pred_check_branch
      %13831 = sbr.rel (%p13829) target = $region56
    $region55: #{tpu_custom_call.1} parent=5 // pred_region
      %s13832 = ssub.s32 %s13, 2
      // Predicated region
      $region57: #{tpu_custom_call.1} parent=55 // pred_check
        %p13833 = pneg %p199
      $region58: #{tpu_custom_call.1} parent=55 // pred_check_branch
        %13835 = sbr.rel (%p13833) target = $region60
      $region59: #{tpu_custom_call.1} parent=55 // pred_region
        %s13836 = smul.u32 32, %s19
        %p13837 = scmp.lt.s32.totalorder %s13836, 63
        %s13838 = scalar_select %p13837, %s13836, 63
        %s13839 = smul.addr %s13838, 8
        %s13840 = scalar_lea.vmem %s7, %s13839
      $region60: #{tpu_custom_call.1} parent=55 // pred_fallthru
        _
    $region56: #{tpu_custom_call.1} parent=5 // pred_fallthru
      _
  $region6: #{tpu_custom_call.1} parent=0 // loop_footer
    %s17 = sadd.s32 1, %s13
  $region7: #{tpu_custom_call.1} parent=0 // loop_footer_branch
    %12 = sbr.rel target = $region3
  $region8: #{tpu_custom_call.1} parent=0 // loop_exit
    _

</llo_original>
